<compile_context>
chip_gen: v7x
topology: tpu7x:2x2x1
jax: 0.10.0
libtpu: 0.0.40
codegen_flags: <defaults>
</compile_context>

<pallas_src>
import functools

import jax
import jax.numpy as jnp
from jax.experimental import pallas as pl
from jax.experimental.pallas import tpu as pltpu


_PARALLEL = pltpu.CompilerParams(dimension_semantics=("parallel",))


# ----------------------------------------------------------------------------
# Helpers (XLA side)
# ----------------------------------------------------------------------------
def _pick_tile(m, tmax=1024):
    """Largest tile <= tmax dividing m (multiples of 8 preferred)."""
    if m <= tmax:
        return m
    t = tmax - (tmax % 8)
    while t >= 8:
        if m % t == 0:
            return t
        t -= 8
    return m


def _phase_decompose(x, *, pad, stride, pad_value=0.0):
    """Pad and split into stride*stride spatial phases stacked along H."""
    N, H, W, C = x.shape
    s = stride
    Hp, Wp = H + 2 * pad, W + 2 * pad
    Hp2, Wp2 = pl.cdiv(Hp, s) * s, pl.cdiv(Wp, s) * s
    xp = jnp.pad(
        x,
        ((0, 0), (pad, pad + Hp2 - Hp), (pad, pad + Wp2 - Wp), (0, 0)),
        constant_values=pad_value,
    )
    Hq, Wq = Hp2 // s, Wp2 // s
    if s == 1:
        return xp, Hq, Wq
    phases = [xp[:, dy::s, dx::s, :] for dy in range(s) for dx in range(s)]
    return jnp.concatenate(phases, axis=1), Hq, Wq


def _im2col(x, kh, kw, stride, pad):
    """XLA-side im2col -> (N, Ho, Wo, kh*kw*C), tap-major / channel-minor.

    Only used for the stem (Cin=3) and the two stride-2 convs; those tensors
    are tiny here, and it lets a single K-dense matmul kernel handle them."""
    N, H, W, C = x.shape
    s = stride
    Ho = (H + 2 * pad - kh) // s + 1
    Wo = (W + 2 * pad - kw) // s + 1
    xph, Hq, Wq = _phase_decompose(x, pad=pad, stride=s)
    taps = []
    for ky in range(kh):
        for kx in range(kw):
            p = (ky % s) * s + (kx % s)
            oy, ox = ky // s, kx // s
            taps.append(xph[:, p * Hq + oy:p * Hq + oy + Ho, ox:ox + Wo, :])
    return jnp.concatenate(taps, axis=-1)


# ----------------------------------------------------------------------------
# Pallas kernels
# ----------------------------------------------------------------------------
def _mm_stats_kernel(a_ref, w_ref, y_ref, st_ref):
    """One bf16 MXU matmul tile + per-tile [sum, sum_sq] for BatchNorm."""
    acc = jnp.dot(a_ref[...], w_ref[...], preferred_element_type=jnp.float32)
    st_ref[0, 0:1, :] = jnp.sum(acc, axis=0, keepdims=True)
    st_ref[0, 1:2, :] = jnp.sum(acc * acc, axis=0, keepdims=True)
    y_ref[...] = acc.astype(y_ref.dtype)


def _conv3x3_kernel(kh, kw, pad, gsz, relu, apply_affine,
                    x_ref, s_ref, b_ref, w_ref, y_ref, st_ref, xa_ref, pk_ref):
    """Fused stride-1 'same' conv for one sample.

    Prologue: previous layer's BN scale/shift (+ReLU) applied ONCE to the
    resident tile (identity when the input is already actualized).
    Main loop: taps are copied (with in-kernel zero padding) into a VMEM
    scratch packed along the contraction dim, so each MXU dot has
    K = gsz*Cin; f32 accumulation; emits bf16 output + BN sums."""
    H, W, Cin = x_ref.shape[1], x_ref.shape[2], x_ref.shape[3]
    Cout = w_ref.shape[2]
    KK = kh * kw
    G = -(-KK // gsz)

    if apply_affine:
        v = x_ref[0].astype(jnp.float32) * s_ref[...] + b_ref[...]
        if relu:
            v = jnp.maximum(v, 0.0)
        xa_ref[...] = v.astype(xa_ref.dtype)
    else:
        xa_ref[...] = x_ref[0]

    # Output spatial size is tiny here; the accumulator stays in vregs.
    acc = jnp.zeros((H * W, Cout), jnp.float32)
    for g in range(G):
        # Zeroing covers both conv zero-padding and phantom taps of the last
        # (short) group; the phantom weight rows are zero anyway.
        pk_ref[...] = jnp.zeros(pk_ref.shape, pk_ref.dtype)
        for j in range(gsz):
            t = g * gsz + j
            if t >= KK:
                break
            ky, kx = t // kw, t % kw
            dy, dx = ky - pad, kx - pad
            r0, r1 = max(0, -dy), min(H, H - dy)
            c0, c1 = max(0, -dx), min(W, W - dx)
            pk_ref[r0:r1, c0:c1, j * Cin:(j + 1) * Cin] = (
                xa_ref[r0 + dy:r1 + dy, c0 + dx:c1 + dx, :])
        a = pk_ref[...].reshape(H * W, gsz * Cin)
        acc = acc + jnp.dot(a, w_ref[g], preferred_element_type=jnp.float32)

    st_ref[0, 0:1, :] = jnp.sum(acc, axis=0, keepdims=True)
    st_ref[0, 1:2, :] = jnp.sum(acc * acc, axis=0, keepdims=True)
    y_ref[...] = acc.reshape(1, H, W, Cout).astype(y_ref.dtype)


def _affine_kernel(relu, x_ref, s_ref, b_ref, o_ref):
    y = x_ref[...].astype(jnp.float32) * s_ref[...] + b_ref[...]
    if relu:
        y = jnp.maximum(y, 0.0)
    o_ref[...] = y.astype(o_ref.dtype)


def _affine_add_kernel(relu, x_ref, s_ref, b_ref, r_ref, o_ref):
    y = (x_ref[...].astype(jnp.float32) * s_ref[...] + b_ref[...]
         + r_ref[...].astype(jnp.float32))
    if relu:
        y = jnp.maximum(y, 0.0)
    o_ref[...] = y.astype(o_ref.dtype)


def _affine_add2_kernel(x_ref, s_ref, b_ref, r_ref, rs_ref, rb_ref, o_ref):
    y = (x_ref[...].astype(jnp.float32) * s_ref[...] + b_ref[...]
         + r_ref[...].astype(jnp.float32) * rs_ref[...] + rb_ref[...])
    o_ref[...] = jnp.maximum(y, 0.0).astype(o_ref.dtype)


def _maxpool_kernel(k, stride, Ho, Wo, x_ref, o_ref):
    s = stride
    Hq = x_ref.shape[1] // (s * s)
    y = None
    for ky in range(k):
        for kx in range(k):
            p = (ky % s) * s + (kx % s)
            oy, ox = ky // s, kx // s
            tap = x_ref[0, p * Hq + oy:p * Hq + oy + Ho, ox:ox + Wo, :]
            y = tap if y is None else jnp.maximum(y, tap)
    o_ref[...] = y.reshape(1, Ho, Wo, y.shape[-1])


def _head_kernel(x_ref, w_ref, b_ref, o_ref):
    """Global average pool + linear for the whole batch (one bf16 MXU dot)."""
    pooled = jnp.mean(x_ref[...].astype(jnp.float32), axis=1)      # (N, C)
    out = jnp.dot(pooled.astype(jnp.bfloat16), w_ref[...],
                  preferred_element_type=jnp.float32)
    o_ref[...] = out + b_ref[...]


# ----------------------------------------------------------------------------
# Wrappers
# ----------------------------------------------------------------------------
def conv_mm(a, w_flat):
    """Conv as a plain matmul (stem / stride-2 convs via im2col / 1x1 conv).

    a: (M, K), w_flat: (K, Cout).  Returns (y bf16 (M, Cout), stats)."""
    a = a.astype(jnp.bfloat16)
    w_flat = w_flat.astype(jnp.bfloat16)
    M, K = a.shape
    Cout = w_flat.shape[1]
    tm = 128 if (M % 128 == 0 and M > 128) else M
    grid = (M // tm,)
    y, stats = pl.pallas_call(
        _mm_stats_kernel,
        out_shape=(jax.ShapeDtypeStruct((M, Cout), jnp.bfloat16),
                   jax.ShapeDtypeStruct((grid[0], 2, Cout), jnp.float32)),
        grid_spec=pltpu.PrefetchScalarGridSpec(
            num_scalar_prefetch=0, grid=grid,
            in_specs=[pl.BlockSpec((tm, K), lambda i: (i, 0)),
                      pl.BlockSpec((K, Cout), lambda i: (0, 0))],
            out_specs=[pl.BlockSpec((tm, Cout), lambda i: (i, 0)),
                       pl.BlockSpec((1, 2, Cout), lambda i: (i, 0, 0))]),
        compiler_params=_PARALLEL,
    )(a, w_flat)
    return y, stats


def conv3x3_fused(x, w, scale=None, shift=None, relu=True):
    """Fused stride-1 'same' 3x3 conv with optional BN(+ReLU) prologue.

    x: (N, H, W, Cin) bf16 raw/actualized activation; w: (9, Cin, Cout).
    scale/shift: pending per-channel affine of the previous layer (None =
    identity, i.e. input is already actualized)."""
    N, H, W, Cin = x.shape
    KK, Cin_w, Cout = w.shape
    assert KK == 9 and Cin_w == Cin, (w.shape, Cin)
    gsz = min(KK, max(1, 256 // Cin))          # K per MXU dot >= 256 when possible
    G = -(-KK // gsz)
    Kg = gsz * Cin
    w_p = jnp.pad(w.astype(jnp.bfloat16), ((0, G * gsz - KK), (0, 0), (0, 0)))
    w_p = w_p.reshape(G, Kg, Cout)
    apply_affine = scale is not None
    s2 = (scale if apply_affine else jnp.ones((Cin,), jnp.float32)).reshape(1, Cin)
    b2 = (shift if apply_affine else jnp.zeros((Cin,), jnp.float32)).reshape(1, Cin)
    kernel = functools.partial(_conv3x3_kernel, 3, 3, 1, gsz, relu, apply_affine)
    y, stats = pl.pallas_call(
        kernel,
        out_shape=(jax.ShapeDtypeStruct((N, H, W, Cout), jnp.bfloat16),
                   jax.ShapeDtypeStruct((N, 2, Cout), jnp.float32)),
        grid_spec=pltpu.PrefetchScalarGridSpec(
            num_scalar_prefetch=0, grid=(N,),
            in_specs=[pl.BlockSpec((1, H, W, Cin), lambda n: (n, 0, 0, 0)),
                      pl.BlockSpec((1, Cin), lambda n: (0, 0)),
                      pl.BlockSpec((1, Cin), lambda n: (0, 0)),
                      pl.BlockSpec((G, Kg, Cout), lambda n: (0, 0, 0))],
            out_specs=[pl.BlockSpec((1, H, W, Cout), lambda n: (n, 0, 0, 0)),
                       pl.BlockSpec((1, 2, Cout), lambda n: (n, 0, 0))],
            scratch_shapes=[pltpu.VMEM((H, W, Cin), jnp.bfloat16),   # actualized tile
                            pltpu.VMEM((H, W, Kg), jnp.bfloat16)]),  # K-packed taps
        compiler_params=_PARALLEL,
    )(x.astype(jnp.bfloat16), s2, b2, w_p)
    return y, stats


def bn_scale_shift(stats, count, gamma, beta, eps=1e-5):
    """Training-mode BN (batch stats, biased variance) from emitted sums.
    Note: single-pass E[x^2]-E[x]^2 in f32; fine at these magnitudes."""
    ssum = jnp.sum(stats[:, 0, :], axis=0)
    ssq = jnp.sum(stats[:, 1, :], axis=0)
    mean = ssum / count
    var = jnp.maximum(ssq / count - mean * mean, 0.0)
    scale = gamma * jax.lax.rsqrt(var + eps)
    shift = beta - mean * scale
    return scale, shift


def bn_finalize(x, scale, shift, residual=None, res_scale=None, res_shift=None,
                relu=True):
    """y = x*scale+shift (+ residual [optionally with its own affine]) (+ReLU).

    Operates on a lane-dense folded (M/fold, 128) view for C<128 layers."""
    N, H, W, C = x.shape
    M = N * H * W
    fold = 128 // C if (C < 128 and 128 % C == 0 and M % (128 // C) == 0) else 1
    Mf, Cf = M // fold, C * fold
    xf = x.reshape(Mf, Cf)
    sf = jnp.tile(scale, (fold,)).reshape(1, Cf)
    bf = jnp.tile(shift, (fold,)).reshape(1, Cf)
    tm = _pick_tile(Mf, 1024)
    x_spec = pl.BlockSpec((tm, Cf), lambda i: (i, 0))
    v_spec = pl.BlockSpec((1, Cf), lambda i: (0, 0))
    if residual is None:
        kernel = functools.partial(_affine_kernel, relu)
        in_specs, args = [x_spec, v_spec, v_spec], (xf, sf, bf)
    elif res_scale is None:
        rf = residual.reshape(Mf, Cf)
        kernel = functools.partial(_affine_add_kernel, relu)
        in_specs, args = [x_spec, v_spec, v_spec, x_spec], (xf, sf, bf, rf)
    else:
        rf = residual.reshape(Mf, Cf)
        rsf = jnp.tile(res_scale, (fold,)).reshape(1, Cf)
        rbf = jnp.tile(res_shift, (fold,)).reshape(1, Cf)
        kernel = _affine_add2_kernel
        in_specs = [x_spec, v_spec, v_spec, x_spec, v_spec, v_spec]
        args = (xf, sf, bf, rf, rsf, rbf)
    out = pl.pallas_call(
        kernel,
        out_shape=jax.ShapeDtypeStruct((Mf, Cf), jnp.bfloat16),
        grid_spec=pltpu.PrefetchScalarGridSpec(
            num_scalar_prefetch=0, grid=(Mf // tm,),
            in_specs=in_specs,
            out_specs=pl.BlockSpec((tm, Cf), lambda i: (i, 0))),
        compiler_params=_PARALLEL,
    )(*args)
    return out.reshape(N, H, W, C)


def maxpool2d(x, *, k=3, stride=2, pad=1):
    """3x3/s2 max pool.  Input is post-ReLU (>= 0), so zero padding is exact."""
    N, H, W, C = x.shape
    s = stride
    Ho = (H + 2 * pad - k) // s + 1
    Wo = (W + 2 * pad - k) // s + 1
    xph, Hq, _ = _phase_decompose(x, pad=pad, stride=s, pad_value=0.0)
    Wq = xph.shape[2]
    kernel = functools.partial(_maxpool_kernel, k, s, Ho, Wo)
    return pl.pallas_call(
        kernel,
        out_shape=jax.ShapeDtypeStruct((N, Ho, Wo, C), x.dtype),
        grid_spec=pltpu.PrefetchScalarGridSpec(
            num_scalar_prefetch=0, grid=(N,),
            in_specs=[pl.BlockSpec((1, s * s * Hq, Wq, C), lambda n: (n, 0, 0, 0))],
            out_specs=pl.BlockSpec((1, Ho, Wo, C), lambda n: (n, 0, 0, 0))),
        compiler_params=_PARALLEL,
    )(xph)


def head(x, fc_w, fc_b, num_classes):
    """Global avg pool + linear for the whole batch in one kernel.
    fc_w/fc_b are pre-padded to a lane-dense (…,128) output; sliced after."""
    N, H, W, C = x.shape
    x3 = x.reshape(N, H * W, C)
    NCp = fc_w.shape[1]
    out = pl.pallas_call(
        _head_kernel,
        out_shape=jax.ShapeDtypeStruct((N, NCp), jnp.float32),
        grid_spec=pltpu.PrefetchScalarGridSpec(
            num_scalar_prefetch=0, grid=(1,),
            in_specs=[pl.BlockSpec((N, H * W, C), lambda i: (0, 0, 0)),
                      pl.BlockSpec((C, NCp), lambda i: (0, 0)),
                      pl.BlockSpec((1, NCp), lambda i: (0, 0))],
            out_specs=pl.BlockSpec((N, NCp), lambda i: (0, 0))),
        compiler_params=_PARALLEL,
    )(x3, fc_w, fc_b)
    return out[:, :num_classes]


# ----------------------------------------------------------------------------
# Model: parameters + forward
# ----------------------------------------------------------------------------
def _conv_params(key, cin, cout, kh, kw):
    std = (2.0 / (cin * kh * kw)) ** 0.5
    w = jax.random.normal(key, (kh * kw, cin, cout), jnp.float32) * std
    return w.astype(jnp.bfloat16)     # MXU-native weights


def _bn_params(c):
    return jnp.ones((c,), jnp.float32), jnp.zeros((c,), jnp.float32)


def build_params(key, in_channels, out_channels, num_classes):
    keys = iter(jax.random.split(key, 64))
    params = {}
    # Conv biases omitted: every conv feeds a training-mode BN which cancels a
    # per-channel constant exactly.
    params["stem_w"] = _conv_params(next(keys), in_channels, 64, 7, 7)
    params["stem_g"], params["stem_be"] = _bn_params(64)
    params["res"] = []
    cin = 64
    for i, c in enumerate(out_channels):
        use_conv1 = (i != 0) and (i % 2 == 0)
        blk = {"w1": _conv_params(next(keys), cin, c, 3, 3)}
        blk["g1"], blk["be1"] = _bn_params(c)
        blk["w2"] = _conv_params(next(keys), c, c, 3, 3)
        blk["g2"], blk["be2"] = _bn_params(c)
        if use_conv1:
            blk["ws"] = _conv_params(next(keys), cin, c, 1, 1)
            blk["gs"], blk["bes"] = _bn_params(c)
        params["res"].append(blk)
        cin = c
    kw_, kb_ = jax.random.split(next(keys))
    ncp = pl.cdiv(num_classes, 128) * 128
    fc_w = jax.random.normal(kw_, (cin, num_classes), jnp.float32) * (1.0 / cin ** 0.5)
    fc_b = jax.random.normal(kb_, (1, num_classes), jnp.float32) * 0.01
    params["fc_w"] = jnp.pad(fc_w, ((0, 0), (0, ncp - num_classes))).astype(jnp.bfloat16)
    params["fc_b"] = jnp.pad(fc_b, ((0, 0), (0, ncp - num_classes)))
    return params


def residual_block(x_act, blk, use_conv1, strides):
    N, H, W, Cin = x_act.shape
    Cout = blk["w1"].shape[-1]

    # conv1 (input is actualized -> identity prologue)
    if strides == 1:
        raw1, st1 = conv3x3_fused(x_act, blk["w1"])
    else:
        cols = _im2col(x_act, 3, 3, strides, 1)                 # tiny tensor
        Ho, Wo = cols.shape[1], cols.shape[2]
        y, st1 = conv_mm(cols.reshape(N * Ho * Wo, 9 * Cin),
                         blk["w1"].reshape(9 * Cin, Cout))
        raw1 = y.reshape(N, Ho, Wo, Cout)
    cnt = raw1.shape[0] * raw1.shape[1] * raw1.shape[2]
    s1, b1 = bn_scale_shift(st1, cnt, blk["g1"], blk["be1"])

    # conv2: bn1+ReLU fused into its prologue (no standalone BN pass)
    raw2, st2 = conv3x3_fused(raw1, blk["w2"], scale=s1, shift=b1, relu=True)
    s2, b2 = bn_scale_shift(st2, cnt, blk["g2"], blk["be2"])

    if use_conv1:
        xs = x_act[:, ::strides, ::strides, :]                  # 1x1 s2 shortcut
        Ns, Hs, Ws, _ = xs.shape
        ys, sts = conv_mm(xs.reshape(Ns * Hs * Ws, Cin), blk["ws"].reshape(Cin, Cout))
        raws = ys.reshape(Ns, Hs, Ws, Cout)
        ss, bs = bn_scale_shift(sts, Ns * Hs * Ws, blk["gs"], blk["bes"])
        return bn_finalize(raw2, s2, b2, residual=raws,
                           res_scale=ss, res_shift=bs, relu=True)
    return bn_finalize(raw2, s2, b2, residual=x_act, relu=True)


def resnet_forward(x_nchw, params, out_channels, num_classes):
    x = jnp.transpose(x_nchw, (0, 2, 3, 1)).astype(jnp.float32)   # NCHW -> NHWC
    N = x.shape[0]

    # Stem: 7x7 s2 conv as one K=147 matmul (tiny XLA im2col on Cin=3 input)
    cols = _im2col(x, 7, 7, 2, 3)
    Ho, Wo = cols.shape[1], cols.shape[2]
    y, st = conv_mm(cols.reshape(N * Ho * Wo, cols.shape[-1]),
                    params["stem_w"].reshape(-1, 64))
    s0, b0 = bn_scale_shift(st, N * Ho * Wo, params["stem_g"], params["stem_be"])
    act = bn_finalize(y.reshape(N, Ho, Wo, 64), s0, b0, relu=True)
    act = maxpool2d(act, k=3, stride=2, pad=1)

    # Residual blocks
    for i, _ in enumerate(out_channels):
        use_conv1 = (i != 0) and (i % 2 == 0)
        strides = 2 if use_conv1 else 1
        act = residual_block(act, params["res"][i], use_conv1, strides)

    # Output block: global avg pool + linear head (one fused kernel)
    return head(act, params["fc_w"], params["fc_b"], num_classes)


# ----------------------------------------------------------------------------
if __name__ == "__main__":
    key = jax.random.PRNGKey(0)
    k_in, k_par = jax.random.split(key)

    out_channels = (64, 64, 128, 128)   # channels change only at even indices,
                                        # matching the torch module's constraint
    num_classes = 10
    x = jax.random.normal(k_in, (2, 3, 32, 32), jnp.float32)  # NCHW, like PyTorch

    params = build_params(k_par, in_channels=3, out_channels=out_channels,
                          num_classes=num_classes)

    fwd = jax.jit(functools.partial(resnet_forward,
                                    out_channels=out_channels,
                                    num_classes=num_classes))
    logits = jax.block_until_ready(fwd(x, params))

    assert logits.shape == (2, num_classes), logits.shape
    assert bool(jnp.all(jnp.isfinite(logits)))
    print("KERNEL_OK")
</pallas_src>

<mosaic_0001>
module attributes {stable_mosaic.version = 11 : i64} {
  func.func @_mm_stats_kernel(%arg0: i32, %arg1: memref<128x147xbf16, #tpu.memory_space<vmem>>, %arg2: memref<147x64xbf16, #tpu.memory_space<vmem>>, %arg3: memref<128x64xbf16, #tpu.memory_space<vmem>>, %arg4: memref<1x2x64xf32, #tpu.memory_space<vmem>>) attributes {dimension_semantics = [#tpu.dimension_semantics<parallel>], iteration_bounds = array<i64: 4>, scalar_prefetch = 0 : i64, scratch_operands = 0 : i64, tpu.core_type = #tpu.core_type<tc>, window_params = [{transform_indices = @transform_0, window_bounds = array<i64: 128, 147>}, {pipeline_mode = #tpu.pipeline_mode<synchronous>, transform_indices = @transform_1, window_bounds = array<i64: 147, 64>}, {transform_indices = @transform_2, window_bounds = array<i64: 128, 64>}, {transform_indices = @transform_3, window_bounds = array<i64: 1, 2, 64>}]} {
    %c0 = arith.constant 0 : index
    %c0_0 = arith.constant 0 : index
    %0 = vector.load %arg1[%c0, %c0_0] : memref<128x147xbf16, #tpu.memory_space<vmem>>, vector<128x147xbf16>
    %c0_1 = arith.constant 0 : index
    %c0_2 = arith.constant 0 : index
    %1 = vector.load %arg2[%c0_1, %c0_2] : memref<147x64xbf16, #tpu.memory_space<vmem>>, vector<147x64xbf16>
    %cst = arith.constant dense<0.000000e+00> : vector<128x64xf32>
    %2 = tpu.matmul %0, %1, %cst {dimension_numbers = #tpu.dot_dimension_numbers<[1], [0], [0], [1], [0, 0, 1, 1], [], []>} : vector<128x147xbf16>, vector<147x64xbf16>, vector<128x64xf32> -> vector<128x64xf32>
    %cst_3 = arith.constant dense<0.000000e+00> : vector<64xf32>
    %3 = vector.multi_reduction <add>, %2, %cst_3 [0] : vector<128x64xf32> to vector<64xf32>
    %4 = vector.shape_cast %3 : vector<64xf32> to vector<1x64xf32>
    %c0_4 = arith.constant 0 : index
    %c0_5 = arith.constant 0 : index
    %c0_6 = arith.constant 0 : index
    %5 = vector.load %arg4[%c0_4, %c0_5, %c0_6] : memref<1x2x64xf32, #tpu.memory_space<vmem>>, vector<1x1x64xf32>
    %6 = vector.shape_cast %5 : vector<1x1x64xf32> to vector<1x64xf32>
    %7 = vector.shape_cast %4 : vector<1x64xf32> to vector<1x1x64xf32>
    tpu.vector_store %arg4[%c0_4, %c0_5, %c0_6], %7 {strides = array<i32>} : memref<1x2x64xf32, #tpu.memory_space<vmem>>, vector<1x1x64xf32>,
    %8 = arith.mulf %2, %2 : vector<128x64xf32>
    %cst_7 = arith.constant dense<0.000000e+00> : vector<64xf32>
    %9 = vector.multi_reduction <add>, %8, %cst_7 [0] : vector<128x64xf32> to vector<64xf32>
    %10 = vector.shape_cast %9 : vector<64xf32> to vector<1x64xf32>
    %c0_8 = arith.constant 0 : index
    %c1 = arith.constant 1 : index
    %c0_9 = arith.constant 0 : index
    %11 = vector.load %arg4[%c0_8, %c1, %c0_9] : memref<1x2x64xf32, #tpu.memory_space<vmem>>, vector<1x1x64xf32>
    %12 = vector.shape_cast %11 : vector<1x1x64xf32> to vector<1x64xf32>
    %13 = vector.shape_cast %10 : vector<1x64xf32> to vector<1x1x64xf32>
    tpu.vector_store %arg4[%c0_8, %c1, %c0_9], %13 {strides = array<i32>} : memref<1x2x64xf32, #tpu.memory_space<vmem>>, vector<1x1x64xf32>,
    %14 = arith.truncf %2 : vector<128x64xf32> to vector<128x64xbf16>
    %c0_10 = arith.constant 0 : index
    %c0_11 = arith.constant 0 : index
    %15 = vector.load %arg3[%c0_10, %c0_11] : memref<128x64xbf16, #tpu.memory_space<vmem>>, vector<128x64xbf16>
    tpu.vector_store %arg3[%c0_10, %c0_11], %14 {strides = array<i32>} : memref<128x64xbf16, #tpu.memory_space<vmem>>, vector<128x64xbf16>,
    return
  }
  func.func @transform_0(%arg0: i32) -> (i32, i32) {
    %c0_i32 = arith.constant 0 : i32
    %c0_i32_0 = arith.constant 0 : i32
    return %arg0, %c0_i32 : i32, i32
  }
  func.func @transform_1(%arg0: i32) -> (i32, i32) {
    %c0_i32 = arith.constant 0 : i32
    %c0_i32_0 = arith.constant 0 : i32
    %c0_i32_1 = arith.constant 0 : i32
    return %c0_i32, %c0_i32_0 : i32, i32
  }
  func.func @transform_2(%arg0: i32) -> (i32, i32) {
    %c0_i32 = arith.constant 0 : i32
    %c0_i32_0 = arith.constant 0 : i32
    return %arg0, %c0_i32 : i32, i32
  }
  func.func @transform_3(%arg0: i32) -> (i32, i32, i32) {
    %c0_i32 = arith.constant 0 : i32
    %c0_i32_0 = arith.constant 0 : i32
    %c0_i32_1 = arith.constant 0 : i32
    return %arg0, %c0_i32, %c0_i32_0 : i32, i32, i32
  }
}

module attributes {stable_mosaic.version = 11 : i64} {
  func.func @_affine_kernel(%arg0: i32, %arg1: memref<256x128xbf16, #tpu.memory_space<vmem>>, %arg2: memref<1x128xf32, #tpu.memory_space<vmem>>, %arg3: memref<1x128xf32, #tpu.memory_space<vmem>>, %arg4: memref<256x128xbf16, #tpu.memory_space<vmem>>) attributes {dimension_semantics = [#tpu.dimension_semantics<parallel>], iteration_bounds = array<i64: 1>, scalar_prefetch = 0 : i64, scratch_operands = 0 : i64, tpu.core_type = #tpu.core_type<tc>, window_params = [{transform_indices = @transform_0, window_bounds = array<i64: 256, 128>}, {pipeline_mode = #tpu.pipeline_mode<synchronous>, transform_indices = @transform_1, window_bounds = array<i64: 1, 128>}, {pipeline_mode = #tpu.pipeline_mode<synchronous>, transform_indices = @transform_2, window_bounds = array<i64: 1, 128>}, {transform_indices = @transform_3, window_bounds = array<i64: 256, 128>}]} {
    %c0 = arith.constant 0 : index
    %c0_0 = arith.constant 0 : index
    %0 = vector.load %arg1[%c0, %c0_0] : memref<256x128xbf16, #tpu.memory_space<vmem>>, vector<256x128xbf16>
    %1 = arith.extf %0 : vector<256x128xbf16> to vector<256x128xf32>
    %c0_1 = arith.constant 0 : index
    %c0_2 = arith.constant 0 : index
    %2 = vector.load %arg2[%c0_1, %c0_2] : memref<1x128xf32, #tpu.memory_space<vmem>>, vector<1x128xf32>
    %3 = vector.broadcast %2 : vector<1x128xf32> to vector<256x128xf32>
    %4 = arith.mulf %1, %3 : vector<256x128xf32>
    %c0_3 = arith.constant 0 : index
    %c0_4 = arith.constant 0 : index
    %5 = vector.load %arg3[%c0_3, %c0_4] : memref<1x128xf32, #tpu.memory_space<vmem>>, vector<1x128xf32>
    %6 = vector.broadcast %5 : vector<1x128xf32> to vector<256x128xf32>
    %7 = arith.addf %4, %6 : vector<256x128xf32>
    %cst = arith.constant 0.000000e+00 : f32
    %8 = vector.broadcast %cst : f32 to vector<256x128xf32>
    %9 = arith.maximumf %7, %8 : vector<256x128xf32>
    %10 = arith.truncf %9 : vector<256x128xf32> to vector<256x128xbf16>
    %c0_5 = arith.constant 0 : index
    %c0_6 = arith.constant 0 : index
    %11 = vector.load %arg4[%c0_5, %c0_6] : memref<256x128xbf16, #tpu.memory_space<vmem>>, vector<256x128xbf16>
    tpu.vector_store %arg4[%c0_5, %c0_6], %10 {strides = array<i32>} : memref<256x128xbf16, #tpu.memory_space<vmem>>, vector<256x128xbf16>,
    return
  }
  func.func @transform_0(%arg0: i32) -> (i32, i32) {
    %c0_i32 = arith.constant 0 : i32
    %c0_i32_0 = arith.constant 0 : i32
    return %arg0, %c0_i32 : i32, i32
  }
  func.func @transform_1(%arg0: i32) -> (i32, i32) {
    %c0_i32 = arith.constant 0 : i32
    %c0_i32_0 = arith.constant 0 : i32
    %c0_i32_1 = arith.constant 0 : i32
    return %c0_i32, %c0_i32_0 : i32, i32
  }
  func.func @transform_2(%arg0: i32) -> (i32, i32) {
    %c0_i32 = arith.constant 0 : i32
    %c0_i32_0 = arith.constant 0 : i32
    %c0_i32_1 = arith.constant 0 : i32
    return %c0_i32, %c0_i32_0 : i32, i32
  }
  func.func @transform_3(%arg0: i32) -> (i32, i32) {
    %c0_i32 = arith.constant 0 : i32
    %c0_i32_0 = arith.constant 0 : i32
    return %arg0, %c0_i32 : i32, i32
  }
}

module attributes {stable_mosaic.version = 11 : i64} {
  func.func @_maxpool_kernel(%arg0: i32, %arg1: memref<1x36x9x64xbf16, #tpu.memory_space<vmem>>, %arg2: memref<1x8x8x64xbf16, #tpu.memory_space<vmem>>) attributes {dimension_semantics = [#tpu.dimension_semantics<parallel>], iteration_bounds = array<i64: 2>, scalar_prefetch = 0 : i64, scratch_operands = 0 : i64, tpu.core_type = #tpu.core_type<tc>, window_params = [{transform_indices = @transform_0, window_bounds = array<i64: 1, 36, 9, 64>}, {transform_indices = @transform_1, window_bounds = array<i64: 1, 8, 8, 64>}]} {
    %c0 = arith.constant 0 : index
    %c0_0 = arith.constant 0 : index
    %c0_1 = arith.constant 0 : index
    %c0_2 = arith.constant 0 : index
    %0 = vector.load %arg1[%c0, %c0_0, %c0_1, %c0_2] : memref<1x36x9x64xbf16, #tpu.memory_space<vmem>>, vector<1x8x8x64xbf16>
    %1 = vector.shape_cast %0 : vector<1x8x8x64xbf16> to vector<8x8x64xbf16>
    %c0_3 = arith.constant 0 : index
    %c9 = arith.constant 9 : index
    %c0_4 = arith.constant 0 : index
    %c0_5 = arith.constant 0 : index
    %2 = vector.load %arg1[%c0_3, %c9, %c0_4, %c0_5] : memref<1x36x9x64xbf16, #tpu.memory_space<vmem>>, vector<1x8x8x64xbf16>
    %3 = vector.shape_cast %2 : vector<1x8x8x64xbf16> to vector<8x8x64xbf16>
    %4 = arith.maximumf %1, %3 : vector<8x8x64xbf16>
    %c0_6 = arith.constant 0 : index
    %c0_7 = arith.constant 0 : index
    %c1 = arith.constant 1 : index
    %c0_8 = arith.constant 0 : index
    %5 = vector.load %arg1[%c0_6, %c0_7, %c1, %c0_8] : memref<1x36x9x64xbf16, #tpu.memory_space<vmem>>, vector<1x8x8x64xbf16>
    %6 = vector.shape_cast %5 : vector<1x8x8x64xbf16> to vector<8x8x64xbf16>
    %7 = arith.maximumf %4, %6 : vector<8x8x64xbf16>
    %c0_9 = arith.constant 0 : index
    %c18 = arith.constant 18 : index
    %c0_10 = arith.constant 0 : index
    %c0_11 = arith.constant 0 : index
    %8 = vector.load %arg1[%c0_9, %c18, %c0_10, %c0_11] : memref<1x36x9x64xbf16, #tpu.memory_space<vmem>>, vector<1x8x8x64xbf16>
    %9 = vector.shape_cast %8 : vector<1x8x8x64xbf16> to vector<8x8x64xbf16>
    %10 = arith.maximumf %7, %9 : vector<8x8x64xbf16>
    %c0_12 = arith.constant 0 : index
    %c27 = arith.constant 27 : index
    %c0_13 = arith.constant 0 : index
    %c0_14 = arith.constant 0 : index
    %11 = vector.load %arg1[%c0_12, %c27, %c0_13, %c0_14] : memref<1x36x9x64xbf16, #tpu.memory_space<vmem>>, vector<1x8x8x64xbf16>
    %12 = vector.shape_cast %11 : vector<1x8x8x64xbf16> to vector<8x8x64xbf16>
    %13 = arith.maximumf %10, %12 : vector<8x8x64xbf16>
    %c0_15 = arith.constant 0 : index
    %c18_16 = arith.constant 18 : index
    %c1_17 = arith.constant 1 : index
    %c0_18 = arith.constant 0 : index
    %14 = vector.load %arg1[%c0_15, %c18_16, %c1_17, %c0_18] : memref<1x36x9x64xbf16, #tpu.memory_space<vmem>>, vector<1x8x8x64xbf16>
    %15 = vector.shape_cast %14 : vector<1x8x8x64xbf16> to vector<8x8x64xbf16>
    %16 = arith.maximumf %13, %15 : vector<8x8x64xbf16>
    %c0_19 = arith.constant 0 : index
    %c1_20 = arith.constant 1 : index
    %c0_21 = arith.constant 0 : index
    %c0_22 = arith.constant 0 : index
    %17 = vector.load %arg1[%c0_19, %c1_20, %c0_21, %c0_22] : memref<1x36x9x64xbf16, #tpu.memory_space<vmem>>, vector<1x8x8x64xbf16>
    %18 = vector.shape_cast %17 : vector<1x8x8x64xbf16> to vector<8x8x64xbf16>
    %19 = arith.maximumf %16, %18 : vector<8x8x64xbf16>
    %c0_23 = arith.constant 0 : index
    %c10 = arith.constant 10 : index
    %c0_24 = arith.constant 0 : index
    %c0_25 = arith.constant 0 : index
    %20 = vector.load %arg1[%c0_23, %c10, %c0_24, %c0_25] : memref<1x36x9x64xbf16, #tpu.memory_space<vmem>>, vector<1x8x8x64xbf16>
    %21 = vector.shape_cast %20 : vector<1x8x8x64xbf16> to vector<8x8x64xbf16>
    %22 = arith.maximumf %19, %21 : vector<8x8x64xbf16>
    %c0_26 = arith.constant 0 : index
    %c1_27 = arith.constant 1 : index
    %c1_28 = arith.constant 1 : index
    %c0_29 = arith.constant 0 : index
    %23 = vector.load %arg1[%c0_26, %c1_27, %c1_28, %c0_29] : memref<1x36x9x64xbf16, #tpu.memory_space<vmem>>, vector<1x8x8x64xbf16>
    %24 = vector.shape_cast %23 : vector<1x8x8x64xbf16> to vector<8x8x64xbf16>
    %25 = arith.maximumf %22, %24 : vector<8x8x64xbf16>
    %26 = vector.shape_cast %25 : vector<8x8x64xbf16> to vector<1x8x8x64xbf16>
    %c0_30 = arith.constant 0 : index
    %c0_31 = arith.constant 0 : index
    %c0_32 = arith.constant 0 : index
    %c0_33 = arith.constant 0 : index
    %27 = vector.load %arg2[%c0_30, %c0_31, %c0_32, %c0_33] : memref<1x8x8x64xbf16, #tpu.memory_space<vmem>>, vector<1x8x8x64xbf16>
    tpu.vector_store %arg2[%c0_30, %c0_31, %c0_32, %c0_33], %26 {strides = array<i32>} : memref<1x8x8x64xbf16, #tpu.memory_space<vmem>>, vector<1x8x8x64xbf16>,
    return
  }
  func.func @transform_0(%arg0: i32) -> (i32, i32, i32, i32) {
    %c0_i32 = arith.constant 0 : i32
    %c0_i32_0 = arith.constant 0 : i32
    %c0_i32_1 = arith.constant 0 : i32
    %c0_i32_2 = arith.constant 0 : i32
    return %arg0, %c0_i32, %c0_i32_0, %c0_i32_1 : i32, i32, i32, i32
  }
  func.func @transform_1(%arg0: i32) -> (i32, i32, i32, i32) {
    %c0_i32 = arith.constant 0 : i32
    %c0_i32_0 = arith.constant 0 : i32
    %c0_i32_1 = arith.constant 0 : i32
    %c0_i32_2 = arith.constant 0 : i32
    return %arg0, %c0_i32, %c0_i32_0, %c0_i32_1 : i32, i32, i32, i32
  }
}

module attributes {stable_mosaic.version = 11 : i64} {
  func.func @_conv3x3_kernel(%arg0: i32, %arg1: memref<1x8x8x64xbf16, #tpu.memory_space<vmem>>, %arg2: memref<1x64xf32, #tpu.memory_space<vmem>>, %arg3: memref<1x64xf32, #tpu.memory_space<vmem>>, %arg4: memref<3x256x64xbf16, #tpu.memory_space<vmem>>, %arg5: memref<1x8x8x64xbf16, #tpu.memory_space<vmem>>, %arg6: memref<1x2x64xf32, #tpu.memory_space<vmem>>, %arg7: memref<8x8x64xbf16, #tpu.memory_space<vmem>>, %arg8: memref<8x8x256xbf16, #tpu.memory_space<vmem>>) attributes {dimension_semantics = [#tpu.dimension_semantics<parallel>], iteration_bounds = array<i64: 2>, scalar_prefetch = 0 : i64, scratch_operands = 2 : i64, tpu.core_type = #tpu.core_type<tc>, window_params = [{transform_indices = @transform_0, window_bounds = array<i64: 1, 8, 8, 64>}, {pipeline_mode = #tpu.pipeline_mode<synchronous>, transform_indices = @transform_1, window_bounds = array<i64: 1, 64>}, {pipeline_mode = #tpu.pipeline_mode<synchronous>, transform_indices = @transform_2, window_bounds = array<i64: 1, 64>}, {pipeline_mode = #tpu.pipeline_mode<synchronous>, transform_indices = @transform_3, window_bounds = array<i64: 3, 256, 64>}, {transform_indices = @transform_4, window_bounds = array<i64: 1, 8, 8, 64>}, {transform_indices = @transform_5, window_bounds = array<i64: 1, 2, 64>}]} {
    %c0 = arith.constant 0 : index
    %c0_0 = arith.constant 0 : index
    %c0_1 = arith.constant 0 : index
    %c0_2 = arith.constant 0 : index
    %0 = vector.load %arg1[%c0, %c0_0, %c0_1, %c0_2] : memref<1x8x8x64xbf16, #tpu.memory_space<vmem>>, vector<1x8x8x64xbf16>
    %1 = vector.shape_cast %0 : vector<1x8x8x64xbf16> to vector<8x8x64xbf16>
    %c0_3 = arith.constant 0 : index
    %c0_4 = arith.constant 0 : index
    %c0_5 = arith.constant 0 : index
    %2 = vector.load %arg7[%c0_3, %c0_4, %c0_5] : memref<8x8x64xbf16, #tpu.memory_space<vmem>>, vector<8x8x64xbf16>
    tpu.vector_store %arg7[%c0_3, %c0_4, %c0_5], %1 {strides = array<i32>} : memref<8x8x64xbf16, #tpu.memory_space<vmem>>, vector<8x8x64xbf16>,
    %cst = arith.constant 0.000000e+00 : f32
    %3 = vector.broadcast %cst : f32 to vector<64x64xf32>
    %cst_6 = arith.constant 0.000000e+00 : bf16
    %4 = vector.broadcast %cst_6 : bf16 to vector<8x8x256xbf16>
    %c0_7 = arith.constant 0 : index
    %c0_8 = arith.constant 0 : index
    %c0_9 = arith.constant 0 : index
    %5 = vector.load %arg8[%c0_7, %c0_8, %c0_9] : memref<8x8x256xbf16, #tpu.memory_space<vmem>>, vector<8x8x256xbf16>
    tpu.vector_store %arg8[%c0_7, %c0_8, %c0_9], %4 {strides = array<i32>} : memref<8x8x256xbf16, #tpu.memory_space<vmem>>, vector<8x8x256xbf16>,
    %c0_10 = arith.constant 0 : index
    %c0_11 = arith.constant 0 : index
    %c0_12 = arith.constant 0 : index
    %6 = vector.load %arg7[%c0_10, %c0_11, %c0_12] : memref<8x8x64xbf16, #tpu.memory_space<vmem>>, vector<7x7x64xbf16>
    %c1 = arith.constant 1 : index
    %c1_13 = arith.constant 1 : index
    %c0_14 = arith.constant 0 : index
    %7 = vector.load %arg8[%c1, %c1_13, %c0_14] : memref<8x8x256xbf16, #tpu.memory_space<vmem>>, vector<7x7x64xbf16>
    tpu.vector_store %arg8[%c1, %c1_13, %c0_14], %6 {strides = array<i32>} : memref<8x8x256xbf16, #tpu.memory_space<vmem>>, vector<7x7x64xbf16>,
    %c0_15 = arith.constant 0 : index
    %c0_16 = arith.constant 0 : index
    %c0_17 = arith.constant 0 : index
    %8 = vector.load %arg7[%c0_15, %c0_16, %c0_17] : memref<8x8x64xbf16, #tpu.memory_space<vmem>>, vector<7x8x64xbf16>
    %c1_18 = arith.constant 1 : index
    %c0_19 = arith.constant 0 : index
    %c64 = arith.constant 64 : index
    %9 = vector.load %arg8[%c1_18, %c0_19, %c64] : memref<8x8x256xbf16, #tpu.memory_space<vmem>>, vector<7x8x64xbf16>
    tpu.vector_store %arg8[%c1_18, %c0_19, %c64], %8 {strides = array<i32>} : memref<8x8x256xbf16, #tpu.memory_space<vmem>>, vector<7x8x64xbf16>,
    %c0_20 = arith.constant 0 : index
    %c1_21 = arith.constant 1 : index
    %c0_22 = arith.constant 0 : index
    %10 = vector.load %arg7[%c0_20, %c1_21, %c0_22] : memref<8x8x64xbf16, #tpu.memory_space<vmem>>, vector<7x7x64xbf16>
    %c1_23 = arith.constant 1 : index
    %c0_24 = arith.constant 0 : index
    %c128 = arith.constant 128 : index
    %11 = vector.load %arg8[%c1_23, %c0_24, %c128] : memref<8x8x256xbf16, #tpu.memory_space<vmem>>, vector<7x7x64xbf16>
    tpu.vector_store %arg8[%c1_23, %c0_24, %c128], %10 {strides = array<i32>} : memref<8x8x256xbf16, #tpu.memory_space<vmem>>, vector<7x7x64xbf16>,
    %c0_25 = arith.constant 0 : index
    %c0_26 = arith.constant 0 : index
    %c0_27 = arith.constant 0 : index
    %12 = vector.load %arg7[%c0_25, %c0_26, %c0_27] : memref<8x8x64xbf16, #tpu.memory_space<vmem>>, vector<8x7x64xbf16>
    %c0_28 = arith.constant 0 : index
    %c1_29 = arith.constant 1 : index
    %c192 = arith.constant 192 : index
    %13 = vector.load %arg8[%c0_28, %c1_29, %c192] : memref<8x8x256xbf16, #tpu.memory_space<vmem>>, vector<8x7x64xbf16>
    tpu.vector_store %arg8[%c0_28, %c1_29, %c192], %12 {strides = array<i32>} : memref<8x8x256xbf16, #tpu.memory_space<vmem>>, vector<8x7x64xbf16>,
    %c0_30 = arith.constant 0 : index
    %c0_31 = arith.constant 0 : index
    %c0_32 = arith.constant 0 : index
    %14 = vector.load %arg8[%c0_30, %c0_31, %c0_32] : memref<8x8x256xbf16, #tpu.memory_space<vmem>>, vector<8x8x256xbf16>
    %15 = vector.shape_cast %14 : vector<8x8x256xbf16> to vector<64x256xbf16>
    %c0_33 = arith.constant 0 : index
    %c0_34 = arith.constant 0 : index
    %c0_35 = arith.constant 0 : index
    %16 = vector.load %arg4[%c0_33, %c0_34, %c0_35] : memref<3x256x64xbf16, #tpu.memory_space<vmem>>, vector<1x256x64xbf16>
    %17 = vector.shape_cast %16 : vector<1x256x64xbf16> to vector<256x64xbf16>
    %cst_36 = arith.constant dense<0.000000e+00> : vector<64x64xf32>
    %18 = tpu.matmul %15, %17, %cst_36 {dimension_numbers = #tpu.dot_dimension_numbers<[1], [0], [0], [1], [0, 0, 1, 1], [], []>} : vector<64x256xbf16>, vector<256x64xbf16>, vector<64x64xf32> -> vector<64x64xf32>
    %19 = arith.addf %3, %18 : vector<64x64xf32>
    %cst_37 = arith.constant 0.000000e+00 : bf16
    %20 = vector.broadcast %cst_37 : bf16 to vector<8x8x256xbf16>
    %c0_38 = arith.constant 0 : index
    %c0_39 = arith.constant 0 : index
    %c0_40 = arith.constant 0 : index
    %21 = vector.load %arg8[%c0_38, %c0_39, %c0_40] : memref<8x8x256xbf16, #tpu.memory_space<vmem>>, vector<8x8x256xbf16>
    tpu.vector_store %arg8[%c0_38, %c0_39, %c0_40], %20 {strides = array<i32>} : memref<8x8x256xbf16, #tpu.memory_space<vmem>>, vector<8x8x256xbf16>,
    %c0_41 = arith.constant 0 : index
    %c0_42 = arith.constant 0 : index
    %c0_43 = arith.constant 0 : index
    %22 = vector.load %arg7[%c0_41, %c0_42, %c0_43] : memref<8x8x64xbf16, #tpu.memory_space<vmem>>, vector<8x8x64xbf16>
    %c0_44 = arith.constant 0 : index
    %c0_45 = arith.constant 0 : index
    %c0_46 = arith.constant 0 : index
    %23 = vector.load %arg8[%c0_44, %c0_45, %c0_46] : memref<8x8x256xbf16, #tpu.memory_space<vmem>>, vector<8x8x64xbf16>
    tpu.vector_store %arg8[%c0_44, %c0_45, %c0_46], %22 {strides = array<i32>} : memref<8x8x256xbf16, #tpu.memory_space<vmem>>, vector<8x8x64xbf16>,
    %c0_47 = arith.constant 0 : index
    %c1_48 = arith.constant 1 : index
    %c0_49 = arith.constant 0 : index
    %24 = vector.load %arg7[%c0_47, %c1_48, %c0_49] : memref<8x8x64xbf16, #tpu.memory_space<vmem>>, vector<8x7x64xbf16>
    %c0_50 = arith.constant 0 : index
    %c0_51 = arith.constant 0 : index
    %c64_52 = arith.constant 64 : index
    %25 = vector.load %arg8[%c0_50, %c0_51, %c64_52] : memref<8x8x256xbf16, #tpu.memory_space<vmem>>, vector<8x7x64xbf16>
    tpu.vector_store %arg8[%c0_50, %c0_51, %c64_52], %24 {strides = array<i32>} : memref<8x8x256xbf16, #tpu.memory_space<vmem>>, vector<8x7x64xbf16>,
    %c1_53 = arith.constant 1 : index
    %c0_54 = arith.constant 0 : index
    %c0_55 = arith.constant 0 : index
    %26 = vector.load %arg7[%c1_53, %c0_54, %c0_55] : memref<8x8x64xbf16, #tpu.memory_space<vmem>>, vector<7x7x64xbf16>
    %c0_56 = arith.constant 0 : index
    %c1_57 = arith.constant 1 : index
    %c128_58 = arith.constant 128 : index
    %27 = vector.load %arg8[%c0_56, %c1_57, %c128_58] : memref<8x8x256xbf16, #tpu.memory_space<vmem>>, vector<7x7x64xbf16>
    tpu.vector_store %arg8[%c0_56, %c1_57, %c128_58], %26 {strides = array<i32>} : memref<8x8x256xbf16, #tpu.memory_space<vmem>>, vector<7x7x64xbf16>,
    %c1_59 = arith.constant 1 : index
    %c0_60 = arith.constant 0 : index
    %c0_61 = arith.constant 0 : index
    %28 = vector.load %arg7[%c1_59, %c0_60, %c0_61] : memref<8x8x64xbf16, #tpu.memory_space<vmem>>, vector<7x8x64xbf16>
    %c0_62 = arith.constant 0 : index
    %c0_63 = arith.constant 0 : index
    %c192_64 = arith.constant 192 : index
    %29 = vector.load %arg8[%c0_62, %c0_63, %c192_64] : memref<8x8x256xbf16, #tpu.memory_space<vmem>>, vector<7x8x64xbf16>
    tpu.vector_store %arg8[%c0_62, %c0_63, %c192_64], %28 {strides = array<i32>} : memref<8x8x256xbf16, #tpu.memory_space<vmem>>, vector<7x8x64xbf16>,
    %c0_65 = arith.constant 0 : index
    %c0_66 = arith.constant 0 : index
    %c0_67 = arith.constant 0 : index
    %30 = vector.load %arg8[%c0_65, %c0_66, %c0_67] : memref<8x8x256xbf16, #tpu.memory_space<vmem>>, vector<8x8x256xbf16>
    %31 = vector.shape_cast %30 : vector<8x8x256xbf16> to vector<64x256xbf16>
    %c1_68 = arith.constant 1 : index
    %c0_69 = arith.constant 0 : index
    %c0_70 = arith.constant 0 : index
    %32 = vector.load %arg4[%c1_68, %c0_69, %c0_70] : memref<3x256x64xbf16, #tpu.memory_space<vmem>>, vector<1x256x64xbf16>
    %33 = vector.shape_cast %32 : vector<1x256x64xbf16> to vector<256x64xbf16>
    %cst_71 = arith.constant dense<0.000000e+00> : vector<64x64xf32>
    %34 = tpu.matmul %31, %33, %cst_71 {dimension_numbers = #tpu.dot_dimension_numbers<[1], [0], [0], [1], [0, 0, 1, 1], [], []>} : vector<64x256xbf16>, vector<256x64xbf16>, vector<64x64xf32> -> vector<64x64xf32>
    %35 = arith.addf %19, %34 : vector<64x64xf32>
    %cst_72 = arith.constant 0.000000e+00 : bf16
    %36 = vector.broadcast %cst_72 : bf16 to vector<8x8x256xbf16>
    %c0_73 = arith.constant 0 : index
    %c0_74 = arith.constant 0 : index
    %c0_75 = arith.constant 0 : index
    %37 = vector.load %arg8[%c0_73, %c0_74, %c0_75] : memref<8x8x256xbf16, #tpu.memory_space<vmem>>, vector<8x8x256xbf16>
    tpu.vector_store %arg8[%c0_73, %c0_74, %c0_75], %36 {strides = array<i32>} : memref<8x8x256xbf16, #tpu.memory_space<vmem>>, vector<8x8x256xbf16>,
    %c1_76 = arith.constant 1 : index
    %c1_77 = arith.constant 1 : index
    %c0_78 = arith.constant 0 : index
    %38 = vector.load %arg7[%c1_76, %c1_77, %c0_78] : memref<8x8x64xbf16, #tpu.memory_space<vmem>>, vector<7x7x64xbf16>
    %c0_79 = arith.constant 0 : index
    %c0_80 = arith.constant 0 : index
    %c0_81 = arith.constant 0 : index
    %39 = vector.load %arg8[%c0_79, %c0_80, %c0_81] : memref<8x8x256xbf16, #tpu.memory_space<vmem>>, vector<7x7x64xbf16>
    tpu.vector_store %arg8[%c0_79, %c0_80, %c0_81], %38 {strides = array<i32>} : memref<8x8x256xbf16, #tpu.memory_space<vmem>>, vector<7x7x64xbf16>,
    %c0_82 = arith.constant 0 : index
    %c0_83 = arith.constant 0 : index
    %c0_84 = arith.constant 0 : index
    %40 = vector.load %arg8[%c0_82, %c0_83, %c0_84] : memref<8x8x256xbf16, #tpu.memory_space<vmem>>, vector<8x8x256xbf16>
    %41 = vector.shape_cast %40 : vector<8x8x256xbf16> to vector<64x256xbf16>
    %c2 = arith.constant 2 : index
    %c0_85 = arith.constant 0 : index
    %c0_86 = arith.constant 0 : index
    %42 = vector.load %arg4[%c2, %c0_85, %c0_86] : memref<3x256x64xbf16, #tpu.memory_space<vmem>>, vector<1x256x64xbf16>
    %43 = vector.shape_cast %42 : vector<1x256x64xbf16> to vector<256x64xbf16>
    %cst_87 = arith.constant dense<0.000000e+00> : vector<64x64xf32>
    %44 = tpu.matmul %41, %43, %cst_87 {dimension_numbers = #tpu.dot_dimension_numbers<[1], [0], [0], [1], [0, 0, 1, 1], [], []>} : vector<64x256xbf16>, vector<256x64xbf16>, vector<64x64xf32> -> vector<64x64xf32>
    %45 = arith.addf %35, %44 : vector<64x64xf32>
    %cst_88 = arith.constant dense<0.000000e+00> : vector<64xf32>
    %46 = vector.multi_reduction <add>, %45, %cst_88 [0] : vector<64x64xf32> to vector<64xf32>
    %47 = vector.shape_cast %46 : vector<64xf32> to vector<1x64xf32>
    %c0_89 = arith.constant 0 : index
    %c0_90 = arith.constant 0 : index
    %c0_91 = arith.constant 0 : index
    %48 = vector.load %arg6[%c0_89, %c0_90, %c0_91] : memref<1x2x64xf32, #tpu.memory_space<vmem>>, vector<1x1x64xf32>
    %49 = vector.shape_cast %48 : vector<1x1x64xf32> to vector<1x64xf32>
    %50 = vector.shape_cast %47 : vector<1x64xf32> to vector<1x1x64xf32>
    tpu.vector_store %arg6[%c0_89, %c0_90, %c0_91], %50 {strides = array<i32>} : memref<1x2x64xf32, #tpu.memory_space<vmem>>, vector<1x1x64xf32>,
    %51 = arith.mulf %45, %45 : vector<64x64xf32>
    %cst_92 = arith.constant dense<0.000000e+00> : vector<64xf32>
    %52 = vector.multi_reduction <add>, %51, %cst_92 [0] : vector<64x64xf32> to vector<64xf32>
    %53 = vector.shape_cast %52 : vector<64xf32> to vector<1x64xf32>
    %c0_93 = arith.constant 0 : index
    %c1_94 = arith.constant 1 : index
    %c0_95 = arith.constant 0 : index
    %54 = vector.load %arg6[%c0_93, %c1_94, %c0_95] : memref<1x2x64xf32, #tpu.memory_space<vmem>>, vector<1x1x64xf32>
    %55 = vector.shape_cast %54 : vector<1x1x64xf32> to vector<1x64xf32>
    %56 = vector.shape_cast %53 : vector<1x64xf32> to vector<1x1x64xf32>
    tpu.vector_store %arg6[%c0_93, %c1_94, %c0_95], %56 {strides = array<i32>} : memref<1x2x64xf32, #tpu.memory_space<vmem>>, vector<1x1x64xf32>,
    %57 = vector.shape_cast %45 : vector<64x64xf32> to vector<1x8x8x64xf32>
    %58 = arith.truncf %57 : vector<1x8x8x64xf32> to vector<1x8x8x64xbf16>
    %c0_96 = arith.constant 0 : index
    %c0_97 = arith.constant 0 : index
    %c0_98 = arith.constant 0 : index
    %c0_99 = arith.constant 0 : index
    %59 = vector.load %arg5[%c0_96, %c0_97, %c0_98, %c0_99] : memref<1x8x8x64xbf16, #tpu.memory_space<vmem>>, vector<1x8x8x64xbf16>
    tpu.vector_store %arg5[%c0_96, %c0_97, %c0_98, %c0_99], %58 {strides = array<i32>} : memref<1x8x8x64xbf16, #tpu.memory_space<vmem>>, vector<1x8x8x64xbf16>,
    return
  }
  func.func @transform_0(%arg0: i32) -> (i32, i32, i32, i32) {
    %c0_i32 = arith.constant 0 : i32
    %c0_i32_0 = arith.constant 0 : i32
    %c0_i32_1 = arith.constant 0 : i32
    %c0_i32_2 = arith.constant 0 : i32
    return %arg0, %c0_i32, %c0_i32_0, %c0_i32_1 : i32, i32, i32, i32
  }
  func.func @transform_1(%arg0: i32) -> (i32, i32) {
    %c0_i32 = arith.constant 0 : i32
    %c0_i32_0 = arith.constant 0 : i32
    %c0_i32_1 = arith.constant 0 : i32
    return %c0_i32, %c0_i32_0 : i32, i32
  }
  func.func @transform_2(%arg0: i32) -> (i32, i32) {
    %c0_i32 = arith.constant 0 : i32
    %c0_i32_0 = arith.constant 0 : i32
    %c0_i32_1 = arith.constant 0 : i32
    return %c0_i32, %c0_i32_0 : i32, i32
  }
  func.func @transform_3(%arg0: i32) -> (i32, i32, i32) {
    %c0_i32 = arith.constant 0 : i32
    %c0_i32_0 = arith.constant 0 : i32
    %c0_i32_1 = arith.constant 0 : i32
    %c0_i32_2 = arith.constant 0 : i32
    return %c0_i32, %c0_i32_0, %c0_i32_1 : i32, i32, i32
  }
  func.func @transform_4(%arg0: i32) -> (i32, i32, i32, i32) {
    %c0_i32 = arith.constant 0 : i32
    %c0_i32_0 = arith.constant 0 : i32
    %c0_i32_1 = arith.constant 0 : i32
    %c0_i32_2 = arith.constant 0 : i32
    return %arg0, %c0_i32, %c0_i32_0, %c0_i32_1 : i32, i32, i32, i32
  }
  func.func @transform_5(%arg0: i32) -> (i32, i32, i32) {
    %c0_i32 = arith.constant 0 : i32
    %c0_i32_0 = arith.constant 0 : i32
    %c0_i32_1 = arith.constant 0 : i32
    return %arg0, %c0_i32, %c0_i32_0 : i32, i32, i32
  }
}

module attributes {stable_mosaic.version = 11 : i64} {
  func.func @_conv3x3_kernel(%arg0: i32, %arg1: memref<1x8x8x64xbf16, #tpu.memory_space<vmem>>, %arg2: memref<1x64xf32, #tpu.memory_space<vmem>>, %arg3: memref<1x64xf32, #tpu.memory_space<vmem>>, %arg4: memref<3x256x64xbf16, #tpu.memory_space<vmem>>, %arg5: memref<1x8x8x64xbf16, #tpu.memory_space<vmem>>, %arg6: memref<1x2x64xf32, #tpu.memory_space<vmem>>, %arg7: memref<8x8x64xbf16, #tpu.memory_space<vmem>>, %arg8: memref<8x8x256xbf16, #tpu.memory_space<vmem>>) attributes {dimension_semantics = [#tpu.dimension_semantics<parallel>], iteration_bounds = array<i64: 2>, scalar_prefetch = 0 : i64, scratch_operands = 2 : i64, tpu.core_type = #tpu.core_type<tc>, window_params = [{transform_indices = @transform_0, window_bounds = array<i64: 1, 8, 8, 64>}, {pipeline_mode = #tpu.pipeline_mode<synchronous>, transform_indices = @transform_1, window_bounds = array<i64: 1, 64>}, {pipeline_mode = #tpu.pipeline_mode<synchronous>, transform_indices = @transform_2, window_bounds = array<i64: 1, 64>}, {pipeline_mode = #tpu.pipeline_mode<synchronous>, transform_indices = @transform_3, window_bounds = array<i64: 3, 256, 64>}, {transform_indices = @transform_4, window_bounds = array<i64: 1, 8, 8, 64>}, {transform_indices = @transform_5, window_bounds = array<i64: 1, 2, 64>}]} {
    %c0 = arith.constant 0 : index
    %c0_0 = arith.constant 0 : index
    %c0_1 = arith.constant 0 : index
    %c0_2 = arith.constant 0 : index
    %0 = vector.load %arg1[%c0, %c0_0, %c0_1, %c0_2] : memref<1x8x8x64xbf16, #tpu.memory_space<vmem>>, vector<1x8x8x64xbf16>
    %1 = vector.shape_cast %0 : vector<1x8x8x64xbf16> to vector<8x8x64xbf16>
    %2 = arith.extf %1 : vector<8x8x64xbf16> to vector<8x8x64xf32>
    %c0_3 = arith.constant 0 : index
    %c0_4 = arith.constant 0 : index
    %3 = vector.load %arg2[%c0_3, %c0_4] : memref<1x64xf32, #tpu.memory_space<vmem>>, vector<1x64xf32>
    %4 = vector.shape_cast %3 : vector<1x64xf32> to vector<1x1x64xf32>
    %5 = vector.broadcast %4 : vector<1x1x64xf32> to vector<8x8x64xf32>
    %6 = arith.mulf %2, %5 : vector<8x8x64xf32>
    %c0_5 = arith.constant 0 : index
    %c0_6 = arith.constant 0 : index
    %7 = vector.load %arg3[%c0_5, %c0_6] : memref<1x64xf32, #tpu.memory_space<vmem>>, vector<1x64xf32>
    %8 = vector.shape_cast %7 : vector<1x64xf32> to vector<1x1x64xf32>
    %9 = vector.broadcast %8 : vector<1x1x64xf32> to vector<8x8x64xf32>
    %10 = arith.addf %6, %9 : vector<8x8x64xf32>
    %cst = arith.constant 0.000000e+00 : f32
    %11 = vector.broadcast %cst : f32 to vector<8x8x64xf32>
    %12 = arith.maximumf %10, %11 : vector<8x8x64xf32>
    %13 = arith.truncf %12 : vector<8x8x64xf32> to vector<8x8x64xbf16>
    %c0_7 = arith.constant 0 : index
    %c0_8 = arith.constant 0 : index
    %c0_9 = arith.constant 0 : index
    %14 = vector.load %arg7[%c0_7, %c0_8, %c0_9] : memref<8x8x64xbf16, #tpu.memory_space<vmem>>, vector<8x8x64xbf16>
    tpu.vector_store %arg7[%c0_7, %c0_8, %c0_9], %13 {strides = array<i32>} : memref<8x8x64xbf16, #tpu.memory_space<vmem>>, vector<8x8x64xbf16>,
    %cst_10 = arith.constant 0.000000e+00 : f32
    %15 = vector.broadcast %cst_10 : f32 to vector<64x64xf32>
    %cst_11 = arith.constant 0.000000e+00 : bf16
    %16 = vector.broadcast %cst_11 : bf16 to vector<8x8x256xbf16>
    %c0_12 = arith.constant 0 : index
    %c0_13 = arith.constant 0 : index
    %c0_14 = arith.constant 0 : index
    %17 = vector.load %arg8[%c0_12, %c0_13, %c0_14] : memref<8x8x256xbf16, #tpu.memory_space<vmem>>, vector<8x8x256xbf16>
    tpu.vector_store %arg8[%c0_12, %c0_13, %c0_14], %16 {strides = array<i32>} : memref<8x8x256xbf16, #tpu.memory_space<vmem>>, vector<8x8x256xbf16>,
    %c0_15 = arith.constant 0 : index
    %c0_16 = arith.constant 0 : index
    %c0_17 = arith.constant 0 : index
    %18 = vector.load %arg7[%c0_15, %c0_16, %c0_17] : memref<8x8x64xbf16, #tpu.memory_space<vmem>>, vector<7x7x64xbf16>
    %c1 = arith.constant 1 : index
    %c1_18 = arith.constant 1 : index
    %c0_19 = arith.constant 0 : index
    %19 = vector.load %arg8[%c1, %c1_18, %c0_19] : memref<8x8x256xbf16, #tpu.memory_space<vmem>>, vector<7x7x64xbf16>
    tpu.vector_store %arg8[%c1, %c1_18, %c0_19], %18 {strides = array<i32>} : memref<8x8x256xbf16, #tpu.memory_space<vmem>>, vector<7x7x64xbf16>,
    %c0_20 = arith.constant 0 : index
    %c0_21 = arith.constant 0 : index
    %c0_22 = arith.constant 0 : index
    %20 = vector.load %arg7[%c0_20, %c0_21, %c0_22] : memref<8x8x64xbf16, #tpu.memory_space<vmem>>, vector<7x8x64xbf16>
    %c1_23 = arith.constant 1 : index
    %c0_24 = arith.constant 0 : index
    %c64 = arith.constant 64 : index
    %21 = vector.load %arg8[%c1_23, %c0_24, %c64] : memref<8x8x256xbf16, #tpu.memory_space<vmem>>, vector<7x8x64xbf16>
    tpu.vector_store %arg8[%c1_23, %c0_24, %c64], %20 {strides = array<i32>} : memref<8x8x256xbf16, #tpu.memory_space<vmem>>, vector<7x8x64xbf16>,
    %c0_25 = arith.constant 0 : index
    %c1_26 = arith.constant 1 : index
    %c0_27 = arith.constant 0 : index
    %22 = vector.load %arg7[%c0_25, %c1_26, %c0_27] : memref<8x8x64xbf16, #tpu.memory_space<vmem>>, vector<7x7x64xbf16>
    %c1_28 = arith.constant 1 : index
    %c0_29 = arith.constant 0 : index
    %c128 = arith.constant 128 : index
    %23 = vector.load %arg8[%c1_28, %c0_29, %c128] : memref<8x8x256xbf16, #tpu.memory_space<vmem>>, vector<7x7x64xbf16>
    tpu.vector_store %arg8[%c1_28, %c0_29, %c128], %22 {strides = array<i32>} : memref<8x8x256xbf16, #tpu.memory_space<vmem>>, vector<7x7x64xbf16>,
    %c0_30 = arith.constant 0 : index
    %c0_31 = arith.constant 0 : index
    %c0_32 = arith.constant 0 : index
    %24 = vector.load %arg7[%c0_30, %c0_31, %c0_32] : memref<8x8x64xbf16, #tpu.memory_space<vmem>>, vector<8x7x64xbf16>
    %c0_33 = arith.constant 0 : index
    %c1_34 = arith.constant 1 : index
    %c192 = arith.constant 192 : index
    %25 = vector.load %arg8[%c0_33, %c1_34, %c192] : memref<8x8x256xbf16, #tpu.memory_space<vmem>>, vector<8x7x64xbf16>
    tpu.vector_store %arg8[%c0_33, %c1_34, %c192], %24 {strides = array<i32>} : memref<8x8x256xbf16, #tpu.memory_space<vmem>>, vector<8x7x64xbf16>,
    %c0_35 = arith.constant 0 : index
    %c0_36 = arith.constant 0 : index
    %c0_37 = arith.constant 0 : index
    %26 = vector.load %arg8[%c0_35, %c0_36, %c0_37] : memref<8x8x256xbf16, #tpu.memory_space<vmem>>, vector<8x8x256xbf16>
    %27 = vector.shape_cast %26 : vector<8x8x256xbf16> to vector<64x256xbf16>
    %c0_38 = arith.constant 0 : index
    %c0_39 = arith.constant 0 : index
    %c0_40 = arith.constant 0 : index
    %28 = vector.load %arg4[%c0_38, %c0_39, %c0_40] : memref<3x256x64xbf16, #tpu.memory_space<vmem>>, vector<1x256x64xbf16>
    %29 = vector.shape_cast %28 : vector<1x256x64xbf16> to vector<256x64xbf16>
    %cst_41 = arith.constant dense<0.000000e+00> : vector<64x64xf32>
    %30 = tpu.matmul %27, %29, %cst_41 {dimension_numbers = #tpu.dot_dimension_numbers<[1], [0], [0], [1], [0, 0, 1, 1], [], []>} : vector<64x256xbf16>, vector<256x64xbf16>, vector<64x64xf32> -> vector<64x64xf32>
    %31 = arith.addf %15, %30 : vector<64x64xf32>
    %cst_42 = arith.constant 0.000000e+00 : bf16
    %32 = vector.broadcast %cst_42 : bf16 to vector<8x8x256xbf16>
    %c0_43 = arith.constant 0 : index
    %c0_44 = arith.constant 0 : index
    %c0_45 = arith.constant 0 : index
    %33 = vector.load %arg8[%c0_43, %c0_44, %c0_45] : memref<8x8x256xbf16, #tpu.memory_space<vmem>>, vector<8x8x256xbf16>
    tpu.vector_store %arg8[%c0_43, %c0_44, %c0_45], %32 {strides = array<i32>} : memref<8x8x256xbf16, #tpu.memory_space<vmem>>, vector<8x8x256xbf16>,
    %c0_46 = arith.constant 0 : index
    %c0_47 = arith.constant 0 : index
    %c0_48 = arith.constant 0 : index
    %34 = vector.load %arg7[%c0_46, %c0_47, %c0_48] : memref<8x8x64xbf16, #tpu.memory_space<vmem>>, vector<8x8x64xbf16>
    %c0_49 = arith.constant 0 : index
    %c0_50 = arith.constant 0 : index
    %c0_51 = arith.constant 0 : index
    %35 = vector.load %arg8[%c0_49, %c0_50, %c0_51] : memref<8x8x256xbf16, #tpu.memory_space<vmem>>, vector<8x8x64xbf16>
    tpu.vector_store %arg8[%c0_49, %c0_50, %c0_51], %34 {strides = array<i32>} : memref<8x8x256xbf16, #tpu.memory_space<vmem>>, vector<8x8x64xbf16>,
    %c0_52 = arith.constant 0 : index
    %c1_53 = arith.constant 1 : index
    %c0_54 = arith.constant 0 : index
    %36 = vector.load %arg7[%c0_52, %c1_53, %c0_54] : memref<8x8x64xbf16, #tpu.memory_space<vmem>>, vector<8x7x64xbf16>
    %c0_55 = arith.constant 0 : index
    %c0_56 = arith.constant 0 : index
    %c64_57 = arith.constant 64 : index
    %37 = vector.load %arg8[%c0_55, %c0_56, %c64_57] : memref<8x8x256xbf16, #tpu.memory_space<vmem>>, vector<8x7x64xbf16>
    tpu.vector_store %arg8[%c0_55, %c0_56, %c64_57], %36 {strides = array<i32>} : memref<8x8x256xbf16, #tpu.memory_space<vmem>>, vector<8x7x64xbf16>,
    %c1_58 = arith.constant 1 : index
    %c0_59 = arith.constant 0 : index
    %c0_60 = arith.constant 0 : index
    %38 = vector.load %arg7[%c1_58, %c0_59, %c0_60] : memref<8x8x64xbf16, #tpu.memory_space<vmem>>, vector<7x7x64xbf16>
    %c0_61 = arith.constant 0 : index
    %c1_62 = arith.constant 1 : index
    %c128_63 = arith.constant 128 : index
    %39 = vector.load %arg8[%c0_61, %c1_62, %c128_63] : memref<8x8x256xbf16, #tpu.memory_space<vmem>>, vector<7x7x64xbf16>
    tpu.vector_store %arg8[%c0_61, %c1_62, %c128_63], %38 {strides = array<i32>} : memref<8x8x256xbf16, #tpu.memory_space<vmem>>, vector<7x7x64xbf16>,
    %c1_64 = arith.constant 1 : index
    %c0_65 = arith.constant 0 : index
    %c0_66 = arith.constant 0 : index
    %40 = vector.load %arg7[%c1_64, %c0_65, %c0_66] : memref<8x8x64xbf16, #tpu.memory_space<vmem>>, vector<7x8x64xbf16>
    %c0_67 = arith.constant 0 : index
    %c0_68 = arith.constant 0 : index
    %c192_69 = arith.constant 192 : index
    %41 = vector.load %arg8[%c0_67, %c0_68, %c192_69] : memref<8x8x256xbf16, #tpu.memory_space<vmem>>, vector<7x8x64xbf16>
    tpu.vector_store %arg8[%c0_67, %c0_68, %c192_69], %40 {strides = array<i32>} : memref<8x8x256xbf16, #tpu.memory_space<vmem>>, vector<7x8x64xbf16>,
    %c0_70 = arith.constant 0 : index
    %c0_71 = arith.constant 0 : index
    %c0_72 = arith.constant 0 : index
    %42 = vector.load %arg8[%c0_70, %c0_71, %c0_72] : memref<8x8x256xbf16, #tpu.memory_space<vmem>>, vector<8x8x256xbf16>
    %43 = vector.shape_cast %42 : vector<8x8x256xbf16> to vector<64x256xbf16>
    %c1_73 = arith.constant 1 : index
    %c0_74 = arith.constant 0 : index
    %c0_75 = arith.constant 0 : index
    %44 = vector.load %arg4[%c1_73, %c0_74, %c0_75] : memref<3x256x64xbf16, #tpu.memory_space<vmem>>, vector<1x256x64xbf16>
    %45 = vector.shape_cast %44 : vector<1x256x64xbf16> to vector<256x64xbf16>
    %cst_76 = arith.constant dense<0.000000e+00> : vector<64x64xf32>
    %46 = tpu.matmul %43, %45, %cst_76 {dimension_numbers = #tpu.dot_dimension_numbers<[1], [0], [0], [1], [0, 0, 1, 1], [], []>} : vector<64x256xbf16>, vector<256x64xbf16>, vector<64x64xf32> -> vector<64x64xf32>
    %47 = arith.addf %31, %46 : vector<64x64xf32>
    %cst_77 = arith.constant 0.000000e+00 : bf16
    %48 = vector.broadcast %cst_77 : bf16 to vector<8x8x256xbf16>
    %c0_78 = arith.constant 0 : index
    %c0_79 = arith.constant 0 : index
    %c0_80 = arith.constant 0 : index
    %49 = vector.load %arg8[%c0_78, %c0_79, %c0_80] : memref<8x8x256xbf16, #tpu.memory_space<vmem>>, vector<8x8x256xbf16>
    tpu.vector_store %arg8[%c0_78, %c0_79, %c0_80], %48 {strides = array<i32>} : memref<8x8x256xbf16, #tpu.memory_space<vmem>>, vector<8x8x256xbf16>,
    %c1_81 = arith.constant 1 : index
    %c1_82 = arith.constant 1 : index
    %c0_83 = arith.constant 0 : index
    %50 = vector.load %arg7[%c1_81, %c1_82, %c0_83] : memref<8x8x64xbf16, #tpu.memory_space<vmem>>, vector<7x7x64xbf16>
    %c0_84 = arith.constant 0 : index
    %c0_85 = arith.constant 0 : index
    %c0_86 = arith.constant 0 : index
    %51 = vector.load %arg8[%c0_84, %c0_85, %c0_86] : memref<8x8x256xbf16, #tpu.memory_space<vmem>>, vector<7x7x64xbf16>
    tpu.vector_store %arg8[%c0_84, %c0_85, %c0_86], %50 {strides = array<i32>} : memref<8x8x256xbf16, #tpu.memory_space<vmem>>, vector<7x7x64xbf16>,
    %c0_87 = arith.constant 0 : index
    %c0_88 = arith.constant 0 : index
    %c0_89 = arith.constant 0 : index
    %52 = vector.load %arg8[%c0_87, %c0_88, %c0_89] : memref<8x8x256xbf16, #tpu.memory_space<vmem>>, vector<8x8x256xbf16>
    %53 = vector.shape_cast %52 : vector<8x8x256xbf16> to vector<64x256xbf16>
    %c2 = arith.constant 2 : index
    %c0_90 = arith.constant 0 : index
    %c0_91 = arith.constant 0 : index
    %54 = vector.load %arg4[%c2, %c0_90, %c0_91] : memref<3x256x64xbf16, #tpu.memory_space<vmem>>, vector<1x256x64xbf16>
    %55 = vector.shape_cast %54 : vector<1x256x64xbf16> to vector<256x64xbf16>
    %cst_92 = arith.constant dense<0.000000e+00> : vector<64x64xf32>
    %56 = tpu.matmul %53, %55, %cst_92 {dimension_numbers = #tpu.dot_dimension_numbers<[1], [0], [0], [1], [0, 0, 1, 1], [], []>} : vector<64x256xbf16>, vector<256x64xbf16>, vector<64x64xf32> -> vector<64x64xf32>
    %57 = arith.addf %47, %56 : vector<64x64xf32>
    %cst_93 = arith.constant dense<0.000000e+00> : vector<64xf32>
    %58 = vector.multi_reduction <add>, %57, %cst_93 [0] : vector<64x64xf32> to vector<64xf32>
    %59 = vector.shape_cast %58 : vector<64xf32> to vector<1x64xf32>
    %c0_94 = arith.constant 0 : index
    %c0_95 = arith.constant 0 : index
    %c0_96 = arith.constant 0 : index
    %60 = vector.load %arg6[%c0_94, %c0_95, %c0_96] : memref<1x2x64xf32, #tpu.memory_space<vmem>>, vector<1x1x64xf32>
    %61 = vector.shape_cast %60 : vector<1x1x64xf32> to vector<1x64xf32>
    %62 = vector.shape_cast %59 : vector<1x64xf32> to vector<1x1x64xf32>
    tpu.vector_store %arg6[%c0_94, %c0_95, %c0_96], %62 {strides = array<i32>} : memref<1x2x64xf32, #tpu.memory_space<vmem>>, vector<1x1x64xf32>,
    %63 = arith.mulf %57, %57 : vector<64x64xf32>
    %cst_97 = arith.constant dense<0.000000e+00> : vector<64xf32>
    %64 = vector.multi_reduction <add>, %63, %cst_97 [0] : vector<64x64xf32> to vector<64xf32>
    %65 = vector.shape_cast %64 : vector<64xf32> to vector<1x64xf32>
    %c0_98 = arith.constant 0 : index
    %c1_99 = arith.constant 1 : index
    %c0_100 = arith.constant 0 : index
    %66 = vector.load %arg6[%c0_98, %c1_99, %c0_100] : memref<1x2x64xf32, #tpu.memory_space<vmem>>, vector<1x1x64xf32>
    %67 = vector.shape_cast %66 : vector<1x1x64xf32> to vector<1x64xf32>
    %68 = vector.shape_cast %65 : vector<1x64xf32> to vector<1x1x64xf32>
    tpu.vector_store %arg6[%c0_98, %c1_99, %c0_100], %68 {strides = array<i32>} : memref<1x2x64xf32, #tpu.memory_space<vmem>>, vector<1x1x64xf32>,
    %69 = vector.shape_cast %57 : vector<64x64xf32> to vector<1x8x8x64xf32>
    %70 = arith.truncf %69 : vector<1x8x8x64xf32> to vector<1x8x8x64xbf16>
    %c0_101 = arith.constant 0 : index
    %c0_102 = arith.constant 0 : index
    %c0_103 = arith.constant 0 : index
    %c0_104 = arith.constant 0 : index
    %71 = vector.load %arg5[%c0_101, %c0_102, %c0_103, %c0_104] : memref<1x8x8x64xbf16, #tpu.memory_space<vmem>>, vector<1x8x8x64xbf16>
    tpu.vector_store %arg5[%c0_101, %c0_102, %c0_103, %c0_104], %70 {strides = array<i32>} : memref<1x8x8x64xbf16, #tpu.memory_space<vmem>>, vector<1x8x8x64xbf16>,
    return
  }
  func.func @transform_0(%arg0: i32) -> (i32, i32, i32, i32) {
    %c0_i32 = arith.constant 0 : i32
    %c0_i32_0 = arith.constant 0 : i32
    %c0_i32_1 = arith.constant 0 : i32
    %c0_i32_2 = arith.constant 0 : i32
    return %arg0, %c0_i32, %c0_i32_0, %c0_i32_1 : i32, i32, i32, i32
  }
  func.func @transform_1(%arg0: i32) -> (i32, i32) {
    %c0_i32 = arith.constant 0 : i32
    %c0_i32_0 = arith.constant 0 : i32
    %c0_i32_1 = arith.constant 0 : i32
    return %c0_i32, %c0_i32_0 : i32, i32
  }
  func.func @transform_2(%arg0: i32) -> (i32, i32) {
    %c0_i32 = arith.constant 0 : i32
    %c0_i32_0 = arith.constant 0 : i32
    %c0_i32_1 = arith.constant 0 : i32
    return %c0_i32, %c0_i32_0 : i32, i32
  }
  func.func @transform_3(%arg0: i32) -> (i32, i32, i32) {
    %c0_i32 = arith.constant 0 : i32
    %c0_i32_0 = arith.constant 0 : i32
    %c0_i32_1 = arith.constant 0 : i32
    %c0_i32_2 = arith.constant 0 : i32
    return %c0_i32, %c0_i32_0, %c0_i32_1 : i32, i32, i32
  }
  func.func @transform_4(%arg0: i32) -> (i32, i32, i32, i32) {
    %c0_i32 = arith.constant 0 : i32
    %c0_i32_0 = arith.constant 0 : i32
    %c0_i32_1 = arith.constant 0 : i32
    %c0_i32_2 = arith.constant 0 : i32
    return %arg0, %c0_i32, %c0_i32_0, %c0_i32_1 : i32, i32, i32, i32
  }
  func.func @transform_5(%arg0: i32) -> (i32, i32, i32) {
    %c0_i32 = arith.constant 0 : i32
    %c0_i32_0 = arith.constant 0 : i32
    %c0_i32_1 = arith.constant 0 : i32
    return %arg0, %c0_i32, %c0_i32_0 : i32, i32, i32
  }
}

module attributes {stable_mosaic.version = 11 : i64} {
  func.func @_affine_add_kernel(%arg0: i32, %arg1: memref<64x128xbf16, #tpu.memory_space<vmem>>, %arg2: memref<1x128xf32, #tpu.memory_space<vmem>>, %arg3: memref<1x128xf32, #tpu.memory_space<vmem>>, %arg4: memref<64x128xbf16, #tpu.memory_space<vmem>>, %arg5: memref<64x128xbf16, #tpu.memory_space<vmem>>) attributes {dimension_semantics = [#tpu.dimension_semantics<parallel>], iteration_bounds = array<i64: 1>, scalar_prefetch = 0 : i64, scratch_operands = 0 : i64, tpu.core_type = #tpu.core_type<tc>, window_params = [{transform_indices = @transform_0, window_bounds = array<i64: 64, 128>}, {pipeline_mode = #tpu.pipeline_mode<synchronous>, transform_indices = @transform_1, window_bounds = array<i64: 1, 128>}, {pipeline_mode = #tpu.pipeline_mode<synchronous>, transform_indices = @transform_2, window_bounds = array<i64: 1, 128>}, {transform_indices = @transform_3, window_bounds = array<i64: 64, 128>}, {transform_indices = @transform_4, window_bounds = array<i64: 64, 128>}]} {
    %c0 = arith.constant 0 : index
    %c0_0 = arith.constant 0 : index
    %0 = vector.load %arg1[%c0, %c0_0] : memref<64x128xbf16, #tpu.memory_space<vmem>>, vector<64x128xbf16>
    %1 = arith.extf %0 : vector<64x128xbf16> to vector<64x128xf32>
    %c0_1 = arith.constant 0 : index
    %c0_2 = arith.constant 0 : index
    %2 = vector.load %arg2[%c0_1, %c0_2] : memref<1x128xf32, #tpu.memory_space<vmem>>, vector<1x128xf32>
    %3 = vector.broadcast %2 : vector<1x128xf32> to vector<64x128xf32>
    %4 = arith.mulf %1, %3 : vector<64x128xf32>
    %c0_3 = arith.constant 0 : index
    %c0_4 = arith.constant 0 : index
    %5 = vector.load %arg3[%c0_3, %c0_4] : memref<1x128xf32, #tpu.memory_space<vmem>>, vector<1x128xf32>
    %6 = vector.broadcast %5 : vector<1x128xf32> to vector<64x128xf32>
    %7 = arith.addf %4, %6 : vector<64x128xf32>
    %c0_5 = arith.constant 0 : index
    %c0_6 = arith.constant 0 : index
    %8 = vector.load %arg4[%c0_5, %c0_6] : memref<64x128xbf16, #tpu.memory_space<vmem>>, vector<64x128xbf16>
    %9 = arith.extf %8 : vector<64x128xbf16> to vector<64x128xf32>
    %10 = arith.addf %7, %9 : vector<64x128xf32>
    %cst = arith.constant 0.000000e+00 : f32
    %11 = vector.broadcast %cst : f32 to vector<64x128xf32>
    %12 = arith.maximumf %10, %11 : vector<64x128xf32>
    %13 = arith.truncf %12 : vector<64x128xf32> to vector<64x128xbf16>
    %c0_7 = arith.constant 0 : index
    %c0_8 = arith.constant 0 : index
    %14 = vector.load %arg5[%c0_7, %c0_8] : memref<64x128xbf16, #tpu.memory_space<vmem>>, vector<64x128xbf16>
    tpu.vector_store %arg5[%c0_7, %c0_8], %13 {strides = array<i32>} : memref<64x128xbf16, #tpu.memory_space<vmem>>, vector<64x128xbf16>,
    return
  }
  func.func @transform_0(%arg0: i32) -> (i32, i32) {
    %c0_i32 = arith.constant 0 : i32
    %c0_i32_0 = arith.constant 0 : i32
    return %arg0, %c0_i32 : i32, i32
  }
  func.func @transform_1(%arg0: i32) -> (i32, i32) {
    %c0_i32 = arith.constant 0 : i32
    %c0_i32_0 = arith.constant 0 : i32
    %c0_i32_1 = arith.constant 0 : i32
    return %c0_i32, %c0_i32_0 : i32, i32
  }
  func.func @transform_2(%arg0: i32) -> (i32, i32) {
    %c0_i32 = arith.constant 0 : i32
    %c0_i32_0 = arith.constant 0 : i32
    %c0_i32_1 = arith.constant 0 : i32
    return %c0_i32, %c0_i32_0 : i32, i32
  }
  func.func @transform_3(%arg0: i32) -> (i32, i32) {
    %c0_i32 = arith.constant 0 : i32
    %c0_i32_0 = arith.constant 0 : i32
    return %arg0, %c0_i32 : i32, i32
  }
  func.func @transform_4(%arg0: i32) -> (i32, i32) {
    %c0_i32 = arith.constant 0 : i32
    %c0_i32_0 = arith.constant 0 : i32
    return %arg0, %c0_i32 : i32, i32
  }
}

module attributes {stable_mosaic.version = 11 : i64} {
  func.func @_mm_stats_kernel(%arg0: i32, %arg1: memref<32x576xbf16, #tpu.memory_space<vmem>>, %arg2: memref<576x128xbf16, #tpu.memory_space<vmem>>, %arg3: memref<32x128xbf16, #tpu.memory_space<vmem>>, %arg4: memref<1x2x128xf32, #tpu.memory_space<vmem>>) attributes {dimension_semantics = [#tpu.dimension_semantics<parallel>], iteration_bounds = array<i64: 1>, scalar_prefetch = 0 : i64, scratch_operands = 0 : i64, tpu.core_type = #tpu.core_type<tc>, window_params = [{transform_indices = @transform_0, window_bounds = array<i64: 32, 576>}, {pipeline_mode = #tpu.pipeline_mode<synchronous>, transform_indices = @transform_1, window_bounds = array<i64: 576, 128>}, {transform_indices = @transform_2, window_bounds = array<i64: 32, 128>}, {transform_indices = @transform_3, window_bounds = array<i64: 1, 2, 128>}]} {
    %c0 = arith.constant 0 : index
    %c0_0 = arith.constant 0 : index
    %0 = vector.load %arg1[%c0, %c0_0] : memref<32x576xbf16, #tpu.memory_space<vmem>>, vector<32x576xbf16>
    %c0_1 = arith.constant 0 : index
    %c0_2 = arith.constant 0 : index
    %1 = vector.load %arg2[%c0_1, %c0_2] : memref<576x128xbf16, #tpu.memory_space<vmem>>, vector<576x128xbf16>
    %cst = arith.constant dense<0.000000e+00> : vector<32x128xf32>
    %2 = tpu.matmul %0, %1, %cst {dimension_numbers = #tpu.dot_dimension_numbers<[1], [0], [0], [1], [0, 0, 1, 1], [], []>} : vector<32x576xbf16>, vector<576x128xbf16>, vector<32x128xf32> -> vector<32x128xf32>
    %cst_3 = arith.constant dense<0.000000e+00> : vector<128xf32>
    %3 = vector.multi_reduction <add>, %2, %cst_3 [0] : vector<32x128xf32> to vector<128xf32>
    %4 = vector.shape_cast %3 : vector<128xf32> to vector<1x128xf32>
    %c0_4 = arith.constant 0 : index
    %c0_5 = arith.constant 0 : index
    %c0_6 = arith.constant 0 : index
    %5 = vector.load %arg4[%c0_4, %c0_5, %c0_6] : memref<1x2x128xf32, #tpu.memory_space<vmem>>, vector<1x1x128xf32>
    %6 = vector.shape_cast %5 : vector<1x1x128xf32> to vector<1x128xf32>
    %7 = vector.shape_cast %4 : vector<1x128xf32> to vector<1x1x128xf32>
    tpu.vector_store %arg4[%c0_4, %c0_5, %c0_6], %7 {strides = array<i32>} : memref<1x2x128xf32, #tpu.memory_space<vmem>>, vector<1x1x128xf32>,
    %8 = arith.mulf %2, %2 : vector<32x128xf32>
    %cst_7 = arith.constant dense<0.000000e+00> : vector<128xf32>
    %9 = vector.multi_reduction <add>, %8, %cst_7 [0] : vector<32x128xf32> to vector<128xf32>
    %10 = vector.shape_cast %9 : vector<128xf32> to vector<1x128xf32>
    %c0_8 = arith.constant 0 : index
    %c1 = arith.constant 1 : index
    %c0_9 = arith.constant 0 : index
    %11 = vector.load %arg4[%c0_8, %c1, %c0_9] : memref<1x2x128xf32, #tpu.memory_space<vmem>>, vector<1x1x128xf32>
    %12 = vector.shape_cast %11 : vector<1x1x128xf32> to vector<1x128xf32>
    %13 = vector.shape_cast %10 : vector<1x128xf32> to vector<1x1x128xf32>
    tpu.vector_store %arg4[%c0_8, %c1, %c0_9], %13 {strides = array<i32>} : memref<1x2x128xf32, #tpu.memory_space<vmem>>, vector<1x1x128xf32>,
    %14 = arith.truncf %2 : vector<32x128xf32> to vector<32x128xbf16>
    %c0_10 = arith.constant 0 : index
    %c0_11 = arith.constant 0 : index
    %15 = vector.load %arg3[%c0_10, %c0_11] : memref<32x128xbf16, #tpu.memory_space<vmem>>, vector<32x128xbf16>
    tpu.vector_store %arg3[%c0_10, %c0_11], %14 {strides = array<i32>} : memref<32x128xbf16, #tpu.memory_space<vmem>>, vector<32x128xbf16>,
    return
  }
  func.func @transform_0(%arg0: i32) -> (i32, i32) {
    %c0_i32 = arith.constant 0 : i32
    %c0_i32_0 = arith.constant 0 : i32
    return %arg0, %c0_i32 : i32, i32
  }
  func.func @transform_1(%arg0: i32) -> (i32, i32) {
    %c0_i32 = arith.constant 0 : i32
    %c0_i32_0 = arith.constant 0 : i32
    %c0_i32_1 = arith.constant 0 : i32
    return %c0_i32, %c0_i32_0 : i32, i32
  }
  func.func @transform_2(%arg0: i32) -> (i32, i32) {
    %c0_i32 = arith.constant 0 : i32
    %c0_i32_0 = arith.constant 0 : i32
    return %arg0, %c0_i32 : i32, i32
  }
  func.func @transform_3(%arg0: i32) -> (i32, i32, i32) {
    %c0_i32 = arith.constant 0 : i32
    %c0_i32_0 = arith.constant 0 : i32
    %c0_i32_1 = arith.constant 0 : i32
    return %arg0, %c0_i32, %c0_i32_0 : i32, i32, i32
  }
}

module attributes {stable_mosaic.version = 11 : i64} {
  func.func @_mm_stats_kernel(%arg0: i32, %arg1: memref<32x64xbf16, #tpu.memory_space<vmem>>, %arg2: memref<64x128xbf16, #tpu.memory_space<vmem>>, %arg3: memref<32x128xbf16, #tpu.memory_space<vmem>>, %arg4: memref<1x2x128xf32, #tpu.memory_space<vmem>>) attributes {dimension_semantics = [#tpu.dimension_semantics<parallel>], iteration_bounds = array<i64: 1>, scalar_prefetch = 0 : i64, scratch_operands = 0 : i64, tpu.core_type = #tpu.core_type<tc>, window_params = [{transform_indices = @transform_0, window_bounds = array<i64: 32, 64>}, {pipeline_mode = #tpu.pipeline_mode<synchronous>, transform_indices = @transform_1, window_bounds = array<i64: 64, 128>}, {transform_indices = @transform_2, window_bounds = array<i64: 32, 128>}, {transform_indices = @transform_3, window_bounds = array<i64: 1, 2, 128>}]} {
    %c0 = arith.constant 0 : index
    %c0_0 = arith.constant 0 : index
    %0 = vector.load %arg1[%c0, %c0_0] : memref<32x64xbf16, #tpu.memory_space<vmem>>, vector<32x64xbf16>
    %c0_1 = arith.constant 0 : index
    %c0_2 = arith.constant 0 : index
    %1 = vector.load %arg2[%c0_1, %c0_2] : memref<64x128xbf16, #tpu.memory_space<vmem>>, vector<64x128xbf16>
    %cst = arith.constant dense<0.000000e+00> : vector<32x128xf32>
    %2 = tpu.matmul %0, %1, %cst {dimension_numbers = #tpu.dot_dimension_numbers<[1], [0], [0], [1], [0, 0, 1, 1], [], []>} : vector<32x64xbf16>, vector<64x128xbf16>, vector<32x128xf32> -> vector<32x128xf32>
    %cst_3 = arith.constant dense<0.000000e+00> : vector<128xf32>
    %3 = vector.multi_reduction <add>, %2, %cst_3 [0] : vector<32x128xf32> to vector<128xf32>
    %4 = vector.shape_cast %3 : vector<128xf32> to vector<1x128xf32>
    %c0_4 = arith.constant 0 : index
    %c0_5 = arith.constant 0 : index
    %c0_6 = arith.constant 0 : index
    %5 = vector.load %arg4[%c0_4, %c0_5, %c0_6] : memref<1x2x128xf32, #tpu.memory_space<vmem>>, vector<1x1x128xf32>
    %6 = vector.shape_cast %5 : vector<1x1x128xf32> to vector<1x128xf32>
    %7 = vector.shape_cast %4 : vector<1x128xf32> to vector<1x1x128xf32>
    tpu.vector_store %arg4[%c0_4, %c0_5, %c0_6], %7 {strides = array<i32>} : memref<1x2x128xf32, #tpu.memory_space<vmem>>, vector<1x1x128xf32>,
    %8 = arith.mulf %2, %2 : vector<32x128xf32>
    %cst_7 = arith.constant dense<0.000000e+00> : vector<128xf32>
    %9 = vector.multi_reduction <add>, %8, %cst_7 [0] : vector<32x128xf32> to vector<128xf32>
    %10 = vector.shape_cast %9 : vector<128xf32> to vector<1x128xf32>
    %c0_8 = arith.constant 0 : index
    %c1 = arith.constant 1 : index
    %c0_9 = arith.constant 0 : index
    %11 = vector.load %arg4[%c0_8, %c1, %c0_9] : memref<1x2x128xf32, #tpu.memory_space<vmem>>, vector<1x1x128xf32>
    %12 = vector.shape_cast %11 : vector<1x1x128xf32> to vector<1x128xf32>
    %13 = vector.shape_cast %10 : vector<1x128xf32> to vector<1x1x128xf32>
    tpu.vector_store %arg4[%c0_8, %c1, %c0_9], %13 {strides = array<i32>} : memref<1x2x128xf32, #tpu.memory_space<vmem>>, vector<1x1x128xf32>,
    %14 = arith.truncf %2 : vector<32x128xf32> to vector<32x128xbf16>
    %c0_10 = arith.constant 0 : index
    %c0_11 = arith.constant 0 : index
    %15 = vector.load %arg3[%c0_10, %c0_11] : memref<32x128xbf16, #tpu.memory_space<vmem>>, vector<32x128xbf16>
    tpu.vector_store %arg3[%c0_10, %c0_11], %14 {strides = array<i32>} : memref<32x128xbf16, #tpu.memory_space<vmem>>, vector<32x128xbf16>,
    return
  }
  func.func @transform_0(%arg0: i32) -> (i32, i32) {
    %c0_i32 = arith.constant 0 : i32
    %c0_i32_0 = arith.constant 0 : i32
    return %arg0, %c0_i32 : i32, i32
  }
  func.func @transform_1(%arg0: i32) -> (i32, i32) {
    %c0_i32 = arith.constant 0 : i32
    %c0_i32_0 = arith.constant 0 : i32
    %c0_i32_1 = arith.constant 0 : i32
    return %c0_i32, %c0_i32_0 : i32, i32
  }
  func.func @transform_2(%arg0: i32) -> (i32, i32) {
    %c0_i32 = arith.constant 0 : i32
    %c0_i32_0 = arith.constant 0 : i32
    return %arg0, %c0_i32 : i32, i32
  }
  func.func @transform_3(%arg0: i32) -> (i32, i32, i32) {
    %c0_i32 = arith.constant 0 : i32
    %c0_i32_0 = arith.constant 0 : i32
    %c0_i32_1 = arith.constant 0 : i32
    return %arg0, %c0_i32, %c0_i32_0 : i32, i32, i32
  }
}

module attributes {stable_mosaic.version = 11 : i64} {
  func.func @_affine_add2_kernel(%arg0: i32, %arg1: memref<32x128xbf16, #tpu.memory_space<vmem>>, %arg2: memref<1x128xf32, #tpu.memory_space<vmem>>, %arg3: memref<1x128xf32, #tpu.memory_space<vmem>>, %arg4: memref<32x128xbf16, #tpu.memory_space<vmem>>, %arg5: memref<1x128xf32, #tpu.memory_space<vmem>>, %arg6: memref<1x128xf32, #tpu.memory_space<vmem>>, %arg7: memref<32x128xbf16, #tpu.memory_space<vmem>>) attributes {dimension_semantics = [#tpu.dimension_semantics<parallel>], iteration_bounds = array<i64: 1>, scalar_prefetch = 0 : i64, scratch_operands = 0 : i64, tpu.core_type = #tpu.core_type<tc>, window_params = [{transform_indices = @transform_0, window_bounds = array<i64: 32, 128>}, {pipeline_mode = #tpu.pipeline_mode<synchronous>, transform_indices = @transform_1, window_bounds = array<i64: 1, 128>}, {pipeline_mode = #tpu.pipeline_mode<synchronous>, transform_indices = @transform_2, window_bounds = array<i64: 1, 128>}, {transform_indices = @transform_3, window_bounds = array<i64: 32, 128>}, {pipeline_mode = #tpu.pipeline_mode<synchronous>, transform_indices = @transform_4, window_bounds = array<i64: 1, 128>}, {pipeline_mode = #tpu.pipeline_mode<synchronous>, transform_indices = @transform_5, window_bounds = array<i64: 1, 128>}, {transform_indices = @transform_6, window_bounds = array<i64: 32, 128>}]} {
    %c0 = arith.constant 0 : index
    %c0_0 = arith.constant 0 : index
    %0 = vector.load %arg1[%c0, %c0_0] : memref<32x128xbf16, #tpu.memory_space<vmem>>, vector<32x128xbf16>
    %1 = arith.extf %0 : vector<32x128xbf16> to vector<32x128xf32>
    %c0_1 = arith.constant 0 : index
    %c0_2 = arith.constant 0 : index
    %2 = vector.load %arg2[%c0_1, %c0_2] : memref<1x128xf32, #tpu.memory_space<vmem>>, vector<1x128xf32>
    %3 = vector.broadcast %2 : vector<1x128xf32> to vector<32x128xf32>
    %4 = arith.mulf %1, %3 : vector<32x128xf32>
    %c0_3 = arith.constant 0 : index
    %c0_4 = arith.constant 0 : index
    %5 = vector.load %arg3[%c0_3, %c0_4] : memref<1x128xf32, #tpu.memory_space<vmem>>, vector<1x128xf32>
    %6 = vector.broadcast %5 : vector<1x128xf32> to vector<32x128xf32>
    %7 = arith.addf %4, %6 : vector<32x128xf32>
    %c0_5 = arith.constant 0 : index
    %c0_6 = arith.constant 0 : index
    %8 = vector.load %arg4[%c0_5, %c0_6] : memref<32x128xbf16, #tpu.memory_space<vmem>>, vector<32x128xbf16>
    %9 = arith.extf %8 : vector<32x128xbf16> to vector<32x128xf32>
    %c0_7 = arith.constant 0 : index
    %c0_8 = arith.constant 0 : index
    %10 = vector.load %arg5[%c0_7, %c0_8] : memref<1x128xf32, #tpu.memory_space<vmem>>, vector<1x128xf32>
    %11 = vector.broadcast %10 : vector<1x128xf32> to vector<32x128xf32>
    %12 = arith.mulf %9, %11 : vector<32x128xf32>
    %13 = arith.addf %7, %12 : vector<32x128xf32>
    %c0_9 = arith.constant 0 : index
    %c0_10 = arith.constant 0 : index
    %14 = vector.load %arg6[%c0_9, %c0_10] : memref<1x128xf32, #tpu.memory_space<vmem>>, vector<1x128xf32>
    %15 = vector.broadcast %14 : vector<1x128xf32> to vector<32x128xf32>
    %16 = arith.addf %13, %15 : vector<32x128xf32>
    %cst = arith.constant 0.000000e+00 : f32
    %17 = vector.broadcast %cst : f32 to vector<32x128xf32>
    %18 = arith.maximumf %16, %17 : vector<32x128xf32>
    %19 = arith.truncf %18 : vector<32x128xf32> to vector<32x128xbf16>
    %c0_11 = arith.constant 0 : index
    %c0_12 = arith.constant 0 : index
    %20 = vector.load %arg7[%c0_11, %c0_12] : memref<32x128xbf16, #tpu.memory_space<vmem>>, vector<32x128xbf16>
    tpu.vector_store %arg7[%c0_11, %c0_12], %19 {strides = array<i32>} : memref<32x128xbf16, #tpu.memory_space<vmem>>, vector<32x128xbf16>,
    return
  }
  func.func @transform_0(%arg0: i32) -> (i32, i32) {
    %c0_i32 = arith.constant 0 : i32
    %c0_i32_0 = arith.constant 0 : i32
    return %arg0, %c0_i32 : i32, i32
  }
  func.func @transform_1(%arg0: i32) -> (i32, i32) {
    %c0_i32 = arith.constant 0 : i32
    %c0_i32_0 = arith.constant 0 : i32
    %c0_i32_1 = arith.constant 0 : i32
    return %c0_i32, %c0_i32_0 : i32, i32
  }
  func.func @transform_2(%arg0: i32) -> (i32, i32) {
    %c0_i32 = arith.constant 0 : i32
    %c0_i32_0 = arith.constant 0 : i32
    %c0_i32_1 = arith.constant 0 : i32
    return %c0_i32, %c0_i32_0 : i32, i32
  }
  func.func @transform_3(%arg0: i32) -> (i32, i32) {
    %c0_i32 = arith.constant 0 : i32
    %c0_i32_0 = arith.constant 0 : i32
    return %arg0, %c0_i32 : i32, i32
  }
  func.func @transform_4(%arg0: i32) -> (i32, i32) {
    %c0_i32 = arith.constant 0 : i32
    %c0_i32_0 = arith.constant 0 : i32
    %c0_i32_1 = arith.constant 0 : i32
    return %c0_i32, %c0_i32_0 : i32, i32
  }
  func.func @transform_5(%arg0: i32) -> (i32, i32) {
    %c0_i32 = arith.constant 0 : i32
    %c0_i32_0 = arith.constant 0 : i32
    %c0_i32_1 = arith.constant 0 : i32
    return %c0_i32, %c0_i32_0 : i32, i32
  }
  func.func @transform_6(%arg0: i32) -> (i32, i32) {
    %c0_i32 = arith.constant 0 : i32
    %c0_i32_0 = arith.constant 0 : i32
    return %arg0, %c0_i32 : i32, i32
  }
}

module attributes {stable_mosaic.version = 11 : i64} {
  func.func @_conv3x3_kernel(%arg0: i32, %arg1: memref<1x4x4x128xbf16, #tpu.memory_space<vmem>>, %arg2: memref<1x128xf32, #tpu.memory_space<vmem>>, %arg3: memref<1x128xf32, #tpu.memory_space<vmem>>, %arg4: memref<5x256x128xbf16, #tpu.memory_space<vmem>>, %arg5: memref<1x4x4x128xbf16, #tpu.memory_space<vmem>>, %arg6: memref<1x2x128xf32, #tpu.memory_space<vmem>>, %arg7: memref<4x4x128xbf16, #tpu.memory_space<vmem>>, %arg8: memref<4x4x256xbf16, #tpu.memory_space<vmem>>) attributes {dimension_semantics = [#tpu.dimension_semantics<parallel>], iteration_bounds = array<i64: 2>, scalar_prefetch = 0 : i64, scratch_operands = 2 : i64, tpu.core_type = #tpu.core_type<tc>, window_params = [{transform_indices = @transform_0, window_bounds = array<i64: 1, 4, 4, 128>}, {pipeline_mode = #tpu.pipeline_mode<synchronous>, transform_indices = @transform_1, window_bounds = array<i64: 1, 128>}, {pipeline_mode = #tpu.pipeline_mode<synchronous>, transform_indices = @transform_2, window_bounds = array<i64: 1, 128>}, {pipeline_mode = #tpu.pipeline_mode<synchronous>, transform_indices = @transform_3, window_bounds = array<i64: 5, 256, 128>}, {transform_indices = @transform_4, window_bounds = array<i64: 1, 4, 4, 128>}, {transform_indices = @transform_5, window_bounds = array<i64: 1, 2, 128>}]} {
    %c0 = arith.constant 0 : index
    %c0_0 = arith.constant 0 : index
    %c0_1 = arith.constant 0 : index
    %c0_2 = arith.constant 0 : index
    %0 = vector.load %arg1[%c0, %c0_0, %c0_1, %c0_2] : memref<1x4x4x128xbf16, #tpu.memory_space<vmem>>, vector<1x4x4x128xbf16>
    %1 = vector.shape_cast %0 : vector<1x4x4x128xbf16> to vector<4x4x128xbf16>
    %2 = arith.extf %1 : vector<4x4x128xbf16> to vector<4x4x128xf32>
    %c0_3 = arith.constant 0 : index
    %c0_4 = arith.constant 0 : index
    %3 = vector.load %arg2[%c0_3, %c0_4] : memref<1x128xf32, #tpu.memory_space<vmem>>, vector<1x128xf32>
    %4 = vector.shape_cast %3 : vector<1x128xf32> to vector<1x1x128xf32>
    %5 = vector.broadcast %4 : vector<1x1x128xf32> to vector<4x4x128xf32>
    %6 = arith.mulf %2, %5 : vector<4x4x128xf32>
    %c0_5 = arith.constant 0 : index
    %c0_6 = arith.constant 0 : index
    %7 = vector.load %arg3[%c0_5, %c0_6] : memref<1x128xf32, #tpu.memory_space<vmem>>, vector<1x128xf32>
    %8 = vector.shape_cast %7 : vector<1x128xf32> to vector<1x1x128xf32>
    %9 = vector.broadcast %8 : vector<1x1x128xf32> to vector<4x4x128xf32>
    %10 = arith.addf %6, %9 : vector<4x4x128xf32>
    %cst = arith.constant 0.000000e+00 : f32
    %11 = vector.broadcast %cst : f32 to vector<4x4x128xf32>
    %12 = arith.maximumf %10, %11 : vector<4x4x128xf32>
    %13 = arith.truncf %12 : vector<4x4x128xf32> to vector<4x4x128xbf16>
    %c0_7 = arith.constant 0 : index
    %c0_8 = arith.constant 0 : index
    %c0_9 = arith.constant 0 : index
    %14 = vector.load %arg7[%c0_7, %c0_8, %c0_9] : memref<4x4x128xbf16, #tpu.memory_space<vmem>>, vector<4x4x128xbf16>
    tpu.vector_store %arg7[%c0_7, %c0_8, %c0_9], %13 {strides = array<i32>} : memref<4x4x128xbf16, #tpu.memory_space<vmem>>, vector<4x4x128xbf16>,
    %cst_10 = arith.constant 0.000000e+00 : f32
    %15 = vector.broadcast %cst_10 : f32 to vector<16x128xf32>
    %cst_11 = arith.constant 0.000000e+00 : bf16
    %16 = vector.broadcast %cst_11 : bf16 to vector<4x4x256xbf16>
    %c0_12 = arith.constant 0 : index
    %c0_13 = arith.constant 0 : index
    %c0_14 = arith.constant 0 : index
    %17 = vector.load %arg8[%c0_12, %c0_13, %c0_14] : memref<4x4x256xbf16, #tpu.memory_space<vmem>>, vector<4x4x256xbf16>
    tpu.vector_store %arg8[%c0_12, %c0_13, %c0_14], %16 {strides = array<i32>} : memref<4x4x256xbf16, #tpu.memory_space<vmem>>, vector<4x4x256xbf16>,
    %c0_15 = arith.constant 0 : index
    %c0_16 = arith.constant 0 : index
    %c0_17 = arith.constant 0 : index
    %18 = vector.load %arg7[%c0_15, %c0_16, %c0_17] : memref<4x4x128xbf16, #tpu.memory_space<vmem>>, vector<3x3x128xbf16>
    %c1 = arith.constant 1 : index
    %c1_18 = arith.constant 1 : index
    %c0_19 = arith.constant 0 : index
    %19 = vector.load %arg8[%c1, %c1_18, %c0_19] : memref<4x4x256xbf16, #tpu.memory_space<vmem>>, vector<3x3x128xbf16>
    tpu.vector_store %arg8[%c1, %c1_18, %c0_19], %18 {strides = array<i32>} : memref<4x4x256xbf16, #tpu.memory_space<vmem>>, vector<3x3x128xbf16>,
    %c0_20 = arith.constant 0 : index
    %c0_21 = arith.constant 0 : index
    %c0_22 = arith.constant 0 : index
    %20 = vector.load %arg7[%c0_20, %c0_21, %c0_22] : memref<4x4x128xbf16, #tpu.memory_space<vmem>>, vector<3x4x128xbf16>
    %c1_23 = arith.constant 1 : index
    %c0_24 = arith.constant 0 : index
    %c128 = arith.constant 128 : index
    %21 = vector.load %arg8[%c1_23, %c0_24, %c128] : memref<4x4x256xbf16, #tpu.memory_space<vmem>>, vector<3x4x128xbf16>
    tpu.vector_store %arg8[%c1_23, %c0_24, %c128], %20 {strides = array<i32>} : memref<4x4x256xbf16, #tpu.memory_space<vmem>>, vector<3x4x128xbf16>,
    %c0_25 = arith.constant 0 : index
    %c0_26 = arith.constant 0 : index
    %c0_27 = arith.constant 0 : index
    %22 = vector.load %arg8[%c0_25, %c0_26, %c0_27] : memref<4x4x256xbf16, #tpu.memory_space<vmem>>, vector<4x4x256xbf16>
    %23 = vector.shape_cast %22 : vector<4x4x256xbf16> to vector<16x256xbf16>
    %c0_28 = arith.constant 0 : index
    %c0_29 = arith.constant 0 : index
    %c0_30 = arith.constant 0 : index
    %24 = vector.load %arg4[%c0_28, %c0_29, %c0_30] : memref<5x256x128xbf16, #tpu.memory_space<vmem>>, vector<1x256x128xbf16>
    %25 = vector.shape_cast %24 : vector<1x256x128xbf16> to vector<256x128xbf16>
    %cst_31 = arith.constant dense<0.000000e+00> : vector<16x128xf32>
    %26 = tpu.matmul %23, %25, %cst_31 {dimension_numbers = #tpu.dot_dimension_numbers<[1], [0], [0], [1], [0, 0, 1, 1], [], []>} : vector<16x256xbf16>, vector<256x128xbf16>, vector<16x128xf32> -> vector<16x128xf32>
    %27 = arith.addf %15, %26 : vector<16x128xf32>
    %cst_32 = arith.constant 0.000000e+00 : bf16
    %28 = vector.broadcast %cst_32 : bf16 to vector<4x4x256xbf16>
    %c0_33 = arith.constant 0 : index
    %c0_34 = arith.constant 0 : index
    %c0_35 = arith.constant 0 : index
    %29 = vector.load %arg8[%c0_33, %c0_34, %c0_35] : memref<4x4x256xbf16, #tpu.memory_space<vmem>>, vector<4x4x256xbf16>
    tpu.vector_store %arg8[%c0_33, %c0_34, %c0_35], %28 {strides = array<i32>} : memref<4x4x256xbf16, #tpu.memory_space<vmem>>, vector<4x4x256xbf16>,
    %c0_36 = arith.constant 0 : index
    %c1_37 = arith.constant 1 : index
    %c0_38 = arith.constant 0 : index
    %30 = vector.load %arg7[%c0_36, %c1_37, %c0_38] : memref<4x4x128xbf16, #tpu.memory_space<vmem>>, vector<3x3x128xbf16>
    %c1_39 = arith.constant 1 : index
    %c0_40 = arith.constant 0 : index
    %c0_41 = arith.constant 0 : index
    %31 = vector.load %arg8[%c1_39, %c0_40, %c0_41] : memref<4x4x256xbf16, #tpu.memory_space<vmem>>, vector<3x3x128xbf16>
    tpu.vector_store %arg8[%c1_39, %c0_40, %c0_41], %30 {strides = array<i32>} : memref<4x4x256xbf16, #tpu.memory_space<vmem>>, vector<3x3x128xbf16>,
    %c0_42 = arith.constant 0 : index
    %c0_43 = arith.constant 0 : index
    %c0_44 = arith.constant 0 : index
    %32 = vector.load %arg7[%c0_42, %c0_43, %c0_44] : memref<4x4x128xbf16, #tpu.memory_space<vmem>>, vector<4x3x128xbf16>
    %c0_45 = arith.constant 0 : index
    %c1_46 = arith.constant 1 : index
    %c128_47 = arith.constant 128 : index
    %33 = vector.load %arg8[%c0_45, %c1_46, %c128_47] : memref<4x4x256xbf16, #tpu.memory_space<vmem>>, vector<4x3x128xbf16>
    tpu.vector_store %arg8[%c0_45, %c1_46, %c128_47], %32 {strides = array<i32>} : memref<4x4x256xbf16, #tpu.memory_space<vmem>>, vector<4x3x128xbf16>,
    %c0_48 = arith.constant 0 : index
    %c0_49 = arith.constant 0 : index
    %c0_50 = arith.constant 0 : index
    %34 = vector.load %arg8[%c0_48, %c0_49, %c0_50] : memref<4x4x256xbf16, #tpu.memory_space<vmem>>, vector<4x4x256xbf16>
    %35 = vector.shape_cast %34 : vector<4x4x256xbf16> to vector<16x256xbf16>
    %c1_51 = arith.constant 1 : index
    %c0_52 = arith.constant 0 : index
    %c0_53 = arith.constant 0 : index
    %36 = vector.load %arg4[%c1_51, %c0_52, %c0_53] : memref<5x256x128xbf16, #tpu.memory_space<vmem>>, vector<1x256x128xbf16>
    %37 = vector.shape_cast %36 : vector<1x256x128xbf16> to vector<256x128xbf16>
    %cst_54 = arith.constant dense<0.000000e+00> : vector<16x128xf32>
    %38 = tpu.matmul %35, %37, %cst_54 {dimension_numbers = #tpu.dot_dimension_numbers<[1], [0], [0], [1], [0, 0, 1, 1], [], []>} : vector<16x256xbf16>, vector<256x128xbf16>, vector<16x128xf32> -> vector<16x128xf32>
    %39 = arith.addf %27, %38 : vector<16x128xf32>
    %cst_55 = arith.constant 0.000000e+00 : bf16
    %40 = vector.broadcast %cst_55 : bf16 to vector<4x4x256xbf16>
    %c0_56 = arith.constant 0 : index
    %c0_57 = arith.constant 0 : index
    %c0_58 = arith.constant 0 : index
    %41 = vector.load %arg8[%c0_56, %c0_57, %c0_58] : memref<4x4x256xbf16, #tpu.memory_space<vmem>>, vector<4x4x256xbf16>
    tpu.vector_store %arg8[%c0_56, %c0_57, %c0_58], %40 {strides = array<i32>} : memref<4x4x256xbf16, #tpu.memory_space<vmem>>, vector<4x4x256xbf16>,
    %c0_59 = arith.constant 0 : index
    %c0_60 = arith.constant 0 : index
    %c0_61 = arith.constant 0 : index
    %42 = vector.load %arg7[%c0_59, %c0_60, %c0_61] : memref<4x4x128xbf16, #tpu.memory_space<vmem>>, vector<4x4x128xbf16>
    %c0_62 = arith.constant 0 : index
    %c0_63 = arith.constant 0 : index
    %c0_64 = arith.constant 0 : index
    %43 = vector.load %arg8[%c0_62, %c0_63, %c0_64] : memref<4x4x256xbf16, #tpu.memory_space<vmem>>, vector<4x4x128xbf16>
    tpu.vector_store %arg8[%c0_62, %c0_63, %c0_64], %42 {strides = array<i32>} : memref<4x4x256xbf16, #tpu.memory_space<vmem>>, vector<4x4x128xbf16>,
    %c0_65 = arith.constant 0 : index
    %c1_66 = arith.constant 1 : index
    %c0_67 = arith.constant 0 : index
    %44 = vector.load %arg7[%c0_65, %c1_66, %c0_67] : memref<4x4x128xbf16, #tpu.memory_space<vmem>>, vector<4x3x128xbf16>
    %c0_68 = arith.constant 0 : index
    %c0_69 = arith.constant 0 : index
    %c128_70 = arith.constant 128 : index
    %45 = vector.load %arg8[%c0_68, %c0_69, %c128_70] : memref<4x4x256xbf16, #tpu.memory_space<vmem>>, vector<4x3x128xbf16>
    tpu.vector_store %arg8[%c0_68, %c0_69, %c128_70], %44 {strides = array<i32>} : memref<4x4x256xbf16, #tpu.memory_space<vmem>>, vector<4x3x128xbf16>,
    %c0_71 = arith.constant 0 : index
    %c0_72 = arith.constant 0 : index
    %c0_73 = arith.constant 0 : index
    %46 = vector.load %arg8[%c0_71, %c0_72, %c0_73] : memref<4x4x256xbf16, #tpu.memory_space<vmem>>, vector<4x4x256xbf16>
    %47 = vector.shape_cast %46 : vector<4x4x256xbf16> to vector<16x256xbf16>
    %c2 = arith.constant 2 : index
    %c0_74 = arith.constant 0 : index
    %c0_75 = arith.constant 0 : index
    %48 = vector.load %arg4[%c2, %c0_74, %c0_75] : memref<5x256x128xbf16, #tpu.memory_space<vmem>>, vector<1x256x128xbf16>
    %49 = vector.shape_cast %48 : vector<1x256x128xbf16> to vector<256x128xbf16>
    %cst_76 = arith.constant dense<0.000000e+00> : vector<16x128xf32>
    %50 = tpu.matmul %47, %49, %cst_76 {dimension_numbers = #tpu.dot_dimension_numbers<[1], [0], [0], [1], [0, 0, 1, 1], [], []>} : vector<16x256xbf16>, vector<256x128xbf16>, vector<16x128xf32> -> vector<16x128xf32>
    %51 = arith.addf %39, %50 : vector<16x128xf32>
    %cst_77 = arith.constant 0.000000e+00 : bf16
    %52 = vector.broadcast %cst_77 : bf16 to vector<4x4x256xbf16>
    %c0_78 = arith.constant 0 : index
    %c0_79 = arith.constant 0 : index
    %c0_80 = arith.constant 0 : index
    %53 = vector.load %arg8[%c0_78, %c0_79, %c0_80] : memref<4x4x256xbf16, #tpu.memory_space<vmem>>, vector<4x4x256xbf16>
    tpu.vector_store %arg8[%c0_78, %c0_79, %c0_80], %52 {strides = array<i32>} : memref<4x4x256xbf16, #tpu.memory_space<vmem>>, vector<4x4x256xbf16>,
    %c1_81 = arith.constant 1 : index
    %c0_82 = arith.constant 0 : index
    %c0_83 = arith.constant 0 : index
    %54 = vector.load %arg7[%c1_81, %c0_82, %c0_83] : memref<4x4x128xbf16, #tpu.memory_space<vmem>>, vector<3x3x128xbf16>
    %c0_84 = arith.constant 0 : index
    %c1_85 = arith.constant 1 : index
    %c0_86 = arith.constant 0 : index
    %55 = vector.load %arg8[%c0_84, %c1_85, %c0_86] : memref<4x4x256xbf16, #tpu.memory_space<vmem>>, vector<3x3x128xbf16>
    tpu.vector_store %arg8[%c0_84, %c1_85, %c0_86], %54 {strides = array<i32>} : memref<4x4x256xbf16, #tpu.memory_space<vmem>>, vector<3x3x128xbf16>,
    %c1_87 = arith.constant 1 : index
    %c0_88 = arith.constant 0 : index
    %c0_89 = arith.constant 0 : index
    %56 = vector.load %arg7[%c1_87, %c0_88, %c0_89] : memref<4x4x128xbf16, #tpu.memory_space<vmem>>, vector<3x4x128xbf16>
    %c0_90 = arith.constant 0 : index
    %c0_91 = arith.constant 0 : index
    %c128_92 = arith.constant 128 : index
    %57 = vector.load %arg8[%c0_90, %c0_91, %c128_92] : memref<4x4x256xbf16, #tpu.memory_space<vmem>>, vector<3x4x128xbf16>
    tpu.vector_store %arg8[%c0_90, %c0_91, %c128_92], %56 {strides = array<i32>} : memref<4x4x256xbf16, #tpu.memory_space<vmem>>, vector<3x4x128xbf16>,
    %c0_93 = arith.constant 0 : index
    %c0_94 = arith.constant 0 : index
    %c0_95 = arith.constant 0 : index
    %58 = vector.load %arg8[%c0_93, %c0_94, %c0_95] : memref<4x4x256xbf16, #tpu.memory_space<vmem>>, vector<4x4x256xbf16>
    %59 = vector.shape_cast %58 : vector<4x4x256xbf16> to vector<16x256xbf16>
    %c3 = arith.constant 3 : index
    %c0_96 = arith.constant 0 : index
    %c0_97 = arith.constant 0 : index
    %60 = vector.load %arg4[%c3, %c0_96, %c0_97] : memref<5x256x128xbf16, #tpu.memory_space<vmem>>, vector<1x256x128xbf16>
    %61 = vector.shape_cast %60 : vector<1x256x128xbf16> to vector<256x128xbf16>
    %cst_98 = arith.constant dense<0.000000e+00> : vector<16x128xf32>
    %62 = tpu.matmul %59, %61, %cst_98 {dimension_numbers = #tpu.dot_dimension_numbers<[1], [0], [0], [1], [0, 0, 1, 1], [], []>} : vector<16x256xbf16>, vector<256x128xbf16>, vector<16x128xf32> -> vector<16x128xf32>
    %63 = arith.addf %51, %62 : vector<16x128xf32>
    %cst_99 = arith.constant 0.000000e+00 : bf16
    %64 = vector.broadcast %cst_99 : bf16 to vector<4x4x256xbf16>
    %c0_100 = arith.constant 0 : index
    %c0_101 = arith.constant 0 : index
    %c0_102 = arith.constant 0 : index
    %65 = vector.load %arg8[%c0_100, %c0_101, %c0_102] : memref<4x4x256xbf16, #tpu.memory_space<vmem>>, vector<4x4x256xbf16>
    tpu.vector_store %arg8[%c0_100, %c0_101, %c0_102], %64 {strides = array<i32>} : memref<4x4x256xbf16, #tpu.memory_space<vmem>>, vector<4x4x256xbf16>,
    %c1_103 = arith.constant 1 : index
    %c1_104 = arith.constant 1 : index
    %c0_105 = arith.constant 0 : index
    %66 = vector.load %arg7[%c1_103, %c1_104, %c0_105] : memref<4x4x128xbf16, #tpu.memory_space<vmem>>, vector<3x3x128xbf16>
    %c0_106 = arith.constant 0 : index
    %c0_107 = arith.constant 0 : index
    %c0_108 = arith.constant 0 : index
    %67 = vector.load %arg8[%c0_106, %c0_107, %c0_108] : memref<4x4x256xbf16, #tpu.memory_space<vmem>>, vector<3x3x128xbf16>
    tpu.vector_store %arg8[%c0_106, %c0_107, %c0_108], %66 {strides = array<i32>} : memref<4x4x256xbf16, #tpu.memory_space<vmem>>, vector<3x3x128xbf16>,
    %c0_109 = arith.constant 0 : index
    %c0_110 = arith.constant 0 : index
    %c0_111 = arith.constant 0 : index
    %68 = vector.load %arg8[%c0_109, %c0_110, %c0_111] : memref<4x4x256xbf16, #tpu.memory_space<vmem>>, vector<4x4x256xbf16>
    %69 = vector.shape_cast %68 : vector<4x4x256xbf16> to vector<16x256xbf16>
    %c4 = arith.constant 4 : index
    %c0_112 = arith.constant 0 : index
    %c0_113 = arith.constant 0 : index
    %70 = vector.load %arg4[%c4, %c0_112, %c0_113] : memref<5x256x128xbf16, #tpu.memory_space<vmem>>, vector<1x256x128xbf16>
    %71 = vector.shape_cast %70 : vector<1x256x128xbf16> to vector<256x128xbf16>
    %cst_114 = arith.constant dense<0.000000e+00> : vector<16x128xf32>
    %72 = tpu.matmul %69, %71, %cst_114 {dimension_numbers = #tpu.dot_dimension_numbers<[1], [0], [0], [1], [0, 0, 1, 1], [], []>} : vector<16x256xbf16>, vector<256x128xbf16>, vector<16x128xf32> -> vector<16x128xf32>
    %73 = arith.addf %63, %72 : vector<16x128xf32>
    %cst_115 = arith.constant dense<0.000000e+00> : vector<128xf32>
    %74 = vector.multi_reduction <add>, %73, %cst_115 [0] : vector<16x128xf32> to vector<128xf32>
    %75 = vector.shape_cast %74 : vector<128xf32> to vector<1x128xf32>
    %c0_116 = arith.constant 0 : index
    %c0_117 = arith.constant 0 : index
    %c0_118 = arith.constant 0 : index
    %76 = vector.load %arg6[%c0_116, %c0_117, %c0_118] : memref<1x2x128xf32, #tpu.memory_space<vmem>>, vector<1x1x128xf32>
    %77 = vector.shape_cast %76 : vector<1x1x128xf32> to vector<1x128xf32>
    %78 = vector.shape_cast %75 : vector<1x128xf32> to vector<1x1x128xf32>
    tpu.vector_store %arg6[%c0_116, %c0_117, %c0_118], %78 {strides = array<i32>} : memref<1x2x128xf32, #tpu.memory_space<vmem>>, vector<1x1x128xf32>,
    %79 = arith.mulf %73, %73 : vector<16x128xf32>
    %cst_119 = arith.constant dense<0.000000e+00> : vector<128xf32>
    %80 = vector.multi_reduction <add>, %79, %cst_119 [0] : vector<16x128xf32> to vector<128xf32>
    %81 = vector.shape_cast %80 : vector<128xf32> to vector<1x128xf32>
    %c0_120 = arith.constant 0 : index
    %c1_121 = arith.constant 1 : index
    %c0_122 = arith.constant 0 : index
    %82 = vector.load %arg6[%c0_120, %c1_121, %c0_122] : memref<1x2x128xf32, #tpu.memory_space<vmem>>, vector<1x1x128xf32>
    %83 = vector.shape_cast %82 : vector<1x1x128xf32> to vector<1x128xf32>
    %84 = vector.shape_cast %81 : vector<1x128xf32> to vector<1x1x128xf32>
    tpu.vector_store %arg6[%c0_120, %c1_121, %c0_122], %84 {strides = array<i32>} : memref<1x2x128xf32, #tpu.memory_space<vmem>>, vector<1x1x128xf32>,
    %85 = vector.shape_cast %73 : vector<16x128xf32> to vector<1x4x4x128xf32>
    %86 = arith.truncf %85 : vector<1x4x4x128xf32> to vector<1x4x4x128xbf16>
    %c0_123 = arith.constant 0 : index
    %c0_124 = arith.constant 0 : index
    %c0_125 = arith.constant 0 : index
    %c0_126 = arith.constant 0 : index
    %87 = vector.load %arg5[%c0_123, %c0_124, %c0_125, %c0_126] : memref<1x4x4x128xbf16, #tpu.memory_space<vmem>>, vector<1x4x4x128xbf16>
    tpu.vector_store %arg5[%c0_123, %c0_124, %c0_125, %c0_126], %86 {strides = array<i32>} : memref<1x4x4x128xbf16, #tpu.memory_space<vmem>>, vector<1x4x4x128xbf16>,
    return
  }
  func.func @transform_0(%arg0: i32) -> (i32, i32, i32, i32) {
    %c0_i32 = arith.constant 0 : i32
    %c0_i32_0 = arith.constant 0 : i32
    %c0_i32_1 = arith.constant 0 : i32
    %c0_i32_2 = arith.constant 0 : i32
    return %arg0, %c0_i32, %c0_i32_0, %c0_i32_1 : i32, i32, i32, i32
  }
  func.func @transform_1(%arg0: i32) -> (i32, i32) {
    %c0_i32 = arith.constant 0 : i32
    %c0_i32_0 = arith.constant 0 : i32
    %c0_i32_1 = arith.constant 0 : i32
    return %c0_i32, %c0_i32_0 : i32, i32
  }
  func.func @transform_2(%arg0: i32) -> (i32, i32) {
    %c0_i32 = arith.constant 0 : i32
    %c0_i32_0 = arith.constant 0 : i32
    %c0_i32_1 = arith.constant 0 : i32
    return %c0_i32, %c0_i32_0 : i32, i32
  }
  func.func @transform_3(%arg0: i32) -> (i32, i32, i32) {
    %c0_i32 = arith.constant 0 : i32
    %c0_i32_0 = arith.constant 0 : i32
    %c0_i32_1 = arith.constant 0 : i32
    %c0_i32_2 = arith.constant 0 : i32
    return %c0_i32, %c0_i32_0, %c0_i32_1 : i32, i32, i32
  }
  func.func @transform_4(%arg0: i32) -> (i32, i32, i32, i32) {
    %c0_i32 = arith.constant 0 : i32
    %c0_i32_0 = arith.constant 0 : i32
    %c0_i32_1 = arith.constant 0 : i32
    %c0_i32_2 = arith.constant 0 : i32
    return %arg0, %c0_i32, %c0_i32_0, %c0_i32_1 : i32, i32, i32, i32
  }
  func.func @transform_5(%arg0: i32) -> (i32, i32, i32) {
    %c0_i32 = arith.constant 0 : i32
    %c0_i32_0 = arith.constant 0 : i32
    %c0_i32_1 = arith.constant 0 : i32
    return %arg0, %c0_i32, %c0_i32_0 : i32, i32, i32
  }
}

module attributes {stable_mosaic.version = 11 : i64} {
  func.func @_head_kernel(%arg0: i32, %arg1: memref<2x16x128xbf16, #tpu.memory_space<vmem>>, %arg2: memref<128x128xbf16, #tpu.memory_space<vmem>>, %arg3: memref<1x128xf32, #tpu.memory_space<vmem>>, %arg4: memref<2x128xf32, #tpu.memory_space<vmem>>) attributes {dimension_semantics = [#tpu.dimension_semantics<parallel>], iteration_bounds = array<i64: 1>, scalar_prefetch = 0 : i64, scratch_operands = 0 : i64, tpu.core_type = #tpu.core_type<tc>, window_params = [{pipeline_mode = #tpu.pipeline_mode<synchronous>, transform_indices = @transform_0, window_bounds = array<i64: 2, 16, 128>}, {pipeline_mode = #tpu.pipeline_mode<synchronous>, transform_indices = @transform_1, window_bounds = array<i64: 128, 128>}, {pipeline_mode = #tpu.pipeline_mode<synchronous>, transform_indices = @transform_2, window_bounds = array<i64: 1, 128>}, {pipeline_mode = #tpu.pipeline_mode<synchronous>, transform_indices = @transform_3, window_bounds = array<i64: 2, 128>}]} {
    %c0 = arith.constant 0 : index
    %c0_0 = arith.constant 0 : index
    %c0_1 = arith.constant 0 : index
    %0 = vector.load %arg1[%c0, %c0_0, %c0_1] : memref<2x16x128xbf16, #tpu.memory_space<vmem>>, vector<2x16x128xbf16>
    %1 = arith.extf %0 : vector<2x16x128xbf16> to vector<2x16x128xf32>
    %cst = arith.constant dense<0.000000e+00> : vector<2x128xf32>
    %2 = vector.multi_reduction <add>, %1, %cst [1] : vector<2x16x128xf32> to vector<2x128xf32>
    %cst_2 = arith.constant 1.600000e+01 : f32
    %3 = vector.broadcast %cst_2 : f32 to vector<2x128xf32>
    %4 = arith.divf %2, %3 : vector<2x128xf32>
    %5 = arith.truncf %4 : vector<2x128xf32> to vector<2x128xbf16>
    %c0_3 = arith.constant 0 : index
    %c0_4 = arith.constant 0 : index
    %6 = vector.load %arg2[%c0_3, %c0_4] : memref<128x128xbf16, #tpu.memory_space<vmem>>, vector<128x128xbf16>
    %cst_5 = arith.constant dense<0.000000e+00> : vector<2x128xf32>
    %7 = tpu.matmul %5, %6, %cst_5 {dimension_numbers = #tpu.dot_dimension_numbers<[1], [0], [0], [1], [0, 0, 1, 1], [], []>} : vector<2x128xbf16>, vector<128x128xbf16>, vector<2x128xf32> -> vector<2x128xf32>
    %c0_6 = arith.constant 0 : index
    %c0_7 = arith.constant 0 : index
    %8 = vector.load %arg3[%c0_6, %c0_7] : memref<1x128xf32, #tpu.memory_space<vmem>>, vector<1x128xf32>
    %9 = vector.broadcast %8 : vector<1x128xf32> to vector<2x128xf32>
    %10 = arith.addf %7, %9 : vector<2x128xf32>
    %c0_8 = arith.constant 0 : index
    %c0_9 = arith.constant 0 : index
    %11 = vector.load %arg4[%c0_8, %c0_9] : memref<2x128xf32, #tpu.memory_space<vmem>>, vector<2x128xf32>
    tpu.vector_store %arg4[%c0_8, %c0_9], %10 {strides = array<i32>} : memref<2x128xf32, #tpu.memory_space<vmem>>, vector<2x128xf32>,
    return
  }
  func.func @transform_0(%arg0: i32) -> (i32, i32, i32) {
    %c0_i32 = arith.constant 0 : i32
    %c0_i32_0 = arith.constant 0 : i32
    %c0_i32_1 = arith.constant 0 : i32
    %c0_i32_2 = arith.constant 0 : i32
    return %c0_i32, %c0_i32_0, %c0_i32_1 : i32, i32, i32
  }
  func.func @transform_1(%arg0: i32) -> (i32, i32) {
    %c0_i32 = arith.constant 0 : i32
    %c0_i32_0 = arith.constant 0 : i32
    %c0_i32_1 = arith.constant 0 : i32
    return %c0_i32, %c0_i32_0 : i32, i32
  }
  func.func @transform_2(%arg0: i32) -> (i32, i32) {
    %c0_i32 = arith.constant 0 : i32
    %c0_i32_0 = arith.constant 0 : i32
    %c0_i32_1 = arith.constant 0 : i32
    return %c0_i32, %c0_i32_0 : i32, i32
  }
  func.func @transform_3(%arg0: i32) -> (i32, i32) {
    %c0_i32 = arith.constant 0 : i32
    %c0_i32_0 = arith.constant 0 : i32
    %c0_i32_1 = arith.constant 0 : i32
    return %c0_i32, %c0_i32_0 : i32, i32
  }
}

module attributes {stable_mosaic.version = 11 : i64} {
  func.func @_conv3x3_kernel(%arg0: i32, %arg1: memref<1x4x4x128xbf16, #tpu.memory_space<vmem>>, %arg2: memref<1x128xf32, #tpu.memory_space<vmem>>, %arg3: memref<1x128xf32, #tpu.memory_space<vmem>>, %arg4: memref<5x256x128xbf16, #tpu.memory_space<vmem>>, %arg5: memref<1x4x4x128xbf16, #tpu.memory_space<vmem>>, %arg6: memref<1x2x128xf32, #tpu.memory_space<vmem>>, %arg7: memref<4x4x128xbf16, #tpu.memory_space<vmem>>, %arg8: memref<4x4x256xbf16, #tpu.memory_space<vmem>>) attributes {dimension_semantics = [#tpu.dimension_semantics<parallel>], iteration_bounds = array<i64: 2>, scalar_prefetch = 0 : i64, scratch_operands = 2 : i64, tpu.core_type = #tpu.core_type<tc>, window_params = [{transform_indices = @transform_0, window_bounds = array<i64: 1, 4, 4, 128>}, {pipeline_mode = #tpu.pipeline_mode<synchronous>, transform_indices = @transform_1, window_bounds = array<i64: 1, 128>}, {pipeline_mode = #tpu.pipeline_mode<synchronous>, transform_indices = @transform_2, window_bounds = array<i64: 1, 128>}, {pipeline_mode = #tpu.pipeline_mode<synchronous>, transform_indices = @transform_3, window_bounds = array<i64: 5, 256, 128>}, {transform_indices = @transform_4, window_bounds = array<i64: 1, 4, 4, 128>}, {transform_indices = @transform_5, window_bounds = array<i64: 1, 2, 128>}]} {
    %c0 = arith.constant 0 : index
    %c0_0 = arith.constant 0 : index
    %c0_1 = arith.constant 0 : index
    %c0_2 = arith.constant 0 : index
    %0 = vector.load %arg1[%c0, %c0_0, %c0_1, %c0_2] : memref<1x4x4x128xbf16, #tpu.memory_space<vmem>>, vector<1x4x4x128xbf16>
    %1 = vector.shape_cast %0 : vector<1x4x4x128xbf16> to vector<4x4x128xbf16>
    %c0_3 = arith.constant 0 : index
    %c0_4 = arith.constant 0 : index
    %c0_5 = arith.constant 0 : index
    %2 = vector.load %arg7[%c0_3, %c0_4, %c0_5] : memref<4x4x128xbf16, #tpu.memory_space<vmem>>, vector<4x4x128xbf16>
    tpu.vector_store %arg7[%c0_3, %c0_4, %c0_5], %1 {strides = array<i32>} : memref<4x4x128xbf16, #tpu.memory_space<vmem>>, vector<4x4x128xbf16>,
    %cst = arith.constant 0.000000e+00 : f32
    %3 = vector.broadcast %cst : f32 to vector<16x128xf32>
    %cst_6 = arith.constant 0.000000e+00 : bf16
    %4 = vector.broadcast %cst_6 : bf16 to vector<4x4x256xbf16>
    %c0_7 = arith.constant 0 : index
    %c0_8 = arith.constant 0 : index
    %c0_9 = arith.constant 0 : index
    %5 = vector.load %arg8[%c0_7, %c0_8, %c0_9] : memref<4x4x256xbf16, #tpu.memory_space<vmem>>, vector<4x4x256xbf16>
    tpu.vector_store %arg8[%c0_7, %c0_8, %c0_9], %4 {strides = array<i32>} : memref<4x4x256xbf16, #tpu.memory_space<vmem>>, vector<4x4x256xbf16>,
    %c0_10 = arith.constant 0 : index
    %c0_11 = arith.constant 0 : index
    %c0_12 = arith.constant 0 : index
    %6 = vector.load %arg7[%c0_10, %c0_11, %c0_12] : memref<4x4x128xbf16, #tpu.memory_space<vmem>>, vector<3x3x128xbf16>
    %c1 = arith.constant 1 : index
    %c1_13 = arith.constant 1 : index
    %c0_14 = arith.constant 0 : index
    %7 = vector.load %arg8[%c1, %c1_13, %c0_14] : memref<4x4x256xbf16, #tpu.memory_space<vmem>>, vector<3x3x128xbf16>
    tpu.vector_store %arg8[%c1, %c1_13, %c0_14], %6 {strides = array<i32>} : memref<4x4x256xbf16, #tpu.memory_space<vmem>>, vector<3x3x128xbf16>,
    %c0_15 = arith.constant 0 : index
    %c0_16 = arith.constant 0 : index
    %c0_17 = arith.constant 0 : index
    %8 = vector.load %arg7[%c0_15, %c0_16, %c0_17] : memref<4x4x128xbf16, #tpu.memory_space<vmem>>, vector<3x4x128xbf16>
    %c1_18 = arith.constant 1 : index
    %c0_19 = arith.constant 0 : index
    %c128 = arith.constant 128 : index
    %9 = vector.load %arg8[%c1_18, %c0_19, %c128] : memref<4x4x256xbf16, #tpu.memory_space<vmem>>, vector<3x4x128xbf16>
    tpu.vector_store %arg8[%c1_18, %c0_19, %c128], %8 {strides = array<i32>} : memref<4x4x256xbf16, #tpu.memory_space<vmem>>, vector<3x4x128xbf16>,
    %c0_20 = arith.constant 0 : index
    %c0_21 = arith.constant 0 : index
    %c0_22 = arith.constant 0 : index
    %10 = vector.load %arg8[%c0_20, %c0_21, %c0_22] : memref<4x4x256xbf16, #tpu.memory_space<vmem>>, vector<4x4x256xbf16>
    %11 = vector.shape_cast %10 : vector<4x4x256xbf16> to vector<16x256xbf16>
    %c0_23 = arith.constant 0 : index
    %c0_24 = arith.constant 0 : index
    %c0_25 = arith.constant 0 : index
    %12 = vector.load %arg4[%c0_23, %c0_24, %c0_25] : memref<5x256x128xbf16, #tpu.memory_space<vmem>>, vector<1x256x128xbf16>
    %13 = vector.shape_cast %12 : vector<1x256x128xbf16> to vector<256x128xbf16>
    %cst_26 = arith.constant dense<0.000000e+00> : vector<16x128xf32>
    %14 = tpu.matmul %11, %13, %cst_26 {dimension_numbers = #tpu.dot_dimension_numbers<[1], [0], [0], [1], [0, 0, 1, 1], [], []>} : vector<16x256xbf16>, vector<256x128xbf16>, vector<16x128xf32> -> vector<16x128xf32>
    %15 = arith.addf %3, %14 : vector<16x128xf32>
    %cst_27 = arith.constant 0.000000e+00 : bf16
    %16 = vector.broadcast %cst_27 : bf16 to vector<4x4x256xbf16>
    %c0_28 = arith.constant 0 : index
    %c0_29 = arith.constant 0 : index
    %c0_30 = arith.constant 0 : index
    %17 = vector.load %arg8[%c0_28, %c0_29, %c0_30] : memref<4x4x256xbf16, #tpu.memory_space<vmem>>, vector<4x4x256xbf16>
    tpu.vector_store %arg8[%c0_28, %c0_29, %c0_30], %16 {strides = array<i32>} : memref<4x4x256xbf16, #tpu.memory_space<vmem>>, vector<4x4x256xbf16>,
    %c0_31 = arith.constant 0 : index
    %c1_32 = arith.constant 1 : index
    %c0_33 = arith.constant 0 : index
    %18 = vector.load %arg7[%c0_31, %c1_32, %c0_33] : memref<4x4x128xbf16, #tpu.memory_space<vmem>>, vector<3x3x128xbf16>
    %c1_34 = arith.constant 1 : index
    %c0_35 = arith.constant 0 : index
    %c0_36 = arith.constant 0 : index
    %19 = vector.load %arg8[%c1_34, %c0_35, %c0_36] : memref<4x4x256xbf16, #tpu.memory_space<vmem>>, vector<3x3x128xbf16>
    tpu.vector_store %arg8[%c1_34, %c0_35, %c0_36], %18 {strides = array<i32>} : memref<4x4x256xbf16, #tpu.memory_space<vmem>>, vector<3x3x128xbf16>,
    %c0_37 = arith.constant 0 : index
    %c0_38 = arith.constant 0 : index
    %c0_39 = arith.constant 0 : index
    %20 = vector.load %arg7[%c0_37, %c0_38, %c0_39] : memref<4x4x128xbf16, #tpu.memory_space<vmem>>, vector<4x3x128xbf16>
    %c0_40 = arith.constant 0 : index
    %c1_41 = arith.constant 1 : index
    %c128_42 = arith.constant 128 : index
    %21 = vector.load %arg8[%c0_40, %c1_41, %c128_42] : memref<4x4x256xbf16, #tpu.memory_space<vmem>>, vector<4x3x128xbf16>
    tpu.vector_store %arg8[%c0_40, %c1_41, %c128_42], %20 {strides = array<i32>} : memref<4x4x256xbf16, #tpu.memory_space<vmem>>, vector<4x3x128xbf16>,
    %c0_43 = arith.constant 0 : index
    %c0_44 = arith.constant 0 : index
    %c0_45 = arith.constant 0 : index
    %22 = vector.load %arg8[%c0_43, %c0_44, %c0_45] : memref<4x4x256xbf16, #tpu.memory_space<vmem>>, vector<4x4x256xbf16>
    %23 = vector.shape_cast %22 : vector<4x4x256xbf16> to vector<16x256xbf16>
    %c1_46 = arith.constant 1 : index
    %c0_47 = arith.constant 0 : index
    %c0_48 = arith.constant 0 : index
    %24 = vector.load %arg4[%c1_46, %c0_47, %c0_48] : memref<5x256x128xbf16, #tpu.memory_space<vmem>>, vector<1x256x128xbf16>
    %25 = vector.shape_cast %24 : vector<1x256x128xbf16> to vector<256x128xbf16>
    %cst_49 = arith.constant dense<0.000000e+00> : vector<16x128xf32>
    %26 = tpu.matmul %23, %25, %cst_49 {dimension_numbers = #tpu.dot_dimension_numbers<[1], [0], [0], [1], [0, 0, 1, 1], [], []>} : vector<16x256xbf16>, vector<256x128xbf16>, vector<16x128xf32> -> vector<16x128xf32>
    %27 = arith.addf %15, %26 : vector<16x128xf32>
    %cst_50 = arith.constant 0.000000e+00 : bf16
    %28 = vector.broadcast %cst_50 : bf16 to vector<4x4x256xbf16>
    %c0_51 = arith.constant 0 : index
    %c0_52 = arith.constant 0 : index
    %c0_53 = arith.constant 0 : index
    %29 = vector.load %arg8[%c0_51, %c0_52, %c0_53] : memref<4x4x256xbf16, #tpu.memory_space<vmem>>, vector<4x4x256xbf16>
    tpu.vector_store %arg8[%c0_51, %c0_52, %c0_53], %28 {strides = array<i32>} : memref<4x4x256xbf16, #tpu.memory_space<vmem>>, vector<4x4x256xbf16>,
    %c0_54 = arith.constant 0 : index
    %c0_55 = arith.constant 0 : index
    %c0_56 = arith.constant 0 : index
    %30 = vector.load %arg7[%c0_54, %c0_55, %c0_56] : memref<4x4x128xbf16, #tpu.memory_space<vmem>>, vector<4x4x128xbf16>
    %c0_57 = arith.constant 0 : index
    %c0_58 = arith.constant 0 : index
    %c0_59 = arith.constant 0 : index
    %31 = vector.load %arg8[%c0_57, %c0_58, %c0_59] : memref<4x4x256xbf16, #tpu.memory_space<vmem>>, vector<4x4x128xbf16>
    tpu.vector_store %arg8[%c0_57, %c0_58, %c0_59], %30 {strides = array<i32>} : memref<4x4x256xbf16, #tpu.memory_space<vmem>>, vector<4x4x128xbf16>,
    %c0_60 = arith.constant 0 : index
    %c1_61 = arith.constant 1 : index
    %c0_62 = arith.constant 0 : index
    %32 = vector.load %arg7[%c0_60, %c1_61, %c0_62] : memref<4x4x128xbf16, #tpu.memory_space<vmem>>, vector<4x3x128xbf16>
    %c0_63 = arith.constant 0 : index
    %c0_64 = arith.constant 0 : index
    %c128_65 = arith.constant 128 : index
    %33 = vector.load %arg8[%c0_63, %c0_64, %c128_65] : memref<4x4x256xbf16, #tpu.memory_space<vmem>>, vector<4x3x128xbf16>
    tpu.vector_store %arg8[%c0_63, %c0_64, %c128_65], %32 {strides = array<i32>} : memref<4x4x256xbf16, #tpu.memory_space<vmem>>, vector<4x3x128xbf16>,
    %c0_66 = arith.constant 0 : index
    %c0_67 = arith.constant 0 : index
    %c0_68 = arith.constant 0 : index
    %34 = vector.load %arg8[%c0_66, %c0_67, %c0_68] : memref<4x4x256xbf16, #tpu.memory_space<vmem>>, vector<4x4x256xbf16>
    %35 = vector.shape_cast %34 : vector<4x4x256xbf16> to vector<16x256xbf16>
    %c2 = arith.constant 2 : index
    %c0_69 = arith.constant 0 : index
    %c0_70 = arith.constant 0 : index
    %36 = vector.load %arg4[%c2, %c0_69, %c0_70] : memref<5x256x128xbf16, #tpu.memory_space<vmem>>, vector<1x256x128xbf16>
    %37 = vector.shape_cast %36 : vector<1x256x128xbf16> to vector<256x128xbf16>
    %cst_71 = arith.constant dense<0.000000e+00> : vector<16x128xf32>
    %38 = tpu.matmul %35, %37, %cst_71 {dimension_numbers = #tpu.dot_dimension_numbers<[1], [0], [0], [1], [0, 0, 1, 1], [], []>} : vector<16x256xbf16>, vector<256x128xbf16>, vector<16x128xf32> -> vector<16x128xf32>
    %39 = arith.addf %27, %38 : vector<16x128xf32>
    %cst_72 = arith.constant 0.000000e+00 : bf16
    %40 = vector.broadcast %cst_72 : bf16 to vector<4x4x256xbf16>
    %c0_73 = arith.constant 0 : index
    %c0_74 = arith.constant 0 : index
    %c0_75 = arith.constant 0 : index
    %41 = vector.load %arg8[%c0_73, %c0_74, %c0_75] : memref<4x4x256xbf16, #tpu.memory_space<vmem>>, vector<4x4x256xbf16>
    tpu.vector_store %arg8[%c0_73, %c0_74, %c0_75], %40 {strides = array<i32>} : memref<4x4x256xbf16, #tpu.memory_space<vmem>>, vector<4x4x256xbf16>,
    %c1_76 = arith.constant 1 : index
    %c0_77 = arith.constant 0 : index
    %c0_78 = arith.constant 0 : index
    %42 = vector.load %arg7[%c1_76, %c0_77, %c0_78] : memref<4x4x128xbf16, #tpu.memory_space<vmem>>, vector<3x3x128xbf16>
    %c0_79 = arith.constant 0 : index
    %c1_80 = arith.constant 1 : index
    %c0_81 = arith.constant 0 : index
    %43 = vector.load %arg8[%c0_79, %c1_80, %c0_81] : memref<4x4x256xbf16, #tpu.memory_space<vmem>>, vector<3x3x128xbf16>
    tpu.vector_store %arg8[%c0_79, %c1_80, %c0_81], %42 {strides = array<i32>} : memref<4x4x256xbf16, #tpu.memory_space<vmem>>, vector<3x3x128xbf16>,
    %c1_82 = arith.constant 1 : index
    %c0_83 = arith.constant 0 : index
    %c0_84 = arith.constant 0 : index
    %44 = vector.load %arg7[%c1_82, %c0_83, %c0_84] : memref<4x4x128xbf16, #tpu.memory_space<vmem>>, vector<3x4x128xbf16>
    %c0_85 = arith.constant 0 : index
    %c0_86 = arith.constant 0 : index
    %c128_87 = arith.constant 128 : index
    %45 = vector.load %arg8[%c0_85, %c0_86, %c128_87] : memref<4x4x256xbf16, #tpu.memory_space<vmem>>, vector<3x4x128xbf16>
    tpu.vector_store %arg8[%c0_85, %c0_86, %c128_87], %44 {strides = array<i32>} : memref<4x4x256xbf16, #tpu.memory_space<vmem>>, vector<3x4x128xbf16>,
    %c0_88 = arith.constant 0 : index
    %c0_89 = arith.constant 0 : index
    %c0_90 = arith.constant 0 : index
    %46 = vector.load %arg8[%c0_88, %c0_89, %c0_90] : memref<4x4x256xbf16, #tpu.memory_space<vmem>>, vector<4x4x256xbf16>
    %47 = vector.shape_cast %46 : vector<4x4x256xbf16> to vector<16x256xbf16>
    %c3 = arith.constant 3 : index
    %c0_91 = arith.constant 0 : index
    %c0_92 = arith.constant 0 : index
    %48 = vector.load %arg4[%c3, %c0_91, %c0_92] : memref<5x256x128xbf16, #tpu.memory_space<vmem>>, vector<1x256x128xbf16>
    %49 = vector.shape_cast %48 : vector<1x256x128xbf16> to vector<256x128xbf16>
    %cst_93 = arith.constant dense<0.000000e+00> : vector<16x128xf32>
    %50 = tpu.matmul %47, %49, %cst_93 {dimension_numbers = #tpu.dot_dimension_numbers<[1], [0], [0], [1], [0, 0, 1, 1], [], []>} : vector<16x256xbf16>, vector<256x128xbf16>, vector<16x128xf32> -> vector<16x128xf32>
    %51 = arith.addf %39, %50 : vector<16x128xf32>
    %cst_94 = arith.constant 0.000000e+00 : bf16
    %52 = vector.broadcast %cst_94 : bf16 to vector<4x4x256xbf16>
    %c0_95 = arith.constant 0 : index
    %c0_96 = arith.constant 0 : index
    %c0_97 = arith.constant 0 : index
    %53 = vector.load %arg8[%c0_95, %c0_96, %c0_97] : memref<4x4x256xbf16, #tpu.memory_space<vmem>>, vector<4x4x256xbf16>
    tpu.vector_store %arg8[%c0_95, %c0_96, %c0_97], %52 {strides = array<i32>} : memref<4x4x256xbf16, #tpu.memory_space<vmem>>, vector<4x4x256xbf16>,
    %c1_98 = arith.constant 1 : index
    %c1_99 = arith.constant 1 : index
    %c0_100 = arith.constant 0 : index
    %54 = vector.load %arg7[%c1_98, %c1_99, %c0_100] : memref<4x4x128xbf16, #tpu.memory_space<vmem>>, vector<3x3x128xbf16>
    %c0_101 = arith.constant 0 : index
    %c0_102 = arith.constant 0 : index
    %c0_103 = arith.constant 0 : index
    %55 = vector.load %arg8[%c0_101, %c0_102, %c0_103] : memref<4x4x256xbf16, #tpu.memory_space<vmem>>, vector<3x3x128xbf16>
    tpu.vector_store %arg8[%c0_101, %c0_102, %c0_103], %54 {strides = array<i32>} : memref<4x4x256xbf16, #tpu.memory_space<vmem>>, vector<3x3x128xbf16>,
    %c0_104 = arith.constant 0 : index
    %c0_105 = arith.constant 0 : index
    %c0_106 = arith.constant 0 : index
    %56 = vector.load %arg8[%c0_104, %c0_105, %c0_106] : memref<4x4x256xbf16, #tpu.memory_space<vmem>>, vector<4x4x256xbf16>
    %57 = vector.shape_cast %56 : vector<4x4x256xbf16> to vector<16x256xbf16>
    %c4 = arith.constant 4 : index
    %c0_107 = arith.constant 0 : index
    %c0_108 = arith.constant 0 : index
    %58 = vector.load %arg4[%c4, %c0_107, %c0_108] : memref<5x256x128xbf16, #tpu.memory_space<vmem>>, vector<1x256x128xbf16>
    %59 = vector.shape_cast %58 : vector<1x256x128xbf16> to vector<256x128xbf16>
    %cst_109 = arith.constant dense<0.000000e+00> : vector<16x128xf32>
    %60 = tpu.matmul %57, %59, %cst_109 {dimension_numbers = #tpu.dot_dimension_numbers<[1], [0], [0], [1], [0, 0, 1, 1], [], []>} : vector<16x256xbf16>, vector<256x128xbf16>, vector<16x128xf32> -> vector<16x128xf32>
    %61 = arith.addf %51, %60 : vector<16x128xf32>
    %cst_110 = arith.constant dense<0.000000e+00> : vector<128xf32>
    %62 = vector.multi_reduction <add>, %61, %cst_110 [0] : vector<16x128xf32> to vector<128xf32>
    %63 = vector.shape_cast %62 : vector<128xf32> to vector<1x128xf32>
    %c0_111 = arith.constant 0 : index
    %c0_112 = arith.constant 0 : index
    %c0_113 = arith.constant 0 : index
    %64 = vector.load %arg6[%c0_111, %c0_112, %c0_113] : memref<1x2x128xf32, #tpu.memory_space<vmem>>, vector<1x1x128xf32>
    %65 = vector.shape_cast %64 : vector<1x1x128xf32> to vector<1x128xf32>
    %66 = vector.shape_cast %63 : vector<1x128xf32> to vector<1x1x128xf32>
    tpu.vector_store %arg6[%c0_111, %c0_112, %c0_113], %66 {strides = array<i32>} : memref<1x2x128xf32, #tpu.memory_space<vmem>>, vector<1x1x128xf32>,
    %67 = arith.mulf %61, %61 : vector<16x128xf32>
    %cst_114 = arith.constant dense<0.000000e+00> : vector<128xf32>
    %68 = vector.multi_reduction <add>, %67, %cst_114 [0] : vector<16x128xf32> to vector<128xf32>
    %69 = vector.shape_cast %68 : vector<128xf32> to vector<1x128xf32>
    %c0_115 = arith.constant 0 : index
    %c1_116 = arith.constant 1 : index
    %c0_117 = arith.constant 0 : index
    %70 = vector.load %arg6[%c0_115, %c1_116, %c0_117] : memref<1x2x128xf32, #tpu.memory_space<vmem>>, vector<1x1x128xf32>
    %71 = vector.shape_cast %70 : vector<1x1x128xf32> to vector<1x128xf32>
    %72 = vector.shape_cast %69 : vector<1x128xf32> to vector<1x1x128xf32>
    tpu.vector_store %arg6[%c0_115, %c1_116, %c0_117], %72 {strides = array<i32>} : memref<1x2x128xf32, #tpu.memory_space<vmem>>, vector<1x1x128xf32>,
    %73 = vector.shape_cast %61 : vector<16x128xf32> to vector<1x4x4x128xf32>
    %74 = arith.truncf %73 : vector<1x4x4x128xf32> to vector<1x4x4x128xbf16>
    %c0_118 = arith.constant 0 : index
    %c0_119 = arith.constant 0 : index
    %c0_120 = arith.constant 0 : index
    %c0_121 = arith.constant 0 : index
    %75 = vector.load %arg5[%c0_118, %c0_119, %c0_120, %c0_121] : memref<1x4x4x128xbf16, #tpu.memory_space<vmem>>, vector<1x4x4x128xbf16>
    tpu.vector_store %arg5[%c0_118, %c0_119, %c0_120, %c0_121], %74 {strides = array<i32>} : memref<1x4x4x128xbf16, #tpu.memory_space<vmem>>, vector<1x4x4x128xbf16>,
    return
  }
  func.func @transform_0(%arg0: i32) -> (i32, i32, i32, i32) {
    %c0_i32 = arith.constant 0 : i32
    %c0_i32_0 = arith.constant 0 : i32
    %c0_i32_1 = arith.constant 0 : i32
    %c0_i32_2 = arith.constant 0 : i32
    return %arg0, %c0_i32, %c0_i32_0, %c0_i32_1 : i32, i32, i32, i32
  }
  func.func @transform_1(%arg0: i32) -> (i32, i32) {
    %c0_i32 = arith.constant 0 : i32
    %c0_i32_0 = arith.constant 0 : i32
    %c0_i32_1 = arith.constant 0 : i32
    return %c0_i32, %c0_i32_0 : i32, i32
  }
  func.func @transform_2(%arg0: i32) -> (i32, i32) {
    %c0_i32 = arith.constant 0 : i32
    %c0_i32_0 = arith.constant 0 : i32
    %c0_i32_1 = arith.constant 0 : i32
    return %c0_i32, %c0_i32_0 : i32, i32
  }
  func.func @transform_3(%arg0: i32) -> (i32, i32, i32) {
    %c0_i32 = arith.constant 0 : i32
    %c0_i32_0 = arith.constant 0 : i32
    %c0_i32_1 = arith.constant 0 : i32
    %c0_i32_2 = arith.constant 0 : i32
    return %c0_i32, %c0_i32_0, %c0_i32_1 : i32, i32, i32
  }
  func.func @transform_4(%arg0: i32) -> (i32, i32, i32, i32) {
    %c0_i32 = arith.constant 0 : i32
    %c0_i32_0 = arith.constant 0 : i32
    %c0_i32_1 = arith.constant 0 : i32
    %c0_i32_2 = arith.constant 0 : i32
    return %arg0, %c0_i32, %c0_i32_0, %c0_i32_1 : i32, i32, i32, i32
  }
  func.func @transform_5(%arg0: i32) -> (i32, i32, i32) {
    %c0_i32 = arith.constant 0 : i32
    %c0_i32_0 = arith.constant 0 : i32
    %c0_i32_1 = arith.constant 0 : i32
    return %arg0, %c0_i32, %c0_i32_0 : i32, i32, i32
  }
}

module attributes {stable_mosaic.version = 11 : i64} {
  func.func @_affine_add_kernel(%arg0: i32, %arg1: memref<32x128xbf16, #tpu.memory_space<vmem>>, %arg2: memref<1x128xf32, #tpu.memory_space<vmem>>, %arg3: memref<1x128xf32, #tpu.memory_space<vmem>>, %arg4: memref<32x128xbf16, #tpu.memory_space<vmem>>, %arg5: memref<32x128xbf16, #tpu.memory_space<vmem>>) attributes {dimension_semantics = [#tpu.dimension_semantics<parallel>], iteration_bounds = array<i64: 1>, scalar_prefetch = 0 : i64, scratch_operands = 0 : i64, tpu.core_type = #tpu.core_type<tc>, window_params = [{transform_indices = @transform_0, window_bounds = array<i64: 32, 128>}, {pipeline_mode = #tpu.pipeline_mode<synchronous>, transform_indices = @transform_1, window_bounds = array<i64: 1, 128>}, {pipeline_mode = #tpu.pipeline_mode<synchronous>, transform_indices = @transform_2, window_bounds = array<i64: 1, 128>}, {transform_indices = @transform_3, window_bounds = array<i64: 32, 128>}, {transform_indices = @transform_4, window_bounds = array<i64: 32, 128>}]} {
    %c0 = arith.constant 0 : index
    %c0_0 = arith.constant 0 : index
    %0 = vector.load %arg1[%c0, %c0_0] : memref<32x128xbf16, #tpu.memory_space<vmem>>, vector<32x128xbf16>
    %1 = arith.extf %0 : vector<32x128xbf16> to vector<32x128xf32>
    %c0_1 = arith.constant 0 : index
    %c0_2 = arith.constant 0 : index
    %2 = vector.load %arg2[%c0_1, %c0_2] : memref<1x128xf32, #tpu.memory_space<vmem>>, vector<1x128xf32>
    %3 = vector.broadcast %2 : vector<1x128xf32> to vector<32x128xf32>
    %4 = arith.mulf %1, %3 : vector<32x128xf32>
    %c0_3 = arith.constant 0 : index
    %c0_4 = arith.constant 0 : index
    %5 = vector.load %arg3[%c0_3, %c0_4] : memref<1x128xf32, #tpu.memory_space<vmem>>, vector<1x128xf32>
    %6 = vector.broadcast %5 : vector<1x128xf32> to vector<32x128xf32>
    %7 = arith.addf %4, %6 : vector<32x128xf32>
    %c0_5 = arith.constant 0 : index
    %c0_6 = arith.constant 0 : index
    %8 = vector.load %arg4[%c0_5, %c0_6] : memref<32x128xbf16, #tpu.memory_space<vmem>>, vector<32x128xbf16>
    %9 = arith.extf %8 : vector<32x128xbf16> to vector<32x128xf32>
    %10 = arith.addf %7, %9 : vector<32x128xf32>
    %cst = arith.constant 0.000000e+00 : f32
    %11 = vector.broadcast %cst : f32 to vector<32x128xf32>
    %12 = arith.maximumf %10, %11 : vector<32x128xf32>
    %13 = arith.truncf %12 : vector<32x128xf32> to vector<32x128xbf16>
    %c0_7 = arith.constant 0 : index
    %c0_8 = arith.constant 0 : index
    %14 = vector.load %arg5[%c0_7, %c0_8] : memref<32x128xbf16, #tpu.memory_space<vmem>>, vector<32x128xbf16>
    tpu.vector_store %arg5[%c0_7, %c0_8], %13 {strides = array<i32>} : memref<32x128xbf16, #tpu.memory_space<vmem>>, vector<32x128xbf16>,
    return
  }
  func.func @transform_0(%arg0: i32) -> (i32, i32) {
    %c0_i32 = arith.constant 0 : i32
    %c0_i32_0 = arith.constant 0 : i32
    return %arg0, %c0_i32 : i32, i32
  }
  func.func @transform_1(%arg0: i32) -> (i32, i32) {
    %c0_i32 = arith.constant 0 : i32
    %c0_i32_0 = arith.constant 0 : i32
    %c0_i32_1 = arith.constant 0 : i32
    return %c0_i32, %c0_i32_0 : i32, i32
  }
  func.func @transform_2(%arg0: i32) -> (i32, i32) {
    %c0_i32 = arith.constant 0 : i32
    %c0_i32_0 = arith.constant 0 : i32
    %c0_i32_1 = arith.constant 0 : i32
    return %c0_i32, %c0_i32_0 : i32, i32
  }
  func.func @transform_3(%arg0: i32) -> (i32, i32) {
    %c0_i32 = arith.constant 0 : i32
    %c0_i32_0 = arith.constant 0 : i32
    return %arg0, %c0_i32 : i32, i32
  }
  func.func @transform_4(%arg0: i32) -> (i32, i32) {
    %c0_i32 = arith.constant 0 : i32
    %c0_i32_0 = arith.constant 0 : i32
    return %arg0, %c0_i32 : i32, i32
  }
}

</mosaic_0001>

<llo_original>
// kernel: tile.39
$region0: #{tile.39}
  #allocation0 [shape = 's32[1]{0}', space=sflag, size = 0x4, scoped, tag = 'scoped memory for tile.39']
  %s0 = inlined_call_operand.vmem [shape: f32[64], index: 0, kind: input, shape index: {}]
  %s1 = inlined_call_operand.vmem [shape: f32[2,64], index: 1, kind: output, shape index: {}]
  // Predicated region
  $region2: #{tile.39} parent=0 // pred_check
    _
  $region3: #{tile.39} parent=0 // pred_check_branch
    %3 = sbr.rel (0) target = $region5
  $region4: #{tile.39} parent=0 // pred_region
    _
  $region5: #{tile.39} parent=0 // pred_fallthru
    _
  %v4 = vld [vmem:[%s0] ss:$0 sm:$0xff]
  %5 = vst [vmem:[%s1] sm:$0x3] %v4

// kernel: tile.40
$region0: #{tile.40}
  %s0 = inlined_call_operand.vmem [shape: f32[2,64], index: 0, kind: input, shape index: {}]
  %s1 = inlined_call_operand.vmem [shape: f32[1,128], index: 1, kind: output, shape index: {}]
  $region1: #{tile.40} parent=0
    #allocation0 [shape = 'u8[4096]{0}', space=vmem, size = 0x1000, scoped, tag = 'scoped mem for output reshape']
    #allocation1 [shape = 'u8[4096]{0}', space=vmem, size = 0x1000, scoped, tag = 'scoped mem for input reshape']
    %s3 = sshllo.u32 0, 2
    %v4 = vld [vmem:[%s0] sm:%s3]
    %5 = vst [vmem:[#allocation1] sm:%s3] %v4
    %v6 = vld [vmem:[#allocation1] sm:$0x1]
    %vm7 = vcmask 523264
    %8 = vst.msk [vmem:[#allocation0] sm:$0x1] %vm7, %v6
    %s9 = scalar_lea.vmem [#allocation1], 1
    %v10 = vld [vmem:[%s9] sm:$0x1]
    %11 = vrot.lane.b32.xlu0 %v10, 64
    %v12 = vpop.permute.xlu0 %11
    %vm13 = vcmask 1048064
    %14 = vst.msk [vmem:[#allocation0] sm:$0x1] %vm13, %v12
    %s16 = sshllo.u32 0, 1
    %v18 = vld [vmem:[#allocation0] sm:%s16]
    %s19 = sshllo.u32 0, 1
    %20 = vst [vmem:[%s1] sm:%s19] %v18

// kernel: resnet_forward.18
$region0: #{resnet_forward.18}
  #allocation0 [shape = 'u32[]', space=smem, size = 0x4, offset = 0x4, fixed_abs, tag = 'smem constant byte address 0x4 - core index']
  #allocation1 [shape = 'u32[144,128]{1,0:T(1,128)}', space=vmem, size = 0x12000, scoped, tag = 'internal scratch']
  %s0 = inlined_call_operand.vmem [shape: bf16[256,128], index: 0, kind: input, shape index: {}]
  %s1 = inlined_call_operand.vmem [shape: f32[1,128], index: 1, kind: input, shape index: {}]
  %s2 = inlined_call_operand.vmem [shape: f32[1,128], index: 2, kind: input, shape index: {}]
  %s3 = inlined_call_operand.vmem [shape: bf16[256,128], index: 3, kind: output, shape index: {}]
  %s4 = sld [smem:[#allocation0]]
  $region22: #{resnet_forward.18} parent=0
    _
  %s6 = ssub.s32 1, %s4
  %s7 = scalar_select 0, %s6, %s4
  // Predicated region
  $region2: #{resnet_forward.18} parent=0 // pred_check
    _
  $region3: #{resnet_forward.18} parent=0 // pred_check_branch
    %9 = sbr.rel (0) target = $region5
  $region4: #{resnet_forward.18} parent=0 // pred_region
    _
  $region5: #{resnet_forward.18} parent=0 // pred_fallthru
    _
  // Predicated region
  $region6: #{resnet_forward.18} parent=0 // pred_check
    _
  $region7: #{resnet_forward.18} parent=0 // pred_check_branch
    %11 = sbr.rel (0) target = $region9
  $region8: #{resnet_forward.18} parent=0 // pred_region
    _
  $region9: #{resnet_forward.18} parent=0 // pred_fallthru
    _
  // Predicated region
  $region10: #{resnet_forward.18} parent=0 // pred_check
    _
  $region11: #{resnet_forward.18} parent=0 // pred_check_branch
    %13 = sbr.rel (0) target = $region13
  $region12: #{resnet_forward.18} parent=0 // pred_region
    _
  $region13: #{resnet_forward.18} parent=0 // pred_fallthru
    _
  %v14 = vld [vmem:[%s0] sm:$0xf]
  %v15 = vld [vmem:[%s0 + $0x4] sm:$0xf]
  %v16 = vld [vmem:[%s0 + $0x8] sm:$0xf]
  %v17 = vld [vmem:[%s0 + $0xc] sm:$0xf]
  %v18 = vld [vmem:[%s0 + $0x10] sm:$0xf]
  %v19 = vld [vmem:[%s0 + $0x14] sm:$0xf]
  %v20 = vld [vmem:[%s0 + $0x18] sm:$0xf]
  %v21 = vld [vmem:[%s0 + $0x1c] sm:$0xf]
  %v22 = vld [vmem:[%s0 + $0x20] sm:$0xf]
  %v23 = vld [vmem:[%s0 + $0x24] sm:$0xf]
  %v24 = vld [vmem:[%s0 + $0x28] sm:$0xf]
  %v25 = vld [vmem:[%s0 + $0x2c] sm:$0xf]
  %v26 = vld [vmem:[%s0 + $0x30] sm:$0xf]
  %v27 = vld [vmem:[%s0 + $0x34] sm:$0xf]
  %v28 = vld [vmem:[%s0 + $0x38] sm:$0xf]
  %v29 = vld [vmem:[%s0 + $0x3c] sm:$0xf]
  %v30 = vld [vmem:[%s0 + $0x40] sm:$0xf]
  %v31 = vld [vmem:[%s0 + $0x44] sm:$0xf]
  %v32 = vld [vmem:[%s0 + $0x48] sm:$0xf]
  %v33 = vld [vmem:[%s0 + $0x4c] sm:$0xf]
  %v34 = vld [vmem:[%s0 + $0x50] sm:$0xf]
  %v35 = vld [vmem:[%s0 + $0x54] sm:$0xf]
  %v36 = vld [vmem:[%s0 + $0x58] sm:$0xf]
  %v37 = vld [vmem:[%s0 + $0x5c] sm:$0xf]
  %v38 = vld [vmem:[%s0 + $0x60] sm:$0xf]
  %v39 = vld [vmem:[%s0 + $0x64] sm:$0xf]
  %v40 = vld [vmem:[%s0 + $0x68] sm:$0xf]
  %v41 = vld [vmem:[%s0 + $0x6c] sm:$0xf]
  %v42 = vld [vmem:[%s0 + $0x70] sm:$0xf]
  %v43 = vld [vmem:[%s0 + $0x74] sm:$0xf]
  %v44 = vld [vmem:[%s0 + $0x78] sm:$0xf]
  %v45 = vld [vmem:[%s0 + $0x7c] sm:$0xf]
  %v46 = vunpack.c.l.bf16 %v14
  %v47 = vunpack.c.l.bf16 %v15
  %v48 = vunpack.c.l.bf16 %v16
  %v49 = vunpack.c.l.bf16 %v17
  %v50 = vunpack.c.l.bf16 %v18
  %v51 = vunpack.c.l.bf16 %v19
  %v52 = vunpack.c.l.bf16 %v20
  %v53 = vunpack.c.l.bf16 %v21
  %v54 = vunpack.c.l.bf16 %v22
  %v55 = vunpack.c.l.bf16 %v23
  %v56 = vunpack.c.l.bf16 %v24
  %v57 = vunpack.c.l.bf16 %v25
  %v58 = vunpack.c.l.bf16 %v26
  %v59 = vunpack.c.l.bf16 %v27
  %v60 = vunpack.c.l.bf16 %v28
  %v61 = vunpack.c.l.bf16 %v29
  %v62 = vunpack.c.l.bf16 %v30
  %v63 = vunpack.c.l.bf16 %v31
  %v64 = vunpack.c.l.bf16 %v32
  %v65 = vunpack.c.l.bf16 %v33
  %v66 = vunpack.c.l.bf16 %v34
  %v67 = vunpack.c.l.bf16 %v35
  %v68 = vunpack.c.l.bf16 %v36
  %v69 = vunpack.c.l.bf16 %v37
  %v70 = vunpack.c.l.bf16 %v38
  %v71 = vunpack.c.l.bf16 %v39
  %v72 = vunpack.c.l.bf16 %v40
  %v73 = vunpack.c.l.bf16 %v41
  %v74 = vunpack.c.l.bf16 %v42
  %v75 = vunpack.c.l.bf16 %v43
  %v76 = vunpack.c.l.bf16 %v44
  %v77 = vunpack.c.l.bf16 %v45
  %v78 = vld [vmem:[%s1] sm:$0x1]
  %v80 = vlaneseq
  %v81 = vshrl.u32 %v80, 7
  %v82 = vsub.s32 0, %v81
  %v83 = vrot.slane %v78, %v82
  %v85 = vmul.f32 %v46, %v83
  %v86 = vmul.f32 %v47, %v83
  %v87 = vmul.f32 %v48, %v83
  %v88 = vmul.f32 %v49, %v83
  %v89 = vmul.f32 %v50, %v83
  %v90 = vmul.f32 %v51, %v83
  %v91 = vmul.f32 %v52, %v83
  %v92 = vmul.f32 %v53, %v83
  %v93 = vmul.f32 %v54, %v83
  %v94 = vmul.f32 %v55, %v83
  %v95 = vmul.f32 %v56, %v83
  %v96 = vmul.f32 %v57, %v83
  %v97 = vmul.f32 %v58, %v83
  %v98 = vmul.f32 %v59, %v83
  %v99 = vmul.f32 %v60, %v83
  %v100 = vmul.f32 %v61, %v83
  %v101 = vmul.f32 %v62, %v83
  %v102 = vmul.f32 %v63, %v83
  %v103 = vmul.f32 %v64, %v83
  %v104 = vmul.f32 %v65, %v83
  %v105 = vmul.f32 %v66, %v83
  %v106 = vmul.f32 %v67, %v83
  %v107 = vmul.f32 %v68, %v83
  %v108 = vmul.f32 %v69, %v83
  %v109 = vmul.f32 %v70, %v83
  %v110 = vmul.f32 %v71, %v83
  %v111 = vmul.f32 %v72, %v83
  %v112 = vmul.f32 %v73, %v83
  %v113 = vmul.f32 %v74, %v83
  %v114 = vmul.f32 %v75, %v83
  %v115 = vmul.f32 %v76, %v83
  %v116 = vmul.f32 %v77, %v83
  %v117 = vld [vmem:[%s2] sm:$0x1]
  %v119 = vlaneseq
  %v120 = vshrl.u32 %v119, 7
  %v121 = vsub.s32 0, %v120
  %v122 = vrot.slane %v117, %v121
  %v124 = vadd.f32 %v85, %v122
  %v125 = vadd.f32 %v86, %v122
  %v126 = vadd.f32 %v87, %v122
  %v127 = vadd.f32 %v88, %v122
  %v128 = vadd.f32 %v89, %v122
  %v129 = vadd.f32 %v90, %v122
  %v130 = vadd.f32 %v91, %v122
  %v131 = vadd.f32 %v92, %v122
  %v132 = vadd.f32 %v93, %v122
  %v133 = vadd.f32 %v94, %v122
  %v134 = vadd.f32 %v95, %v122
  %v135 = vadd.f32 %v96, %v122
  %v136 = vadd.f32 %v97, %v122
  %v137 = vadd.f32 %v98, %v122
  %v138 = vadd.f32 %v99, %v122
  %v139 = vadd.f32 %v100, %v122
  %v140 = vadd.f32 %v101, %v122
  %v141 = vadd.f32 %v102, %v122
  %v142 = vadd.f32 %v103, %v122
  %v143 = vadd.f32 %v104, %v122
  %v144 = vadd.f32 %v105, %v122
  %v145 = vadd.f32 %v106, %v122
  %v146 = vadd.f32 %v107, %v122
  %v147 = vadd.f32 %v108, %v122
  %v148 = vadd.f32 %v109, %v122
  %v149 = vadd.f32 %v110, %v122
  %v150 = vadd.f32 %v111, %v122
  %v151 = vadd.f32 %v112, %v122
  %v152 = vadd.f32 %v113, %v122
  %v153 = vadd.f32 %v114, %v122
  %v154 = vadd.f32 %v115, %v122
  %v155 = vadd.f32 %v116, %v122
  %v156 = vmax.f32 %v124, 0.0
  %v157 = vmax.f32 %v125, 0.0
  %v158 = vmax.f32 %v126, 0.0
  %v159 = vmax.f32 %v127, 0.0
  %v160 = vmax.f32 %v128, 0.0
  %v161 = vmax.f32 %v129, 0.0
  %v162 = vmax.f32 %v130, 0.0
  %v163 = vmax.f32 %v131, 0.0
  %v164 = vmax.f32 %v132, 0.0
  %v165 = vmax.f32 %v133, 0.0
  %v166 = vmax.f32 %v134, 0.0
  %v167 = vmax.f32 %v135, 0.0
  %v168 = vmax.f32 %v136, 0.0
  %v169 = vmax.f32 %v137, 0.0
  %v170 = vmax.f32 %v138, 0.0
  %v171 = vmax.f32 %v139, 0.0
  %v172 = vmax.f32 %v140, 0.0
  %v173 = vmax.f32 %v141, 0.0
  %v174 = vmax.f32 %v142, 0.0
  %v175 = vmax.f32 %v143, 0.0
  %v176 = vmax.f32 %v144, 0.0
  %v177 = vmax.f32 %v145, 0.0
  %v178 = vmax.f32 %v146, 0.0
  %v179 = vmax.f32 %v147, 0.0
  %v180 = vmax.f32 %v148, 0.0
  %v181 = vmax.f32 %v149, 0.0
  %v182 = vmax.f32 %v150, 0.0
  %v183 = vmax.f32 %v151, 0.0
  %v184 = vmax.f32 %v152, 0.0
  %v185 = vmax.f32 %v153, 0.0
  %v186 = vmax.f32 %v154, 0.0
  %v187 = vmax.f32 %v155, 0.0
  %v188 = vpack.c.bf16 %v157, %v156
  %v189 = vpack.c.bf16 %v159, %v158
  %v190 = vpack.c.bf16 %v161, %v160
  %v191 = vpack.c.bf16 %v163, %v162
  %v192 = vpack.c.bf16 %v165, %v164
  %v193 = vpack.c.bf16 %v167, %v166
  %v194 = vpack.c.bf16 %v169, %v168
  %v195 = vpack.c.bf16 %v171, %v170
  %v196 = vpack.c.bf16 %v173, %v172
  %v197 = vpack.c.bf16 %v175, %v174
  %v198 = vpack.c.bf16 %v177, %v176
  %v199 = vpack.c.bf16 %v179, %v178
  %v200 = vpack.c.bf16 %v181, %v180
  %v201 = vpack.c.bf16 %v183, %v182
  %v202 = vpack.c.bf16 %v185, %v184
  %v203 = vpack.c.bf16 %v187, %v186
  %v220 = vunpack.c.l.b16 %v188
  %v221 = vunpack.c.h.b16 %v188
  %v222 = vunpack.c.l.b16 %v189
  %v223 = vunpack.c.h.b16 %v189
  %v224 = vunpack.c.l.b16 %v190
  %v225 = vunpack.c.h.b16 %v190
  %v226 = vunpack.c.l.b16 %v191
  %v227 = vunpack.c.h.b16 %v191
  %v228 = vunpack.c.l.b16 %v192
  %v229 = vunpack.c.h.b16 %v192
  %v230 = vunpack.c.l.b16 %v193
  %v231 = vunpack.c.h.b16 %v193
  %v232 = vunpack.c.l.b16 %v194
  %v233 = vunpack.c.h.b16 %v194
  %v234 = vunpack.c.l.b16 %v195
  %v235 = vunpack.c.h.b16 %v195
  %v236 = vunpack.c.l.b16 %v196
  %v237 = vunpack.c.h.b16 %v196
  %v238 = vunpack.c.l.b16 %v197
  %v239 = vunpack.c.h.b16 %v197
  %v240 = vunpack.c.l.b16 %v198
  %v241 = vunpack.c.h.b16 %v198
  %v242 = vunpack.c.l.b16 %v199
  %v243 = vunpack.c.h.b16 %v199
  %v244 = vunpack.c.l.b16 %v200
  %v245 = vunpack.c.h.b16 %v200
  %v246 = vunpack.c.l.b16 %v201
  %v247 = vunpack.c.h.b16 %v201
  %v248 = vunpack.c.l.b16 %v202
  %v249 = vunpack.c.h.b16 %v202
  %v250 = vunpack.c.l.b16 %v203
  %v251 = vunpack.c.h.b16 %v203
  %v252 = vpack.c.b16 %v220, %v220
  %v253 = vpack.c.b16 %v221, %v221
  %v254 = vpack.c.b16 %v222, %v222
  %v255 = vpack.c.b16 %v223, %v223
  %v256 = vpack.c.b16 %v224, %v224
  %v257 = vpack.c.b16 %v225, %v225
  %v258 = vpack.c.b16 %v226, %v226
  %v259 = vpack.c.b16 %v227, %v227
  %v260 = vpack.c.b16 %v228, %v228
  %v261 = vpack.c.b16 %v229, %v229
  %v262 = vpack.c.b16 %v230, %v230
  %v263 = vpack.c.b16 %v231, %v231
  %v264 = vpack.c.b16 %v232, %v232
  %v265 = vpack.c.b16 %v233, %v233
  %v266 = vpack.c.b16 %v234, %v234
  %v267 = vpack.c.b16 %v235, %v235
  %v268 = vpack.c.b16 %v236, %v236
  %v269 = vpack.c.b16 %v237, %v237
  %v270 = vpack.c.b16 %v238, %v238
  %v271 = vpack.c.b16 %v239, %v239
  %v272 = vpack.c.b16 %v240, %v240
  %v273 = vpack.c.b16 %v241, %v241
  %v274 = vpack.c.b16 %v242, %v242
  %v275 = vpack.c.b16 %v243, %v243
  %v276 = vpack.c.b16 %v244, %v244
  %v277 = vpack.c.b16 %v245, %v245
  %v278 = vpack.c.b16 %v246, %v246
  %v279 = vpack.c.b16 %v247, %v247
  %v280 = vpack.c.b16 %v248, %v248
  %v281 = vpack.c.b16 %v249, %v249
  %v282 = vpack.c.b16 %v250, %v250
  %v283 = vpack.c.b16 %v251, %v251
  %316 = vst [vmem:[%s3] sm:$0xf] %v252
  %317 = vst [vmem:[%s3 + $0x4] sm:$0xf] %v253
  %318 = vst [vmem:[%s3 + $0x8] sm:$0xf] %v254
  %319 = vst [vmem:[%s3 + $0xc] sm:$0xf] %v255
  %320 = vst [vmem:[%s3 + $0x10] sm:$0xf] %v256
  %321 = vst [vmem:[%s3 + $0x14] sm:$0xf] %v257
  %322 = vst [vmem:[%s3 + $0x18] sm:$0xf] %v258
  %323 = vst [vmem:[%s3 + $0x1c] sm:$0xf] %v259
  %324 = vst [vmem:[%s3 + $0x20] sm:$0xf] %v260
  %325 = vst [vmem:[%s3 + $0x24] sm:$0xf] %v261
  %326 = vst [vmem:[%s3 + $0x28] sm:$0xf] %v262
  %327 = vst [vmem:[%s3 + $0x2c] sm:$0xf] %v263
  %328 = vst [vmem:[%s3 + $0x30] sm:$0xf] %v264
  %329 = vst [vmem:[%s3 + $0x34] sm:$0xf] %v265
  %330 = vst [vmem:[%s3 + $0x38] sm:$0xf] %v266
  %331 = vst [vmem:[%s3 + $0x3c] sm:$0xf] %v267
  %332 = vst [vmem:[%s3 + $0x40] sm:$0xf] %v268
  %333 = vst [vmem:[%s3 + $0x44] sm:$0xf] %v269
  %334 = vst [vmem:[%s3 + $0x48] sm:$0xf] %v270
  %335 = vst [vmem:[%s3 + $0x4c] sm:$0xf] %v271
  %336 = vst [vmem:[%s3 + $0x50] sm:$0xf] %v272
  %337 = vst [vmem:[%s3 + $0x54] sm:$0xf] %v273
  %338 = vst [vmem:[%s3 + $0x58] sm:$0xf] %v274
  %339 = vst [vmem:[%s3 + $0x5c] sm:$0xf] %v275
  %340 = vst [vmem:[%s3 + $0x60] sm:$0xf] %v276
  %341 = vst [vmem:[%s3 + $0x64] sm:$0xf] %v277
  %342 = vst [vmem:[%s3 + $0x68] sm:$0xf] %v278
  %343 = vst [vmem:[%s3 + $0x6c] sm:$0xf] %v279
  %344 = vst [vmem:[%s3 + $0x70] sm:$0xf] %v280
  %345 = vst [vmem:[%s3 + $0x74] sm:$0xf] %v281
  %346 = vst [vmem:[%s3 + $0x78] sm:$0xf] %v282
  %347 = vst [vmem:[%s3 + $0x7c] sm:$0xf] %v283
  // Predicated region
  $region14: #{resnet_forward.18} parent=0 // pred_check
    _
  $region15: #{resnet_forward.18} parent=0 // pred_check_branch
    %349 = sbr.rel (0) target = $region17
  $region16: #{resnet_forward.18} parent=0 // pred_region
    _
  $region17: #{resnet_forward.18} parent=0 // pred_fallthru
    _
  // Predicated region
  $region18: #{resnet_forward.18} parent=0 // pred_check
    _
  $region19: #{resnet_forward.18} parent=0 // pred_check_branch
    %351 = sbr.rel (0) target = $region21
  $region20: #{resnet_forward.18} parent=0 // pred_region
    _
  $region21: #{resnet_forward.18} parent=0 // pred_fallthru
    _

// kernel: resnet_forward.17
$region0: #{resnet_forward.17}
  #allocation0 [shape = 'u32[]', space=smem, size = 0x4, offset = 0x4, fixed_abs, tag = 'smem constant byte address 0x4 - core index']
  #allocation1 [shape = 'u32[144,128]{1,0:T(1,128)}', space=vmem, size = 0x12000, scoped, tag = 'internal scratch']
  %s0 = inlined_call_operand.vmem [shape: bf16[512,147], index: 0, kind: input, shape index: {}]
  %s1 = inlined_call_operand.vmem [shape: bf16[147,64], index: 1, kind: input, shape index: {}]
  %s2 = inlined_call_operand.vmem [shape: bf16[512,64], index: 2, kind: output, shape index: {0}]
  %s3 = inlined_call_operand.vmem [shape: f32[4,2,64], index: 3, kind: output, shape index: {1}]
  %4 = xla_tuple %s2, %s3
  %s5 = sld [smem:[#allocation0]]
  $region49: #{resnet_forward.17} parent=0
    _
  %s7 = ssub.s32 1, %s5
  %s8 = scalar_select 0, %s7, %s5
  loop: start=0, step=1, limit=6
  $region2: #{resnet_forward.17} parent=0 // loop_pre_header
    _
  $region3: #{resnet_forward.17} parent=0 // loop_header
    %s10 = sphi 0, %s14
    %p11 = scmp.ge.s32.totalorder %s10, 6
    %s20 = sphi 0, %s22
    %s23 = sphi 0, %s20
    %s24 = sphi 0, %s23
    %s40 = sphi 0, %s24
    %s44 = sphi 0, %s44
    %s46 = sphi 0, %s44
    %s47 = sphi 0, %s46
    %s61 = sphi 0, %s47
    %s67 = sphi 0, %s69
    %s70 = sphi 0, %s67
    %s71 = sphi 0, %s70
    %s87 = sphi 0, %s71
    %s93 = sphi 0, %s95
    %s96 = sphi 0, %s93
    %s97 = sphi 0, %s96
    %s113 = sphi 0, %s97
  $region4: #{resnet_forward.17} parent=0 // loop_header_branch
    %13 = sbr.rel (%p11) target = $region8
  $region5: #{resnet_forward.17} parent=0 // loop_body
    %s15 = ssub.s32 %s10, 1
    %s16 = ssub.s32 %s10, 2
    %s17 = sadd.s32 %s10, 1
    %s18 = ssub.s32 %s10, %s17
    %p19 = scmp.eq.s32.totalorder %s18, 0
    %s21 = sadd.s32 %s20, 1
    %s22 = scalar_select %p19, %s20, %s21
    %p25 = pneg %p19
    %p26 = scmp.eq.s32.totalorder %s10, 3
    %p27 = por %p25, %p26
    %p28 = scmp.ne.s32.totalorder %s20, %s23
    %p29 = scmp.eq.s32.totalorder %s10, 0
    %p30 = por %p28, %p29
    %p31 = scmp.ne.s32.totalorder %s20, %s23
    %p32 = scmp.eq.s32.totalorder %s15, 3
    %p33 = por %p31, %p32
    %p34 = scmp.ne.s32.totalorder %s23, %s24
    %p35 = scmp.eq.s32.totalorder %s15, 0
    %p36 = por %p34, %p35
    %p37 = scmp.ne.s32.totalorder %s23, %s24
    %p38 = scmp.eq.s32.totalorder %s16, 3
    %p39 = por %p37, %p38
    %p41 = scmp.ne.s32.totalorder %s24, %s40
    %p42 = scmp.eq.s32.totalorder %s16, 0
    %p43 = por %p41, %p42
    %s45 = sadd.s32 %s44, 1
    %p48 = scmp.eq.s32.totalorder %s10, 3
    %p49 = scmp.ne.s32.totalorder %s44, %s46
    %p50 = scmp.eq.s32.totalorder %s10, 0
    %p51 = por %p49, %p50
    %p52 = scmp.ne.s32.totalorder %s44, %s46
    %p53 = scmp.eq.s32.totalorder %s15, 3
    %p54 = por %p52, %p53
    %p55 = scmp.ne.s32.totalorder %s46, %s47
    %p56 = scmp.eq.s32.totalorder %s15, 0
    %p57 = por %p55, %p56
    %p58 = scmp.ne.s32.totalorder %s46, %s47
    %p59 = scmp.eq.s32.totalorder %s16, 3
    %p60 = por %p58, %p59
    %p62 = scmp.ne.s32.totalorder %s47, %s61
    %p63 = scmp.eq.s32.totalorder %s16, 0
    %p64 = por %p62, %p63
    %s65 = ssub.s32 %s10, %s17
    %p66 = scmp.eq.s32.totalorder %s65, 0
    %s68 = sadd.s32 %s67, 1
    %s69 = scalar_select %p66, %s67, %s68
    %p72 = pneg %p66
    %p73 = scmp.eq.s32.totalorder %s10, 3
    %p74 = por %p72, %p73
    %p75 = scmp.ne.s32.totalorder %s67, %s70
    %p76 = scmp.eq.s32.totalorder %s10, 0
    %p77 = por %p75, %p76
    %p78 = scmp.ne.s32.totalorder %s67, %s70
    %p79 = scmp.eq.s32.totalorder %s15, 3
    %p80 = por %p78, %p79
    %p81 = scmp.ne.s32.totalorder %s70, %s71
    %p82 = scmp.eq.s32.totalorder %s15, 0
    %p83 = por %p81, %p82
    %p84 = scmp.ne.s32.totalorder %s70, %s71
    %p85 = scmp.eq.s32.totalorder %s16, 3
    %p86 = por %p84, %p85
    %p88 = scmp.ne.s32.totalorder %s71, %s87
    %p89 = scmp.eq.s32.totalorder %s16, 0
    %p90 = por %p88, %p89
    %s91 = ssub.s32 %s10, %s17
    %p92 = scmp.eq.s32.totalorder %s91, 0
    %s94 = sadd.s32 %s93, 1
    %s95 = scalar_select %p92, %s93, %s94
    %p98 = pneg %p92
    %p99 = scmp.eq.s32.totalorder %s10, 3
    %p100 = por %p98, %p99
    %p101 = scmp.ne.s32.totalorder %s93, %s96
    %p102 = scmp.eq.s32.totalorder %s10, 0
    %p103 = por %p101, %p102
    %p104 = scmp.ne.s32.totalorder %s93, %s96
    %p105 = scmp.eq.s32.totalorder %s15, 3
    %p106 = por %p104, %p105
    %p107 = scmp.ne.s32.totalorder %s96, %s97
    %p108 = scmp.eq.s32.totalorder %s15, 0
    %p109 = por %p107, %p108
    %p110 = scmp.ne.s32.totalorder %s96, %s97
    %p111 = scmp.eq.s32.totalorder %s16, 3
    %p112 = por %p110, %p111
    %p114 = scmp.ne.s32.totalorder %s97, %s113
    %p115 = scmp.eq.s32.totalorder %s16, 0
    %p116 = por %p114, %p115
    %p117 = scmp.le.s32.totalorder 1, %s10
    %p118 = scmp.lt.s32.totalorder %s10, 5
    %p119 = pnand %p117, %p118
    %p120 = pneg %p119
    // Predicated region
    $region9: #{resnet_forward.17} parent=5 // pred_check
      _
    $region10: #{resnet_forward.17} parent=5 // pred_check_branch
      %122 = sbr.rel (%p119) target = $region12
    $region11: #{resnet_forward.17} parent=5 // pred_region
      %s123 = ssub.s32 %s10, 1
      // Predicated region
      $region13: #{resnet_forward.17} parent=11 // pred_check
        %p124 = pneg %p57
      $region14: #{resnet_forward.17} parent=11 // pred_check_branch
        %126 = sbr.rel (%p124) target = $region16
      $region15: #{resnet_forward.17} parent=11 // pred_region
        _
      $region16: #{resnet_forward.17} parent=11 // pred_fallthru
        _
    $region12: #{resnet_forward.17} parent=5 // pred_fallthru
      _
    %p127 = scmp.lt.s32.totalorder %s10, 4
    // Predicated region
    $region17: #{resnet_forward.17} parent=5 // pred_check
      %p128 = pneg %p127
    $region18: #{resnet_forward.17} parent=5 // pred_check_branch
      %130 = sbr.rel (%p128) target = $region20
    $region19: #{resnet_forward.17} parent=5 // pred_region
      // Predicated region
      $region21: #{resnet_forward.17} parent=19 // pred_check
        %p131 = pneg %p30
      $region22: #{resnet_forward.17} parent=19 // pred_check_branch
        %133 = sbr.rel (%p131) target = $region24
      $region23: #{resnet_forward.17} parent=19 // pred_region
        %s134 = smul.u32 16, %s10
        %p135 = scmp.lt.s32.totalorder %s134, 63
        %s136 = scalar_select %p135, %s134, 63
        %s137 = smul.addr %s136, 2
        %s138 = smul.addr %s137, 4
        %s139 = scalar_lea.vmem %s0, %s138
        %s140 = smul.u32 16, %s10
      $region24: #{resnet_forward.17} parent=19 // pred_fallthru
        _
    $region20: #{resnet_forward.17} parent=5 // pred_fallthru
      _
    %p141 = scmp.le.s32.totalorder 1, %s10
    %p142 = scmp.lt.s32.totalorder %s10, 5
    %p143 = pnand %p141, %p142
    %p144 = pneg %p143
    // Predicated region
    $region25: #{resnet_forward.17} parent=5 // pred_check
      _
    $region26: #{resnet_forward.17} parent=5 // pred_check_branch
      %146 = sbr.rel (%p143) target = $region28
    $region27: #{resnet_forward.17} parent=5 // pred_region
      %s147 = ssub.s32 %s10, 1
      %s148 = smul.u32 16, %s15
      %p149 = scmp.lt.s32.totalorder %s148, 63
      %s150 = scalar_select %p149, %s148, 63
      %s151 = smul.addr %s150, 2
      %s152 = smul.addr %s151, 4
      %s153 = scalar_lea.vmem %s0, %s152
      %p154 = pneg %p36
      %p155 = pneg %p33
      %p156 = pneg %p57
      %p157 = pneg %p54
      %p158 = pneg %p83
      %p159 = pneg %p80
      %s160 = smul.u32 16, %s15
      %p161 = scmp.lt.s32.totalorder %s160, 63
      %s162 = scalar_select %p161, %s160, 63
      %s163 = smul.addr %s162, 4
      %s164 = scalar_lea.vmem %s2, %s163
      %p165 = pneg %p109
      %p166 = pneg %p106
      %p167 = scmp.lt.s32.totalorder %s15, 3
      %s168 = scalar_select %p167, %s15, 3
      %s169 = smul.addr %s168, 2
      %s170 = scalar_lea.vmem %s3, %s169
      %s171 = smul.u32 16, %s15
      %p172 = scmp.lt.s32.totalorder %s171, 63
      %s173 = scalar_select %p172, %s171, 63
      %s174 = smul.addr %s173, 2
      %s175 = smul.addr %s174, 4
      %s176 = scalar_lea.vmem %s0, %s175
      %s177 = smul.u32 16, %s15
      %s178 = smul.u32 16, %s15
      %p179 = scmp.lt.s32.totalorder %s178, 63
      %s180 = scalar_select %p179, %s178, 63
      %s181 = smul.addr %s180, 4
      %s182 = scalar_lea.vmem %s2, %s181
      %s183 = smul.u32 16, %s15
      %p184 = scmp.lt.s32.totalorder %s15, 3
      %s185 = scalar_select %p184, %s15, 3
      %s186 = smul.addr %s185, 2
      %s187 = scalar_lea.vmem %s3, %s186
      %v189 = vld [vmem:[%s176] sm:$0xff]
      %v190 = vld [vmem:[%s176 + $0x8] sm:$0xff]
      %v191 = vld [vmem:[%s176 + $0x10] sm:$0xff]
      %v192 = vld [vmem:[%s176 + $0x18] sm:$0xff]
      %v193 = vld [vmem:[%s176 + $0x20] sm:$0xff]
      %v194 = vld [vmem:[%s176 + $0x28] sm:$0xff]
      %v195 = vld [vmem:[%s176 + $0x30] sm:$0xff]
      %v196 = vld [vmem:[%s176 + $0x38] sm:$0xff]
      %v197 = vld [vmem:[%s176 + $0x40] sm:$0xff]
      %v198 = vld [vmem:[%s176 + $0x48] sm:$0xff]
      %v199 = vld [vmem:[%s176 + $0x50] sm:$0xff]
      %v200 = vld [vmem:[%s176 + $0x58] sm:$0xff]
      %v201 = vld [vmem:[%s176 + $0x60] sm:$0xff]
      %v202 = vld [vmem:[%s176 + $0x68] sm:$0xff]
      %v203 = vld [vmem:[%s176 + $0x70] sm:$0xff]
      %v204 = vld [vmem:[%s176 + $0x78] sm:$0xff]
      %v205 = vld [vmem:[%s1] sm:$0xf]
      %v206 = vld [vmem:[%s1 + $0x4] sm:$0xf]
      %v207 = vld [vmem:[%s1 + $0x8] sm:$0xf]
      %v208 = vld [vmem:[%s1 + $0xc] sm:$0xf]
      %v209 = vld [vmem:[%s1 + $0x10] sm:$0xf]
      %v210 = vld [vmem:[%s1 + $0x14] sm:$0xf]
      %v211 = vld [vmem:[%s1 + $0x18] sm:$0xf]
      %v212 = vld [vmem:[%s1 + $0x1c] sm:$0xf]
      %v213 = vld [vmem:[%s1 + $0x20] sm:$0xf]
      %v214 = vld [vmem:[%s1 + $0x24] sm:$0xf]
      %v215 = vld [vmem:[%s1 + $0x28] sm:$0xf]
      %v216 = vld [vmem:[%s1 + $0x2c] sm:$0xf]
      %v217 = vld [vmem:[%s1 + $0x30] sm:$0xf]
      %v218 = vld [vmem:[%s1 + $0x34] sm:$0xf]
      %v219 = vld [vmem:[%s1 + $0x38] sm:$0xf]
      %v220 = vld [vmem:[%s1 + $0x3c] sm:$0xf]
      %v221 = vld [vmem:[%s1 + $0x40] sm:$0xf]
      %v222 = vld [vmem:[%s1 + $0x44] sm:$0xf]
      %v223 = vld [vmem:[%s1 + $0x48] sm:$0x3]
      %v240 = vunpack.c.l.b16 %v189
      %v241 = vunpack.c.h.b16 %v189
      %v242 = vunpack.c.l.b16 %v190
      %v243 = vunpack.c.h.b16 %v190
      %v244 = vunpack.c.l.b16 %v191
      %v245 = vunpack.c.h.b16 %v191
      %v246 = vunpack.c.l.b16 %v192
      %v247 = vunpack.c.h.b16 %v192
      %v248 = vunpack.c.l.b16 %v193
      %v249 = vunpack.c.h.b16 %v193
      %v250 = vunpack.c.l.b16 %v194
      %v251 = vunpack.c.h.b16 %v194
      %v252 = vunpack.c.l.b16 %v195
      %v253 = vunpack.c.h.b16 %v195
      %v254 = vunpack.c.l.b16 %v196
      %v255 = vunpack.c.h.b16 %v196
      %v256 = vunpack.c.l.b16 %v197
      %v257 = vunpack.c.h.b16 %v197
      %v258 = vunpack.c.l.b16 %v198
      %v259 = vunpack.c.h.b16 %v198
      %v260 = vunpack.c.l.b16 %v199
      %v261 = vunpack.c.h.b16 %v199
      %v262 = vunpack.c.l.b16 %v200
      %v263 = vunpack.c.h.b16 %v200
      %v264 = vunpack.c.l.b16 %v201
      %v265 = vunpack.c.h.b16 %v201
      %v266 = vunpack.c.l.b16 %v202
      %v267 = vunpack.c.h.b16 %v202
      %v268 = vunpack.c.l.b16 %v203
      %v269 = vunpack.c.h.b16 %v203
      %v270 = vunpack.c.l.b16 %v204
      %v271 = vunpack.c.h.b16 %v204
      %v272 = vpack.c.b16 %v242, %v240
      %v273 = vpack.c.b16 %v243, %v241
      %v274 = vpack.c.b16 %v246, %v244
      %v275 = vpack.c.b16 %v247, %v245
      %v276 = vpack.c.b16 %v250, %v248
      %v277 = vpack.c.b16 %v251, %v249
      %v278 = vpack.c.b16 %v254, %v252
      %v279 = vpack.c.b16 %v255, %v253
      %v280 = vpack.c.b16 %v258, %v256
      %v281 = vpack.c.b16 %v259, %v257
      %v282 = vpack.c.b16 %v262, %v260
      %v283 = vpack.c.b16 %v263, %v261
      %v284 = vpack.c.b16 %v266, %v264
      %v285 = vpack.c.b16 %v267, %v265
      %v286 = vpack.c.b16 %v270, %v268
      %v287 = vpack.c.b16 %v271, %v269
      %v315 = vunpack.c.l.b16 %v205
      %v316 = vunpack.c.l.b16 %v206
      %v317 = vunpack.c.l.b16 %v207
      %v318 = vunpack.c.l.b16 %v208
      %v319 = vunpack.c.l.b16 %v209
      %v320 = vunpack.c.l.b16 %v210
      %v321 = vunpack.c.l.b16 %v211
      %v322 = vunpack.c.l.b16 %v212
      %v323 = vunpack.c.l.b16 %v213
      %v324 = vunpack.c.l.b16 %v214
      %v325 = vunpack.c.l.b16 %v215
      %v326 = vunpack.c.l.b16 %v216
      %v327 = vunpack.c.l.b16 %v217
      %v328 = vunpack.c.l.b16 %v218
      %v329 = vunpack.c.l.b16 %v219
      %v330 = vunpack.c.l.b16 %v220
      %v331 = vunpack.c.l.b16 %v221
      %v332 = vunpack.c.l.b16 %v222
      %v333 = vunpack.c.l.b16 %v223
      %v334 = vpack.c.b16 %v316, %v315
      %v335 = vpack.c.b16 %v318, %v317
      %v336 = vpack.c.b16 %v320, %v319
      %v337 = vpack.c.b16 %v322, %v321
      %v338 = vpack.c.b16 %v324, %v323
      %v339 = vpack.c.b16 %v326, %v325
      %v340 = vpack.c.b16 %v328, %v327
      %v341 = vpack.c.b16 %v330, %v329
      %v342 = vpack.c.b16 %v332, %v331
      %v343 = vpack.c.b16 %v333, %v333
      %vm353 = vcmask 154624
      %v355 = vsel %vm353, %v273, 0
      %v358 = vsel %vm353, %v275, 0
      %v361 = vsel %vm353, %v277, 0
      %v364 = vsel %vm353, %v279, 0
      %v367 = vsel %vm353, %v281, 0
      %v370 = vsel %vm353, %v283, 0
      %v373 = vsel %vm353, %v285, 0
      %v376 = vsel %vm353, %v287, 0
      %vm378 = vcmask 1040384
      %vm379 = vcmask 1041408
      %v380 = vsel %vm378, 4294967295, 65535
      %v381 = vsel %vm379, %v380, 0
      %v383 = vand.u32 %v343, %v381
      %385 = vmatprep.subr.bf16.mxu0 0
      %386 = vmatpush1.bf16.msra.mxu0 %v334
      %387 = vmatprep.subr.bf16.mxu0 0
      %388 = vmatpush1.bf16.msra.mxu0 %v335
      %389 = vmatprep.subr.bf16.mxu0 0
      %390 = vmatpush1.bf16.msra.mxu0 %v336
      %391 = vmatprep.subr.bf16.mxu0 0
      %392 = vmatpush1.bf16.msra.mxu0 %v337
      %393 = vmatprep.subr.bf16.mxu0 0
      %394 = vmatpush1.bf16.msra.mxu0 %v338
      %395 = vmatprep.subr.bf16.mxu0 0
      %396 = vmatpush1.bf16.msra.mxu0 %v339
      %397 = vmatprep.subr.bf16.mxu0 0
      %398 = vmatpush1.bf16.msra.mxu0 %v340
      %399 = vmatprep.subr.bf16.mxu0 0
      %400 = vmatpush1.bf16.msra.mxu0 %v341
      %401 = vmatprep.subr.bf16.mxu0 0
      %402 = vmatpush1.bf16.msra.mxu0 %v342
      %403 = vmatprep.subr.bf16.mxu0 0
      %404 = vmatpush1.bf16.msra.mxu0 %v383
      %405 = vmatprep.subr.bf16.mxu0 0
      %406 = vmatpush1.bf16.msra.mxu0 0
      %407 = vmatprep.subr.bf16.mxu0 0
      %408 = vmatpush1.bf16.msra.mxu0 0
      %409 = vmatprep.subr.bf16.mxu0 0
      %410 = vmatpush1.bf16.msra.mxu0 0
      %411 = vmatprep.subr.bf16.mxu0 0
      %412 = vmatpush1.bf16.msra.mxu0 0
      %413 = vmatprep.subr.bf16.mxu0 0
      %414 = vmatpush1.bf16.msra.mxu0 0
      %415 = vmatprep.subr.bf16.mxu0 0
      %416 = vmatpush1.bf16.msra.mxu0 0
      %417 = vmatprep.mubr.bf16.mxu0 %v355
      %418 = vmatmul.mubr.bf16.gmra.mrb[0].mxu0 %v272
      %v419 = vpop.f32.mrb[0].mxu0
      %v420 = vadd.f32 0.0, %v419
      %v421 = vpop.f32.mrb[0].mxu0
      %v422 = vpop.f32.mrb[0].mxu0
      %v423 = vadd.f32 0.0, %v422
      %v424 = vpop.f32.mrb[0].mxu0
      %425 = vmatprep.mubr.bf16.mxu0 %v358
      %426 = vmatmul.mubr.bf16.gmra.mrb[0].mxu0 %v274
      %v427 = vpop.f32.mrb[0].mxu0
      %v428 = vadd.f32 0.0, %v427
      %v429 = vpop.f32.mrb[0].mxu0
      %v430 = vpop.f32.mrb[0].mxu0
      %v431 = vadd.f32 0.0, %v430
      %v432 = vpop.f32.mrb[0].mxu0
      %433 = vmatprep.mubr.bf16.mxu0 %v361
      %434 = vmatmul.mubr.bf16.gmra.mrb[0].mxu0 %v276
      %v435 = vpop.f32.mrb[0].mxu0
      %v436 = vadd.f32 0.0, %v435
      %v437 = vpop.f32.mrb[0].mxu0
      %v438 = vpop.f32.mrb[0].mxu0
      %v439 = vadd.f32 0.0, %v438
      %v440 = vpop.f32.mrb[0].mxu0
      %441 = vmatprep.mubr.bf16.mxu0 %v364
      %442 = vmatmul.mubr.bf16.gmra.mrb[0].mxu0 %v278
      %v443 = vpop.f32.mrb[0].mxu0
      %v444 = vadd.f32 0.0, %v443
      %v445 = vpop.f32.mrb[0].mxu0
      %v446 = vpop.f32.mrb[0].mxu0
      %v447 = vadd.f32 0.0, %v446
      %v448 = vpop.f32.mrb[0].mxu0
      %449 = vmatprep.mubr.bf16.mxu0 %v367
      %450 = vmatmul.mubr.bf16.gmra.mrb[0].mxu0 %v280
      %v451 = vpop.f32.mrb[0].mxu0
      %v452 = vadd.f32 0.0, %v451
      %v453 = vpop.f32.mrb[0].mxu0
      %v454 = vpop.f32.mrb[0].mxu0
      %v455 = vadd.f32 0.0, %v454
      %v456 = vpop.f32.mrb[0].mxu0
      %457 = vmatprep.mubr.bf16.mxu0 %v370
      %458 = vmatmul.mubr.bf16.gmra.mrb[0].mxu0 %v282
      %v459 = vpop.f32.mrb[0].mxu0
      %v460 = vadd.f32 0.0, %v459
      %v461 = vpop.f32.mrb[0].mxu0
      %v462 = vpop.f32.mrb[0].mxu0
      %v463 = vadd.f32 0.0, %v462
      %v464 = vpop.f32.mrb[0].mxu0
      %465 = vmatprep.mubr.bf16.mxu0 %v373
      %466 = vmatmul.mubr.bf16.gmra.mrb[0].mxu0 %v284
      %v467 = vpop.f32.mrb[0].mxu0
      %v468 = vadd.f32 0.0, %v467
      %v469 = vpop.f32.mrb[0].mxu0
      %v470 = vpop.f32.mrb[0].mxu0
      %v471 = vadd.f32 0.0, %v470
      %v472 = vpop.f32.mrb[0].mxu0
      %473 = vmatprep.mubr.bf16.mxu0 %v376
      %474 = vmatmul.mubr.bf16.gmra.mrb[0].mxu0 %v286
      %v475 = vpop.f32.mrb[0].mxu0
      %v476 = vadd.f32 0.0, %v475
      %v477 = vpop.f32.mrb[0].mxu0
      %v478 = vpop.f32.mrb[0].mxu0
      %v479 = vadd.f32 0.0, %v478
      %v480 = vpop.f32.mrb[0].mxu0
      %481 = vdwg.mxu0
      %vm482 = vcmask 523264
      %v483 = vsel %vm482, %v420, 0.0
      %v484 = vsel %vm482, %v423, 0.0
      %v485 = vadd.f32 %v483, %v484
      %v486 = vsel %vm482, %v428, 0.0
      %v487 = vadd.f32 %v485, %v486
      %v488 = vsel %vm482, %v431, 0.0
      %v489 = vadd.f32 %v487, %v488
      %v490 = vsel %vm482, %v436, 0.0
      %v491 = vadd.f32 %v489, %v490
      %v492 = vsel %vm482, %v439, 0.0
      %v493 = vadd.f32 %v491, %v492
      %v494 = vsel %vm482, %v444, 0.0
      %v495 = vadd.f32 %v493, %v494
      %v496 = vsel %vm482, %v447, 0.0
      %v497 = vadd.f32 %v495, %v496
      %v498 = vsel %vm482, %v452, 0.0
      %v499 = vadd.f32 %v497, %v498
      %v500 = vsel %vm482, %v455, 0.0
      %v501 = vadd.f32 %v499, %v500
      %v502 = vsel %vm482, %v460, 0.0
      %v503 = vadd.f32 %v501, %v502
      %v504 = vsel %vm482, %v463, 0.0
      %v505 = vadd.f32 %v503, %v504
      %v506 = vsel %vm482, %v468, 0.0
      %v507 = vadd.f32 %v505, %v506
      %v508 = vsel %vm482, %v471, 0.0
      %v509 = vadd.f32 %v507, %v508
      %v510 = vsel %vm482, %v476, 0.0
      %v511 = vadd.f32 %v509, %v510
      %v512 = vsel %vm482, %v479, 0.0
      %v513 = vadd.f32 %v511, %v512
      %v514 = vrot.slane %v513, 4
      %v515 = vadd.f32 %v513, %v514
      %v516 = vrot.slane %v515, 2
      %v517 = vadd.f32 %v515, %v516
      %v518 = vrot.slane %v517, 1
      %v519 = vadd.f32 %v517, %v518
      %vm520 = vcmask 516096
      %521 = vst.msk [vmem:[%s187] sm:$0x1] %vm520, %v519
      %v522 = vmul.f32 %v420, %v420
      %v523 = vmul.f32 %v423, %v423
      %v524 = vmul.f32 %v428, %v428
      %v525 = vmul.f32 %v431, %v431
      %v526 = vmul.f32 %v436, %v436
      %v527 = vmul.f32 %v439, %v439
      %v528 = vmul.f32 %v444, %v444
      %v529 = vmul.f32 %v447, %v447
      %v530 = vmul.f32 %v452, %v452
      %v531 = vmul.f32 %v455, %v455
      %v532 = vmul.f32 %v460, %v460
      %v533 = vmul.f32 %v463, %v463
      %v534 = vmul.f32 %v468, %v468
      %v535 = vmul.f32 %v471, %v471
      %v536 = vmul.f32 %v476, %v476
      %v537 = vmul.f32 %v479, %v479
      %v538 = vsel %vm482, %v522, 0.0
      %v539 = vsel %vm482, %v523, 0.0
      %v540 = vadd.f32 %v538, %v539
      %v541 = vsel %vm482, %v524, 0.0
      %v542 = vadd.f32 %v540, %v541
      %v543 = vsel %vm482, %v525, 0.0
      %v544 = vadd.f32 %v542, %v543
      %v545 = vsel %vm482, %v526, 0.0
      %v546 = vadd.f32 %v544, %v545
      %v547 = vsel %vm482, %v527, 0.0
      %v548 = vadd.f32 %v546, %v547
      %v549 = vsel %vm482, %v528, 0.0
      %v550 = vadd.f32 %v548, %v549
      %v551 = vsel %vm482, %v529, 0.0
      %v552 = vadd.f32 %v550, %v551
      %v553 = vsel %vm482, %v530, 0.0
      %v554 = vadd.f32 %v552, %v553
      %v555 = vsel %vm482, %v531, 0.0
      %v556 = vadd.f32 %v554, %v555
      %v557 = vsel %vm482, %v532, 0.0
      %v558 = vadd.f32 %v556, %v557
      %v559 = vsel %vm482, %v533, 0.0
      %v560 = vadd.f32 %v558, %v559
      %v561 = vsel %vm482, %v534, 0.0
      %v562 = vadd.f32 %v560, %v561
      %v563 = vsel %vm482, %v535, 0.0
      %v564 = vadd.f32 %v562, %v563
      %v565 = vsel %vm482, %v536, 0.0
      %v566 = vadd.f32 %v564, %v565
      %v567 = vsel %vm482, %v537, 0.0
      %v568 = vadd.f32 %v566, %v567
      %v569 = vrot.slane %v568, 4
      %v570 = vadd.f32 %v568, %v569
      %v571 = vrot.slane %v570, 2
      %v572 = vadd.f32 %v570, %v571
      %v573 = vrot.slane %v572, 1
      %v574 = vadd.f32 %v572, %v573
      %575 = vst.msk [vmem:[%s187 + $0x1] sm:$0x1] %vm520, %v574
      %v576 = vpack.c.bf16 %v423, %v420
      %v577 = vpack.c.bf16 %v431, %v428
      %v578 = vpack.c.bf16 %v439, %v436
      %v579 = vpack.c.bf16 %v447, %v444
      %v580 = vpack.c.bf16 %v455, %v452
      %v581 = vpack.c.bf16 %v463, %v460
      %v582 = vpack.c.bf16 %v471, %v468
      %v583 = vpack.c.bf16 %v479, %v476
      %v592 = vunpack.c.l.b16 %v576
      %v593 = vunpack.c.h.b16 %v576
      %v594 = vunpack.c.l.b16 %v577
      %v595 = vunpack.c.h.b16 %v577
      %v596 = vunpack.c.l.b16 %v578
      %v597 = vunpack.c.h.b16 %v578
      %v598 = vunpack.c.l.b16 %v579
      %v599 = vunpack.c.h.b16 %v579
      %v600 = vunpack.c.l.b16 %v580
      %v601 = vunpack.c.h.b16 %v580
      %v602 = vunpack.c.l.b16 %v581
      %v603 = vunpack.c.h.b16 %v581
      %v604 = vunpack.c.l.b16 %v582
      %v605 = vunpack.c.h.b16 %v582
      %v606 = vunpack.c.l.b16 %v583
      %v607 = vunpack.c.h.b16 %v583
      %v608 = vpack.c.b16 %v592, %v592
      %v609 = vpack.c.b16 %v593, %v593
      %v610 = vpack.c.b16 %v594, %v594
      %v611 = vpack.c.b16 %v595, %v595
      %v612 = vpack.c.b16 %v596, %v596
      %v613 = vpack.c.b16 %v597, %v597
      %v614 = vpack.c.b16 %v598, %v598
      %v615 = vpack.c.b16 %v599, %v599
      %v616 = vpack.c.b16 %v600, %v600
      %v617 = vpack.c.b16 %v601, %v601
      %v618 = vpack.c.b16 %v602, %v602
      %v619 = vpack.c.b16 %v603, %v603
      %v620 = vpack.c.b16 %v604, %v604
      %v621 = vpack.c.b16 %v605, %v605
      %v622 = vpack.c.b16 %v606, %v606
      %v623 = vpack.c.b16 %v607, %v607
      %vm640 = vcmask 519168
      %641 = vst.msk [vmem:[%s182] sm:$0xf] %vm640, %v608
      %642 = vst.msk [vmem:[%s182 + $0x4] sm:$0xf] %vm640, %v609
      %643 = vst.msk [vmem:[%s182 + $0x8] sm:$0xf] %vm640, %v610
      %644 = vst.msk [vmem:[%s182 + $0xc] sm:$0xf] %vm640, %v611
      %645 = vst.msk [vmem:[%s182 + $0x10] sm:$0xf] %vm640, %v612
      %646 = vst.msk [vmem:[%s182 + $0x14] sm:$0xf] %vm640, %v613
      %647 = vst.msk [vmem:[%s182 + $0x18] sm:$0xf] %vm640, %v614
      %648 = vst.msk [vmem:[%s182 + $0x1c] sm:$0xf] %vm640, %v615
      %649 = vst.msk [vmem:[%s182 + $0x20] sm:$0xf] %vm640, %v616
      %650 = vst.msk [vmem:[%s182 + $0x24] sm:$0xf] %vm640, %v617
      %651 = vst.msk [vmem:[%s182 + $0x28] sm:$0xf] %vm640, %v618
      %652 = vst.msk [vmem:[%s182 + $0x2c] sm:$0xf] %vm640, %v619
      %653 = vst.msk [vmem:[%s182 + $0x30] sm:$0xf] %vm640, %v620
      %654 = vst.msk [vmem:[%s182 + $0x34] sm:$0xf] %vm640, %v621
      %655 = vst.msk [vmem:[%s182 + $0x38] sm:$0xf] %vm640, %v622
      %656 = vst.msk [vmem:[%s182 + $0x3c] sm:$0xf] %vm640, %v623
      %s657 = smul.u32 16, %s15
      %p658 = scmp.lt.s32.totalorder %s657, 63
      %s659 = scalar_select %p658, %s657, 63
      %s660 = smul.addr %s659, 4
      %s661 = scalar_lea.vmem %s2, %s660
      %p662 = scmp.lt.s32.totalorder %s15, 3
      %s663 = scalar_select %p662, %s15, 3
      %s664 = smul.addr %s663, 2
      %s665 = scalar_lea.vmem %s3, %s664
      // Predicated region
      $region29: #{resnet_forward.17} parent=27 // pred_check
        %p666 = pneg %p80
      $region30: #{resnet_forward.17} parent=27 // pred_check_branch
        %668 = sbr.rel (%p666) target = $region32
      $region31: #{resnet_forward.17} parent=27 // pred_region
        %s669 = smul.u32 16, %s15
      $region32: #{resnet_forward.17} parent=27 // pred_fallthru
        _
      // Predicated region
      $region33: #{resnet_forward.17} parent=27 // pred_check
        %p670 = pneg %p106
      $region34: #{resnet_forward.17} parent=27 // pred_check_branch
        %672 = sbr.rel (%p670) target = $region36
      $region35: #{resnet_forward.17} parent=27 // pred_region
        _
      $region36: #{resnet_forward.17} parent=27 // pred_fallthru
        _
    $region28: #{resnet_forward.17} parent=5 // pred_fallthru
      _
    %p673 = scmp.le.s32.totalorder 2, %s10
    // Predicated region
    $region37: #{resnet_forward.17} parent=5 // pred_check
      %p674 = pneg %p673
    $region38: #{resnet_forward.17} parent=5 // pred_check_branch
      %676 = sbr.rel (%p674) target = $region40
    $region39: #{resnet_forward.17} parent=5 // pred_region
      %s677 = ssub.s32 %s10, 2
      // Predicated region
      $region41: #{resnet_forward.17} parent=39 // pred_check
        %p678 = pneg %p86
      $region42: #{resnet_forward.17} parent=39 // pred_check_branch
        %680 = sbr.rel (%p678) target = $region44
      $region43: #{resnet_forward.17} parent=39 // pred_region
        %s681 = smul.u32 16, %s16
        %p682 = scmp.lt.s32.totalorder %s681, 63
        %s683 = scalar_select %p682, %s681, 63
        %s684 = smul.addr %s683, 4
        %s685 = scalar_lea.vmem %s2, %s684
      $region44: #{resnet_forward.17} parent=39 // pred_fallthru
        _
      // Predicated region
      $region45: #{resnet_forward.17} parent=39 // pred_check
        %p686 = pneg %p112
      $region46: #{resnet_forward.17} parent=39 // pred_check_branch
        %688 = sbr.rel (%p686) target = $region48
      $region47: #{resnet_forward.17} parent=39 // pred_region
        %p689 = scmp.lt.s32.totalorder %s16, 3
        %s690 = scalar_select %p689, %s16, 3
        %s691 = smul.addr %s690, 2
        %s692 = scalar_lea.vmem %s3, %s691
      $region48: #{resnet_forward.17} parent=39 // pred_fallthru
        _
    $region40: #{resnet_forward.17} parent=5 // pred_fallthru
      _
  $region6: #{resnet_forward.17} parent=0 // loop_footer
    %s14 = sadd.s32 1, %s10
  $region7: #{resnet_forward.17} parent=0 // loop_footer_branch
    %9 = sbr.rel target = $region3
  $region8: #{resnet_forward.17} parent=0 // loop_exit
    _

// kernel: resnet_forward.19
$region0: #{resnet_forward.19}
  #allocation0 [shape = 'u32[]', space=smem, size = 0x4, offset = 0x4, fixed_abs, tag = 'smem constant byte address 0x4 - core index']
  #allocation1 [shape = 'u32[144,128]{1,0:T(1,128)}', space=vmem, size = 0x12000, scoped, tag = 'internal scratch']
  %s0 = inlined_call_operand.vmem [shape: bf16[2,36,9,64], index: 0, kind: input, shape index: {}]
  %s1 = inlined_call_operand.vmem [shape: bf16[2,8,8,64], index: 1, kind: output, shape index: {}]
  %s2 = sld [smem:[#allocation0]]
  $region37: #{resnet_forward.19} parent=0
    _
  %s4 = ssub.s32 1, %s2
  %s5 = scalar_select 0, %s4, %s2
  loop: start=0, step=1, limit=4
  $region2: #{resnet_forward.19} parent=0 // loop_pre_header
    _
  $region3: #{resnet_forward.19} parent=0 // loop_header
    %s7 = sphi 0, %s11
    %p8 = scmp.ge.s32.totalorder %s7, 4
    %s17 = sphi 0, %s19
    %s20 = sphi 0, %s17
    %s21 = sphi 0, %s20
    %s37 = sphi 0, %s21
    %s43 = sphi 0, %s45
    %s46 = sphi 0, %s43
    %s47 = sphi 0, %s46
    %s63 = sphi 0, %s47
  $region4: #{resnet_forward.19} parent=0 // loop_header_branch
    %10 = sbr.rel (%p8) target = $region8
  $region5: #{resnet_forward.19} parent=0 // loop_body
    %s12 = ssub.s32 %s7, 1
    %s13 = ssub.s32 %s7, 2
    %s14 = sadd.s32 %s7, 1
    %s15 = ssub.s32 %s7, %s14
    %p16 = scmp.eq.s32.totalorder %s15, 0
    %s18 = sadd.s32 %s17, 1
    %s19 = scalar_select %p16, %s17, %s18
    %p22 = pneg %p16
    %p23 = scmp.eq.s32.totalorder %s7, 1
    %p24 = por %p22, %p23
    %p25 = scmp.ne.s32.totalorder %s17, %s20
    %p26 = scmp.eq.s32.totalorder %s7, 0
    %p27 = por %p25, %p26
    %p28 = scmp.ne.s32.totalorder %s17, %s20
    %p29 = scmp.eq.s32.totalorder %s12, 1
    %p30 = por %p28, %p29
    %p31 = scmp.ne.s32.totalorder %s20, %s21
    %p32 = scmp.eq.s32.totalorder %s12, 0
    %p33 = por %p31, %p32
    %p34 = scmp.ne.s32.totalorder %s20, %s21
    %p35 = scmp.eq.s32.totalorder %s13, 1
    %p36 = por %p34, %p35
    %p38 = scmp.ne.s32.totalorder %s21, %s37
    %p39 = scmp.eq.s32.totalorder %s13, 0
    %p40 = por %p38, %p39
    %s41 = ssub.s32 %s7, %s14
    %p42 = scmp.eq.s32.totalorder %s41, 0
    %s44 = sadd.s32 %s43, 1
    %s45 = scalar_select %p42, %s43, %s44
    %p48 = pneg %p42
    %p49 = scmp.eq.s32.totalorder %s7, 1
    %p50 = por %p48, %p49
    %p51 = scmp.ne.s32.totalorder %s43, %s46
    %p52 = scmp.eq.s32.totalorder %s7, 0
    %p53 = por %p51, %p52
    %p54 = scmp.ne.s32.totalorder %s43, %s46
    %p55 = scmp.eq.s32.totalorder %s12, 1
    %p56 = por %p54, %p55
    %p57 = scmp.ne.s32.totalorder %s46, %s47
    %p58 = scmp.eq.s32.totalorder %s12, 0
    %p59 = por %p57, %p58
    %p60 = scmp.ne.s32.totalorder %s46, %s47
    %p61 = scmp.eq.s32.totalorder %s13, 1
    %p62 = por %p60, %p61
    %p64 = scmp.ne.s32.totalorder %s47, %s63
    %p65 = scmp.eq.s32.totalorder %s13, 0
    %p66 = por %p64, %p65
    %p67 = scmp.le.s32.totalorder 1, %s7
    %p68 = scmp.lt.s32.totalorder %s7, 3
    %p69 = pnand %p67, %p68
    %p70 = pneg %p69
    // Predicated region
    $region9: #{resnet_forward.19} parent=5 // pred_check
      _
    $region10: #{resnet_forward.19} parent=5 // pred_check_branch
      %72 = sbr.rel (%p69) target = $region12
    $region11: #{resnet_forward.19} parent=5 // pred_region
      %s73 = ssub.s32 %s7, 1
    $region12: #{resnet_forward.19} parent=5 // pred_fallthru
      _
    %p74 = scmp.lt.s32.totalorder %s7, 2
    // Predicated region
    $region13: #{resnet_forward.19} parent=5 // pred_check
      %p75 = pneg %p74
    $region14: #{resnet_forward.19} parent=5 // pred_check_branch
      %77 = sbr.rel (%p75) target = $region16
    $region15: #{resnet_forward.19} parent=5 // pred_region
      // Predicated region
      $region17: #{resnet_forward.19} parent=15 // pred_check
        %p78 = pneg %p27
      $region18: #{resnet_forward.19} parent=15 // pred_check_branch
        %80 = sbr.rel (%p78) target = $region20
      $region19: #{resnet_forward.19} parent=15 // pred_region
        %p81 = scmp.lt.s32.totalorder %s7, 1
        %s82 = scalar_select %p81, %s7, 1
        %s83 = smul.addr %s82, 72
        %s84 = smul.addr %s83, 4
        %s85 = scalar_lea.vmem %s0, %s84
      $region20: #{resnet_forward.19} parent=15 // pred_fallthru
        _
    $region16: #{resnet_forward.19} parent=5 // pred_fallthru
      _
    %p86 = scmp.le.s32.totalorder 1, %s7
    %p87 = scmp.lt.s32.totalorder %s7, 3
    %p88 = pnand %p86, %p87
    %p89 = pneg %p88
    // Predicated region
    $region21: #{resnet_forward.19} parent=5 // pred_check
      _
    $region22: #{resnet_forward.19} parent=5 // pred_check_branch
      %91 = sbr.rel (%p88) target = $region24
    $region23: #{resnet_forward.19} parent=5 // pred_region
      %s92 = ssub.s32 %s7, 1
      %p93 = scmp.lt.s32.totalorder %s12, 1
      %s94 = scalar_select %p93, %s12, 1
      %s95 = smul.addr %s94, 72
      %s96 = smul.addr %s95, 4
      %s97 = scalar_lea.vmem %s0, %s96
      %p98 = pneg %p33
      %p99 = pneg %p30
      %p100 = pneg %p59
      %p101 = pneg %p56
      %p102 = scmp.lt.s32.totalorder %s12, 1
      %s103 = scalar_select %p102, %s12, 1
      %s104 = smul.addr %s103, 8
      %s105 = smul.addr %s104, 4
      %s106 = scalar_lea.vmem %s1, %s105
      %p107 = scmp.lt.s32.totalorder %s12, 1
      %s108 = scalar_select %p107, %s12, 1
      %s109 = smul.addr %s108, 72
      %s110 = smul.addr %s109, 4
      %s111 = scalar_lea.vmem %s0, %s110
      %p112 = scmp.lt.s32.totalorder %s12, 1
      %s113 = scalar_select %p112, %s12, 1
      %s114 = smul.addr %s113, 8
      %s115 = smul.addr %s114, 4
      %s116 = scalar_lea.vmem %s1, %s115
      %v117 = vld [vmem:[%s111] sm:$0xf]
      %v118 = vld [vmem:[%s111 + $0x8] sm:$0xf]
      %v119 = vld [vmem:[%s111 + $0x10] sm:$0xf]
      %v120 = vld [vmem:[%s111 + $0x18] sm:$0xf]
      %v121 = vld [vmem:[%s111 + $0x20] sm:$0xf]
      %v122 = vld [vmem:[%s111 + $0x28] sm:$0xf]
      %v123 = vld [vmem:[%s111 + $0x30] sm:$0xf]
      %v124 = vld [vmem:[%s111 + $0x38] sm:$0xf]
      %s125 = scalar_lea.vmem %s111, 72
      %v126 = vld [vmem:[%s125] sm:$0xf]
      %v127 = vld [vmem:[%s125 + $0x8] sm:$0xf]
      %v128 = vld [vmem:[%s125 + $0x10] sm:$0xf]
      %v129 = vld [vmem:[%s125 + $0x18] sm:$0xf]
      %v130 = vld [vmem:[%s125 + $0x20] sm:$0xf]
      %v131 = vld [vmem:[%s125 + $0x28] sm:$0xf]
      %v132 = vld [vmem:[%s125 + $0x30] sm:$0xf]
      %v133 = vld [vmem:[%s125 + $0x38] sm:$0xf]
      %v134 = vmax.bf16 %v117, %v126
      %v135 = vmax.bf16 %v118, %v127
      %v136 = vmax.bf16 %v119, %v128
      %v137 = vmax.bf16 %v120, %v129
      %v138 = vmax.bf16 %v121, %v130
      %v139 = vmax.bf16 %v122, %v131
      %v140 = vmax.bf16 %v123, %v132
      %v141 = vmax.bf16 %v124, %v133
      %v142 = vld [vmem:[%s111 + $0x4] sm:$0x1]
      %v143 = vld [vmem:[%s111 + $0xc] sm:$0x1]
      %v144 = vld [vmem:[%s111 + $0x14] sm:$0x1]
      %v145 = vld [vmem:[%s111 + $0x1c] sm:$0x1]
      %v146 = vld [vmem:[%s111 + $0x24] sm:$0x1]
      %v147 = vld [vmem:[%s111 + $0x2c] sm:$0x1]
      %v148 = vld [vmem:[%s111 + $0x34] sm:$0x1]
      %v149 = vld [vmem:[%s111 + $0x3c] sm:$0x1]
      %vm150 = vsmask.f32 3328
      %vm151 = vsmask.f32 7440
      %vm152 = vmor %vm150, %vm151
      %v154 = vshrl.u32 %v117, 16
      %v156 = vrot.slane %v154, 4
      %v157 = vshll.u32 %v117, 16
      %v159 = vrot.slane %v157, 5
      %v160 = vor.u32 %v156, %v159
      %v161 = vrot.slane %v160, 4
      %v163 = vshll.u32 %v142, 16
      %v165 = vrot.slane %v163, 5
      %v166 = vsel %vm152, %v161, %v165
      %v168 = vshrl.u32 %v118, 16
      %v170 = vrot.slane %v168, 4
      %v171 = vshll.u32 %v118, 16
      %v173 = vrot.slane %v171, 5
      %v174 = vor.u32 %v170, %v173
      %v175 = vrot.slane %v174, 4
      %v177 = vshll.u32 %v143, 16
      %v179 = vrot.slane %v177, 5
      %v180 = vsel %vm152, %v175, %v179
      %v182 = vshrl.u32 %v119, 16
      %v184 = vrot.slane %v182, 4
      %v185 = vshll.u32 %v119, 16
      %v187 = vrot.slane %v185, 5
      %v188 = vor.u32 %v184, %v187
      %v189 = vrot.slane %v188, 4
      %v191 = vshll.u32 %v144, 16
      %v193 = vrot.slane %v191, 5
      %v194 = vsel %vm152, %v189, %v193
      %v196 = vshrl.u32 %v120, 16
      %v198 = vrot.slane %v196, 4
      %v199 = vshll.u32 %v120, 16
      %v201 = vrot.slane %v199, 5
      %v202 = vor.u32 %v198, %v201
      %v203 = vrot.slane %v202, 4
      %v205 = vshll.u32 %v145, 16
      %v207 = vrot.slane %v205, 5
      %v208 = vsel %vm152, %v203, %v207
      %v210 = vshrl.u32 %v121, 16
      %v212 = vrot.slane %v210, 4
      %v213 = vshll.u32 %v121, 16
      %v215 = vrot.slane %v213, 5
      %v216 = vor.u32 %v212, %v215
      %v217 = vrot.slane %v216, 4
      %v219 = vshll.u32 %v146, 16
      %v221 = vrot.slane %v219, 5
      %v222 = vsel %vm152, %v217, %v221
      %v224 = vshrl.u32 %v122, 16
      %v226 = vrot.slane %v224, 4
      %v227 = vshll.u32 %v122, 16
      %v229 = vrot.slane %v227, 5
      %v230 = vor.u32 %v226, %v229
      %v231 = vrot.slane %v230, 4
      %v233 = vshll.u32 %v147, 16
      %v235 = vrot.slane %v233, 5
      %v236 = vsel %vm152, %v231, %v235
      %v238 = vshrl.u32 %v123, 16
      %v240 = vrot.slane %v238, 4
      %v241 = vshll.u32 %v123, 16
      %v243 = vrot.slane %v241, 5
      %v244 = vor.u32 %v240, %v243
      %v245 = vrot.slane %v244, 4
      %v247 = vshll.u32 %v148, 16
      %v249 = vrot.slane %v247, 5
      %v250 = vsel %vm152, %v245, %v249
      %v252 = vshrl.u32 %v124, 16
      %v254 = vrot.slane %v252, 4
      %v255 = vshll.u32 %v124, 16
      %v257 = vrot.slane %v255, 5
      %v258 = vor.u32 %v254, %v257
      %v259 = vrot.slane %v258, 4
      %v261 = vshll.u32 %v149, 16
      %v263 = vrot.slane %v261, 5
      %v264 = vsel %vm152, %v259, %v263
      %v273 = vmax.bf16 %v134, %v166
      %v274 = vmax.bf16 %v135, %v180
      %v275 = vmax.bf16 %v136, %v194
      %v276 = vmax.bf16 %v137, %v208
      %v277 = vmax.bf16 %v138, %v222
      %v278 = vmax.bf16 %v139, %v236
      %v279 = vmax.bf16 %v140, %v250
      %v280 = vmax.bf16 %v141, %v264
      %s281 = scalar_lea.vmem %s111, 144
      %v282 = vld [vmem:[%s281] sm:$0xf]
      %v283 = vld [vmem:[%s281 + $0x8] sm:$0xf]
      %v284 = vld [vmem:[%s281 + $0x10] sm:$0xf]
      %v285 = vld [vmem:[%s281 + $0x18] sm:$0xf]
      %v286 = vld [vmem:[%s281 + $0x20] sm:$0xf]
      %v287 = vld [vmem:[%s281 + $0x28] sm:$0xf]
      %v288 = vld [vmem:[%s281 + $0x30] sm:$0xf]
      %v289 = vld [vmem:[%s281 + $0x38] sm:$0xf]
      %v290 = vmax.bf16 %v273, %v282
      %v291 = vmax.bf16 %v274, %v283
      %v292 = vmax.bf16 %v275, %v284
      %v293 = vmax.bf16 %v276, %v285
      %v294 = vmax.bf16 %v277, %v286
      %v295 = vmax.bf16 %v278, %v287
      %v296 = vmax.bf16 %v279, %v288
      %v297 = vmax.bf16 %v280, %v289
      %s298 = scalar_lea.vmem %s111, 216
      %v299 = vld [vmem:[%s298] sm:$0xf]
      %v300 = vld [vmem:[%s298 + $0x8] sm:$0xf]
      %v301 = vld [vmem:[%s298 + $0x10] sm:$0xf]
      %v302 = vld [vmem:[%s298 + $0x18] sm:$0xf]
      %v303 = vld [vmem:[%s298 + $0x20] sm:$0xf]
      %v304 = vld [vmem:[%s298 + $0x28] sm:$0xf]
      %v305 = vld [vmem:[%s298 + $0x30] sm:$0xf]
      %v306 = vld [vmem:[%s298 + $0x38] sm:$0xf]
      %v307 = vmax.bf16 %v290, %v299
      %v308 = vmax.bf16 %v291, %v300
      %v309 = vmax.bf16 %v292, %v301
      %v310 = vmax.bf16 %v293, %v302
      %v311 = vmax.bf16 %v294, %v303
      %v312 = vmax.bf16 %v295, %v304
      %v313 = vmax.bf16 %v296, %v305
      %v314 = vmax.bf16 %v297, %v306
      %v315 = vld [vmem:[%s281 + $0x4] sm:$0x1]
      %v316 = vld [vmem:[%s281 + $0xc] sm:$0x1]
      %v317 = vld [vmem:[%s281 + $0x14] sm:$0x1]
      %v318 = vld [vmem:[%s281 + $0x1c] sm:$0x1]
      %v319 = vld [vmem:[%s281 + $0x24] sm:$0x1]
      %v320 = vld [vmem:[%s281 + $0x2c] sm:$0x1]
      %v321 = vld [vmem:[%s281 + $0x34] sm:$0x1]
      %v322 = vld [vmem:[%s281 + $0x3c] sm:$0x1]
      %v324 = vshrl.u32 %v282, 16
      %v326 = vrot.slane %v324, 4
      %v327 = vshll.u32 %v282, 16
      %v329 = vrot.slane %v327, 5
      %v330 = vor.u32 %v326, %v329
      %v331 = vrot.slane %v330, 4
      %v333 = vshll.u32 %v315, 16
      %v335 = vrot.slane %v333, 5
      %v336 = vsel %vm152, %v331, %v335
      %v338 = vshrl.u32 %v283, 16
      %v340 = vrot.slane %v338, 4
      %v341 = vshll.u32 %v283, 16
      %v343 = vrot.slane %v341, 5
      %v344 = vor.u32 %v340, %v343
      %v345 = vrot.slane %v344, 4
      %v347 = vshll.u32 %v316, 16
      %v349 = vrot.slane %v347, 5
      %v350 = vsel %vm152, %v345, %v349
      %v352 = vshrl.u32 %v284, 16
      %v354 = vrot.slane %v352, 4
      %v355 = vshll.u32 %v284, 16
      %v357 = vrot.slane %v355, 5
      %v358 = vor.u32 %v354, %v357
      %v359 = vrot.slane %v358, 4
      %v361 = vshll.u32 %v317, 16
      %v363 = vrot.slane %v361, 5
      %v364 = vsel %vm152, %v359, %v363
      %v366 = vshrl.u32 %v285, 16
      %v368 = vrot.slane %v366, 4
      %v369 = vshll.u32 %v285, 16
      %v371 = vrot.slane %v369, 5
      %v372 = vor.u32 %v368, %v371
      %v373 = vrot.slane %v372, 4
      %v375 = vshll.u32 %v318, 16
      %v377 = vrot.slane %v375, 5
      %v378 = vsel %vm152, %v373, %v377
      %v380 = vshrl.u32 %v286, 16
      %v382 = vrot.slane %v380, 4
      %v383 = vshll.u32 %v286, 16
      %v385 = vrot.slane %v383, 5
      %v386 = vor.u32 %v382, %v385
      %v387 = vrot.slane %v386, 4
      %v389 = vshll.u32 %v319, 16
      %v391 = vrot.slane %v389, 5
      %v392 = vsel %vm152, %v387, %v391
      %v394 = vshrl.u32 %v287, 16
      %v396 = vrot.slane %v394, 4
      %v397 = vshll.u32 %v287, 16
      %v399 = vrot.slane %v397, 5
      %v400 = vor.u32 %v396, %v399
      %v401 = vrot.slane %v400, 4
      %v403 = vshll.u32 %v320, 16
      %v405 = vrot.slane %v403, 5
      %v406 = vsel %vm152, %v401, %v405
      %v408 = vshrl.u32 %v288, 16
      %v410 = vrot.slane %v408, 4
      %v411 = vshll.u32 %v288, 16
      %v413 = vrot.slane %v411, 5
      %v414 = vor.u32 %v410, %v413
      %v415 = vrot.slane %v414, 4
      %v417 = vshll.u32 %v321, 16
      %v419 = vrot.slane %v417, 5
      %v420 = vsel %vm152, %v415, %v419
      %v422 = vshrl.u32 %v289, 16
      %v424 = vrot.slane %v422, 4
      %v425 = vshll.u32 %v289, 16
      %v427 = vrot.slane %v425, 5
      %v428 = vor.u32 %v424, %v427
      %v429 = vrot.slane %v428, 4
      %v431 = vshll.u32 %v322, 16
      %v433 = vrot.slane %v431, 5
      %v434 = vsel %vm152, %v429, %v433
      %v443 = vmax.bf16 %v307, %v336
      %v444 = vmax.bf16 %v308, %v350
      %v445 = vmax.bf16 %v309, %v364
      %v446 = vmax.bf16 %v310, %v378
      %v447 = vmax.bf16 %v311, %v392
      %v448 = vmax.bf16 %v312, %v406
      %v449 = vmax.bf16 %v313, %v420
      %v450 = vmax.bf16 %v314, %v434
      %s451 = scalar_lea.vmem %s111, 8
      %v452 = vld [vmem:[%s451] sm:$0xf]
      %v453 = vld [vmem:[%s451 + $0x8] sm:$0xf]
      %v454 = vld [vmem:[%s451 + $0x10] sm:$0xf]
      %v455 = vld [vmem:[%s451 + $0x18] sm:$0xf]
      %v456 = vld [vmem:[%s451 + $0x20] sm:$0xf]
      %v457 = vld [vmem:[%s451 + $0x28] sm:$0xf]
      %v458 = vld [vmem:[%s451 + $0x30] sm:$0xf]
      %v459 = vld [vmem:[%s451 + $0x38] sm:$0xf]
      %v460 = vmax.bf16 %v443, %v452
      %v461 = vmax.bf16 %v444, %v453
      %v462 = vmax.bf16 %v445, %v454
      %v463 = vmax.bf16 %v446, %v455
      %v464 = vmax.bf16 %v447, %v456
      %v465 = vmax.bf16 %v448, %v457
      %v466 = vmax.bf16 %v449, %v458
      %v467 = vmax.bf16 %v450, %v459
      %s468 = scalar_lea.vmem %s111, 80
      %v469 = vld [vmem:[%s468] sm:$0xf]
      %v470 = vld [vmem:[%s468 + $0x8] sm:$0xf]
      %v471 = vld [vmem:[%s468 + $0x10] sm:$0xf]
      %v472 = vld [vmem:[%s468 + $0x18] sm:$0xf]
      %v473 = vld [vmem:[%s468 + $0x20] sm:$0xf]
      %v474 = vld [vmem:[%s468 + $0x28] sm:$0xf]
      %v475 = vld [vmem:[%s468 + $0x30] sm:$0xf]
      %v476 = vld [vmem:[%s468 + $0x38] sm:$0xf]
      %v477 = vmax.bf16 %v460, %v469
      %v478 = vmax.bf16 %v461, %v470
      %v479 = vmax.bf16 %v462, %v471
      %v480 = vmax.bf16 %v463, %v472
      %v481 = vmax.bf16 %v464, %v473
      %v482 = vmax.bf16 %v465, %v474
      %v483 = vmax.bf16 %v466, %v475
      %v484 = vmax.bf16 %v467, %v476
      %v485 = vld [vmem:[%s451 + $0x4] sm:$0x1]
      %v486 = vld [vmem:[%s451 + $0xc] sm:$0x1]
      %v487 = vld [vmem:[%s451 + $0x14] sm:$0x1]
      %v488 = vld [vmem:[%s451 + $0x1c] sm:$0x1]
      %v489 = vld [vmem:[%s451 + $0x24] sm:$0x1]
      %v490 = vld [vmem:[%s451 + $0x2c] sm:$0x1]
      %v491 = vld [vmem:[%s451 + $0x34] sm:$0x1]
      %v492 = vld [vmem:[%s451 + $0x3c] sm:$0x1]
      %v494 = vshrl.u32 %v452, 16
      %v496 = vrot.slane %v494, 4
      %v497 = vshll.u32 %v452, 16
      %v499 = vrot.slane %v497, 5
      %v500 = vor.u32 %v496, %v499
      %v501 = vrot.slane %v500, 4
      %v503 = vshll.u32 %v485, 16
      %v505 = vrot.slane %v503, 5
      %v506 = vsel %vm152, %v501, %v505
      %v508 = vshrl.u32 %v453, 16
      %v510 = vrot.slane %v508, 4
      %v511 = vshll.u32 %v453, 16
      %v513 = vrot.slane %v511, 5
      %v514 = vor.u32 %v510, %v513
      %v515 = vrot.slane %v514, 4
      %v517 = vshll.u32 %v486, 16
      %v519 = vrot.slane %v517, 5
      %v520 = vsel %vm152, %v515, %v519
      %v522 = vshrl.u32 %v454, 16
      %v524 = vrot.slane %v522, 4
      %v525 = vshll.u32 %v454, 16
      %v527 = vrot.slane %v525, 5
      %v528 = vor.u32 %v524, %v527
      %v529 = vrot.slane %v528, 4
      %v531 = vshll.u32 %v487, 16
      %v533 = vrot.slane %v531, 5
      %v534 = vsel %vm152, %v529, %v533
      %v536 = vshrl.u32 %v455, 16
      %v538 = vrot.slane %v536, 4
      %v539 = vshll.u32 %v455, 16
      %v541 = vrot.slane %v539, 5
      %v542 = vor.u32 %v538, %v541
      %v543 = vrot.slane %v542, 4
      %v545 = vshll.u32 %v488, 16
      %v547 = vrot.slane %v545, 5
      %v548 = vsel %vm152, %v543, %v547
      %v550 = vshrl.u32 %v456, 16
      %v552 = vrot.slane %v550, 4
      %v553 = vshll.u32 %v456, 16
      %v555 = vrot.slane %v553, 5
      %v556 = vor.u32 %v552, %v555
      %v557 = vrot.slane %v556, 4
      %v559 = vshll.u32 %v489, 16
      %v561 = vrot.slane %v559, 5
      %v562 = vsel %vm152, %v557, %v561
      %v564 = vshrl.u32 %v457, 16
      %v566 = vrot.slane %v564, 4
      %v567 = vshll.u32 %v457, 16
      %v569 = vrot.slane %v567, 5
      %v570 = vor.u32 %v566, %v569
      %v571 = vrot.slane %v570, 4
      %v573 = vshll.u32 %v490, 16
      %v575 = vrot.slane %v573, 5
      %v576 = vsel %vm152, %v571, %v575
      %v578 = vshrl.u32 %v458, 16
      %v580 = vrot.slane %v578, 4
      %v581 = vshll.u32 %v458, 16
      %v583 = vrot.slane %v581, 5
      %v584 = vor.u32 %v580, %v583
      %v585 = vrot.slane %v584, 4
      %v587 = vshll.u32 %v491, 16
      %v589 = vrot.slane %v587, 5
      %v590 = vsel %vm152, %v585, %v589
      %v592 = vshrl.u32 %v459, 16
      %v594 = vrot.slane %v592, 4
      %v595 = vshll.u32 %v459, 16
      %v597 = vrot.slane %v595, 5
      %v598 = vor.u32 %v594, %v597
      %v599 = vrot.slane %v598, 4
      %v601 = vshll.u32 %v492, 16
      %v603 = vrot.slane %v601, 5
      %v604 = vsel %vm152, %v599, %v603
      %v613 = vmax.bf16 %v477, %v506
      %v614 = vmax.bf16 %v478, %v520
      %v615 = vmax.bf16 %v479, %v534
      %v616 = vmax.bf16 %v480, %v548
      %v617 = vmax.bf16 %v481, %v562
      %v618 = vmax.bf16 %v482, %v576
      %v619 = vmax.bf16 %v483, %v590
      %v620 = vmax.bf16 %v484, %v604
      %vm621 = vcmask 519168
      %622 = vst.msk [vmem:[%s116] sm:$0xf] %vm621, %v613
      %623 = vst.msk [vmem:[%s116 + $0x4] sm:$0xf] %vm621, %v614
      %624 = vst.msk [vmem:[%s116 + $0x8] sm:$0xf] %vm621, %v615
      %625 = vst.msk [vmem:[%s116 + $0xc] sm:$0xf] %vm621, %v616
      %626 = vst.msk [vmem:[%s116 + $0x10] sm:$0xf] %vm621, %v617
      %627 = vst.msk [vmem:[%s116 + $0x14] sm:$0xf] %vm621, %v618
      %628 = vst.msk [vmem:[%s116 + $0x18] sm:$0xf] %vm621, %v619
      %629 = vst.msk [vmem:[%s116 + $0x1c] sm:$0xf] %vm621, %v620
      %p630 = scmp.lt.s32.totalorder %s12, 1
      %s631 = scalar_select %p630, %s12, 1
      %s632 = smul.addr %s631, 8
      %s633 = smul.addr %s632, 4
      %s634 = scalar_lea.vmem %s1, %s633
      // Predicated region
      $region25: #{resnet_forward.19} parent=23 // pred_check
        %p635 = pneg %p56
      $region26: #{resnet_forward.19} parent=23 // pred_check_branch
        %637 = sbr.rel (%p635) target = $region28
      $region27: #{resnet_forward.19} parent=23 // pred_region
        _
      $region28: #{resnet_forward.19} parent=23 // pred_fallthru
        _
    $region24: #{resnet_forward.19} parent=5 // pred_fallthru
      _
    %p638 = scmp.le.s32.totalorder 2, %s7
    // Predicated region
    $region29: #{resnet_forward.19} parent=5 // pred_check
      %p639 = pneg %p638
    $region30: #{resnet_forward.19} parent=5 // pred_check_branch
      %641 = sbr.rel (%p639) target = $region32
    $region31: #{resnet_forward.19} parent=5 // pred_region
      %s642 = ssub.s32 %s7, 2
      // Predicated region
      $region33: #{resnet_forward.19} parent=31 // pred_check
        %p643 = pneg %p62
      $region34: #{resnet_forward.19} parent=31 // pred_check_branch
        %645 = sbr.rel (%p643) target = $region36
      $region35: #{resnet_forward.19} parent=31 // pred_region
        %p646 = scmp.lt.s32.totalorder %s13, 1
        %s647 = scalar_select %p646, %s13, 1
        %s648 = smul.addr %s647, 8
        %s649 = smul.addr %s648, 4
        %s650 = scalar_lea.vmem %s1, %s649
      $region36: #{resnet_forward.19} parent=31 // pred_fallthru
        _
    $region32: #{resnet_forward.19} parent=5 // pred_fallthru
      _
  $region6: #{resnet_forward.19} parent=0 // loop_footer
    %s11 = sadd.s32 1, %s7
  $region7: #{resnet_forward.19} parent=0 // loop_footer_branch
    %6 = sbr.rel target = $region3
  $region8: #{resnet_forward.19} parent=0 // loop_exit
    _

// kernel: resnet_forward.22
$region0: #{resnet_forward.22}
  #allocation0 [shape = 'u32[]', space=smem, size = 0x4, offset = 0x4, fixed_abs, tag = 'smem constant byte address 0x4 - core index']
  #allocation1 [shape = 'u32[144,128]{1,0:T(1,128)}', space=vmem, size = 0x12000, scoped, tag = 'internal scratch']
  %s0 = inlined_call_operand.vmem [shape: bf16[64,128], index: 0, kind: input, shape index: {}]
  %s1 = inlined_call_operand.vmem [shape: f32[1,128], index: 1, kind: input, shape index: {}]
  %s2 = inlined_call_operand.vmem [shape: f32[1,128], index: 2, kind: input, shape index: {}]
  %s3 = inlined_call_operand.vmem [shape: bf16[64,128], index: 3, kind: input, shape index: {}]
  %s4 = inlined_call_operand.vmem [shape: bf16[64,128], index: 4, kind: output, shape index: {}]
  %s5 = sld [smem:[#allocation0]]
  $region26: #{resnet_forward.22} parent=0
    _
  %s7 = ssub.s32 1, %s5
  %s8 = scalar_select 0, %s7, %s5
  // Predicated region
  $region2: #{resnet_forward.22} parent=0 // pred_check
    _
  $region3: #{resnet_forward.22} parent=0 // pred_check_branch
    %10 = sbr.rel (0) target = $region5
  $region4: #{resnet_forward.22} parent=0 // pred_region
    _
  $region5: #{resnet_forward.22} parent=0 // pred_fallthru
    _
  // Predicated region
  $region6: #{resnet_forward.22} parent=0 // pred_check
    _
  $region7: #{resnet_forward.22} parent=0 // pred_check_branch
    %12 = sbr.rel (0) target = $region9
  $region8: #{resnet_forward.22} parent=0 // pred_region
    _
  $region9: #{resnet_forward.22} parent=0 // pred_fallthru
    _
  // Predicated region
  $region10: #{resnet_forward.22} parent=0 // pred_check
    _
  $region11: #{resnet_forward.22} parent=0 // pred_check_branch
    %14 = sbr.rel (0) target = $region13
  $region12: #{resnet_forward.22} parent=0 // pred_region
    _
  $region13: #{resnet_forward.22} parent=0 // pred_fallthru
    _
  // Predicated region
  $region14: #{resnet_forward.22} parent=0 // pred_check
    _
  $region15: #{resnet_forward.22} parent=0 // pred_check_branch
    %16 = sbr.rel (0) target = $region17
  $region16: #{resnet_forward.22} parent=0 // pred_region
    _
  $region17: #{resnet_forward.22} parent=0 // pred_fallthru
    _
  %v17 = vld [vmem:[%s0] sm:$0xf]
  %v18 = vld [vmem:[%s0 + $0x4] sm:$0xf]
  %v19 = vld [vmem:[%s0 + $0x8] sm:$0xf]
  %v20 = vld [vmem:[%s0 + $0xc] sm:$0xf]
  %v21 = vld [vmem:[%s0 + $0x10] sm:$0xf]
  %v22 = vld [vmem:[%s0 + $0x14] sm:$0xf]
  %v23 = vld [vmem:[%s0 + $0x18] sm:$0xf]
  %v24 = vld [vmem:[%s0 + $0x1c] sm:$0xf]
  %v25 = vunpack.c.l.bf16 %v17
  %v26 = vunpack.c.l.bf16 %v18
  %v27 = vunpack.c.l.bf16 %v19
  %v28 = vunpack.c.l.bf16 %v20
  %v29 = vunpack.c.l.bf16 %v21
  %v30 = vunpack.c.l.bf16 %v22
  %v31 = vunpack.c.l.bf16 %v23
  %v32 = vunpack.c.l.bf16 %v24
  %v33 = vld [vmem:[%s1] sm:$0x1]
  %v35 = vlaneseq
  %v36 = vshrl.u32 %v35, 7
  %v37 = vsub.s32 0, %v36
  %v38 = vrot.slane %v33, %v37
  %v40 = vmul.f32 %v25, %v38
  %v41 = vmul.f32 %v26, %v38
  %v42 = vmul.f32 %v27, %v38
  %v43 = vmul.f32 %v28, %v38
  %v44 = vmul.f32 %v29, %v38
  %v45 = vmul.f32 %v30, %v38
  %v46 = vmul.f32 %v31, %v38
  %v47 = vmul.f32 %v32, %v38
  %v48 = vld [vmem:[%s2] sm:$0x1]
  %v50 = vlaneseq
  %v51 = vshrl.u32 %v50, 7
  %v52 = vsub.s32 0, %v51
  %v53 = vrot.slane %v48, %v52
  %v55 = vadd.f32 %v40, %v53
  %v56 = vadd.f32 %v41, %v53
  %v57 = vadd.f32 %v42, %v53
  %v58 = vadd.f32 %v43, %v53
  %v59 = vadd.f32 %v44, %v53
  %v60 = vadd.f32 %v45, %v53
  %v61 = vadd.f32 %v46, %v53
  %v62 = vadd.f32 %v47, %v53
  %v63 = vld [vmem:[%s3] sm:$0xf]
  %v64 = vld [vmem:[%s3 + $0x4] sm:$0xf]
  %v65 = vld [vmem:[%s3 + $0x8] sm:$0xf]
  %v66 = vld [vmem:[%s3 + $0xc] sm:$0xf]
  %v67 = vld [vmem:[%s3 + $0x10] sm:$0xf]
  %v68 = vld [vmem:[%s3 + $0x14] sm:$0xf]
  %v69 = vld [vmem:[%s3 + $0x18] sm:$0xf]
  %v70 = vld [vmem:[%s3 + $0x1c] sm:$0xf]
  %v71 = vunpack.c.l.bf16 %v63
  %v72 = vunpack.c.l.bf16 %v64
  %v73 = vunpack.c.l.bf16 %v65
  %v74 = vunpack.c.l.bf16 %v66
  %v75 = vunpack.c.l.bf16 %v67
  %v76 = vunpack.c.l.bf16 %v68
  %v77 = vunpack.c.l.bf16 %v69
  %v78 = vunpack.c.l.bf16 %v70
  %v79 = vadd.f32 %v55, %v71
  %v80 = vadd.f32 %v56, %v72
  %v81 = vadd.f32 %v57, %v73
  %v82 = vadd.f32 %v58, %v74
  %v83 = vadd.f32 %v59, %v75
  %v84 = vadd.f32 %v60, %v76
  %v85 = vadd.f32 %v61, %v77
  %v86 = vadd.f32 %v62, %v78
  %v87 = vmax.f32 %v79, 0.0
  %v88 = vmax.f32 %v80, 0.0
  %v89 = vmax.f32 %v81, 0.0
  %v90 = vmax.f32 %v82, 0.0
  %v91 = vmax.f32 %v83, 0.0
  %v92 = vmax.f32 %v84, 0.0
  %v93 = vmax.f32 %v85, 0.0
  %v94 = vmax.f32 %v86, 0.0
  %v95 = vpack.c.bf16 %v88, %v87
  %v96 = vpack.c.bf16 %v90, %v89
  %v97 = vpack.c.bf16 %v92, %v91
  %v98 = vpack.c.bf16 %v94, %v93
  %v103 = vunpack.c.l.b16 %v95
  %v104 = vunpack.c.h.b16 %v95
  %v105 = vunpack.c.l.b16 %v96
  %v106 = vunpack.c.h.b16 %v96
  %v107 = vunpack.c.l.b16 %v97
  %v108 = vunpack.c.h.b16 %v97
  %v109 = vunpack.c.l.b16 %v98
  %v110 = vunpack.c.h.b16 %v98
  %v111 = vpack.c.b16 %v103, %v103
  %v112 = vpack.c.b16 %v104, %v104
  %v113 = vpack.c.b16 %v105, %v105
  %v114 = vpack.c.b16 %v106, %v106
  %v115 = vpack.c.b16 %v107, %v107
  %v116 = vpack.c.b16 %v108, %v108
  %v117 = vpack.c.b16 %v109, %v109
  %v118 = vpack.c.b16 %v110, %v110
  %127 = vst [vmem:[%s4] sm:$0xf] %v111
  %128 = vst [vmem:[%s4 + $0x4] sm:$0xf] %v112
  %129 = vst [vmem:[%s4 + $0x8] sm:$0xf] %v113
  %130 = vst [vmem:[%s4 + $0xc] sm:$0xf] %v114
  %131 = vst [vmem:[%s4 + $0x10] sm:$0xf] %v115
  %132 = vst [vmem:[%s4 + $0x14] sm:$0xf] %v116
  %133 = vst [vmem:[%s4 + $0x18] sm:$0xf] %v117
  %134 = vst [vmem:[%s4 + $0x1c] sm:$0xf] %v118
  // Predicated region
  $region18: #{resnet_forward.22} parent=0 // pred_check
    _
  $region19: #{resnet_forward.22} parent=0 // pred_check_branch
    %136 = sbr.rel (0) target = $region21
  $region20: #{resnet_forward.22} parent=0 // pred_region
    _
  $region21: #{resnet_forward.22} parent=0 // pred_fallthru
    _
  // Predicated region
  $region22: #{resnet_forward.22} parent=0 // pred_check
    _
  $region23: #{resnet_forward.22} parent=0 // pred_check_branch
    %138 = sbr.rel (0) target = $region25
  $region24: #{resnet_forward.22} parent=0 // pred_region
    _
  $region25: #{resnet_forward.22} parent=0 // pred_fallthru
    _

// kernel: resnet_forward.20
$region0: #{resnet_forward.20}
  #allocation0 [shape = 'u32[]', space=smem, size = 0x4, offset = 0x4, fixed_abs, tag = 'smem constant byte address 0x4 - core index']
  #allocation1 [shape = 'u32[144,128]{1,0:T(1,128)}', space=vmem, size = 0x12000, scoped, tag = 'internal scratch']
  #allocation2 [shape = 'bf16[8,8,64]{2,1,0:T(8,128)(2,1)}', space=vmem, size = 0x4000, scoped, tag = 'scratch operand']
  #allocation3 [shape = 'bf16[8,8,256]{2,1,0:T(8,128)(2,1)}', space=vmem, size = 0x8000, scoped, tag = 'scratch operand']
  %s0 = inlined_call_operand.vmem [shape: bf16[2,8,8,64], index: 0, kind: input, shape index: {}]
  %s1 = inlined_call_operand.vmem [shape: f32[1,64], index: 1, kind: input, shape index: {}]
  %s2 = inlined_call_operand.vmem [shape: f32[1,64], index: 2, kind: input, shape index: {}]
  %s3 = inlined_call_operand.vmem [shape: bf16[3,256,64], index: 3, kind: input, shape index: {}]
  %s4 = inlined_call_operand.vmem [shape: bf16[2,8,8,64], index: 4, kind: output, shape index: {0}]
  %s5 = inlined_call_operand.vmem [shape: f32[2,2,64], index: 5, kind: output, shape index: {1}]
  %6 = xla_tuple %s4, %s5
  %s7 = sld [smem:[#allocation0]]
  $region57: #{resnet_forward.20} parent=0
    _
  %s9 = ssub.s32 1, %s7
  %s10 = scalar_select 0, %s9, %s7
  loop: start=0, step=1, limit=4
  $region2: #{resnet_forward.20} parent=0 // loop_pre_header
    _
  $region3: #{resnet_forward.20} parent=0 // loop_header
    %s12 = sphi 0, %s16
    %p13 = scmp.ge.s32.totalorder %s12, 4
    %s22 = sphi 0, %s24
    %s25 = sphi 0, %s22
    %s26 = sphi 0, %s25
    %s42 = sphi 0, %s26
    %s46 = sphi 0, %s46
    %s48 = sphi 0, %s46
    %s49 = sphi 0, %s48
    %s63 = sphi 0, %s49
    %s67 = sphi 0, %s67
    %s69 = sphi 0, %s67
    %s70 = sphi 0, %s69
    %s84 = sphi 0, %s70
    %s88 = sphi 0, %s88
    %s90 = sphi 0, %s88
    %s91 = sphi 0, %s90
    %s105 = sphi 0, %s91
    %s111 = sphi 0, %s113
    %s114 = sphi 0, %s111
    %s115 = sphi 0, %s114
    %s131 = sphi 0, %s115
    %s137 = sphi 0, %s139
    %s140 = sphi 0, %s137
    %s141 = sphi 0, %s140
    %s157 = sphi 0, %s141
  $region4: #{resnet_forward.20} parent=0 // loop_header_branch
    %15 = sbr.rel (%p13) target = $region8
  $region5: #{resnet_forward.20} parent=0 // loop_body
    %s17 = ssub.s32 %s12, 1
    %s18 = ssub.s32 %s12, 2
    %s19 = sadd.s32 %s12, 1
    %s20 = ssub.s32 %s12, %s19
    %p21 = scmp.eq.s32.totalorder %s20, 0
    %s23 = sadd.s32 %s22, 1
    %s24 = scalar_select %p21, %s22, %s23
    %p27 = pneg %p21
    %p28 = scmp.eq.s32.totalorder %s12, 1
    %p29 = por %p27, %p28
    %p30 = scmp.ne.s32.totalorder %s22, %s25
    %p31 = scmp.eq.s32.totalorder %s12, 0
    %p32 = por %p30, %p31
    %p33 = scmp.ne.s32.totalorder %s22, %s25
    %p34 = scmp.eq.s32.totalorder %s17, 1
    %p35 = por %p33, %p34
    %p36 = scmp.ne.s32.totalorder %s25, %s26
    %p37 = scmp.eq.s32.totalorder %s17, 0
    %p38 = por %p36, %p37
    %p39 = scmp.ne.s32.totalorder %s25, %s26
    %p40 = scmp.eq.s32.totalorder %s18, 1
    %p41 = por %p39, %p40
    %p43 = scmp.ne.s32.totalorder %s26, %s42
    %p44 = scmp.eq.s32.totalorder %s18, 0
    %p45 = por %p43, %p44
    %s47 = sadd.s32 %s46, 1
    %p50 = scmp.eq.s32.totalorder %s12, 1
    %p51 = scmp.ne.s32.totalorder %s46, %s48
    %p52 = scmp.eq.s32.totalorder %s12, 0
    %p53 = por %p51, %p52
    %p54 = scmp.ne.s32.totalorder %s46, %s48
    %p55 = scmp.eq.s32.totalorder %s17, 1
    %p56 = por %p54, %p55
    %p57 = scmp.ne.s32.totalorder %s48, %s49
    %p58 = scmp.eq.s32.totalorder %s17, 0
    %p59 = por %p57, %p58
    %p60 = scmp.ne.s32.totalorder %s48, %s49
    %p61 = scmp.eq.s32.totalorder %s18, 1
    %p62 = por %p60, %p61
    %p64 = scmp.ne.s32.totalorder %s49, %s63
    %p65 = scmp.eq.s32.totalorder %s18, 0
    %p66 = por %p64, %p65
    %s68 = sadd.s32 %s67, 1
    %p71 = scmp.eq.s32.totalorder %s12, 1
    %p72 = scmp.ne.s32.totalorder %s67, %s69
    %p73 = scmp.eq.s32.totalorder %s12, 0
    %p74 = por %p72, %p73
    %p75 = scmp.ne.s32.totalorder %s67, %s69
    %p76 = scmp.eq.s32.totalorder %s17, 1
    %p77 = por %p75, %p76
    %p78 = scmp.ne.s32.totalorder %s69, %s70
    %p79 = scmp.eq.s32.totalorder %s17, 0
    %p80 = por %p78, %p79
    %p81 = scmp.ne.s32.totalorder %s69, %s70
    %p82 = scmp.eq.s32.totalorder %s18, 1
    %p83 = por %p81, %p82
    %p85 = scmp.ne.s32.totalorder %s70, %s84
    %p86 = scmp.eq.s32.totalorder %s18, 0
    %p87 = por %p85, %p86
    %s89 = sadd.s32 %s88, 1
    %p92 = scmp.eq.s32.totalorder %s12, 1
    %p93 = scmp.ne.s32.totalorder %s88, %s90
    %p94 = scmp.eq.s32.totalorder %s12, 0
    %p95 = por %p93, %p94
    %p96 = scmp.ne.s32.totalorder %s88, %s90
    %p97 = scmp.eq.s32.totalorder %s17, 1
    %p98 = por %p96, %p97
    %p99 = scmp.ne.s32.totalorder %s90, %s91
    %p100 = scmp.eq.s32.totalorder %s17, 0
    %p101 = por %p99, %p100
    %p102 = scmp.ne.s32.totalorder %s90, %s91
    %p103 = scmp.eq.s32.totalorder %s18, 1
    %p104 = por %p102, %p103
    %p106 = scmp.ne.s32.totalorder %s91, %s105
    %p107 = scmp.eq.s32.totalorder %s18, 0
    %p108 = por %p106, %p107
    %s109 = ssub.s32 %s12, %s19
    %p110 = scmp.eq.s32.totalorder %s109, 0
    %s112 = sadd.s32 %s111, 1
    %s113 = scalar_select %p110, %s111, %s112
    %p116 = pneg %p110
    %p117 = scmp.eq.s32.totalorder %s12, 1
    %p118 = por %p116, %p117
    %p119 = scmp.ne.s32.totalorder %s111, %s114
    %p120 = scmp.eq.s32.totalorder %s12, 0
    %p121 = por %p119, %p120
    %p122 = scmp.ne.s32.totalorder %s111, %s114
    %p123 = scmp.eq.s32.totalorder %s17, 1
    %p124 = por %p122, %p123
    %p125 = scmp.ne.s32.totalorder %s114, %s115
    %p126 = scmp.eq.s32.totalorder %s17, 0
    %p127 = por %p125, %p126
    %p128 = scmp.ne.s32.totalorder %s114, %s115
    %p129 = scmp.eq.s32.totalorder %s18, 1
    %p130 = por %p128, %p129
    %p132 = scmp.ne.s32.totalorder %s115, %s131
    %p133 = scmp.eq.s32.totalorder %s18, 0
    %p134 = por %p132, %p133
    %s135 = ssub.s32 %s12, %s19
    %p136 = scmp.eq.s32.totalorder %s135, 0
    %s138 = sadd.s32 %s137, 1
    %s139 = scalar_select %p136, %s137, %s138
    %p142 = pneg %p136
    %p143 = scmp.eq.s32.totalorder %s12, 1
    %p144 = por %p142, %p143
    %p145 = scmp.ne.s32.totalorder %s137, %s140
    %p146 = scmp.eq.s32.totalorder %s12, 0
    %p147 = por %p145, %p146
    %p148 = scmp.ne.s32.totalorder %s137, %s140
    %p149 = scmp.eq.s32.totalorder %s17, 1
    %p150 = por %p148, %p149
    %p151 = scmp.ne.s32.totalorder %s140, %s141
    %p152 = scmp.eq.s32.totalorder %s17, 0
    %p153 = por %p151, %p152
    %p154 = scmp.ne.s32.totalorder %s140, %s141
    %p155 = scmp.eq.s32.totalorder %s18, 1
    %p156 = por %p154, %p155
    %p158 = scmp.ne.s32.totalorder %s141, %s157
    %p159 = scmp.eq.s32.totalorder %s18, 0
    %p160 = por %p158, %p159
    %p161 = scmp.le.s32.totalorder 1, %s12
    %p162 = scmp.lt.s32.totalorder %s12, 3
    %p163 = pnand %p161, %p162
    %p164 = pneg %p163
    // Predicated region
    $region9: #{resnet_forward.20} parent=5 // pred_check
      _
    $region10: #{resnet_forward.20} parent=5 // pred_check_branch
      %166 = sbr.rel (%p163) target = $region12
    $region11: #{resnet_forward.20} parent=5 // pred_region
      %s167 = ssub.s32 %s12, 1
      // Predicated region
      $region13: #{resnet_forward.20} parent=11 // pred_check
        %p168 = pneg %p59
      $region14: #{resnet_forward.20} parent=11 // pred_check_branch
        %170 = sbr.rel (%p168) target = $region16
      $region15: #{resnet_forward.20} parent=11 // pred_region
        _
      $region16: #{resnet_forward.20} parent=11 // pred_fallthru
        _
      // Predicated region
      $region17: #{resnet_forward.20} parent=11 // pred_check
        %p171 = pneg %p80
      $region18: #{resnet_forward.20} parent=11 // pred_check_branch
        %173 = sbr.rel (%p171) target = $region20
      $region19: #{resnet_forward.20} parent=11 // pred_region
        _
      $region20: #{resnet_forward.20} parent=11 // pred_fallthru
        _
      // Predicated region
      $region21: #{resnet_forward.20} parent=11 // pred_check
        %p174 = pneg %p101
      $region22: #{resnet_forward.20} parent=11 // pred_check_branch
        %176 = sbr.rel (%p174) target = $region24
      $region23: #{resnet_forward.20} parent=11 // pred_region
        _
      $region24: #{resnet_forward.20} parent=11 // pred_fallthru
        _
    $region12: #{resnet_forward.20} parent=5 // pred_fallthru
      _
    %p177 = scmp.lt.s32.totalorder %s12, 2
    // Predicated region
    $region25: #{resnet_forward.20} parent=5 // pred_check
      %p178 = pneg %p177
    $region26: #{resnet_forward.20} parent=5 // pred_check_branch
      %180 = sbr.rel (%p178) target = $region28
    $region27: #{resnet_forward.20} parent=5 // pred_region
      // Predicated region
      $region29: #{resnet_forward.20} parent=27 // pred_check
        %p181 = pneg %p32
      $region30: #{resnet_forward.20} parent=27 // pred_check_branch
        %183 = sbr.rel (%p181) target = $region32
      $region31: #{resnet_forward.20} parent=27 // pred_region
        %p184 = scmp.lt.s32.totalorder %s12, 1
        %s185 = scalar_select %p184, %s12, 1
        %s186 = smul.addr %s185, 8
        %s187 = smul.addr %s186, 4
        %s188 = scalar_lea.vmem %s0, %s187
      $region32: #{resnet_forward.20} parent=27 // pred_fallthru
        _
    $region28: #{resnet_forward.20} parent=5 // pred_fallthru
      _
    %p189 = scmp.le.s32.totalorder 1, %s12
    %p190 = scmp.lt.s32.totalorder %s12, 3
    %p191 = pnand %p189, %p190
    %p192 = pneg %p191
    // Predicated region
    $region33: #{resnet_forward.20} parent=5 // pred_check
      _
    $region34: #{resnet_forward.20} parent=5 // pred_check_branch
      %194 = sbr.rel (%p191) target = $region36
    $region35: #{resnet_forward.20} parent=5 // pred_region
      %s195 = ssub.s32 %s12, 1
      %p196 = scmp.lt.s32.totalorder %s17, 1
      %s197 = scalar_select %p196, %s17, 1
      %s198 = smul.addr %s197, 8
      %s199 = smul.addr %s198, 4
      %s200 = scalar_lea.vmem %s0, %s199
      %p201 = pneg %p38
      %p202 = pneg %p35
      %p203 = pneg %p59
      %p204 = pneg %p56
      %p205 = pneg %p80
      %p206 = pneg %p77
      %p207 = pneg %p101
      %p208 = pneg %p98
      %p209 = pneg %p127
      %p210 = pneg %p124
      %p211 = scmp.lt.s32.totalorder %s17, 1
      %s212 = scalar_select %p211, %s17, 1
      %s213 = smul.addr %s212, 8
      %s214 = smul.addr %s213, 4
      %s215 = scalar_lea.vmem %s4, %s214
      %p216 = pneg %p153
      %p217 = pneg %p150
      %p218 = scmp.lt.s32.totalorder %s17, 1
      %s219 = scalar_select %p218, %s17, 1
      %s220 = smul.addr %s219, 2
      %s221 = scalar_lea.vmem %s5, %s220
      %p222 = scmp.lt.s32.totalorder %s17, 1
      %s223 = scalar_select %p222, %s17, 1
      %s224 = smul.addr %s223, 8
      %s225 = smul.addr %s224, 4
      %s226 = scalar_lea.vmem %s0, %s225
      %p227 = scmp.lt.s32.totalorder %s17, 1
      %s228 = scalar_select %p227, %s17, 1
      %s229 = smul.addr %s228, 8
      %s230 = smul.addr %s229, 4
      %s231 = scalar_lea.vmem %s4, %s230
      %p232 = scmp.lt.s32.totalorder %s17, 1
      %s233 = scalar_select %p232, %s17, 1
      %s234 = smul.addr %s233, 2
      %s235 = scalar_lea.vmem %s5, %s234
      %v237 = vld [vmem:[%s226] sm:$0xf]
      %v238 = vld [vmem:[%s226 + $0x4] sm:$0xf]
      %v239 = vld [vmem:[%s226 + $0x8] sm:$0xf]
      %v240 = vld [vmem:[%s226 + $0xc] sm:$0xf]
      %v241 = vld [vmem:[%s226 + $0x10] sm:$0xf]
      %v242 = vld [vmem:[%s226 + $0x14] sm:$0xf]
      %v243 = vld [vmem:[%s226 + $0x18] sm:$0xf]
      %v244 = vld [vmem:[%s226 + $0x1c] sm:$0xf]
      %vm245 = vcmask 519168
      %246 = vst.msk [vmem:[#allocation2] sm:$0xf] %vm245, %v237
      %247 = vst.msk [vmem:[#allocation2 + $0x4] sm:$0xf] %vm245, %v238
      %248 = vst.msk [vmem:[#allocation2 + $0x8] sm:$0xf] %vm245, %v239
      %249 = vst.msk [vmem:[#allocation2 + $0xc] sm:$0xf] %vm245, %v240
      %250 = vst.msk [vmem:[#allocation2 + $0x10] sm:$0xf] %vm245, %v241
      %251 = vst.msk [vmem:[#allocation2 + $0x14] sm:$0xf] %vm245, %v242
      %252 = vst.msk [vmem:[#allocation2 + $0x18] sm:$0xf] %vm245, %v243
      %253 = vst.msk [vmem:[#allocation2 + $0x1c] sm:$0xf] %vm245, %v244
      %254 = vst [vmem:[#allocation3] sm:$0xff] 0
      %255 = vst [vmem:[#allocation3 + $0x8] sm:$0xff] 0
      %256 = vst [vmem:[#allocation3 + $0x10] sm:$0xff] 0
      %257 = vst [vmem:[#allocation3 + $0x18] sm:$0xff] 0
      %258 = vst [vmem:[#allocation3 + $0x20] sm:$0xff] 0
      %259 = vst [vmem:[#allocation3 + $0x28] sm:$0xff] 0
      %260 = vst [vmem:[#allocation3 + $0x30] sm:$0xff] 0
      %261 = vst [vmem:[#allocation3 + $0x38] sm:$0xff] 0
      %v262 = vld [vmem:[#allocation2] sm:$0xf]
      %v263 = vld [vmem:[#allocation2 + $0x4] sm:$0xf]
      %v264 = vld [vmem:[#allocation2 + $0x8] sm:$0xf]
      %v265 = vld [vmem:[#allocation2 + $0xc] sm:$0xf]
      %v266 = vld [vmem:[#allocation2 + $0x10] sm:$0xf]
      %v267 = vld [vmem:[#allocation2 + $0x14] sm:$0xf]
      %v268 = vld [vmem:[#allocation2 + $0x18] sm:$0xf]
      %v270 = vshrl.u32 %v262, 16
      %v272 = vrot.slane %v270, 7
      %v273 = vshll.u32 %v262, 16
      %v275 = vor.u32 %v272, %v273
      %v277 = vshrl.u32 %v263, 16
      %v279 = vrot.slane %v277, 7
      %v280 = vshll.u32 %v263, 16
      %v282 = vor.u32 %v279, %v280
      %v284 = vshrl.u32 %v264, 16
      %v286 = vrot.slane %v284, 7
      %v287 = vshll.u32 %v264, 16
      %v289 = vor.u32 %v286, %v287
      %v291 = vshrl.u32 %v265, 16
      %v293 = vrot.slane %v291, 7
      %v294 = vshll.u32 %v265, 16
      %v296 = vor.u32 %v293, %v294
      %v298 = vshrl.u32 %v266, 16
      %v300 = vrot.slane %v298, 7
      %v301 = vshll.u32 %v266, 16
      %v303 = vor.u32 %v300, %v301
      %v305 = vshrl.u32 %v267, 16
      %v307 = vrot.slane %v305, 7
      %v308 = vshll.u32 %v267, 16
      %v310 = vor.u32 %v307, %v308
      %v312 = vshrl.u32 %v268, 16
      %v314 = vrot.slane %v312, 7
      %v315 = vshll.u32 %v268, 16
      %v317 = vor.u32 %v314, %v315
      %s325 = scalar_lea.vmem [#allocation3], 8
      %vm326 = vcmask 519168
      %vm327 = vsmask.f32 7938
      %vm328 = vmand %vm326, %vm327
      %v329 = vld [vmem:[%s325] sm:$0xf]
      %v330 = vsel %vm328, %v275, %v329
      %331 = vst [vmem:[%s325] sm:$0xf] %v330
      %v332 = vld [vmem:[%s325 + $0x8] sm:$0xf]
      %v333 = vsel %vm328, %v282, %v332
      %334 = vst [vmem:[%s325 + $0x8] sm:$0xf] %v333
      %v335 = vld [vmem:[%s325 + $0x10] sm:$0xf]
      %v336 = vsel %vm328, %v289, %v335
      %337 = vst [vmem:[%s325 + $0x10] sm:$0xf] %v336
      %v338 = vld [vmem:[%s325 + $0x18] sm:$0xf]
      %v339 = vsel %vm328, %v296, %v338
      %340 = vst [vmem:[%s325 + $0x18] sm:$0xf] %v339
      %v341 = vld [vmem:[%s325 + $0x20] sm:$0xf]
      %v342 = vsel %vm328, %v303, %v341
      %343 = vst [vmem:[%s325 + $0x20] sm:$0xf] %v342
      %v344 = vld [vmem:[%s325 + $0x28] sm:$0xf]
      %v345 = vsel %vm328, %v310, %v344
      %346 = vst [vmem:[%s325 + $0x28] sm:$0xf] %v345
      %v347 = vld [vmem:[%s325 + $0x30] sm:$0xf]
      %v348 = vsel %vm328, %v317, %v347
      %349 = vst [vmem:[%s325 + $0x30] sm:$0xf] %v348
      %v350 = vld [vmem:[#allocation2] sm:$0xf]
      %v351 = vld [vmem:[#allocation2 + $0x4] sm:$0xf]
      %v352 = vld [vmem:[#allocation2 + $0x8] sm:$0xf]
      %v353 = vld [vmem:[#allocation2 + $0xc] sm:$0xf]
      %v354 = vld [vmem:[#allocation2 + $0x10] sm:$0xf]
      %v355 = vld [vmem:[#allocation2 + $0x14] sm:$0xf]
      %v356 = vld [vmem:[#allocation2 + $0x18] sm:$0xf]
      %364 = vrot.lane.b32.xlu0 %v350, 64
      %v365 = vpop.permute.xlu0 %364
      %366 = vrot.lane.b32.xlu0 %v351, 64
      %v367 = vpop.permute.xlu0 %366
      %368 = vrot.lane.b32.xlu0 %v352, 64
      %v369 = vpop.permute.xlu0 %368
      %370 = vrot.lane.b32.xlu0 %v353, 64
      %v371 = vpop.permute.xlu0 %370
      %372 = vrot.lane.b32.xlu0 %v354, 64
      %v373 = vpop.permute.xlu0 %372
      %374 = vrot.lane.b32.xlu0 %v355, 64
      %v375 = vpop.permute.xlu0 %374
      %376 = vrot.lane.b32.xlu0 %v356, 64
      %v377 = vpop.permute.xlu0 %376
      %vm385 = vcmask 1043968
      %386 = vst.msk [vmem:[%s325] sm:$0xf] %vm385, %v365
      %387 = vst.msk [vmem:[%s325 + $0x8] sm:$0xf] %vm385, %v367
      %388 = vst.msk [vmem:[%s325 + $0x10] sm:$0xf] %vm385, %v369
      %389 = vst.msk [vmem:[%s325 + $0x18] sm:$0xf] %vm385, %v371
      %390 = vst.msk [vmem:[%s325 + $0x20] sm:$0xf] %vm385, %v373
      %391 = vst.msk [vmem:[%s325 + $0x28] sm:$0xf] %vm385, %v375
      %392 = vst.msk [vmem:[%s325 + $0x30] sm:$0xf] %vm385, %v377
      %v393 = vld [vmem:[#allocation2] sm:$0xf]
      %v394 = vld [vmem:[#allocation2 + $0x4] sm:$0xf]
      %v395 = vld [vmem:[#allocation2 + $0x8] sm:$0xf]
      %v396 = vld [vmem:[#allocation2 + $0xc] sm:$0xf]
      %v397 = vld [vmem:[#allocation2 + $0x10] sm:$0xf]
      %v398 = vld [vmem:[#allocation2 + $0x14] sm:$0xf]
      %v399 = vld [vmem:[#allocation2 + $0x18] sm:$0xf]
      %v401 = vshrl.u32 %v393, 16
      %v403 = vrot.slane %v401, 4
      %v404 = vshll.u32 %v393, 16
      %v406 = vrot.slane %v404, 5
      %v407 = vor.u32 %v403, %v406
      %v408 = vrot.slane %v407, 4
      %v410 = vshrl.u32 %v394, 16
      %v412 = vrot.slane %v410, 4
      %v413 = vshll.u32 %v394, 16
      %v415 = vrot.slane %v413, 5
      %v416 = vor.u32 %v412, %v415
      %v417 = vrot.slane %v416, 4
      %v419 = vshrl.u32 %v395, 16
      %v421 = vrot.slane %v419, 4
      %v422 = vshll.u32 %v395, 16
      %v424 = vrot.slane %v422, 5
      %v425 = vor.u32 %v421, %v424
      %v426 = vrot.slane %v425, 4
      %v428 = vshrl.u32 %v396, 16
      %v430 = vrot.slane %v428, 4
      %v431 = vshll.u32 %v396, 16
      %v433 = vrot.slane %v431, 5
      %v434 = vor.u32 %v430, %v433
      %v435 = vrot.slane %v434, 4
      %v437 = vshrl.u32 %v397, 16
      %v439 = vrot.slane %v437, 4
      %v440 = vshll.u32 %v397, 16
      %v442 = vrot.slane %v440, 5
      %v443 = vor.u32 %v439, %v442
      %v444 = vrot.slane %v443, 4
      %v446 = vshrl.u32 %v398, 16
      %v448 = vrot.slane %v446, 4
      %v449 = vshll.u32 %v398, 16
      %v451 = vrot.slane %v449, 5
      %v452 = vor.u32 %v448, %v451
      %v453 = vrot.slane %v452, 4
      %v455 = vshrl.u32 %v399, 16
      %v457 = vrot.slane %v455, 4
      %v458 = vshll.u32 %v399, 16
      %v460 = vrot.slane %v458, 5
      %v461 = vor.u32 %v457, %v460
      %v462 = vrot.slane %v461, 4
      %vm470 = vsmask.f32 3328
      %vm471 = vmand %vm326, %vm470
      %v472 = vld [vmem:[%s325 + $0x4] sm:$0xf]
      %v473 = vsel %vm471, %v408, %v472
      %474 = vst [vmem:[%s325 + $0x4] sm:$0xf] %v473
      %v475 = vld [vmem:[%s325 + $0xc] sm:$0xf]
      %v476 = vsel %vm471, %v417, %v475
      %477 = vst [vmem:[%s325 + $0xc] sm:$0xf] %v476
      %v478 = vld [vmem:[%s325 + $0x14] sm:$0xf]
      %v479 = vsel %vm471, %v426, %v478
      %480 = vst [vmem:[%s325 + $0x14] sm:$0xf] %v479
      %v481 = vld [vmem:[%s325 + $0x1c] sm:$0xf]
      %v482 = vsel %vm471, %v435, %v481
      %483 = vst [vmem:[%s325 + $0x1c] sm:$0xf] %v482
      %v484 = vld [vmem:[%s325 + $0x24] sm:$0xf]
      %v485 = vsel %vm471, %v444, %v484
      %486 = vst [vmem:[%s325 + $0x24] sm:$0xf] %v485
      %v487 = vld [vmem:[%s325 + $0x2c] sm:$0xf]
      %v488 = vsel %vm471, %v453, %v487
      %489 = vst [vmem:[%s325 + $0x2c] sm:$0xf] %v488
      %v490 = vld [vmem:[%s325 + $0x34] sm:$0xf]
      %v491 = vsel %vm471, %v462, %v490
      %492 = vst [vmem:[%s325 + $0x34] sm:$0xf] %v491
      %v493 = vld [vmem:[#allocation2] sm:$0xf]
      %v494 = vld [vmem:[#allocation2 + $0x4] sm:$0xf]
      %v495 = vld [vmem:[#allocation2 + $0x8] sm:$0xf]
      %v496 = vld [vmem:[#allocation2 + $0xc] sm:$0xf]
      %v497 = vld [vmem:[#allocation2 + $0x10] sm:$0xf]
      %v498 = vld [vmem:[#allocation2 + $0x14] sm:$0xf]
      %v499 = vld [vmem:[#allocation2 + $0x18] sm:$0xf]
      %v500 = vld [vmem:[#allocation2 + $0x1c] sm:$0xf]
      %v502 = vshrl.u32 %v493, 16
      %v504 = vrot.slane %v502, 7
      %v505 = vshll.u32 %v493, 16
      %v507 = vor.u32 %v504, %v505
      %v509 = vshrl.u32 %v494, 16
      %v511 = vrot.slane %v509, 7
      %v512 = vshll.u32 %v494, 16
      %v514 = vor.u32 %v511, %v512
      %v516 = vshrl.u32 %v495, 16
      %v518 = vrot.slane %v516, 7
      %v519 = vshll.u32 %v495, 16
      %v521 = vor.u32 %v518, %v519
      %v523 = vshrl.u32 %v496, 16
      %v525 = vrot.slane %v523, 7
      %v526 = vshll.u32 %v496, 16
      %v528 = vor.u32 %v525, %v526
      %v530 = vshrl.u32 %v497, 16
      %v532 = vrot.slane %v530, 7
      %v533 = vshll.u32 %v497, 16
      %v535 = vor.u32 %v532, %v533
      %v537 = vshrl.u32 %v498, 16
      %v539 = vrot.slane %v537, 7
      %v540 = vshll.u32 %v498, 16
      %v542 = vor.u32 %v539, %v540
      %v544 = vshrl.u32 %v499, 16
      %v546 = vrot.slane %v544, 7
      %v547 = vshll.u32 %v499, 16
      %v549 = vor.u32 %v546, %v547
      %v551 = vshrl.u32 %v500, 16
      %v553 = vrot.slane %v551, 7
      %v554 = vshll.u32 %v500, 16
      %v556 = vor.u32 %v553, %v554
      %557 = vrot.lane.b32.xlu0 %v507, 64
      %v558 = vpop.permute.xlu0 %557
      %559 = vrot.lane.b32.xlu0 %v514, 64
      %v560 = vpop.permute.xlu0 %559
      %561 = vrot.lane.b32.xlu0 %v521, 64
      %v562 = vpop.permute.xlu0 %561
      %563 = vrot.lane.b32.xlu0 %v528, 64
      %v564 = vpop.permute.xlu0 %563
      %565 = vrot.lane.b32.xlu0 %v535, 64
      %v566 = vpop.permute.xlu0 %565
      %567 = vrot.lane.b32.xlu0 %v542, 64
      %v568 = vpop.permute.xlu0 %567
      %569 = vrot.lane.b32.xlu0 %v549, 64
      %v570 = vpop.permute.xlu0 %569
      %571 = vrot.lane.b32.xlu0 %v556, 64
      %v572 = vpop.permute.xlu0 %571
      %vm581 = vcmask 1043968
      %vm582 = vmand %vm581, %vm327
      %v583 = vld [vmem:[#allocation3 + $0x4] sm:$0xf]
      %v584 = vsel %vm582, %v558, %v583
      %585 = vst [vmem:[#allocation3 + $0x4] sm:$0xf] %v584
      %v586 = vld [vmem:[#allocation3 + $0xc] sm:$0xf]
      %v587 = vsel %vm582, %v560, %v586
      %588 = vst [vmem:[#allocation3 + $0xc] sm:$0xf] %v587
      %v589 = vld [vmem:[#allocation3 + $0x14] sm:$0xf]
      %v590 = vsel %vm582, %v562, %v589
      %591 = vst [vmem:[#allocation3 + $0x14] sm:$0xf] %v590
      %v592 = vld [vmem:[#allocation3 + $0x1c] sm:$0xf]
      %v593 = vsel %vm582, %v564, %v592
      %594 = vst [vmem:[#allocation3 + $0x1c] sm:$0xf] %v593
      %v595 = vld [vmem:[#allocation3 + $0x24] sm:$0xf]
      %v596 = vsel %vm582, %v566, %v595
      %597 = vst [vmem:[#allocation3 + $0x24] sm:$0xf] %v596
      %v598 = vld [vmem:[#allocation3 + $0x2c] sm:$0xf]
      %v599 = vsel %vm582, %v568, %v598
      %600 = vst [vmem:[#allocation3 + $0x2c] sm:$0xf] %v599
      %v601 = vld [vmem:[#allocation3 + $0x34] sm:$0xf]
      %v602 = vsel %vm582, %v570, %v601
      %603 = vst [vmem:[#allocation3 + $0x34] sm:$0xf] %v602
      %v604 = vld [vmem:[#allocation3 + $0x3c] sm:$0xf]
      %v605 = vsel %vm582, %v572, %v604
      %606 = vst [vmem:[#allocation3 + $0x3c] sm:$0xf] %v605
      %v607 = vld [vmem:[#allocation3] sm:$0xff]
      %v608 = vld [vmem:[#allocation3 + $0x8] sm:$0xff]
      %v609 = vld [vmem:[#allocation3 + $0x10] sm:$0xff]
      %v610 = vld [vmem:[#allocation3 + $0x18] sm:$0xff]
      %v611 = vld [vmem:[#allocation3 + $0x20] sm:$0xff]
      %v612 = vld [vmem:[#allocation3 + $0x28] sm:$0xff]
      %v613 = vld [vmem:[#allocation3 + $0x30] sm:$0xff]
      %v614 = vld [vmem:[#allocation3 + $0x38] sm:$0xff]
      %v615 = vld [vmem:[%s3] sm:$0xf]
      %v616 = vld [vmem:[%s3 + $0x4] sm:$0xf]
      %v617 = vld [vmem:[%s3 + $0x8] sm:$0xf]
      %v618 = vld [vmem:[%s3 + $0xc] sm:$0xf]
      %v619 = vld [vmem:[%s3 + $0x10] sm:$0xf]
      %v620 = vld [vmem:[%s3 + $0x14] sm:$0xf]
      %v621 = vld [vmem:[%s3 + $0x18] sm:$0xf]
      %v622 = vld [vmem:[%s3 + $0x1c] sm:$0xf]
      %v623 = vld [vmem:[%s3 + $0x20] sm:$0xf]
      %v624 = vld [vmem:[%s3 + $0x24] sm:$0xf]
      %v625 = vld [vmem:[%s3 + $0x28] sm:$0xf]
      %v626 = vld [vmem:[%s3 + $0x2c] sm:$0xf]
      %v627 = vld [vmem:[%s3 + $0x30] sm:$0xf]
      %v628 = vld [vmem:[%s3 + $0x34] sm:$0xf]
      %v629 = vld [vmem:[%s3 + $0x38] sm:$0xf]
      %v630 = vld [vmem:[%s3 + $0x3c] sm:$0xf]
      %v631 = vld [vmem:[%s3 + $0x40] sm:$0xf]
      %v632 = vld [vmem:[%s3 + $0x44] sm:$0xf]
      %v633 = vld [vmem:[%s3 + $0x48] sm:$0xf]
      %v634 = vld [vmem:[%s3 + $0x4c] sm:$0xf]
      %v635 = vld [vmem:[%s3 + $0x50] sm:$0xf]
      %v636 = vld [vmem:[%s3 + $0x54] sm:$0xf]
      %v637 = vld [vmem:[%s3 + $0x58] sm:$0xf]
      %v638 = vld [vmem:[%s3 + $0x5c] sm:$0xf]
      %v639 = vld [vmem:[%s3 + $0x60] sm:$0xf]
      %v640 = vld [vmem:[%s3 + $0x64] sm:$0xf]
      %v641 = vld [vmem:[%s3 + $0x68] sm:$0xf]
      %v642 = vld [vmem:[%s3 + $0x6c] sm:$0xf]
      %v643 = vld [vmem:[%s3 + $0x70] sm:$0xf]
      %v644 = vld [vmem:[%s3 + $0x74] sm:$0xf]
      %v645 = vld [vmem:[%s3 + $0x78] sm:$0xf]
      %v646 = vld [vmem:[%s3 + $0x7c] sm:$0xf]
      %647 = vst [vmem:[#allocation3] sm:$0xff] 0
      %648 = vst [vmem:[#allocation3 + $0x8] sm:$0xff] 0
      %649 = vst [vmem:[#allocation3 + $0x10] sm:$0xff] 0
      %650 = vst [vmem:[#allocation3 + $0x18] sm:$0xff] 0
      %651 = vst [vmem:[#allocation3 + $0x20] sm:$0xff] 0
      %652 = vst [vmem:[#allocation3 + $0x28] sm:$0xff] 0
      %653 = vst [vmem:[#allocation3 + $0x30] sm:$0xff] 0
      %654 = vst [vmem:[#allocation3 + $0x38] sm:$0xff] 0
      %v655 = vld [vmem:[#allocation2] sm:$0xf]
      %v656 = vld [vmem:[#allocation2 + $0x4] sm:$0xf]
      %v657 = vld [vmem:[#allocation2 + $0x8] sm:$0xf]
      %v658 = vld [vmem:[#allocation2 + $0xc] sm:$0xf]
      %v659 = vld [vmem:[#allocation2 + $0x10] sm:$0xf]
      %v660 = vld [vmem:[#allocation2 + $0x14] sm:$0xf]
      %v661 = vld [vmem:[#allocation2 + $0x18] sm:$0xf]
      %v662 = vld [vmem:[#allocation2 + $0x1c] sm:$0xf]
      %663 = vst.msk [vmem:[#allocation3] sm:$0xf] %vm245, %v655
      %664 = vst.msk [vmem:[#allocation3 + $0x8] sm:$0xf] %vm245, %v656
      %665 = vst.msk [vmem:[#allocation3 + $0x10] sm:$0xf] %vm245, %v657
      %666 = vst.msk [vmem:[#allocation3 + $0x18] sm:$0xf] %vm245, %v658
      %667 = vst.msk [vmem:[#allocation3 + $0x20] sm:$0xf] %vm245, %v659
      %668 = vst.msk [vmem:[#allocation3 + $0x28] sm:$0xf] %vm245, %v660
      %669 = vst.msk [vmem:[#allocation3 + $0x30] sm:$0xf] %vm245, %v661
      %670 = vst.msk [vmem:[#allocation3 + $0x38] sm:$0xf] %vm245, %v662
      %v671 = vld [vmem:[#allocation2] sm:$0xf]
      %v672 = vld [vmem:[#allocation2 + $0x4] sm:$0xf]
      %v673 = vld [vmem:[#allocation2 + $0x8] sm:$0xf]
      %v674 = vld [vmem:[#allocation2 + $0xc] sm:$0xf]
      %v675 = vld [vmem:[#allocation2 + $0x10] sm:$0xf]
      %v676 = vld [vmem:[#allocation2 + $0x14] sm:$0xf]
      %v677 = vld [vmem:[#allocation2 + $0x18] sm:$0xf]
      %v678 = vld [vmem:[#allocation2 + $0x1c] sm:$0xf]
      %v680 = vshrl.u32 %v671, 16
      %v682 = vrot.slane %v680, 4
      %v683 = vshll.u32 %v671, 16
      %v685 = vrot.slane %v683, 5
      %v686 = vor.u32 %v682, %v685
      %v687 = vrot.slane %v686, 4
      %v689 = vshrl.u32 %v672, 16
      %v691 = vrot.slane %v689, 4
      %v692 = vshll.u32 %v672, 16
      %v694 = vrot.slane %v692, 5
      %v695 = vor.u32 %v691, %v694
      %v696 = vrot.slane %v695, 4
      %v698 = vshrl.u32 %v673, 16
      %v700 = vrot.slane %v698, 4
      %v701 = vshll.u32 %v673, 16
      %v703 = vrot.slane %v701, 5
      %v704 = vor.u32 %v700, %v703
      %v705 = vrot.slane %v704, 4
      %v707 = vshrl.u32 %v674, 16
      %v709 = vrot.slane %v707, 4
      %v710 = vshll.u32 %v674, 16
      %v712 = vrot.slane %v710, 5
      %v713 = vor.u32 %v709, %v712
      %v714 = vrot.slane %v713, 4
      %v716 = vshrl.u32 %v675, 16
      %v718 = vrot.slane %v716, 4
      %v719 = vshll.u32 %v675, 16
      %v721 = vrot.slane %v719, 5
      %v722 = vor.u32 %v718, %v721
      %v723 = vrot.slane %v722, 4
      %v725 = vshrl.u32 %v676, 16
      %v727 = vrot.slane %v725, 4
      %v728 = vshll.u32 %v676, 16
      %v730 = vrot.slane %v728, 5
      %v731 = vor.u32 %v727, %v730
      %v732 = vrot.slane %v731, 4
      %v734 = vshrl.u32 %v677, 16
      %v736 = vrot.slane %v734, 4
      %v737 = vshll.u32 %v677, 16
      %v739 = vrot.slane %v737, 5
      %v740 = vor.u32 %v736, %v739
      %v741 = vrot.slane %v740, 4
      %v743 = vshrl.u32 %v678, 16
      %v745 = vrot.slane %v743, 4
      %v746 = vshll.u32 %v678, 16
      %v748 = vrot.slane %v746, 5
      %v749 = vor.u32 %v745, %v748
      %v750 = vrot.slane %v749, 4
      %751 = vrot.lane.b32.xlu0 %v687, 64
      %v752 = vpop.permute.xlu0 %751
      %753 = vrot.lane.b32.xlu0 %v696, 64
      %v754 = vpop.permute.xlu0 %753
      %755 = vrot.lane.b32.xlu0 %v705, 64
      %v756 = vpop.permute.xlu0 %755
      %757 = vrot.lane.b32.xlu0 %v714, 64
      %v758 = vpop.permute.xlu0 %757
      %759 = vrot.lane.b32.xlu0 %v723, 64
      %v760 = vpop.permute.xlu0 %759
      %761 = vrot.lane.b32.xlu0 %v732, 64
      %v762 = vpop.permute.xlu0 %761
      %763 = vrot.lane.b32.xlu0 %v741, 64
      %v764 = vpop.permute.xlu0 %763
      %765 = vrot.lane.b32.xlu0 %v750, 64
      %v766 = vpop.permute.xlu0 %765
      %vm775 = vmand %vm581, %vm470
      %v776 = vld [vmem:[#allocation3] sm:$0xf]
      %v777 = vsel %vm775, %v752, %v776
      %778 = vst [vmem:[#allocation3] sm:$0xf] %v777
      %v779 = vld [vmem:[#allocation3 + $0x8] sm:$0xf]
      %v780 = vsel %vm775, %v754, %v779
      %781 = vst [vmem:[#allocation3 + $0x8] sm:$0xf] %v780
      %v782 = vld [vmem:[#allocation3 + $0x10] sm:$0xf]
      %v783 = vsel %vm775, %v756, %v782
      %784 = vst [vmem:[#allocation3 + $0x10] sm:$0xf] %v783
      %v785 = vld [vmem:[#allocation3 + $0x18] sm:$0xf]
      %v786 = vsel %vm775, %v758, %v785
      %787 = vst [vmem:[#allocation3 + $0x18] sm:$0xf] %v786
      %v788 = vld [vmem:[#allocation3 + $0x20] sm:$0xf]
      %v789 = vsel %vm775, %v760, %v788
      %790 = vst [vmem:[#allocation3 + $0x20] sm:$0xf] %v789
      %v791 = vld [vmem:[#allocation3 + $0x28] sm:$0xf]
      %v792 = vsel %vm775, %v762, %v791
      %793 = vst [vmem:[#allocation3 + $0x28] sm:$0xf] %v792
      %v794 = vld [vmem:[#allocation3 + $0x30] sm:$0xf]
      %v795 = vsel %vm775, %v764, %v794
      %796 = vst [vmem:[#allocation3 + $0x30] sm:$0xf] %v795
      %v797 = vld [vmem:[#allocation3 + $0x38] sm:$0xf]
      %v798 = vsel %vm775, %v766, %v797
      %799 = vst [vmem:[#allocation3 + $0x38] sm:$0xf] %v798
      %s800 = scalar_lea.vmem [#allocation2], 4
      %v801 = vld [vmem:[%s800] sm:$0xf]
      %v802 = vld [vmem:[%s800 + $0x4] sm:$0xf]
      %v803 = vld [vmem:[%s800 + $0x8] sm:$0xf]
      %v804 = vld [vmem:[%s800 + $0xc] sm:$0xf]
      %v805 = vld [vmem:[%s800 + $0x10] sm:$0xf]
      %v806 = vld [vmem:[%s800 + $0x14] sm:$0xf]
      %v807 = vld [vmem:[%s800 + $0x18] sm:$0xf]
      %v809 = vshrl.u32 %v801, 16
      %v811 = vrot.slane %v809, 7
      %v812 = vshll.u32 %v801, 16
      %v814 = vor.u32 %v811, %v812
      %v816 = vshrl.u32 %v802, 16
      %v818 = vrot.slane %v816, 7
      %v819 = vshll.u32 %v802, 16
      %v821 = vor.u32 %v818, %v819
      %v823 = vshrl.u32 %v803, 16
      %v825 = vrot.slane %v823, 7
      %v826 = vshll.u32 %v803, 16
      %v828 = vor.u32 %v825, %v826
      %v830 = vshrl.u32 %v804, 16
      %v832 = vrot.slane %v830, 7
      %v833 = vshll.u32 %v804, 16
      %v835 = vor.u32 %v832, %v833
      %v837 = vshrl.u32 %v805, 16
      %v839 = vrot.slane %v837, 7
      %v840 = vshll.u32 %v805, 16
      %v842 = vor.u32 %v839, %v840
      %v844 = vshrl.u32 %v806, 16
      %v846 = vrot.slane %v844, 7
      %v847 = vshll.u32 %v806, 16
      %v849 = vor.u32 %v846, %v847
      %v851 = vshrl.u32 %v807, 16
      %v853 = vrot.slane %v851, 7
      %v854 = vshll.u32 %v807, 16
      %v856 = vor.u32 %v853, %v854
      %v864 = vld [vmem:[#allocation3 + $0x4] sm:$0xf]
      %v865 = vsel %vm328, %v814, %v864
      %866 = vst [vmem:[#allocation3 + $0x4] sm:$0xf] %v865
      %v867 = vld [vmem:[#allocation3 + $0xc] sm:$0xf]
      %v868 = vsel %vm328, %v821, %v867
      %869 = vst [vmem:[#allocation3 + $0xc] sm:$0xf] %v868
      %v870 = vld [vmem:[#allocation3 + $0x14] sm:$0xf]
      %v871 = vsel %vm328, %v828, %v870
      %872 = vst [vmem:[#allocation3 + $0x14] sm:$0xf] %v871
      %v873 = vld [vmem:[#allocation3 + $0x1c] sm:$0xf]
      %v874 = vsel %vm328, %v835, %v873
      %875 = vst [vmem:[#allocation3 + $0x1c] sm:$0xf] %v874
      %v876 = vld [vmem:[#allocation3 + $0x24] sm:$0xf]
      %v877 = vsel %vm328, %v842, %v876
      %878 = vst [vmem:[#allocation3 + $0x24] sm:$0xf] %v877
      %v879 = vld [vmem:[#allocation3 + $0x2c] sm:$0xf]
      %v880 = vsel %vm328, %v849, %v879
      %881 = vst [vmem:[#allocation3 + $0x2c] sm:$0xf] %v880
      %v882 = vld [vmem:[#allocation3 + $0x34] sm:$0xf]
      %v883 = vsel %vm328, %v856, %v882
      %884 = vst [vmem:[#allocation3 + $0x34] sm:$0xf] %v883
      %v885 = vld [vmem:[%s800] sm:$0xf]
      %v886 = vld [vmem:[%s800 + $0x4] sm:$0xf]
      %v887 = vld [vmem:[%s800 + $0x8] sm:$0xf]
      %v888 = vld [vmem:[%s800 + $0xc] sm:$0xf]
      %v889 = vld [vmem:[%s800 + $0x10] sm:$0xf]
      %v890 = vld [vmem:[%s800 + $0x14] sm:$0xf]
      %v891 = vld [vmem:[%s800 + $0x18] sm:$0xf]
      %899 = vrot.lane.b32.xlu0 %v885, 64
      %v900 = vpop.permute.xlu0 %899
      %901 = vrot.lane.b32.xlu0 %v886, 64
      %v902 = vpop.permute.xlu0 %901
      %903 = vrot.lane.b32.xlu0 %v887, 64
      %v904 = vpop.permute.xlu0 %903
      %905 = vrot.lane.b32.xlu0 %v888, 64
      %v906 = vpop.permute.xlu0 %905
      %907 = vrot.lane.b32.xlu0 %v889, 64
      %v908 = vpop.permute.xlu0 %907
      %909 = vrot.lane.b32.xlu0 %v890, 64
      %v910 = vpop.permute.xlu0 %909
      %911 = vrot.lane.b32.xlu0 %v891, 64
      %v912 = vpop.permute.xlu0 %911
      %920 = vst.msk [vmem:[#allocation3 + $0x4] sm:$0xf] %vm385, %v900
      %921 = vst.msk [vmem:[#allocation3 + $0xc] sm:$0xf] %vm385, %v902
      %922 = vst.msk [vmem:[#allocation3 + $0x14] sm:$0xf] %vm385, %v904
      %923 = vst.msk [vmem:[#allocation3 + $0x1c] sm:$0xf] %vm385, %v906
      %924 = vst.msk [vmem:[#allocation3 + $0x24] sm:$0xf] %vm385, %v908
      %925 = vst.msk [vmem:[#allocation3 + $0x2c] sm:$0xf] %vm385, %v910
      %926 = vst.msk [vmem:[#allocation3 + $0x34] sm:$0xf] %vm385, %v912
      %v927 = vld [vmem:[#allocation3] sm:$0xff]
      %v928 = vld [vmem:[#allocation3 + $0x8] sm:$0xff]
      %v929 = vld [vmem:[#allocation3 + $0x10] sm:$0xff]
      %v930 = vld [vmem:[#allocation3 + $0x18] sm:$0xff]
      %v931 = vld [vmem:[#allocation3 + $0x20] sm:$0xff]
      %v932 = vld [vmem:[#allocation3 + $0x28] sm:$0xff]
      %v933 = vld [vmem:[#allocation3 + $0x30] sm:$0xff]
      %v934 = vld [vmem:[#allocation3 + $0x38] sm:$0xff]
      %s935 = scalar_lea.vmem %s3, 128
      %v936 = vld [vmem:[%s935] sm:$0xf]
      %v937 = vld [vmem:[%s935 + $0x4] sm:$0xf]
      %v938 = vld [vmem:[%s935 + $0x8] sm:$0xf]
      %v939 = vld [vmem:[%s935 + $0xc] sm:$0xf]
      %v940 = vld [vmem:[%s935 + $0x10] sm:$0xf]
      %v941 = vld [vmem:[%s935 + $0x14] sm:$0xf]
      %v942 = vld [vmem:[%s935 + $0x18] sm:$0xf]
      %v943 = vld [vmem:[%s935 + $0x1c] sm:$0xf]
      %v944 = vld [vmem:[%s935 + $0x20] sm:$0xf]
      %v945 = vld [vmem:[%s935 + $0x24] sm:$0xf]
      %v946 = vld [vmem:[%s935 + $0x28] sm:$0xf]
      %v947 = vld [vmem:[%s935 + $0x2c] sm:$0xf]
      %v948 = vld [vmem:[%s935 + $0x30] sm:$0xf]
      %v949 = vld [vmem:[%s935 + $0x34] sm:$0xf]
      %v950 = vld [vmem:[%s935 + $0x38] sm:$0xf]
      %v951 = vld [vmem:[%s935 + $0x3c] sm:$0xf]
      %v952 = vld [vmem:[%s935 + $0x40] sm:$0xf]
      %v953 = vld [vmem:[%s935 + $0x44] sm:$0xf]
      %v954 = vld [vmem:[%s935 + $0x48] sm:$0xf]
      %v955 = vld [vmem:[%s935 + $0x4c] sm:$0xf]
      %v956 = vld [vmem:[%s935 + $0x50] sm:$0xf]
      %v957 = vld [vmem:[%s935 + $0x54] sm:$0xf]
      %v958 = vld [vmem:[%s935 + $0x58] sm:$0xf]
      %v959 = vld [vmem:[%s935 + $0x5c] sm:$0xf]
      %v960 = vld [vmem:[%s935 + $0x60] sm:$0xf]
      %v961 = vld [vmem:[%s935 + $0x64] sm:$0xf]
      %v962 = vld [vmem:[%s935 + $0x68] sm:$0xf]
      %v963 = vld [vmem:[%s935 + $0x6c] sm:$0xf]
      %v964 = vld [vmem:[%s935 + $0x70] sm:$0xf]
      %v965 = vld [vmem:[%s935 + $0x74] sm:$0xf]
      %v966 = vld [vmem:[%s935 + $0x78] sm:$0xf]
      %v967 = vld [vmem:[%s935 + $0x7c] sm:$0xf]
      %v976 = vunpack.c.l.b16 %v927
      %v977 = vunpack.c.h.b16 %v927
      %v978 = vunpack.c.l.b16 %v928
      %v979 = vunpack.c.h.b16 %v928
      %v980 = vunpack.c.l.b16 %v929
      %v981 = vunpack.c.h.b16 %v929
      %v982 = vunpack.c.l.b16 %v930
      %v983 = vunpack.c.h.b16 %v930
      %v984 = vunpack.c.l.b16 %v931
      %v985 = vunpack.c.h.b16 %v931
      %v986 = vunpack.c.l.b16 %v932
      %v987 = vunpack.c.h.b16 %v932
      %v988 = vunpack.c.l.b16 %v933
      %v989 = vunpack.c.h.b16 %v933
      %v990 = vunpack.c.l.b16 %v934
      %v991 = vunpack.c.h.b16 %v934
      %v992 = vpack.c.b16 %v978, %v976
      %v993 = vpack.c.b16 %v979, %v977
      %v994 = vpack.c.b16 %v982, %v980
      %v995 = vpack.c.b16 %v983, %v981
      %v996 = vpack.c.b16 %v986, %v984
      %v997 = vpack.c.b16 %v987, %v985
      %v998 = vpack.c.b16 %v990, %v988
      %v999 = vpack.c.b16 %v991, %v989
      %v1040 = vunpack.c.l.b16 %v936
      %v1041 = vunpack.c.l.b16 %v937
      %v1042 = vunpack.c.l.b16 %v938
      %v1043 = vunpack.c.l.b16 %v939
      %v1044 = vunpack.c.l.b16 %v940
      %v1045 = vunpack.c.l.b16 %v941
      %v1046 = vunpack.c.l.b16 %v942
      %v1047 = vunpack.c.l.b16 %v943
      %v1048 = vunpack.c.l.b16 %v944
      %v1049 = vunpack.c.l.b16 %v945
      %v1050 = vunpack.c.l.b16 %v946
      %v1051 = vunpack.c.l.b16 %v947
      %v1052 = vunpack.c.l.b16 %v948
      %v1053 = vunpack.c.l.b16 %v949
      %v1054 = vunpack.c.l.b16 %v950
      %v1055 = vunpack.c.l.b16 %v951
      %v1056 = vunpack.c.l.b16 %v952
      %v1057 = vunpack.c.l.b16 %v953
      %v1058 = vunpack.c.l.b16 %v954
      %v1059 = vunpack.c.l.b16 %v955
      %v1060 = vunpack.c.l.b16 %v956
      %v1061 = vunpack.c.l.b16 %v957
      %v1062 = vunpack.c.l.b16 %v958
      %v1063 = vunpack.c.l.b16 %v959
      %v1064 = vunpack.c.l.b16 %v960
      %v1065 = vunpack.c.l.b16 %v961
      %v1066 = vunpack.c.l.b16 %v962
      %v1067 = vunpack.c.l.b16 %v963
      %v1068 = vunpack.c.l.b16 %v964
      %v1069 = vunpack.c.l.b16 %v965
      %v1070 = vunpack.c.l.b16 %v966
      %v1071 = vunpack.c.l.b16 %v967
      %v1072 = vpack.c.b16 %v1041, %v1040
      %v1073 = vpack.c.b16 %v1043, %v1042
      %v1074 = vpack.c.b16 %v1045, %v1044
      %v1075 = vpack.c.b16 %v1047, %v1046
      %v1076 = vpack.c.b16 %v1049, %v1048
      %v1077 = vpack.c.b16 %v1051, %v1050
      %v1078 = vpack.c.b16 %v1053, %v1052
      %v1079 = vpack.c.b16 %v1055, %v1054
      %v1080 = vpack.c.b16 %v1057, %v1056
      %v1081 = vpack.c.b16 %v1059, %v1058
      %v1082 = vpack.c.b16 %v1061, %v1060
      %v1083 = vpack.c.b16 %v1063, %v1062
      %v1084 = vpack.c.b16 %v1065, %v1064
      %v1085 = vpack.c.b16 %v1067, %v1066
      %v1086 = vpack.c.b16 %v1069, %v1068
      %v1087 = vpack.c.b16 %v1071, %v1070
      %1104 = vmatprep.subr.bf16.mxu0 0
      %1105 = vmatpush1.bf16.msra.mxu0 %v1072
      %1106 = vmatprep.subr.bf16.mxu0 0
      %1107 = vmatpush1.bf16.msra.mxu0 %v1073
      %1108 = vmatprep.subr.bf16.mxu0 0
      %1109 = vmatpush1.bf16.msra.mxu0 %v1074
      %1110 = vmatprep.subr.bf16.mxu0 0
      %1111 = vmatpush1.bf16.msra.mxu0 %v1075
      %1112 = vmatprep.subr.bf16.mxu0 0
      %1113 = vmatpush1.bf16.msra.mxu0 %v1076
      %1114 = vmatprep.subr.bf16.mxu0 0
      %1115 = vmatpush1.bf16.msra.mxu0 %v1077
      %1116 = vmatprep.subr.bf16.mxu0 0
      %1117 = vmatpush1.bf16.msra.mxu0 %v1078
      %1118 = vmatprep.subr.bf16.mxu0 0
      %1119 = vmatpush1.bf16.msra.mxu0 %v1079
      %1120 = vmatprep.subr.bf16.mxu0 0
      %1121 = vmatpush1.bf16.msra.mxu0 %v1080
      %1122 = vmatprep.subr.bf16.mxu0 0
      %1123 = vmatpush1.bf16.msra.mxu0 %v1081
      %1124 = vmatprep.subr.bf16.mxu0 0
      %1125 = vmatpush1.bf16.msra.mxu0 %v1082
      %1126 = vmatprep.subr.bf16.mxu0 0
      %1127 = vmatpush1.bf16.msra.mxu0 %v1083
      %1128 = vmatprep.subr.bf16.mxu0 0
      %1129 = vmatpush1.bf16.msra.mxu0 %v1084
      %1130 = vmatprep.subr.bf16.mxu0 0
      %1131 = vmatpush1.bf16.msra.mxu0 %v1085
      %1132 = vmatprep.subr.bf16.mxu0 0
      %1133 = vmatpush1.bf16.msra.mxu0 %v1086
      %1134 = vmatprep.subr.bf16.mxu0 0
      %1135 = vmatpush1.bf16.msra.mxu0 %v1087
      %1136 = vmatprep.mubr.bf16.mxu0 %v993
      %1137 = vmatmul.mubr.bf16.gmra.mrb[0].mxu0 %v992
      %v1138 = vpop.f32.mrb[0].mxu0
      %v1139 = vadd.f32 0.0, %v1138
      %v1140 = vpop.f32.mrb[0].mxu0
      %v1141 = vpop.f32.mrb[0].mxu0
      %v1142 = vadd.f32 0.0, %v1141
      %v1143 = vpop.f32.mrb[0].mxu0
      %1144 = vmatprep.mubr.bf16.mxu0 %v995
      %1145 = vmatmul.mubr.bf16.gmra.mrb[0].mxu0 %v994
      %v1146 = vpop.f32.mrb[0].mxu0
      %v1147 = vadd.f32 0.0, %v1146
      %v1148 = vpop.f32.mrb[0].mxu0
      %v1149 = vpop.f32.mrb[0].mxu0
      %v1150 = vadd.f32 0.0, %v1149
      %v1151 = vpop.f32.mrb[0].mxu0
      %1152 = vmatprep.mubr.bf16.mxu0 %v997
      %1153 = vmatmul.mubr.bf16.gmra.mrb[0].mxu0 %v996
      %v1154 = vpop.f32.mrb[0].mxu0
      %v1155 = vadd.f32 0.0, %v1154
      %v1156 = vpop.f32.mrb[0].mxu0
      %v1157 = vpop.f32.mrb[0].mxu0
      %v1158 = vadd.f32 0.0, %v1157
      %v1159 = vpop.f32.mrb[0].mxu0
      %1160 = vmatprep.mubr.bf16.mxu0 %v999
      %1161 = vmatmul.mubr.bf16.gmra.mrb[0].mxu0 %v998
      %v1162 = vpop.f32.mrb[0].mxu0
      %v1163 = vadd.f32 0.0, %v1162
      %v1164 = vpop.f32.mrb[0].mxu0
      %v1165 = vpop.f32.mrb[0].mxu0
      %v1166 = vadd.f32 0.0, %v1165
      %v1167 = vpop.f32.mrb[0].mxu0
      %1168 = vdwg.mxu0
      %v1177 = vunpack.c.l.b16 %v607
      %v1178 = vunpack.c.h.b16 %v607
      %v1179 = vunpack.c.l.b16 %v608
      %v1180 = vunpack.c.h.b16 %v608
      %v1181 = vunpack.c.l.b16 %v609
      %v1182 = vunpack.c.h.b16 %v609
      %v1183 = vunpack.c.l.b16 %v610
      %v1184 = vunpack.c.h.b16 %v610
      %v1185 = vunpack.c.l.b16 %v611
      %v1186 = vunpack.c.h.b16 %v611
      %v1187 = vunpack.c.l.b16 %v612
      %v1188 = vunpack.c.h.b16 %v612
      %v1189 = vunpack.c.l.b16 %v613
      %v1190 = vunpack.c.h.b16 %v613
      %v1191 = vunpack.c.l.b16 %v614
      %v1192 = vunpack.c.h.b16 %v614
      %v1193 = vpack.c.b16 %v1179, %v1177
      %v1194 = vpack.c.b16 %v1180, %v1178
      %v1195 = vpack.c.b16 %v1183, %v1181
      %v1196 = vpack.c.b16 %v1184, %v1182
      %v1197 = vpack.c.b16 %v1187, %v1185
      %v1198 = vpack.c.b16 %v1188, %v1186
      %v1199 = vpack.c.b16 %v1191, %v1189
      %v1200 = vpack.c.b16 %v1192, %v1190
      %v1241 = vunpack.c.l.b16 %v615
      %v1242 = vunpack.c.l.b16 %v616
      %v1243 = vunpack.c.l.b16 %v617
      %v1244 = vunpack.c.l.b16 %v618
      %v1245 = vunpack.c.l.b16 %v619
      %v1246 = vunpack.c.l.b16 %v620
      %v1247 = vunpack.c.l.b16 %v621
      %v1248 = vunpack.c.l.b16 %v622
      %v1249 = vunpack.c.l.b16 %v623
      %v1250 = vunpack.c.l.b16 %v624
      %v1251 = vunpack.c.l.b16 %v625
      %v1252 = vunpack.c.l.b16 %v626
      %v1253 = vunpack.c.l.b16 %v627
      %v1254 = vunpack.c.l.b16 %v628
      %v1255 = vunpack.c.l.b16 %v629
      %v1256 = vunpack.c.l.b16 %v630
      %v1257 = vunpack.c.l.b16 %v631
      %v1258 = vunpack.c.l.b16 %v632
      %v1259 = vunpack.c.l.b16 %v633
      %v1260 = vunpack.c.l.b16 %v634
      %v1261 = vunpack.c.l.b16 %v635
      %v1262 = vunpack.c.l.b16 %v636
      %v1263 = vunpack.c.l.b16 %v637
      %v1264 = vunpack.c.l.b16 %v638
      %v1265 = vunpack.c.l.b16 %v639
      %v1266 = vunpack.c.l.b16 %v640
      %v1267 = vunpack.c.l.b16 %v641
      %v1268 = vunpack.c.l.b16 %v642
      %v1269 = vunpack.c.l.b16 %v643
      %v1270 = vunpack.c.l.b16 %v644
      %v1271 = vunpack.c.l.b16 %v645
      %v1272 = vunpack.c.l.b16 %v646
      %v1273 = vpack.c.b16 %v1242, %v1241
      %v1274 = vpack.c.b16 %v1244, %v1243
      %v1275 = vpack.c.b16 %v1246, %v1245
      %v1276 = vpack.c.b16 %v1248, %v1247
      %v1277 = vpack.c.b16 %v1250, %v1249
      %v1278 = vpack.c.b16 %v1252, %v1251
      %v1279 = vpack.c.b16 %v1254, %v1253
      %v1280 = vpack.c.b16 %v1256, %v1255
      %v1281 = vpack.c.b16 %v1258, %v1257
      %v1282 = vpack.c.b16 %v1260, %v1259
      %v1283 = vpack.c.b16 %v1262, %v1261
      %v1284 = vpack.c.b16 %v1264, %v1263
      %v1285 = vpack.c.b16 %v1266, %v1265
      %v1286 = vpack.c.b16 %v1268, %v1267
      %v1287 = vpack.c.b16 %v1270, %v1269
      %v1288 = vpack.c.b16 %v1272, %v1271
      %1305 = vmatprep.subr.bf16.mxu0 0
      %1306 = vmatpush1.bf16.msra.mxu0 %v1273
      %1307 = vmatprep.subr.bf16.mxu0 0
      %1308 = vmatpush1.bf16.msra.mxu0 %v1274
      %1309 = vmatprep.subr.bf16.mxu0 0
      %1310 = vmatpush1.bf16.msra.mxu0 %v1275
      %1311 = vmatprep.subr.bf16.mxu0 0
      %1312 = vmatpush1.bf16.msra.mxu0 %v1276
      %1313 = vmatprep.subr.bf16.mxu0 0
      %1314 = vmatpush1.bf16.msra.mxu0 %v1277
      %1315 = vmatprep.subr.bf16.mxu0 0
      %1316 = vmatpush1.bf16.msra.mxu0 %v1278
      %1317 = vmatprep.subr.bf16.mxu0 0
      %1318 = vmatpush1.bf16.msra.mxu0 %v1279
      %1319 = vmatprep.subr.bf16.mxu0 0
      %1320 = vmatpush1.bf16.msra.mxu0 %v1280
      %1321 = vmatprep.subr.bf16.mxu0 0
      %1322 = vmatpush1.bf16.msra.mxu0 %v1281
      %1323 = vmatprep.subr.bf16.mxu0 0
      %1324 = vmatpush1.bf16.msra.mxu0 %v1282
      %1325 = vmatprep.subr.bf16.mxu0 0
      %1326 = vmatpush1.bf16.msra.mxu0 %v1283
      %1327 = vmatprep.subr.bf16.mxu0 0
      %1328 = vmatpush1.bf16.msra.mxu0 %v1284
      %1329 = vmatprep.subr.bf16.mxu0 0
      %1330 = vmatpush1.bf16.msra.mxu0 %v1285
      %1331 = vmatprep.subr.bf16.mxu0 0
      %1332 = vmatpush1.bf16.msra.mxu0 %v1286
      %1333 = vmatprep.subr.bf16.mxu0 0
      %1334 = vmatpush1.bf16.msra.mxu0 %v1287
      %1335 = vmatprep.subr.bf16.mxu0 0
      %1336 = vmatpush1.bf16.msra.mxu0 %v1288
      %1337 = vmatprep.mubr.bf16.mxu0 %v1194
      %1338 = vmatmul.mubr.bf16.gmra.mrb[0].mxu0 %v1193
      %v1339 = vpop.f32.mrb[0].mxu0
      %v1340 = vadd.f32 %v1139, %v1339
      %v1341 = vpop.f32.mrb[0].mxu0
      %v1342 = vpop.f32.mrb[0].mxu0
      %v1343 = vadd.f32 %v1142, %v1342
      %v1344 = vpop.f32.mrb[0].mxu0
      %1345 = vmatprep.mubr.bf16.mxu0 %v1196
      %1346 = vmatmul.mubr.bf16.gmra.mrb[0].mxu0 %v1195
      %v1347 = vpop.f32.mrb[0].mxu0
      %v1348 = vadd.f32 %v1147, %v1347
      %v1349 = vpop.f32.mrb[0].mxu0
      %v1350 = vpop.f32.mrb[0].mxu0
      %v1351 = vadd.f32 %v1150, %v1350
      %v1352 = vpop.f32.mrb[0].mxu0
      %1353 = vmatprep.mubr.bf16.mxu0 %v1198
      %1354 = vmatmul.mubr.bf16.gmra.mrb[0].mxu0 %v1197
      %v1355 = vpop.f32.mrb[0].mxu0
      %v1356 = vadd.f32 %v1155, %v1355
      %v1357 = vpop.f32.mrb[0].mxu0
      %v1358 = vpop.f32.mrb[0].mxu0
      %v1359 = vadd.f32 %v1158, %v1358
      %v1360 = vpop.f32.mrb[0].mxu0
      %1361 = vmatprep.mubr.bf16.mxu0 %v1200
      %1362 = vmatmul.mubr.bf16.gmra.mrb[0].mxu0 %v1199
      %v1363 = vpop.f32.mrb[0].mxu0
      %v1364 = vadd.f32 %v1163, %v1363
      %v1365 = vpop.f32.mrb[0].mxu0
      %v1366 = vpop.f32.mrb[0].mxu0
      %v1367 = vadd.f32 %v1166, %v1366
      %v1368 = vpop.f32.mrb[0].mxu0
      %1369 = vdwg.mxu0
      %1370 = vst [vmem:[#allocation3] sm:$0xff] 0
      %1371 = vst [vmem:[#allocation3 + $0x8] sm:$0xff] 0
      %1372 = vst [vmem:[#allocation3 + $0x10] sm:$0xff] 0
      %1373 = vst [vmem:[#allocation3 + $0x18] sm:$0xff] 0
      %1374 = vst [vmem:[#allocation3 + $0x20] sm:$0xff] 0
      %1375 = vst [vmem:[#allocation3 + $0x28] sm:$0xff] 0
      %1376 = vst [vmem:[#allocation3 + $0x30] sm:$0xff] 0
      %1377 = vst [vmem:[#allocation3 + $0x38] sm:$0xff] 0
      %v1378 = vld [vmem:[%s800] sm:$0xf]
      %v1379 = vld [vmem:[%s800 + $0x4] sm:$0xf]
      %v1380 = vld [vmem:[%s800 + $0x8] sm:$0xf]
      %v1381 = vld [vmem:[%s800 + $0xc] sm:$0xf]
      %v1382 = vld [vmem:[%s800 + $0x10] sm:$0xf]
      %v1383 = vld [vmem:[%s800 + $0x14] sm:$0xf]
      %v1384 = vld [vmem:[%s800 + $0x18] sm:$0xf]
      %v1386 = vshrl.u32 %v1378, 16
      %v1388 = vrot.slane %v1386, 4
      %v1389 = vshll.u32 %v1378, 16
      %v1391 = vrot.slane %v1389, 5
      %v1392 = vor.u32 %v1388, %v1391
      %v1393 = vrot.slane %v1392, 4
      %v1395 = vshrl.u32 %v1379, 16
      %v1397 = vrot.slane %v1395, 4
      %v1398 = vshll.u32 %v1379, 16
      %v1400 = vrot.slane %v1398, 5
      %v1401 = vor.u32 %v1397, %v1400
      %v1402 = vrot.slane %v1401, 4
      %v1404 = vshrl.u32 %v1380, 16
      %v1406 = vrot.slane %v1404, 4
      %v1407 = vshll.u32 %v1380, 16
      %v1409 = vrot.slane %v1407, 5
      %v1410 = vor.u32 %v1406, %v1409
      %v1411 = vrot.slane %v1410, 4
      %v1413 = vshrl.u32 %v1381, 16
      %v1415 = vrot.slane %v1413, 4
      %v1416 = vshll.u32 %v1381, 16
      %v1418 = vrot.slane %v1416, 5
      %v1419 = vor.u32 %v1415, %v1418
      %v1420 = vrot.slane %v1419, 4
      %v1422 = vshrl.u32 %v1382, 16
      %v1424 = vrot.slane %v1422, 4
      %v1425 = vshll.u32 %v1382, 16
      %v1427 = vrot.slane %v1425, 5
      %v1428 = vor.u32 %v1424, %v1427
      %v1429 = vrot.slane %v1428, 4
      %v1431 = vshrl.u32 %v1383, 16
      %v1433 = vrot.slane %v1431, 4
      %v1434 = vshll.u32 %v1383, 16
      %v1436 = vrot.slane %v1434, 5
      %v1437 = vor.u32 %v1433, %v1436
      %v1438 = vrot.slane %v1437, 4
      %v1440 = vshrl.u32 %v1384, 16
      %v1442 = vrot.slane %v1440, 4
      %v1443 = vshll.u32 %v1384, 16
      %v1445 = vrot.slane %v1443, 5
      %v1446 = vor.u32 %v1442, %v1445
      %v1447 = vrot.slane %v1446, 4
      %v1455 = vld [vmem:[#allocation3] sm:$0xf]
      %v1456 = vsel %vm471, %v1393, %v1455
      %1457 = vst [vmem:[#allocation3] sm:$0xf] %v1456
      %v1458 = vld [vmem:[#allocation3 + $0x8] sm:$0xf]
      %v1459 = vsel %vm471, %v1402, %v1458
      %1460 = vst [vmem:[#allocation3 + $0x8] sm:$0xf] %v1459
      %v1461 = vld [vmem:[#allocation3 + $0x10] sm:$0xf]
      %v1462 = vsel %vm471, %v1411, %v1461
      %1463 = vst [vmem:[#allocation3 + $0x10] sm:$0xf] %v1462
      %v1464 = vld [vmem:[#allocation3 + $0x18] sm:$0xf]
      %v1465 = vsel %vm471, %v1420, %v1464
      %1466 = vst [vmem:[#allocation3 + $0x18] sm:$0xf] %v1465
      %v1467 = vld [vmem:[#allocation3 + $0x20] sm:$0xf]
      %v1468 = vsel %vm471, %v1429, %v1467
      %1469 = vst [vmem:[#allocation3 + $0x20] sm:$0xf] %v1468
      %v1470 = vld [vmem:[#allocation3 + $0x28] sm:$0xf]
      %v1471 = vsel %vm471, %v1438, %v1470
      %1472 = vst [vmem:[#allocation3 + $0x28] sm:$0xf] %v1471
      %v1473 = vld [vmem:[#allocation3 + $0x30] sm:$0xf]
      %v1474 = vsel %vm471, %v1447, %v1473
      %1475 = vst [vmem:[#allocation3 + $0x30] sm:$0xf] %v1474
      %v1476 = vld [vmem:[#allocation3] sm:$0xff]
      %v1477 = vld [vmem:[#allocation3 + $0x8] sm:$0xff]
      %v1478 = vld [vmem:[#allocation3 + $0x10] sm:$0xff]
      %v1479 = vld [vmem:[#allocation3 + $0x18] sm:$0xff]
      %v1480 = vld [vmem:[#allocation3 + $0x20] sm:$0xff]
      %v1481 = vld [vmem:[#allocation3 + $0x28] sm:$0xff]
      %v1482 = vld [vmem:[#allocation3 + $0x30] sm:$0xff]
      %v1483 = vld [vmem:[#allocation3 + $0x38] sm:$0xff]
      %s1484 = scalar_lea.vmem %s3, 256
      %v1485 = vld [vmem:[%s1484] sm:$0xf]
      %v1486 = vld [vmem:[%s1484 + $0x4] sm:$0xf]
      %v1487 = vld [vmem:[%s1484 + $0x8] sm:$0xf]
      %v1488 = vld [vmem:[%s1484 + $0xc] sm:$0xf]
      %v1489 = vld [vmem:[%s1484 + $0x10] sm:$0xf]
      %v1490 = vld [vmem:[%s1484 + $0x14] sm:$0xf]
      %v1491 = vld [vmem:[%s1484 + $0x18] sm:$0xf]
      %v1492 = vld [vmem:[%s1484 + $0x1c] sm:$0xf]
      %v1493 = vld [vmem:[%s1484 + $0x20] sm:$0xf]
      %v1494 = vld [vmem:[%s1484 + $0x24] sm:$0xf]
      %v1495 = vld [vmem:[%s1484 + $0x28] sm:$0xf]
      %v1496 = vld [vmem:[%s1484 + $0x2c] sm:$0xf]
      %v1497 = vld [vmem:[%s1484 + $0x30] sm:$0xf]
      %v1498 = vld [vmem:[%s1484 + $0x34] sm:$0xf]
      %v1499 = vld [vmem:[%s1484 + $0x38] sm:$0xf]
      %v1500 = vld [vmem:[%s1484 + $0x3c] sm:$0xf]
      %v1501 = vld [vmem:[%s1484 + $0x40] sm:$0xf]
      %v1502 = vld [vmem:[%s1484 + $0x44] sm:$0xf]
      %v1503 = vld [vmem:[%s1484 + $0x48] sm:$0xf]
      %v1504 = vld [vmem:[%s1484 + $0x4c] sm:$0xf]
      %v1505 = vld [vmem:[%s1484 + $0x50] sm:$0xf]
      %v1506 = vld [vmem:[%s1484 + $0x54] sm:$0xf]
      %v1507 = vld [vmem:[%s1484 + $0x58] sm:$0xf]
      %v1508 = vld [vmem:[%s1484 + $0x5c] sm:$0xf]
      %v1509 = vld [vmem:[%s1484 + $0x60] sm:$0xf]
      %v1510 = vld [vmem:[%s1484 + $0x64] sm:$0xf]
      %v1511 = vld [vmem:[%s1484 + $0x68] sm:$0xf]
      %v1512 = vld [vmem:[%s1484 + $0x6c] sm:$0xf]
      %v1513 = vld [vmem:[%s1484 + $0x70] sm:$0xf]
      %v1514 = vld [vmem:[%s1484 + $0x74] sm:$0xf]
      %v1515 = vld [vmem:[%s1484 + $0x78] sm:$0xf]
      %v1516 = vld [vmem:[%s1484 + $0x7c] sm:$0xf]
      %v1525 = vunpack.c.l.b16 %v1476
      %v1526 = vunpack.c.h.b16 %v1476
      %v1527 = vunpack.c.l.b16 %v1477
      %v1528 = vunpack.c.h.b16 %v1477
      %v1529 = vunpack.c.l.b16 %v1478
      %v1530 = vunpack.c.h.b16 %v1478
      %v1531 = vunpack.c.l.b16 %v1479
      %v1532 = vunpack.c.h.b16 %v1479
      %v1533 = vunpack.c.l.b16 %v1480
      %v1534 = vunpack.c.h.b16 %v1480
      %v1535 = vunpack.c.l.b16 %v1481
      %v1536 = vunpack.c.h.b16 %v1481
      %v1537 = vunpack.c.l.b16 %v1482
      %v1538 = vunpack.c.h.b16 %v1482
      %v1539 = vunpack.c.l.b16 %v1483
      %v1540 = vunpack.c.h.b16 %v1483
      %v1541 = vpack.c.b16 %v1527, %v1525
      %v1542 = vpack.c.b16 %v1528, %v1526
      %v1543 = vpack.c.b16 %v1531, %v1529
      %v1544 = vpack.c.b16 %v1532, %v1530
      %v1545 = vpack.c.b16 %v1535, %v1533
      %v1546 = vpack.c.b16 %v1536, %v1534
      %v1547 = vpack.c.b16 %v1539, %v1537
      %v1548 = vpack.c.b16 %v1540, %v1538
      %v1589 = vunpack.c.l.b16 %v1485
      %v1590 = vunpack.c.l.b16 %v1486
      %v1591 = vunpack.c.l.b16 %v1487
      %v1592 = vunpack.c.l.b16 %v1488
      %v1593 = vunpack.c.l.b16 %v1489
      %v1594 = vunpack.c.l.b16 %v1490
      %v1595 = vunpack.c.l.b16 %v1491
      %v1596 = vunpack.c.l.b16 %v1492
      %v1597 = vunpack.c.l.b16 %v1493
      %v1598 = vunpack.c.l.b16 %v1494
      %v1599 = vunpack.c.l.b16 %v1495
      %v1600 = vunpack.c.l.b16 %v1496
      %v1601 = vunpack.c.l.b16 %v1497
      %v1602 = vunpack.c.l.b16 %v1498
      %v1603 = vunpack.c.l.b16 %v1499
      %v1604 = vunpack.c.l.b16 %v1500
      %v1605 = vunpack.c.l.b16 %v1501
      %v1606 = vunpack.c.l.b16 %v1502
      %v1607 = vunpack.c.l.b16 %v1503
      %v1608 = vunpack.c.l.b16 %v1504
      %v1609 = vunpack.c.l.b16 %v1505
      %v1610 = vunpack.c.l.b16 %v1506
      %v1611 = vunpack.c.l.b16 %v1507
      %v1612 = vunpack.c.l.b16 %v1508
      %v1613 = vunpack.c.l.b16 %v1509
      %v1614 = vunpack.c.l.b16 %v1510
      %v1615 = vunpack.c.l.b16 %v1511
      %v1616 = vunpack.c.l.b16 %v1512
      %v1617 = vunpack.c.l.b16 %v1513
      %v1618 = vunpack.c.l.b16 %v1514
      %v1619 = vunpack.c.l.b16 %v1515
      %v1620 = vunpack.c.l.b16 %v1516
      %v1621 = vpack.c.b16 %v1590, %v1589
      %v1622 = vpack.c.b16 %v1592, %v1591
      %v1623 = vpack.c.b16 %v1594, %v1593
      %v1624 = vpack.c.b16 %v1596, %v1595
      %v1625 = vpack.c.b16 %v1598, %v1597
      %v1626 = vpack.c.b16 %v1600, %v1599
      %v1627 = vpack.c.b16 %v1602, %v1601
      %v1628 = vpack.c.b16 %v1604, %v1603
      %v1629 = vpack.c.b16 %v1606, %v1605
      %v1630 = vpack.c.b16 %v1608, %v1607
      %v1631 = vpack.c.b16 %v1610, %v1609
      %v1632 = vpack.c.b16 %v1612, %v1611
      %v1633 = vpack.c.b16 %v1614, %v1613
      %v1634 = vpack.c.b16 %v1616, %v1615
      %v1635 = vpack.c.b16 %v1618, %v1617
      %v1636 = vpack.c.b16 %v1620, %v1619
      %1653 = vmatprep.subr.bf16.mxu0 0
      %1654 = vmatpush1.bf16.msra.mxu0 %v1621
      %1655 = vmatprep.subr.bf16.mxu0 0
      %1656 = vmatpush1.bf16.msra.mxu0 %v1622
      %1657 = vmatprep.subr.bf16.mxu0 0
      %1658 = vmatpush1.bf16.msra.mxu0 %v1623
      %1659 = vmatprep.subr.bf16.mxu0 0
      %1660 = vmatpush1.bf16.msra.mxu0 %v1624
      %1661 = vmatprep.subr.bf16.mxu0 0
      %1662 = vmatpush1.bf16.msra.mxu0 %v1625
      %1663 = vmatprep.subr.bf16.mxu0 0
      %1664 = vmatpush1.bf16.msra.mxu0 %v1626
      %1665 = vmatprep.subr.bf16.mxu0 0
      %1666 = vmatpush1.bf16.msra.mxu0 %v1627
      %1667 = vmatprep.subr.bf16.mxu0 0
      %1668 = vmatpush1.bf16.msra.mxu0 %v1628
      %1669 = vmatprep.subr.bf16.mxu0 0
      %1670 = vmatpush1.bf16.msra.mxu0 %v1629
      %1671 = vmatprep.subr.bf16.mxu0 0
      %1672 = vmatpush1.bf16.msra.mxu0 %v1630
      %1673 = vmatprep.subr.bf16.mxu0 0
      %1674 = vmatpush1.bf16.msra.mxu0 %v1631
      %1675 = vmatprep.subr.bf16.mxu0 0
      %1676 = vmatpush1.bf16.msra.mxu0 %v1632
      %1677 = vmatprep.subr.bf16.mxu0 0
      %1678 = vmatpush1.bf16.msra.mxu0 %v1633
      %1679 = vmatprep.subr.bf16.mxu0 0
      %1680 = vmatpush1.bf16.msra.mxu0 %v1634
      %1681 = vmatprep.subr.bf16.mxu0 0
      %1682 = vmatpush1.bf16.msra.mxu0 %v1635
      %1683 = vmatprep.subr.bf16.mxu0 0
      %1684 = vmatpush1.bf16.msra.mxu0 %v1636
      %1685 = vmatprep.mubr.bf16.mxu0 %v1542
      %1686 = vmatmul.mubr.bf16.gmra.mrb[0].mxu0 %v1541
      %v1687 = vpop.f32.mrb[0].mxu0
      %v1688 = vadd.f32 0.0, %v1687
      %v1689 = vpop.f32.mrb[0].mxu0
      %v1690 = vpop.f32.mrb[0].mxu0
      %v1691 = vadd.f32 0.0, %v1690
      %v1692 = vpop.f32.mrb[0].mxu0
      %1693 = vmatprep.mubr.bf16.mxu0 %v1544
      %1694 = vmatmul.mubr.bf16.gmra.mrb[0].mxu0 %v1543
      %v1695 = vpop.f32.mrb[0].mxu0
      %v1696 = vadd.f32 0.0, %v1695
      %v1697 = vpop.f32.mrb[0].mxu0
      %v1698 = vpop.f32.mrb[0].mxu0
      %v1699 = vadd.f32 0.0, %v1698
      %v1700 = vpop.f32.mrb[0].mxu0
      %1701 = vmatprep.mubr.bf16.mxu0 %v1546
      %1702 = vmatmul.mubr.bf16.gmra.mrb[0].mxu0 %v1545
      %v1703 = vpop.f32.mrb[0].mxu0
      %v1704 = vadd.f32 0.0, %v1703
      %v1705 = vpop.f32.mrb[0].mxu0
      %v1706 = vpop.f32.mrb[0].mxu0
      %v1707 = vadd.f32 0.0, %v1706
      %v1708 = vpop.f32.mrb[0].mxu0
      %1709 = vmatprep.mubr.bf16.mxu0 %v1548
      %1710 = vmatmul.mubr.bf16.gmra.mrb[0].mxu0 %v1547
      %v1711 = vpop.f32.mrb[0].mxu0
      %v1712 = vadd.f32 0.0, %v1711
      %v1713 = vpop.f32.mrb[0].mxu0
      %v1714 = vpop.f32.mrb[0].mxu0
      %v1715 = vadd.f32 0.0, %v1714
      %v1716 = vpop.f32.mrb[0].mxu0
      %1717 = vdwg.mxu0
      %v1718 = vadd.f32 %v1340, %v1688
      %v1719 = vadd.f32 %v1343, %v1691
      %v1720 = vadd.f32 %v1348, %v1696
      %v1721 = vadd.f32 %v1351, %v1699
      %v1722 = vadd.f32 %v1356, %v1704
      %v1723 = vadd.f32 %v1359, %v1707
      %v1724 = vadd.f32 %v1364, %v1712
      %v1725 = vadd.f32 %v1367, %v1715
      %vm1726 = vcmask 523264
      %v1727 = vsel %vm1726, %v1718, 0.0
      %v1728 = vsel %vm1726, %v1719, 0.0
      %v1729 = vadd.f32 %v1727, %v1728
      %v1730 = vsel %vm1726, %v1720, 0.0
      %v1731 = vadd.f32 %v1729, %v1730
      %v1732 = vsel %vm1726, %v1721, 0.0
      %v1733 = vadd.f32 %v1731, %v1732
      %v1734 = vsel %vm1726, %v1722, 0.0
      %v1735 = vadd.f32 %v1733, %v1734
      %v1736 = vsel %vm1726, %v1723, 0.0
      %v1737 = vadd.f32 %v1735, %v1736
      %v1738 = vsel %vm1726, %v1724, 0.0
      %v1739 = vadd.f32 %v1737, %v1738
      %v1740 = vsel %vm1726, %v1725, 0.0
      %v1741 = vadd.f32 %v1739, %v1740
      %v1742 = vrot.slane %v1741, 4
      %v1743 = vadd.f32 %v1741, %v1742
      %v1744 = vrot.slane %v1743, 2
      %v1745 = vadd.f32 %v1743, %v1744
      %v1746 = vrot.slane %v1745, 1
      %v1747 = vadd.f32 %v1745, %v1746
      %vm1748 = vcmask 516096
      %1749 = vst.msk [vmem:[%s235] sm:$0x1] %vm1748, %v1747
      %v1750 = vmul.f32 %v1718, %v1718
      %v1751 = vmul.f32 %v1719, %v1719
      %v1752 = vmul.f32 %v1720, %v1720
      %v1753 = vmul.f32 %v1721, %v1721
      %v1754 = vmul.f32 %v1722, %v1722
      %v1755 = vmul.f32 %v1723, %v1723
      %v1756 = vmul.f32 %v1724, %v1724
      %v1757 = vmul.f32 %v1725, %v1725
      %v1758 = vsel %vm1726, %v1750, 0.0
      %v1759 = vsel %vm1726, %v1751, 0.0
      %v1760 = vadd.f32 %v1758, %v1759
      %v1761 = vsel %vm1726, %v1752, 0.0
      %v1762 = vadd.f32 %v1760, %v1761
      %v1763 = vsel %vm1726, %v1753, 0.0
      %v1764 = vadd.f32 %v1762, %v1763
      %v1765 = vsel %vm1726, %v1754, 0.0
      %v1766 = vadd.f32 %v1764, %v1765
      %v1767 = vsel %vm1726, %v1755, 0.0
      %v1768 = vadd.f32 %v1766, %v1767
      %v1769 = vsel %vm1726, %v1756, 0.0
      %v1770 = vadd.f32 %v1768, %v1769
      %v1771 = vsel %vm1726, %v1757, 0.0
      %v1772 = vadd.f32 %v1770, %v1771
      %v1773 = vrot.slane %v1772, 4
      %v1774 = vadd.f32 %v1772, %v1773
      %v1775 = vrot.slane %v1774, 2
      %v1776 = vadd.f32 %v1774, %v1775
      %v1777 = vrot.slane %v1776, 1
      %v1778 = vadd.f32 %v1776, %v1777
      %1779 = vst.msk [vmem:[%s235 + $0x1] sm:$0x1] %vm1748, %v1778
      %v1780 = vpack.c.bf16 %v1718, %v1718
      %v1781 = vpack.c.bf16 %v1719, %v1719
      %v1782 = vpack.c.bf16 %v1720, %v1720
      %v1783 = vpack.c.bf16 %v1721, %v1721
      %v1784 = vpack.c.bf16 %v1722, %v1722
      %v1785 = vpack.c.bf16 %v1723, %v1723
      %v1786 = vpack.c.bf16 %v1724, %v1724
      %v1787 = vpack.c.bf16 %v1725, %v1725
      %1788 = vst.msk [vmem:[%s231] sm:$0xf] %vm245, %v1780
      %1789 = vst.msk [vmem:[%s231 + $0x4] sm:$0xf] %vm245, %v1781
      %1790 = vst.msk [vmem:[%s231 + $0x8] sm:$0xf] %vm245, %v1782
      %1791 = vst.msk [vmem:[%s231 + $0xc] sm:$0xf] %vm245, %v1783
      %1792 = vst.msk [vmem:[%s231 + $0x10] sm:$0xf] %vm245, %v1784
      %1793 = vst.msk [vmem:[%s231 + $0x14] sm:$0xf] %vm245, %v1785
      %1794 = vst.msk [vmem:[%s231 + $0x18] sm:$0xf] %vm245, %v1786
      %1795 = vst.msk [vmem:[%s231 + $0x1c] sm:$0xf] %vm245, %v1787
      %p1796 = scmp.lt.s32.totalorder %s17, 1
      %s1797 = scalar_select %p1796, %s17, 1
      %s1798 = smul.addr %s1797, 8
      %s1799 = smul.addr %s1798, 4
      %s1800 = scalar_lea.vmem %s4, %s1799
      %p1801 = scmp.lt.s32.totalorder %s17, 1
      %s1802 = scalar_select %p1801, %s17, 1
      %s1803 = smul.addr %s1802, 2
      %s1804 = scalar_lea.vmem %s5, %s1803
      // Predicated region
      $region37: #{resnet_forward.20} parent=35 // pred_check
        %p1805 = pneg %p124
      $region38: #{resnet_forward.20} parent=35 // pred_check_branch
        %1807 = sbr.rel (%p1805) target = $region40
      $region39: #{resnet_forward.20} parent=35 // pred_region
        _
      $region40: #{resnet_forward.20} parent=35 // pred_fallthru
        _
      // Predicated region
      $region41: #{resnet_forward.20} parent=35 // pred_check
        %p1808 = pneg %p150
      $region42: #{resnet_forward.20} parent=35 // pred_check_branch
        %1810 = sbr.rel (%p1808) target = $region44
      $region43: #{resnet_forward.20} parent=35 // pred_region
        _
      $region44: #{resnet_forward.20} parent=35 // pred_fallthru
        _
    $region36: #{resnet_forward.20} parent=5 // pred_fallthru
      _
    %p1811 = scmp.le.s32.totalorder 2, %s12
    // Predicated region
    $region45: #{resnet_forward.20} parent=5 // pred_check
      %p1812 = pneg %p1811
    $region46: #{resnet_forward.20} parent=5 // pred_check_branch
      %1814 = sbr.rel (%p1812) target = $region48
    $region47: #{resnet_forward.20} parent=5 // pred_region
      %s1815 = ssub.s32 %s12, 2
      // Predicated region
      $region49: #{resnet_forward.20} parent=47 // pred_check
        %p1816 = pneg %p130
      $region50: #{resnet_forward.20} parent=47 // pred_check_branch
        %1818 = sbr.rel (%p1816) target = $region52
      $region51: #{resnet_forward.20} parent=47 // pred_region
        %p1819 = scmp.lt.s32.totalorder %s18, 1
        %s1820 = scalar_select %p1819, %s18, 1
        %s1821 = smul.addr %s1820, 8
        %s1822 = smul.addr %s1821, 4
        %s1823 = scalar_lea.vmem %s4, %s1822
      $region52: #{resnet_forward.20} parent=47 // pred_fallthru
        _
      // Predicated region
      $region53: #{resnet_forward.20} parent=47 // pred_check
        %p1824 = pneg %p156
      $region54: #{resnet_forward.20} parent=47 // pred_check_branch
        %1826 = sbr.rel (%p1824) target = $region56
      $region55: #{resnet_forward.20} parent=47 // pred_region
        %p1827 = scmp.lt.s32.totalorder %s18, 1
        %s1828 = scalar_select %p1827, %s18, 1
        %s1829 = smul.addr %s1828, 2
        %s1830 = scalar_lea.vmem %s5, %s1829
      $region56: #{resnet_forward.20} parent=47 // pred_fallthru
        _
    $region48: #{resnet_forward.20} parent=5 // pred_fallthru
      _
  $region6: #{resnet_forward.20} parent=0 // loop_footer
    %s16 = sadd.s32 1, %s12
  $region7: #{resnet_forward.20} parent=0 // loop_footer_branch
    %11 = sbr.rel target = $region3
  $region8: #{resnet_forward.20} parent=0 // loop_exit
    _

// kernel: resnet_forward.21
$region0: #{resnet_forward.21}
  #allocation0 [shape = 'u32[]', space=smem, size = 0x4, offset = 0x4, fixed_abs, tag = 'smem constant byte address 0x4 - core index']
  #allocation1 [shape = 'u32[144,128]{1,0:T(1,128)}', space=vmem, size = 0x12000, scoped, tag = 'internal scratch']
  #allocation2 [shape = 'bf16[8,8,64]{2,1,0:T(8,128)(2,1)}', space=vmem, size = 0x4000, scoped, tag = 'scratch operand']
  #allocation3 [shape = 'bf16[8,8,256]{2,1,0:T(8,128)(2,1)}', space=vmem, size = 0x8000, scoped, tag = 'scratch operand']
  %s0 = inlined_call_operand.vmem [shape: bf16[2,8,8,64], index: 0, kind: input, shape index: {}]
  %s1 = inlined_call_operand.vmem [shape: f32[1,64], index: 1, kind: input, shape index: {}]
  %s2 = inlined_call_operand.vmem [shape: f32[1,64], index: 2, kind: input, shape index: {}]
  %s3 = inlined_call_operand.vmem [shape: bf16[3,256,64], index: 3, kind: input, shape index: {}]
  %s4 = inlined_call_operand.vmem [shape: bf16[2,8,8,64], index: 4, kind: output, shape index: {0}]
  %s5 = inlined_call_operand.vmem [shape: f32[2,2,64], index: 5, kind: output, shape index: {1}]
  %6 = xla_tuple %s4, %s5
  %s7 = sld [smem:[#allocation0]]
  $region57: #{resnet_forward.21} parent=0
    _
  %s9 = ssub.s32 1, %s7
  %s10 = scalar_select 0, %s9, %s7
  loop: start=0, step=1, limit=4
  $region2: #{resnet_forward.21} parent=0 // loop_pre_header
    _
  $region3: #{resnet_forward.21} parent=0 // loop_header
    %s12 = sphi 0, %s16
    %p13 = scmp.ge.s32.totalorder %s12, 4
    %s22 = sphi 0, %s24
    %s25 = sphi 0, %s22
    %s26 = sphi 0, %s25
    %s42 = sphi 0, %s26
    %s46 = sphi 0, %s46
    %s48 = sphi 0, %s46
    %s49 = sphi 0, %s48
    %s63 = sphi 0, %s49
    %s67 = sphi 0, %s67
    %s69 = sphi 0, %s67
    %s70 = sphi 0, %s69
    %s84 = sphi 0, %s70
    %s88 = sphi 0, %s88
    %s90 = sphi 0, %s88
    %s91 = sphi 0, %s90
    %s105 = sphi 0, %s91
    %s111 = sphi 0, %s113
    %s114 = sphi 0, %s111
    %s115 = sphi 0, %s114
    %s131 = sphi 0, %s115
    %s137 = sphi 0, %s139
    %s140 = sphi 0, %s137
    %s141 = sphi 0, %s140
    %s157 = sphi 0, %s141
  $region4: #{resnet_forward.21} parent=0 // loop_header_branch
    %15 = sbr.rel (%p13) target = $region8
  $region5: #{resnet_forward.21} parent=0 // loop_body
    %s17 = ssub.s32 %s12, 1
    %s18 = ssub.s32 %s12, 2
    %s19 = sadd.s32 %s12, 1
    %s20 = ssub.s32 %s12, %s19
    %p21 = scmp.eq.s32.totalorder %s20, 0
    %s23 = sadd.s32 %s22, 1
    %s24 = scalar_select %p21, %s22, %s23
    %p27 = pneg %p21
    %p28 = scmp.eq.s32.totalorder %s12, 1
    %p29 = por %p27, %p28
    %p30 = scmp.ne.s32.totalorder %s22, %s25
    %p31 = scmp.eq.s32.totalorder %s12, 0
    %p32 = por %p30, %p31
    %p33 = scmp.ne.s32.totalorder %s22, %s25
    %p34 = scmp.eq.s32.totalorder %s17, 1
    %p35 = por %p33, %p34
    %p36 = scmp.ne.s32.totalorder %s25, %s26
    %p37 = scmp.eq.s32.totalorder %s17, 0
    %p38 = por %p36, %p37
    %p39 = scmp.ne.s32.totalorder %s25, %s26
    %p40 = scmp.eq.s32.totalorder %s18, 1
    %p41 = por %p39, %p40
    %p43 = scmp.ne.s32.totalorder %s26, %s42
    %p44 = scmp.eq.s32.totalorder %s18, 0
    %p45 = por %p43, %p44
    %s47 = sadd.s32 %s46, 1
    %p50 = scmp.eq.s32.totalorder %s12, 1
    %p51 = scmp.ne.s32.totalorder %s46, %s48
    %p52 = scmp.eq.s32.totalorder %s12, 0
    %p53 = por %p51, %p52
    %p54 = scmp.ne.s32.totalorder %s46, %s48
    %p55 = scmp.eq.s32.totalorder %s17, 1
    %p56 = por %p54, %p55
    %p57 = scmp.ne.s32.totalorder %s48, %s49
    %p58 = scmp.eq.s32.totalorder %s17, 0
    %p59 = por %p57, %p58
    %p60 = scmp.ne.s32.totalorder %s48, %s49
    %p61 = scmp.eq.s32.totalorder %s18, 1
    %p62 = por %p60, %p61
    %p64 = scmp.ne.s32.totalorder %s49, %s63
    %p65 = scmp.eq.s32.totalorder %s18, 0
    %p66 = por %p64, %p65
    %s68 = sadd.s32 %s67, 1
    %p71 = scmp.eq.s32.totalorder %s12, 1
    %p72 = scmp.ne.s32.totalorder %s67, %s69
    %p73 = scmp.eq.s32.totalorder %s12, 0
    %p74 = por %p72, %p73
    %p75 = scmp.ne.s32.totalorder %s67, %s69
    %p76 = scmp.eq.s32.totalorder %s17, 1
    %p77 = por %p75, %p76
    %p78 = scmp.ne.s32.totalorder %s69, %s70
    %p79 = scmp.eq.s32.totalorder %s17, 0
    %p80 = por %p78, %p79
    %p81 = scmp.ne.s32.totalorder %s69, %s70
    %p82 = scmp.eq.s32.totalorder %s18, 1
    %p83 = por %p81, %p82
    %p85 = scmp.ne.s32.totalorder %s70, %s84
    %p86 = scmp.eq.s32.totalorder %s18, 0
    %p87 = por %p85, %p86
    %s89 = sadd.s32 %s88, 1
    %p92 = scmp.eq.s32.totalorder %s12, 1
    %p93 = scmp.ne.s32.totalorder %s88, %s90
    %p94 = scmp.eq.s32.totalorder %s12, 0
    %p95 = por %p93, %p94
    %p96 = scmp.ne.s32.totalorder %s88, %s90
    %p97 = scmp.eq.s32.totalorder %s17, 1
    %p98 = por %p96, %p97
    %p99 = scmp.ne.s32.totalorder %s90, %s91
    %p100 = scmp.eq.s32.totalorder %s17, 0
    %p101 = por %p99, %p100
    %p102 = scmp.ne.s32.totalorder %s90, %s91
    %p103 = scmp.eq.s32.totalorder %s18, 1
    %p104 = por %p102, %p103
    %p106 = scmp.ne.s32.totalorder %s91, %s105
    %p107 = scmp.eq.s32.totalorder %s18, 0
    %p108 = por %p106, %p107
    %s109 = ssub.s32 %s12, %s19
    %p110 = scmp.eq.s32.totalorder %s109, 0
    %s112 = sadd.s32 %s111, 1
    %s113 = scalar_select %p110, %s111, %s112
    %p116 = pneg %p110
    %p117 = scmp.eq.s32.totalorder %s12, 1
    %p118 = por %p116, %p117
    %p119 = scmp.ne.s32.totalorder %s111, %s114
    %p120 = scmp.eq.s32.totalorder %s12, 0
    %p121 = por %p119, %p120
    %p122 = scmp.ne.s32.totalorder %s111, %s114
    %p123 = scmp.eq.s32.totalorder %s17, 1
    %p124 = por %p122, %p123
    %p125 = scmp.ne.s32.totalorder %s114, %s115
    %p126 = scmp.eq.s32.totalorder %s17, 0
    %p127 = por %p125, %p126
    %p128 = scmp.ne.s32.totalorder %s114, %s115
    %p129 = scmp.eq.s32.totalorder %s18, 1
    %p130 = por %p128, %p129
    %p132 = scmp.ne.s32.totalorder %s115, %s131
    %p133 = scmp.eq.s32.totalorder %s18, 0
    %p134 = por %p132, %p133
    %s135 = ssub.s32 %s12, %s19
    %p136 = scmp.eq.s32.totalorder %s135, 0
    %s138 = sadd.s32 %s137, 1
    %s139 = scalar_select %p136, %s137, %s138
    %p142 = pneg %p136
    %p143 = scmp.eq.s32.totalorder %s12, 1
    %p144 = por %p142, %p143
    %p145 = scmp.ne.s32.totalorder %s137, %s140
    %p146 = scmp.eq.s32.totalorder %s12, 0
    %p147 = por %p145, %p146
    %p148 = scmp.ne.s32.totalorder %s137, %s140
    %p149 = scmp.eq.s32.totalorder %s17, 1
    %p150 = por %p148, %p149
    %p151 = scmp.ne.s32.totalorder %s140, %s141
    %p152 = scmp.eq.s32.totalorder %s17, 0
    %p153 = por %p151, %p152
    %p154 = scmp.ne.s32.totalorder %s140, %s141
    %p155 = scmp.eq.s32.totalorder %s18, 1
    %p156 = por %p154, %p155
    %p158 = scmp.ne.s32.totalorder %s141, %s157
    %p159 = scmp.eq.s32.totalorder %s18, 0
    %p160 = por %p158, %p159
    %p161 = scmp.le.s32.totalorder 1, %s12
    %p162 = scmp.lt.s32.totalorder %s12, 3
    %p163 = pnand %p161, %p162
    %p164 = pneg %p163
    // Predicated region
    $region9: #{resnet_forward.21} parent=5 // pred_check
      _
    $region10: #{resnet_forward.21} parent=5 // pred_check_branch
      %166 = sbr.rel (%p163) target = $region12
    $region11: #{resnet_forward.21} parent=5 // pred_region
      %s167 = ssub.s32 %s12, 1
      // Predicated region
      $region13: #{resnet_forward.21} parent=11 // pred_check
        %p168 = pneg %p59
      $region14: #{resnet_forward.21} parent=11 // pred_check_branch
        %170 = sbr.rel (%p168) target = $region16
      $region15: #{resnet_forward.21} parent=11 // pred_region
        _
      $region16: #{resnet_forward.21} parent=11 // pred_fallthru
        _
      // Predicated region
      $region17: #{resnet_forward.21} parent=11 // pred_check
        %p171 = pneg %p80
      $region18: #{resnet_forward.21} parent=11 // pred_check_branch
        %173 = sbr.rel (%p171) target = $region20
      $region19: #{resnet_forward.21} parent=11 // pred_region
        _
      $region20: #{resnet_forward.21} parent=11 // pred_fallthru
        _
      // Predicated region
      $region21: #{resnet_forward.21} parent=11 // pred_check
        %p174 = pneg %p101
      $region22: #{resnet_forward.21} parent=11 // pred_check_branch
        %176 = sbr.rel (%p174) target = $region24
      $region23: #{resnet_forward.21} parent=11 // pred_region
        _
      $region24: #{resnet_forward.21} parent=11 // pred_fallthru
        _
    $region12: #{resnet_forward.21} parent=5 // pred_fallthru
      _
    %p177 = scmp.lt.s32.totalorder %s12, 2
    // Predicated region
    $region25: #{resnet_forward.21} parent=5 // pred_check
      %p178 = pneg %p177
    $region26: #{resnet_forward.21} parent=5 // pred_check_branch
      %180 = sbr.rel (%p178) target = $region28
    $region27: #{resnet_forward.21} parent=5 // pred_region
      // Predicated region
      $region29: #{resnet_forward.21} parent=27 // pred_check
        %p181 = pneg %p32
      $region30: #{resnet_forward.21} parent=27 // pred_check_branch
        %183 = sbr.rel (%p181) target = $region32
      $region31: #{resnet_forward.21} parent=27 // pred_region
        %p184 = scmp.lt.s32.totalorder %s12, 1
        %s185 = scalar_select %p184, %s12, 1
        %s186 = smul.addr %s185, 8
        %s187 = smul.addr %s186, 4
        %s188 = scalar_lea.vmem %s0, %s187
      $region32: #{resnet_forward.21} parent=27 // pred_fallthru
        _
    $region28: #{resnet_forward.21} parent=5 // pred_fallthru
      _
    %p189 = scmp.le.s32.totalorder 1, %s12
    %p190 = scmp.lt.s32.totalorder %s12, 3
    %p191 = pnand %p189, %p190
    %p192 = pneg %p191
    // Predicated region
    $region33: #{resnet_forward.21} parent=5 // pred_check
      _
    $region34: #{resnet_forward.21} parent=5 // pred_check_branch
      %194 = sbr.rel (%p191) target = $region36
    $region35: #{resnet_forward.21} parent=5 // pred_region
      %s195 = ssub.s32 %s12, 1
      %p196 = scmp.lt.s32.totalorder %s17, 1
      %s197 = scalar_select %p196, %s17, 1
      %s198 = smul.addr %s197, 8
      %s199 = smul.addr %s198, 4
      %s200 = scalar_lea.vmem %s0, %s199
      %p201 = pneg %p38
      %p202 = pneg %p35
      %p203 = pneg %p59
      %p204 = pneg %p56
      %p205 = pneg %p80
      %p206 = pneg %p77
      %p207 = pneg %p101
      %p208 = pneg %p98
      %p209 = pneg %p127
      %p210 = pneg %p124
      %p211 = scmp.lt.s32.totalorder %s17, 1
      %s212 = scalar_select %p211, %s17, 1
      %s213 = smul.addr %s212, 8
      %s214 = smul.addr %s213, 4
      %s215 = scalar_lea.vmem %s4, %s214
      %p216 = pneg %p153
      %p217 = pneg %p150
      %p218 = scmp.lt.s32.totalorder %s17, 1
      %s219 = scalar_select %p218, %s17, 1
      %s220 = smul.addr %s219, 2
      %s221 = scalar_lea.vmem %s5, %s220
      %p222 = scmp.lt.s32.totalorder %s17, 1
      %s223 = scalar_select %p222, %s17, 1
      %s224 = smul.addr %s223, 8
      %s225 = smul.addr %s224, 4
      %s226 = scalar_lea.vmem %s0, %s225
      %p227 = scmp.lt.s32.totalorder %s17, 1
      %s228 = scalar_select %p227, %s17, 1
      %s229 = smul.addr %s228, 8
      %s230 = smul.addr %s229, 4
      %s231 = scalar_lea.vmem %s4, %s230
      %p232 = scmp.lt.s32.totalorder %s17, 1
      %s233 = scalar_select %p232, %s17, 1
      %s234 = smul.addr %s233, 2
      %s235 = scalar_lea.vmem %s5, %s234
      %v237 = vld [vmem:[%s226] sm:$0xf]
      %v238 = vld [vmem:[%s226 + $0x4] sm:$0xf]
      %v239 = vld [vmem:[%s226 + $0x8] sm:$0xf]
      %v240 = vld [vmem:[%s226 + $0xc] sm:$0xf]
      %v241 = vld [vmem:[%s226 + $0x10] sm:$0xf]
      %v242 = vld [vmem:[%s226 + $0x14] sm:$0xf]
      %v243 = vld [vmem:[%s226 + $0x18] sm:$0xf]
      %v244 = vld [vmem:[%s226 + $0x1c] sm:$0xf]
      %v245 = vunpack.c.l.bf16 %v237
      %v246 = vunpack.c.l.bf16 %v238
      %v247 = vunpack.c.l.bf16 %v239
      %v248 = vunpack.c.l.bf16 %v240
      %v249 = vunpack.c.l.bf16 %v241
      %v250 = vunpack.c.l.bf16 %v242
      %v251 = vunpack.c.l.bf16 %v243
      %v252 = vunpack.c.l.bf16 %v244
      %v253 = vld [vmem:[%s1] sm:$0x1]
      %v255 = vlaneseq
      %v256 = vshrl.u32 %v255, 7
      %v257 = vsub.s32 0, %v256
      %v258 = vrot.slane %v253, %v257
      %v260 = vmul.f32 %v245, %v258
      %v261 = vmul.f32 %v246, %v258
      %v262 = vmul.f32 %v247, %v258
      %v263 = vmul.f32 %v248, %v258
      %v264 = vmul.f32 %v249, %v258
      %v265 = vmul.f32 %v250, %v258
      %v266 = vmul.f32 %v251, %v258
      %v267 = vmul.f32 %v252, %v258
      %v268 = vld [vmem:[%s2] sm:$0x1]
      %v270 = vlaneseq
      %v271 = vshrl.u32 %v270, 7
      %v272 = vsub.s32 0, %v271
      %v273 = vrot.slane %v268, %v272
      %v275 = vadd.f32 %v260, %v273
      %v276 = vadd.f32 %v261, %v273
      %v277 = vadd.f32 %v262, %v273
      %v278 = vadd.f32 %v263, %v273
      %v279 = vadd.f32 %v264, %v273
      %v280 = vadd.f32 %v265, %v273
      %v281 = vadd.f32 %v266, %v273
      %v282 = vadd.f32 %v267, %v273
      %v283 = vmax.f32 %v275, 0.0
      %v284 = vmax.f32 %v276, 0.0
      %v285 = vmax.f32 %v277, 0.0
      %v286 = vmax.f32 %v278, 0.0
      %v287 = vmax.f32 %v279, 0.0
      %v288 = vmax.f32 %v280, 0.0
      %v289 = vmax.f32 %v281, 0.0
      %v290 = vmax.f32 %v282, 0.0
      %v291 = vpack.c.bf16 %v283, %v283
      %v292 = vpack.c.bf16 %v284, %v284
      %v293 = vpack.c.bf16 %v285, %v285
      %v294 = vpack.c.bf16 %v286, %v286
      %v295 = vpack.c.bf16 %v287, %v287
      %v296 = vpack.c.bf16 %v288, %v288
      %v297 = vpack.c.bf16 %v289, %v289
      %v298 = vpack.c.bf16 %v290, %v290
      %vm299 = vcmask 519168
      %300 = vst.msk [vmem:[#allocation2] sm:$0xf] %vm299, %v291
      %301 = vst.msk [vmem:[#allocation2 + $0x4] sm:$0xf] %vm299, %v292
      %302 = vst.msk [vmem:[#allocation2 + $0x8] sm:$0xf] %vm299, %v293
      %303 = vst.msk [vmem:[#allocation2 + $0xc] sm:$0xf] %vm299, %v294
      %304 = vst.msk [vmem:[#allocation2 + $0x10] sm:$0xf] %vm299, %v295
      %305 = vst.msk [vmem:[#allocation2 + $0x14] sm:$0xf] %vm299, %v296
      %306 = vst.msk [vmem:[#allocation2 + $0x18] sm:$0xf] %vm299, %v297
      %307 = vst.msk [vmem:[#allocation2 + $0x1c] sm:$0xf] %vm299, %v298
      %308 = vst [vmem:[#allocation3] sm:$0xff] 0
      %309 = vst [vmem:[#allocation3 + $0x8] sm:$0xff] 0
      %310 = vst [vmem:[#allocation3 + $0x10] sm:$0xff] 0
      %311 = vst [vmem:[#allocation3 + $0x18] sm:$0xff] 0
      %312 = vst [vmem:[#allocation3 + $0x20] sm:$0xff] 0
      %313 = vst [vmem:[#allocation3 + $0x28] sm:$0xff] 0
      %314 = vst [vmem:[#allocation3 + $0x30] sm:$0xff] 0
      %315 = vst [vmem:[#allocation3 + $0x38] sm:$0xff] 0
      %v316 = vld [vmem:[#allocation2] sm:$0xf]
      %v317 = vld [vmem:[#allocation2 + $0x4] sm:$0xf]
      %v318 = vld [vmem:[#allocation2 + $0x8] sm:$0xf]
      %v319 = vld [vmem:[#allocation2 + $0xc] sm:$0xf]
      %v320 = vld [vmem:[#allocation2 + $0x10] sm:$0xf]
      %v321 = vld [vmem:[#allocation2 + $0x14] sm:$0xf]
      %v322 = vld [vmem:[#allocation2 + $0x18] sm:$0xf]
      %v324 = vshrl.u32 %v316, 16
      %v326 = vrot.slane %v324, 7
      %v327 = vshll.u32 %v316, 16
      %v329 = vor.u32 %v326, %v327
      %v331 = vshrl.u32 %v317, 16
      %v333 = vrot.slane %v331, 7
      %v334 = vshll.u32 %v317, 16
      %v336 = vor.u32 %v333, %v334
      %v338 = vshrl.u32 %v318, 16
      %v340 = vrot.slane %v338, 7
      %v341 = vshll.u32 %v318, 16
      %v343 = vor.u32 %v340, %v341
      %v345 = vshrl.u32 %v319, 16
      %v347 = vrot.slane %v345, 7
      %v348 = vshll.u32 %v319, 16
      %v350 = vor.u32 %v347, %v348
      %v352 = vshrl.u32 %v320, 16
      %v354 = vrot.slane %v352, 7
      %v355 = vshll.u32 %v320, 16
      %v357 = vor.u32 %v354, %v355
      %v359 = vshrl.u32 %v321, 16
      %v361 = vrot.slane %v359, 7
      %v362 = vshll.u32 %v321, 16
      %v364 = vor.u32 %v361, %v362
      %v366 = vshrl.u32 %v322, 16
      %v368 = vrot.slane %v366, 7
      %v369 = vshll.u32 %v322, 16
      %v371 = vor.u32 %v368, %v369
      %s379 = scalar_lea.vmem [#allocation3], 8
      %vm380 = vcmask 519168
      %vm381 = vsmask.f32 7938
      %vm382 = vmand %vm380, %vm381
      %v383 = vld [vmem:[%s379] sm:$0xf]
      %v384 = vsel %vm382, %v329, %v383
      %385 = vst [vmem:[%s379] sm:$0xf] %v384
      %v386 = vld [vmem:[%s379 + $0x8] sm:$0xf]
      %v387 = vsel %vm382, %v336, %v386
      %388 = vst [vmem:[%s379 + $0x8] sm:$0xf] %v387
      %v389 = vld [vmem:[%s379 + $0x10] sm:$0xf]
      %v390 = vsel %vm382, %v343, %v389
      %391 = vst [vmem:[%s379 + $0x10] sm:$0xf] %v390
      %v392 = vld [vmem:[%s379 + $0x18] sm:$0xf]
      %v393 = vsel %vm382, %v350, %v392
      %394 = vst [vmem:[%s379 + $0x18] sm:$0xf] %v393
      %v395 = vld [vmem:[%s379 + $0x20] sm:$0xf]
      %v396 = vsel %vm382, %v357, %v395
      %397 = vst [vmem:[%s379 + $0x20] sm:$0xf] %v396
      %v398 = vld [vmem:[%s379 + $0x28] sm:$0xf]
      %v399 = vsel %vm382, %v364, %v398
      %400 = vst [vmem:[%s379 + $0x28] sm:$0xf] %v399
      %v401 = vld [vmem:[%s379 + $0x30] sm:$0xf]
      %v402 = vsel %vm382, %v371, %v401
      %403 = vst [vmem:[%s379 + $0x30] sm:$0xf] %v402
      %v404 = vld [vmem:[#allocation2] sm:$0xf]
      %v405 = vld [vmem:[#allocation2 + $0x4] sm:$0xf]
      %v406 = vld [vmem:[#allocation2 + $0x8] sm:$0xf]
      %v407 = vld [vmem:[#allocation2 + $0xc] sm:$0xf]
      %v408 = vld [vmem:[#allocation2 + $0x10] sm:$0xf]
      %v409 = vld [vmem:[#allocation2 + $0x14] sm:$0xf]
      %v410 = vld [vmem:[#allocation2 + $0x18] sm:$0xf]
      %418 = vrot.lane.b32.xlu0 %v404, 64
      %v419 = vpop.permute.xlu0 %418
      %420 = vrot.lane.b32.xlu0 %v405, 64
      %v421 = vpop.permute.xlu0 %420
      %422 = vrot.lane.b32.xlu0 %v406, 64
      %v423 = vpop.permute.xlu0 %422
      %424 = vrot.lane.b32.xlu0 %v407, 64
      %v425 = vpop.permute.xlu0 %424
      %426 = vrot.lane.b32.xlu0 %v408, 64
      %v427 = vpop.permute.xlu0 %426
      %428 = vrot.lane.b32.xlu0 %v409, 64
      %v429 = vpop.permute.xlu0 %428
      %430 = vrot.lane.b32.xlu0 %v410, 64
      %v431 = vpop.permute.xlu0 %430
      %vm439 = vcmask 1043968
      %440 = vst.msk [vmem:[%s379] sm:$0xf] %vm439, %v419
      %441 = vst.msk [vmem:[%s379 + $0x8] sm:$0xf] %vm439, %v421
      %442 = vst.msk [vmem:[%s379 + $0x10] sm:$0xf] %vm439, %v423
      %443 = vst.msk [vmem:[%s379 + $0x18] sm:$0xf] %vm439, %v425
      %444 = vst.msk [vmem:[%s379 + $0x20] sm:$0xf] %vm439, %v427
      %445 = vst.msk [vmem:[%s379 + $0x28] sm:$0xf] %vm439, %v429
      %446 = vst.msk [vmem:[%s379 + $0x30] sm:$0xf] %vm439, %v431
      %v447 = vld [vmem:[#allocation2] sm:$0xf]
      %v448 = vld [vmem:[#allocation2 + $0x4] sm:$0xf]
      %v449 = vld [vmem:[#allocation2 + $0x8] sm:$0xf]
      %v450 = vld [vmem:[#allocation2 + $0xc] sm:$0xf]
      %v451 = vld [vmem:[#allocation2 + $0x10] sm:$0xf]
      %v452 = vld [vmem:[#allocation2 + $0x14] sm:$0xf]
      %v453 = vld [vmem:[#allocation2 + $0x18] sm:$0xf]
      %v455 = vshrl.u32 %v447, 16
      %v457 = vrot.slane %v455, 4
      %v458 = vshll.u32 %v447, 16
      %v460 = vrot.slane %v458, 5
      %v461 = vor.u32 %v457, %v460
      %v462 = vrot.slane %v461, 4
      %v464 = vshrl.u32 %v448, 16
      %v466 = vrot.slane %v464, 4
      %v467 = vshll.u32 %v448, 16
      %v469 = vrot.slane %v467, 5
      %v470 = vor.u32 %v466, %v469
      %v471 = vrot.slane %v470, 4
      %v473 = vshrl.u32 %v449, 16
      %v475 = vrot.slane %v473, 4
      %v476 = vshll.u32 %v449, 16
      %v478 = vrot.slane %v476, 5
      %v479 = vor.u32 %v475, %v478
      %v480 = vrot.slane %v479, 4
      %v482 = vshrl.u32 %v450, 16
      %v484 = vrot.slane %v482, 4
      %v485 = vshll.u32 %v450, 16
      %v487 = vrot.slane %v485, 5
      %v488 = vor.u32 %v484, %v487
      %v489 = vrot.slane %v488, 4
      %v491 = vshrl.u32 %v451, 16
      %v493 = vrot.slane %v491, 4
      %v494 = vshll.u32 %v451, 16
      %v496 = vrot.slane %v494, 5
      %v497 = vor.u32 %v493, %v496
      %v498 = vrot.slane %v497, 4
      %v500 = vshrl.u32 %v452, 16
      %v502 = vrot.slane %v500, 4
      %v503 = vshll.u32 %v452, 16
      %v505 = vrot.slane %v503, 5
      %v506 = vor.u32 %v502, %v505
      %v507 = vrot.slane %v506, 4
      %v509 = vshrl.u32 %v453, 16
      %v511 = vrot.slane %v509, 4
      %v512 = vshll.u32 %v453, 16
      %v514 = vrot.slane %v512, 5
      %v515 = vor.u32 %v511, %v514
      %v516 = vrot.slane %v515, 4
      %vm524 = vsmask.f32 3328
      %vm525 = vmand %vm380, %vm524
      %v526 = vld [vmem:[%s379 + $0x4] sm:$0xf]
      %v527 = vsel %vm525, %v462, %v526
      %528 = vst [vmem:[%s379 + $0x4] sm:$0xf] %v527
      %v529 = vld [vmem:[%s379 + $0xc] sm:$0xf]
      %v530 = vsel %vm525, %v471, %v529
      %531 = vst [vmem:[%s379 + $0xc] sm:$0xf] %v530
      %v532 = vld [vmem:[%s379 + $0x14] sm:$0xf]
      %v533 = vsel %vm525, %v480, %v532
      %534 = vst [vmem:[%s379 + $0x14] sm:$0xf] %v533
      %v535 = vld [vmem:[%s379 + $0x1c] sm:$0xf]
      %v536 = vsel %vm525, %v489, %v535
      %537 = vst [vmem:[%s379 + $0x1c] sm:$0xf] %v536
      %v538 = vld [vmem:[%s379 + $0x24] sm:$0xf]
      %v539 = vsel %vm525, %v498, %v538
      %540 = vst [vmem:[%s379 + $0x24] sm:$0xf] %v539
      %v541 = vld [vmem:[%s379 + $0x2c] sm:$0xf]
      %v542 = vsel %vm525, %v507, %v541
      %543 = vst [vmem:[%s379 + $0x2c] sm:$0xf] %v542
      %v544 = vld [vmem:[%s379 + $0x34] sm:$0xf]
      %v545 = vsel %vm525, %v516, %v544
      %546 = vst [vmem:[%s379 + $0x34] sm:$0xf] %v545
      %v547 = vld [vmem:[#allocation2] sm:$0xf]
      %v548 = vld [vmem:[#allocation2 + $0x4] sm:$0xf]
      %v549 = vld [vmem:[#allocation2 + $0x8] sm:$0xf]
      %v550 = vld [vmem:[#allocation2 + $0xc] sm:$0xf]
      %v551 = vld [vmem:[#allocation2 + $0x10] sm:$0xf]
      %v552 = vld [vmem:[#allocation2 + $0x14] sm:$0xf]
      %v553 = vld [vmem:[#allocation2 + $0x18] sm:$0xf]
      %v554 = vld [vmem:[#allocation2 + $0x1c] sm:$0xf]
      %v556 = vshrl.u32 %v547, 16
      %v558 = vrot.slane %v556, 7
      %v559 = vshll.u32 %v547, 16
      %v561 = vor.u32 %v558, %v559
      %v563 = vshrl.u32 %v548, 16
      %v565 = vrot.slane %v563, 7
      %v566 = vshll.u32 %v548, 16
      %v568 = vor.u32 %v565, %v566
      %v570 = vshrl.u32 %v549, 16
      %v572 = vrot.slane %v570, 7
      %v573 = vshll.u32 %v549, 16
      %v575 = vor.u32 %v572, %v573
      %v577 = vshrl.u32 %v550, 16
      %v579 = vrot.slane %v577, 7
      %v580 = vshll.u32 %v550, 16
      %v582 = vor.u32 %v579, %v580
      %v584 = vshrl.u32 %v551, 16
      %v586 = vrot.slane %v584, 7
      %v587 = vshll.u32 %v551, 16
      %v589 = vor.u32 %v586, %v587
      %v591 = vshrl.u32 %v552, 16
      %v593 = vrot.slane %v591, 7
      %v594 = vshll.u32 %v552, 16
      %v596 = vor.u32 %v593, %v594
      %v598 = vshrl.u32 %v553, 16
      %v600 = vrot.slane %v598, 7
      %v601 = vshll.u32 %v553, 16
      %v603 = vor.u32 %v600, %v601
      %v605 = vshrl.u32 %v554, 16
      %v607 = vrot.slane %v605, 7
      %v608 = vshll.u32 %v554, 16
      %v610 = vor.u32 %v607, %v608
      %611 = vrot.lane.b32.xlu0 %v561, 64
      %v612 = vpop.permute.xlu0 %611
      %613 = vrot.lane.b32.xlu0 %v568, 64
      %v614 = vpop.permute.xlu0 %613
      %615 = vrot.lane.b32.xlu0 %v575, 64
      %v616 = vpop.permute.xlu0 %615
      %617 = vrot.lane.b32.xlu0 %v582, 64
      %v618 = vpop.permute.xlu0 %617
      %619 = vrot.lane.b32.xlu0 %v589, 64
      %v620 = vpop.permute.xlu0 %619
      %621 = vrot.lane.b32.xlu0 %v596, 64
      %v622 = vpop.permute.xlu0 %621
      %623 = vrot.lane.b32.xlu0 %v603, 64
      %v624 = vpop.permute.xlu0 %623
      %625 = vrot.lane.b32.xlu0 %v610, 64
      %v626 = vpop.permute.xlu0 %625
      %vm635 = vcmask 1043968
      %vm636 = vmand %vm635, %vm381
      %v637 = vld [vmem:[#allocation3 + $0x4] sm:$0xf]
      %v638 = vsel %vm636, %v612, %v637
      %639 = vst [vmem:[#allocation3 + $0x4] sm:$0xf] %v638
      %v640 = vld [vmem:[#allocation3 + $0xc] sm:$0xf]
      %v641 = vsel %vm636, %v614, %v640
      %642 = vst [vmem:[#allocation3 + $0xc] sm:$0xf] %v641
      %v643 = vld [vmem:[#allocation3 + $0x14] sm:$0xf]
      %v644 = vsel %vm636, %v616, %v643
      %645 = vst [vmem:[#allocation3 + $0x14] sm:$0xf] %v644
      %v646 = vld [vmem:[#allocation3 + $0x1c] sm:$0xf]
      %v647 = vsel %vm636, %v618, %v646
      %648 = vst [vmem:[#allocation3 + $0x1c] sm:$0xf] %v647
      %v649 = vld [vmem:[#allocation3 + $0x24] sm:$0xf]
      %v650 = vsel %vm636, %v620, %v649
      %651 = vst [vmem:[#allocation3 + $0x24] sm:$0xf] %v650
      %v652 = vld [vmem:[#allocation3 + $0x2c] sm:$0xf]
      %v653 = vsel %vm636, %v622, %v652
      %654 = vst [vmem:[#allocation3 + $0x2c] sm:$0xf] %v653
      %v655 = vld [vmem:[#allocation3 + $0x34] sm:$0xf]
      %v656 = vsel %vm636, %v624, %v655
      %657 = vst [vmem:[#allocation3 + $0x34] sm:$0xf] %v656
      %v658 = vld [vmem:[#allocation3 + $0x3c] sm:$0xf]
      %v659 = vsel %vm636, %v626, %v658
      %660 = vst [vmem:[#allocation3 + $0x3c] sm:$0xf] %v659
      %v661 = vld [vmem:[#allocation3] sm:$0xff]
      %v662 = vld [vmem:[#allocation3 + $0x8] sm:$0xff]
      %v663 = vld [vmem:[#allocation3 + $0x10] sm:$0xff]
      %v664 = vld [vmem:[#allocation3 + $0x18] sm:$0xff]
      %v665 = vld [vmem:[#allocation3 + $0x20] sm:$0xff]
      %v666 = vld [vmem:[#allocation3 + $0x28] sm:$0xff]
      %v667 = vld [vmem:[#allocation3 + $0x30] sm:$0xff]
      %v668 = vld [vmem:[#allocation3 + $0x38] sm:$0xff]
      %v669 = vld [vmem:[%s3] sm:$0xf]
      %v670 = vld [vmem:[%s3 + $0x4] sm:$0xf]
      %v671 = vld [vmem:[%s3 + $0x8] sm:$0xf]
      %v672 = vld [vmem:[%s3 + $0xc] sm:$0xf]
      %v673 = vld [vmem:[%s3 + $0x10] sm:$0xf]
      %v674 = vld [vmem:[%s3 + $0x14] sm:$0xf]
      %v675 = vld [vmem:[%s3 + $0x18] sm:$0xf]
      %v676 = vld [vmem:[%s3 + $0x1c] sm:$0xf]
      %v677 = vld [vmem:[%s3 + $0x20] sm:$0xf]
      %v678 = vld [vmem:[%s3 + $0x24] sm:$0xf]
      %v679 = vld [vmem:[%s3 + $0x28] sm:$0xf]
      %v680 = vld [vmem:[%s3 + $0x2c] sm:$0xf]
      %v681 = vld [vmem:[%s3 + $0x30] sm:$0xf]
      %v682 = vld [vmem:[%s3 + $0x34] sm:$0xf]
      %v683 = vld [vmem:[%s3 + $0x38] sm:$0xf]
      %v684 = vld [vmem:[%s3 + $0x3c] sm:$0xf]
      %v685 = vld [vmem:[%s3 + $0x40] sm:$0xf]
      %v686 = vld [vmem:[%s3 + $0x44] sm:$0xf]
      %v687 = vld [vmem:[%s3 + $0x48] sm:$0xf]
      %v688 = vld [vmem:[%s3 + $0x4c] sm:$0xf]
      %v689 = vld [vmem:[%s3 + $0x50] sm:$0xf]
      %v690 = vld [vmem:[%s3 + $0x54] sm:$0xf]
      %v691 = vld [vmem:[%s3 + $0x58] sm:$0xf]
      %v692 = vld [vmem:[%s3 + $0x5c] sm:$0xf]
      %v693 = vld [vmem:[%s3 + $0x60] sm:$0xf]
      %v694 = vld [vmem:[%s3 + $0x64] sm:$0xf]
      %v695 = vld [vmem:[%s3 + $0x68] sm:$0xf]
      %v696 = vld [vmem:[%s3 + $0x6c] sm:$0xf]
      %v697 = vld [vmem:[%s3 + $0x70] sm:$0xf]
      %v698 = vld [vmem:[%s3 + $0x74] sm:$0xf]
      %v699 = vld [vmem:[%s3 + $0x78] sm:$0xf]
      %v700 = vld [vmem:[%s3 + $0x7c] sm:$0xf]
      %701 = vst [vmem:[#allocation3] sm:$0xff] 0
      %702 = vst [vmem:[#allocation3 + $0x8] sm:$0xff] 0
      %703 = vst [vmem:[#allocation3 + $0x10] sm:$0xff] 0
      %704 = vst [vmem:[#allocation3 + $0x18] sm:$0xff] 0
      %705 = vst [vmem:[#allocation3 + $0x20] sm:$0xff] 0
      %706 = vst [vmem:[#allocation3 + $0x28] sm:$0xff] 0
      %707 = vst [vmem:[#allocation3 + $0x30] sm:$0xff] 0
      %708 = vst [vmem:[#allocation3 + $0x38] sm:$0xff] 0
      %v709 = vld [vmem:[#allocation2] sm:$0xf]
      %v710 = vld [vmem:[#allocation2 + $0x4] sm:$0xf]
      %v711 = vld [vmem:[#allocation2 + $0x8] sm:$0xf]
      %v712 = vld [vmem:[#allocation2 + $0xc] sm:$0xf]
      %v713 = vld [vmem:[#allocation2 + $0x10] sm:$0xf]
      %v714 = vld [vmem:[#allocation2 + $0x14] sm:$0xf]
      %v715 = vld [vmem:[#allocation2 + $0x18] sm:$0xf]
      %v716 = vld [vmem:[#allocation2 + $0x1c] sm:$0xf]
      %717 = vst.msk [vmem:[#allocation3] sm:$0xf] %vm299, %v709
      %718 = vst.msk [vmem:[#allocation3 + $0x8] sm:$0xf] %vm299, %v710
      %719 = vst.msk [vmem:[#allocation3 + $0x10] sm:$0xf] %vm299, %v711
      %720 = vst.msk [vmem:[#allocation3 + $0x18] sm:$0xf] %vm299, %v712
      %721 = vst.msk [vmem:[#allocation3 + $0x20] sm:$0xf] %vm299, %v713
      %722 = vst.msk [vmem:[#allocation3 + $0x28] sm:$0xf] %vm299, %v714
      %723 = vst.msk [vmem:[#allocation3 + $0x30] sm:$0xf] %vm299, %v715
      %724 = vst.msk [vmem:[#allocation3 + $0x38] sm:$0xf] %vm299, %v716
      %v725 = vld [vmem:[#allocation2] sm:$0xf]
      %v726 = vld [vmem:[#allocation2 + $0x4] sm:$0xf]
      %v727 = vld [vmem:[#allocation2 + $0x8] sm:$0xf]
      %v728 = vld [vmem:[#allocation2 + $0xc] sm:$0xf]
      %v729 = vld [vmem:[#allocation2 + $0x10] sm:$0xf]
      %v730 = vld [vmem:[#allocation2 + $0x14] sm:$0xf]
      %v731 = vld [vmem:[#allocation2 + $0x18] sm:$0xf]
      %v732 = vld [vmem:[#allocation2 + $0x1c] sm:$0xf]
      %v734 = vshrl.u32 %v725, 16
      %v736 = vrot.slane %v734, 4
      %v737 = vshll.u32 %v725, 16
      %v739 = vrot.slane %v737, 5
      %v740 = vor.u32 %v736, %v739
      %v741 = vrot.slane %v740, 4
      %v743 = vshrl.u32 %v726, 16
      %v745 = vrot.slane %v743, 4
      %v746 = vshll.u32 %v726, 16
      %v748 = vrot.slane %v746, 5
      %v749 = vor.u32 %v745, %v748
      %v750 = vrot.slane %v749, 4
      %v752 = vshrl.u32 %v727, 16
      %v754 = vrot.slane %v752, 4
      %v755 = vshll.u32 %v727, 16
      %v757 = vrot.slane %v755, 5
      %v758 = vor.u32 %v754, %v757
      %v759 = vrot.slane %v758, 4
      %v761 = vshrl.u32 %v728, 16
      %v763 = vrot.slane %v761, 4
      %v764 = vshll.u32 %v728, 16
      %v766 = vrot.slane %v764, 5
      %v767 = vor.u32 %v763, %v766
      %v768 = vrot.slane %v767, 4
      %v770 = vshrl.u32 %v729, 16
      %v772 = vrot.slane %v770, 4
      %v773 = vshll.u32 %v729, 16
      %v775 = vrot.slane %v773, 5
      %v776 = vor.u32 %v772, %v775
      %v777 = vrot.slane %v776, 4
      %v779 = vshrl.u32 %v730, 16
      %v781 = vrot.slane %v779, 4
      %v782 = vshll.u32 %v730, 16
      %v784 = vrot.slane %v782, 5
      %v785 = vor.u32 %v781, %v784
      %v786 = vrot.slane %v785, 4
      %v788 = vshrl.u32 %v731, 16
      %v790 = vrot.slane %v788, 4
      %v791 = vshll.u32 %v731, 16
      %v793 = vrot.slane %v791, 5
      %v794 = vor.u32 %v790, %v793
      %v795 = vrot.slane %v794, 4
      %v797 = vshrl.u32 %v732, 16
      %v799 = vrot.slane %v797, 4
      %v800 = vshll.u32 %v732, 16
      %v802 = vrot.slane %v800, 5
      %v803 = vor.u32 %v799, %v802
      %v804 = vrot.slane %v803, 4
      %805 = vrot.lane.b32.xlu0 %v741, 64
      %v806 = vpop.permute.xlu0 %805
      %807 = vrot.lane.b32.xlu0 %v750, 64
      %v808 = vpop.permute.xlu0 %807
      %809 = vrot.lane.b32.xlu0 %v759, 64
      %v810 = vpop.permute.xlu0 %809
      %811 = vrot.lane.b32.xlu0 %v768, 64
      %v812 = vpop.permute.xlu0 %811
      %813 = vrot.lane.b32.xlu0 %v777, 64
      %v814 = vpop.permute.xlu0 %813
      %815 = vrot.lane.b32.xlu0 %v786, 64
      %v816 = vpop.permute.xlu0 %815
      %817 = vrot.lane.b32.xlu0 %v795, 64
      %v818 = vpop.permute.xlu0 %817
      %819 = vrot.lane.b32.xlu0 %v804, 64
      %v820 = vpop.permute.xlu0 %819
      %vm829 = vmand %vm635, %vm524
      %v830 = vld [vmem:[#allocation3] sm:$0xf]
      %v831 = vsel %vm829, %v806, %v830
      %832 = vst [vmem:[#allocation3] sm:$0xf] %v831
      %v833 = vld [vmem:[#allocation3 + $0x8] sm:$0xf]
      %v834 = vsel %vm829, %v808, %v833
      %835 = vst [vmem:[#allocation3 + $0x8] sm:$0xf] %v834
      %v836 = vld [vmem:[#allocation3 + $0x10] sm:$0xf]
      %v837 = vsel %vm829, %v810, %v836
      %838 = vst [vmem:[#allocation3 + $0x10] sm:$0xf] %v837
      %v839 = vld [vmem:[#allocation3 + $0x18] sm:$0xf]
      %v840 = vsel %vm829, %v812, %v839
      %841 = vst [vmem:[#allocation3 + $0x18] sm:$0xf] %v840
      %v842 = vld [vmem:[#allocation3 + $0x20] sm:$0xf]
      %v843 = vsel %vm829, %v814, %v842
      %844 = vst [vmem:[#allocation3 + $0x20] sm:$0xf] %v843
      %v845 = vld [vmem:[#allocation3 + $0x28] sm:$0xf]
      %v846 = vsel %vm829, %v816, %v845
      %847 = vst [vmem:[#allocation3 + $0x28] sm:$0xf] %v846
      %v848 = vld [vmem:[#allocation3 + $0x30] sm:$0xf]
      %v849 = vsel %vm829, %v818, %v848
      %850 = vst [vmem:[#allocation3 + $0x30] sm:$0xf] %v849
      %v851 = vld [vmem:[#allocation3 + $0x38] sm:$0xf]
      %v852 = vsel %vm829, %v820, %v851
      %853 = vst [vmem:[#allocation3 + $0x38] sm:$0xf] %v852
      %s854 = scalar_lea.vmem [#allocation2], 4
      %v855 = vld [vmem:[%s854] sm:$0xf]
      %v856 = vld [vmem:[%s854 + $0x4] sm:$0xf]
      %v857 = vld [vmem:[%s854 + $0x8] sm:$0xf]
      %v858 = vld [vmem:[%s854 + $0xc] sm:$0xf]
      %v859 = vld [vmem:[%s854 + $0x10] sm:$0xf]
      %v860 = vld [vmem:[%s854 + $0x14] sm:$0xf]
      %v861 = vld [vmem:[%s854 + $0x18] sm:$0xf]
      %v863 = vshrl.u32 %v855, 16
      %v865 = vrot.slane %v863, 7
      %v866 = vshll.u32 %v855, 16
      %v868 = vor.u32 %v865, %v866
      %v870 = vshrl.u32 %v856, 16
      %v872 = vrot.slane %v870, 7
      %v873 = vshll.u32 %v856, 16
      %v875 = vor.u32 %v872, %v873
      %v877 = vshrl.u32 %v857, 16
      %v879 = vrot.slane %v877, 7
      %v880 = vshll.u32 %v857, 16
      %v882 = vor.u32 %v879, %v880
      %v884 = vshrl.u32 %v858, 16
      %v886 = vrot.slane %v884, 7
      %v887 = vshll.u32 %v858, 16
      %v889 = vor.u32 %v886, %v887
      %v891 = vshrl.u32 %v859, 16
      %v893 = vrot.slane %v891, 7
      %v894 = vshll.u32 %v859, 16
      %v896 = vor.u32 %v893, %v894
      %v898 = vshrl.u32 %v860, 16
      %v900 = vrot.slane %v898, 7
      %v901 = vshll.u32 %v860, 16
      %v903 = vor.u32 %v900, %v901
      %v905 = vshrl.u32 %v861, 16
      %v907 = vrot.slane %v905, 7
      %v908 = vshll.u32 %v861, 16
      %v910 = vor.u32 %v907, %v908
      %v918 = vld [vmem:[#allocation3 + $0x4] sm:$0xf]
      %v919 = vsel %vm382, %v868, %v918
      %920 = vst [vmem:[#allocation3 + $0x4] sm:$0xf] %v919
      %v921 = vld [vmem:[#allocation3 + $0xc] sm:$0xf]
      %v922 = vsel %vm382, %v875, %v921
      %923 = vst [vmem:[#allocation3 + $0xc] sm:$0xf] %v922
      %v924 = vld [vmem:[#allocation3 + $0x14] sm:$0xf]
      %v925 = vsel %vm382, %v882, %v924
      %926 = vst [vmem:[#allocation3 + $0x14] sm:$0xf] %v925
      %v927 = vld [vmem:[#allocation3 + $0x1c] sm:$0xf]
      %v928 = vsel %vm382, %v889, %v927
      %929 = vst [vmem:[#allocation3 + $0x1c] sm:$0xf] %v928
      %v930 = vld [vmem:[#allocation3 + $0x24] sm:$0xf]
      %v931 = vsel %vm382, %v896, %v930
      %932 = vst [vmem:[#allocation3 + $0x24] sm:$0xf] %v931
      %v933 = vld [vmem:[#allocation3 + $0x2c] sm:$0xf]
      %v934 = vsel %vm382, %v903, %v933
      %935 = vst [vmem:[#allocation3 + $0x2c] sm:$0xf] %v934
      %v936 = vld [vmem:[#allocation3 + $0x34] sm:$0xf]
      %v937 = vsel %vm382, %v910, %v936
      %938 = vst [vmem:[#allocation3 + $0x34] sm:$0xf] %v937
      %v939 = vld [vmem:[%s854] sm:$0xf]
      %v940 = vld [vmem:[%s854 + $0x4] sm:$0xf]
      %v941 = vld [vmem:[%s854 + $0x8] sm:$0xf]
      %v942 = vld [vmem:[%s854 + $0xc] sm:$0xf]
      %v943 = vld [vmem:[%s854 + $0x10] sm:$0xf]
      %v944 = vld [vmem:[%s854 + $0x14] sm:$0xf]
      %v945 = vld [vmem:[%s854 + $0x18] sm:$0xf]
      %953 = vrot.lane.b32.xlu0 %v939, 64
      %v954 = vpop.permute.xlu0 %953
      %955 = vrot.lane.b32.xlu0 %v940, 64
      %v956 = vpop.permute.xlu0 %955
      %957 = vrot.lane.b32.xlu0 %v941, 64
      %v958 = vpop.permute.xlu0 %957
      %959 = vrot.lane.b32.xlu0 %v942, 64
      %v960 = vpop.permute.xlu0 %959
      %961 = vrot.lane.b32.xlu0 %v943, 64
      %v962 = vpop.permute.xlu0 %961
      %963 = vrot.lane.b32.xlu0 %v944, 64
      %v964 = vpop.permute.xlu0 %963
      %965 = vrot.lane.b32.xlu0 %v945, 64
      %v966 = vpop.permute.xlu0 %965
      %974 = vst.msk [vmem:[#allocation3 + $0x4] sm:$0xf] %vm439, %v954
      %975 = vst.msk [vmem:[#allocation3 + $0xc] sm:$0xf] %vm439, %v956
      %976 = vst.msk [vmem:[#allocation3 + $0x14] sm:$0xf] %vm439, %v958
      %977 = vst.msk [vmem:[#allocation3 + $0x1c] sm:$0xf] %vm439, %v960
      %978 = vst.msk [vmem:[#allocation3 + $0x24] sm:$0xf] %vm439, %v962
      %979 = vst.msk [vmem:[#allocation3 + $0x2c] sm:$0xf] %vm439, %v964
      %980 = vst.msk [vmem:[#allocation3 + $0x34] sm:$0xf] %vm439, %v966
      %v981 = vld [vmem:[#allocation3] sm:$0xff]
      %v982 = vld [vmem:[#allocation3 + $0x8] sm:$0xff]
      %v983 = vld [vmem:[#allocation3 + $0x10] sm:$0xff]
      %v984 = vld [vmem:[#allocation3 + $0x18] sm:$0xff]
      %v985 = vld [vmem:[#allocation3 + $0x20] sm:$0xff]
      %v986 = vld [vmem:[#allocation3 + $0x28] sm:$0xff]
      %v987 = vld [vmem:[#allocation3 + $0x30] sm:$0xff]
      %v988 = vld [vmem:[#allocation3 + $0x38] sm:$0xff]
      %s989 = scalar_lea.vmem %s3, 128
      %v990 = vld [vmem:[%s989] sm:$0xf]
      %v991 = vld [vmem:[%s989 + $0x4] sm:$0xf]
      %v992 = vld [vmem:[%s989 + $0x8] sm:$0xf]
      %v993 = vld [vmem:[%s989 + $0xc] sm:$0xf]
      %v994 = vld [vmem:[%s989 + $0x10] sm:$0xf]
      %v995 = vld [vmem:[%s989 + $0x14] sm:$0xf]
      %v996 = vld [vmem:[%s989 + $0x18] sm:$0xf]
      %v997 = vld [vmem:[%s989 + $0x1c] sm:$0xf]
      %v998 = vld [vmem:[%s989 + $0x20] sm:$0xf]
      %v999 = vld [vmem:[%s989 + $0x24] sm:$0xf]
      %v1000 = vld [vmem:[%s989 + $0x28] sm:$0xf]
      %v1001 = vld [vmem:[%s989 + $0x2c] sm:$0xf]
      %v1002 = vld [vmem:[%s989 + $0x30] sm:$0xf]
      %v1003 = vld [vmem:[%s989 + $0x34] sm:$0xf]
      %v1004 = vld [vmem:[%s989 + $0x38] sm:$0xf]
      %v1005 = vld [vmem:[%s989 + $0x3c] sm:$0xf]
      %v1006 = vld [vmem:[%s989 + $0x40] sm:$0xf]
      %v1007 = vld [vmem:[%s989 + $0x44] sm:$0xf]
      %v1008 = vld [vmem:[%s989 + $0x48] sm:$0xf]
      %v1009 = vld [vmem:[%s989 + $0x4c] sm:$0xf]
      %v1010 = vld [vmem:[%s989 + $0x50] sm:$0xf]
      %v1011 = vld [vmem:[%s989 + $0x54] sm:$0xf]
      %v1012 = vld [vmem:[%s989 + $0x58] sm:$0xf]
      %v1013 = vld [vmem:[%s989 + $0x5c] sm:$0xf]
      %v1014 = vld [vmem:[%s989 + $0x60] sm:$0xf]
      %v1015 = vld [vmem:[%s989 + $0x64] sm:$0xf]
      %v1016 = vld [vmem:[%s989 + $0x68] sm:$0xf]
      %v1017 = vld [vmem:[%s989 + $0x6c] sm:$0xf]
      %v1018 = vld [vmem:[%s989 + $0x70] sm:$0xf]
      %v1019 = vld [vmem:[%s989 + $0x74] sm:$0xf]
      %v1020 = vld [vmem:[%s989 + $0x78] sm:$0xf]
      %v1021 = vld [vmem:[%s989 + $0x7c] sm:$0xf]
      %v1030 = vunpack.c.l.b16 %v981
      %v1031 = vunpack.c.h.b16 %v981
      %v1032 = vunpack.c.l.b16 %v982
      %v1033 = vunpack.c.h.b16 %v982
      %v1034 = vunpack.c.l.b16 %v983
      %v1035 = vunpack.c.h.b16 %v983
      %v1036 = vunpack.c.l.b16 %v984
      %v1037 = vunpack.c.h.b16 %v984
      %v1038 = vunpack.c.l.b16 %v985
      %v1039 = vunpack.c.h.b16 %v985
      %v1040 = vunpack.c.l.b16 %v986
      %v1041 = vunpack.c.h.b16 %v986
      %v1042 = vunpack.c.l.b16 %v987
      %v1043 = vunpack.c.h.b16 %v987
      %v1044 = vunpack.c.l.b16 %v988
      %v1045 = vunpack.c.h.b16 %v988
      %v1046 = vpack.c.b16 %v1032, %v1030
      %v1047 = vpack.c.b16 %v1033, %v1031
      %v1048 = vpack.c.b16 %v1036, %v1034
      %v1049 = vpack.c.b16 %v1037, %v1035
      %v1050 = vpack.c.b16 %v1040, %v1038
      %v1051 = vpack.c.b16 %v1041, %v1039
      %v1052 = vpack.c.b16 %v1044, %v1042
      %v1053 = vpack.c.b16 %v1045, %v1043
      %v1094 = vunpack.c.l.b16 %v990
      %v1095 = vunpack.c.l.b16 %v991
      %v1096 = vunpack.c.l.b16 %v992
      %v1097 = vunpack.c.l.b16 %v993
      %v1098 = vunpack.c.l.b16 %v994
      %v1099 = vunpack.c.l.b16 %v995
      %v1100 = vunpack.c.l.b16 %v996
      %v1101 = vunpack.c.l.b16 %v997
      %v1102 = vunpack.c.l.b16 %v998
      %v1103 = vunpack.c.l.b16 %v999
      %v1104 = vunpack.c.l.b16 %v1000
      %v1105 = vunpack.c.l.b16 %v1001
      %v1106 = vunpack.c.l.b16 %v1002
      %v1107 = vunpack.c.l.b16 %v1003
      %v1108 = vunpack.c.l.b16 %v1004
      %v1109 = vunpack.c.l.b16 %v1005
      %v1110 = vunpack.c.l.b16 %v1006
      %v1111 = vunpack.c.l.b16 %v1007
      %v1112 = vunpack.c.l.b16 %v1008
      %v1113 = vunpack.c.l.b16 %v1009
      %v1114 = vunpack.c.l.b16 %v1010
      %v1115 = vunpack.c.l.b16 %v1011
      %v1116 = vunpack.c.l.b16 %v1012
      %v1117 = vunpack.c.l.b16 %v1013
      %v1118 = vunpack.c.l.b16 %v1014
      %v1119 = vunpack.c.l.b16 %v1015
      %v1120 = vunpack.c.l.b16 %v1016
      %v1121 = vunpack.c.l.b16 %v1017
      %v1122 = vunpack.c.l.b16 %v1018
      %v1123 = vunpack.c.l.b16 %v1019
      %v1124 = vunpack.c.l.b16 %v1020
      %v1125 = vunpack.c.l.b16 %v1021
      %v1126 = vpack.c.b16 %v1095, %v1094
      %v1127 = vpack.c.b16 %v1097, %v1096
      %v1128 = vpack.c.b16 %v1099, %v1098
      %v1129 = vpack.c.b16 %v1101, %v1100
      %v1130 = vpack.c.b16 %v1103, %v1102
      %v1131 = vpack.c.b16 %v1105, %v1104
      %v1132 = vpack.c.b16 %v1107, %v1106
      %v1133 = vpack.c.b16 %v1109, %v1108
      %v1134 = vpack.c.b16 %v1111, %v1110
      %v1135 = vpack.c.b16 %v1113, %v1112
      %v1136 = vpack.c.b16 %v1115, %v1114
      %v1137 = vpack.c.b16 %v1117, %v1116
      %v1138 = vpack.c.b16 %v1119, %v1118
      %v1139 = vpack.c.b16 %v1121, %v1120
      %v1140 = vpack.c.b16 %v1123, %v1122
      %v1141 = vpack.c.b16 %v1125, %v1124
      %1158 = vmatprep.subr.bf16.mxu0 0
      %1159 = vmatpush1.bf16.msra.mxu0 %v1126
      %1160 = vmatprep.subr.bf16.mxu0 0
      %1161 = vmatpush1.bf16.msra.mxu0 %v1127
      %1162 = vmatprep.subr.bf16.mxu0 0
      %1163 = vmatpush1.bf16.msra.mxu0 %v1128
      %1164 = vmatprep.subr.bf16.mxu0 0
      %1165 = vmatpush1.bf16.msra.mxu0 %v1129
      %1166 = vmatprep.subr.bf16.mxu0 0
      %1167 = vmatpush1.bf16.msra.mxu0 %v1130
      %1168 = vmatprep.subr.bf16.mxu0 0
      %1169 = vmatpush1.bf16.msra.mxu0 %v1131
      %1170 = vmatprep.subr.bf16.mxu0 0
      %1171 = vmatpush1.bf16.msra.mxu0 %v1132
      %1172 = vmatprep.subr.bf16.mxu0 0
      %1173 = vmatpush1.bf16.msra.mxu0 %v1133
      %1174 = vmatprep.subr.bf16.mxu0 0
      %1175 = vmatpush1.bf16.msra.mxu0 %v1134
      %1176 = vmatprep.subr.bf16.mxu0 0
      %1177 = vmatpush1.bf16.msra.mxu0 %v1135
      %1178 = vmatprep.subr.bf16.mxu0 0
      %1179 = vmatpush1.bf16.msra.mxu0 %v1136
      %1180 = vmatprep.subr.bf16.mxu0 0
      %1181 = vmatpush1.bf16.msra.mxu0 %v1137
      %1182 = vmatprep.subr.bf16.mxu0 0
      %1183 = vmatpush1.bf16.msra.mxu0 %v1138
      %1184 = vmatprep.subr.bf16.mxu0 0
      %1185 = vmatpush1.bf16.msra.mxu0 %v1139
      %1186 = vmatprep.subr.bf16.mxu0 0
      %1187 = vmatpush1.bf16.msra.mxu0 %v1140
      %1188 = vmatprep.subr.bf16.mxu0 0
      %1189 = vmatpush1.bf16.msra.mxu0 %v1141
      %1190 = vmatprep.mubr.bf16.mxu0 %v1047
      %1191 = vmatmul.mubr.bf16.gmra.mrb[0].mxu0 %v1046
      %v1192 = vpop.f32.mrb[0].mxu0
      %v1193 = vadd.f32 0.0, %v1192
      %v1194 = vpop.f32.mrb[0].mxu0
      %v1195 = vpop.f32.mrb[0].mxu0
      %v1196 = vadd.f32 0.0, %v1195
      %v1197 = vpop.f32.mrb[0].mxu0
      %1198 = vmatprep.mubr.bf16.mxu0 %v1049
      %1199 = vmatmul.mubr.bf16.gmra.mrb[0].mxu0 %v1048
      %v1200 = vpop.f32.mrb[0].mxu0
      %v1201 = vadd.f32 0.0, %v1200
      %v1202 = vpop.f32.mrb[0].mxu0
      %v1203 = vpop.f32.mrb[0].mxu0
      %v1204 = vadd.f32 0.0, %v1203
      %v1205 = vpop.f32.mrb[0].mxu0
      %1206 = vmatprep.mubr.bf16.mxu0 %v1051
      %1207 = vmatmul.mubr.bf16.gmra.mrb[0].mxu0 %v1050
      %v1208 = vpop.f32.mrb[0].mxu0
      %v1209 = vadd.f32 0.0, %v1208
      %v1210 = vpop.f32.mrb[0].mxu0
      %v1211 = vpop.f32.mrb[0].mxu0
      %v1212 = vadd.f32 0.0, %v1211
      %v1213 = vpop.f32.mrb[0].mxu0
      %1214 = vmatprep.mubr.bf16.mxu0 %v1053
      %1215 = vmatmul.mubr.bf16.gmra.mrb[0].mxu0 %v1052
      %v1216 = vpop.f32.mrb[0].mxu0
      %v1217 = vadd.f32 0.0, %v1216
      %v1218 = vpop.f32.mrb[0].mxu0
      %v1219 = vpop.f32.mrb[0].mxu0
      %v1220 = vadd.f32 0.0, %v1219
      %v1221 = vpop.f32.mrb[0].mxu0
      %1222 = vdwg.mxu0
      %v1231 = vunpack.c.l.b16 %v661
      %v1232 = vunpack.c.h.b16 %v661
      %v1233 = vunpack.c.l.b16 %v662
      %v1234 = vunpack.c.h.b16 %v662
      %v1235 = vunpack.c.l.b16 %v663
      %v1236 = vunpack.c.h.b16 %v663
      %v1237 = vunpack.c.l.b16 %v664
      %v1238 = vunpack.c.h.b16 %v664
      %v1239 = vunpack.c.l.b16 %v665
      %v1240 = vunpack.c.h.b16 %v665
      %v1241 = vunpack.c.l.b16 %v666
      %v1242 = vunpack.c.h.b16 %v666
      %v1243 = vunpack.c.l.b16 %v667
      %v1244 = vunpack.c.h.b16 %v667
      %v1245 = vunpack.c.l.b16 %v668
      %v1246 = vunpack.c.h.b16 %v668
      %v1247 = vpack.c.b16 %v1233, %v1231
      %v1248 = vpack.c.b16 %v1234, %v1232
      %v1249 = vpack.c.b16 %v1237, %v1235
      %v1250 = vpack.c.b16 %v1238, %v1236
      %v1251 = vpack.c.b16 %v1241, %v1239
      %v1252 = vpack.c.b16 %v1242, %v1240
      %v1253 = vpack.c.b16 %v1245, %v1243
      %v1254 = vpack.c.b16 %v1246, %v1244
      %v1295 = vunpack.c.l.b16 %v669
      %v1296 = vunpack.c.l.b16 %v670
      %v1297 = vunpack.c.l.b16 %v671
      %v1298 = vunpack.c.l.b16 %v672
      %v1299 = vunpack.c.l.b16 %v673
      %v1300 = vunpack.c.l.b16 %v674
      %v1301 = vunpack.c.l.b16 %v675
      %v1302 = vunpack.c.l.b16 %v676
      %v1303 = vunpack.c.l.b16 %v677
      %v1304 = vunpack.c.l.b16 %v678
      %v1305 = vunpack.c.l.b16 %v679
      %v1306 = vunpack.c.l.b16 %v680
      %v1307 = vunpack.c.l.b16 %v681
      %v1308 = vunpack.c.l.b16 %v682
      %v1309 = vunpack.c.l.b16 %v683
      %v1310 = vunpack.c.l.b16 %v684
      %v1311 = vunpack.c.l.b16 %v685
      %v1312 = vunpack.c.l.b16 %v686
      %v1313 = vunpack.c.l.b16 %v687
      %v1314 = vunpack.c.l.b16 %v688
      %v1315 = vunpack.c.l.b16 %v689
      %v1316 = vunpack.c.l.b16 %v690
      %v1317 = vunpack.c.l.b16 %v691
      %v1318 = vunpack.c.l.b16 %v692
      %v1319 = vunpack.c.l.b16 %v693
      %v1320 = vunpack.c.l.b16 %v694
      %v1321 = vunpack.c.l.b16 %v695
      %v1322 = vunpack.c.l.b16 %v696
      %v1323 = vunpack.c.l.b16 %v697
      %v1324 = vunpack.c.l.b16 %v698
      %v1325 = vunpack.c.l.b16 %v699
      %v1326 = vunpack.c.l.b16 %v700
      %v1327 = vpack.c.b16 %v1296, %v1295
      %v1328 = vpack.c.b16 %v1298, %v1297
      %v1329 = vpack.c.b16 %v1300, %v1299
      %v1330 = vpack.c.b16 %v1302, %v1301
      %v1331 = vpack.c.b16 %v1304, %v1303
      %v1332 = vpack.c.b16 %v1306, %v1305
      %v1333 = vpack.c.b16 %v1308, %v1307
      %v1334 = vpack.c.b16 %v1310, %v1309
      %v1335 = vpack.c.b16 %v1312, %v1311
      %v1336 = vpack.c.b16 %v1314, %v1313
      %v1337 = vpack.c.b16 %v1316, %v1315
      %v1338 = vpack.c.b16 %v1318, %v1317
      %v1339 = vpack.c.b16 %v1320, %v1319
      %v1340 = vpack.c.b16 %v1322, %v1321
      %v1341 = vpack.c.b16 %v1324, %v1323
      %v1342 = vpack.c.b16 %v1326, %v1325
      %1359 = vmatprep.subr.bf16.mxu0 0
      %1360 = vmatpush1.bf16.msra.mxu0 %v1327
      %1361 = vmatprep.subr.bf16.mxu0 0
      %1362 = vmatpush1.bf16.msra.mxu0 %v1328
      %1363 = vmatprep.subr.bf16.mxu0 0
      %1364 = vmatpush1.bf16.msra.mxu0 %v1329
      %1365 = vmatprep.subr.bf16.mxu0 0
      %1366 = vmatpush1.bf16.msra.mxu0 %v1330
      %1367 = vmatprep.subr.bf16.mxu0 0
      %1368 = vmatpush1.bf16.msra.mxu0 %v1331
      %1369 = vmatprep.subr.bf16.mxu0 0
      %1370 = vmatpush1.bf16.msra.mxu0 %v1332
      %1371 = vmatprep.subr.bf16.mxu0 0
      %1372 = vmatpush1.bf16.msra.mxu0 %v1333
      %1373 = vmatprep.subr.bf16.mxu0 0
      %1374 = vmatpush1.bf16.msra.mxu0 %v1334
      %1375 = vmatprep.subr.bf16.mxu0 0
      %1376 = vmatpush1.bf16.msra.mxu0 %v1335
      %1377 = vmatprep.subr.bf16.mxu0 0
      %1378 = vmatpush1.bf16.msra.mxu0 %v1336
      %1379 = vmatprep.subr.bf16.mxu0 0
      %1380 = vmatpush1.bf16.msra.mxu0 %v1337
      %1381 = vmatprep.subr.bf16.mxu0 0
      %1382 = vmatpush1.bf16.msra.mxu0 %v1338
      %1383 = vmatprep.subr.bf16.mxu0 0
      %1384 = vmatpush1.bf16.msra.mxu0 %v1339
      %1385 = vmatprep.subr.bf16.mxu0 0
      %1386 = vmatpush1.bf16.msra.mxu0 %v1340
      %1387 = vmatprep.subr.bf16.mxu0 0
      %1388 = vmatpush1.bf16.msra.mxu0 %v1341
      %1389 = vmatprep.subr.bf16.mxu0 0
      %1390 = vmatpush1.bf16.msra.mxu0 %v1342
      %1391 = vmatprep.mubr.bf16.mxu0 %v1248
      %1392 = vmatmul.mubr.bf16.gmra.mrb[0].mxu0 %v1247
      %v1393 = vpop.f32.mrb[0].mxu0
      %v1394 = vadd.f32 %v1193, %v1393
      %v1395 = vpop.f32.mrb[0].mxu0
      %v1396 = vpop.f32.mrb[0].mxu0
      %v1397 = vadd.f32 %v1196, %v1396
      %v1398 = vpop.f32.mrb[0].mxu0
      %1399 = vmatprep.mubr.bf16.mxu0 %v1250
      %1400 = vmatmul.mubr.bf16.gmra.mrb[0].mxu0 %v1249
      %v1401 = vpop.f32.mrb[0].mxu0
      %v1402 = vadd.f32 %v1201, %v1401
      %v1403 = vpop.f32.mrb[0].mxu0
      %v1404 = vpop.f32.mrb[0].mxu0
      %v1405 = vadd.f32 %v1204, %v1404
      %v1406 = vpop.f32.mrb[0].mxu0
      %1407 = vmatprep.mubr.bf16.mxu0 %v1252
      %1408 = vmatmul.mubr.bf16.gmra.mrb[0].mxu0 %v1251
      %v1409 = vpop.f32.mrb[0].mxu0
      %v1410 = vadd.f32 %v1209, %v1409
      %v1411 = vpop.f32.mrb[0].mxu0
      %v1412 = vpop.f32.mrb[0].mxu0
      %v1413 = vadd.f32 %v1212, %v1412
      %v1414 = vpop.f32.mrb[0].mxu0
      %1415 = vmatprep.mubr.bf16.mxu0 %v1254
      %1416 = vmatmul.mubr.bf16.gmra.mrb[0].mxu0 %v1253
      %v1417 = vpop.f32.mrb[0].mxu0
      %v1418 = vadd.f32 %v1217, %v1417
      %v1419 = vpop.f32.mrb[0].mxu0
      %v1420 = vpop.f32.mrb[0].mxu0
      %v1421 = vadd.f32 %v1220, %v1420
      %v1422 = vpop.f32.mrb[0].mxu0
      %1423 = vdwg.mxu0
      %1424 = vst [vmem:[#allocation3] sm:$0xff] 0
      %1425 = vst [vmem:[#allocation3 + $0x8] sm:$0xff] 0
      %1426 = vst [vmem:[#allocation3 + $0x10] sm:$0xff] 0
      %1427 = vst [vmem:[#allocation3 + $0x18] sm:$0xff] 0
      %1428 = vst [vmem:[#allocation3 + $0x20] sm:$0xff] 0
      %1429 = vst [vmem:[#allocation3 + $0x28] sm:$0xff] 0
      %1430 = vst [vmem:[#allocation3 + $0x30] sm:$0xff] 0
      %1431 = vst [vmem:[#allocation3 + $0x38] sm:$0xff] 0
      %v1432 = vld [vmem:[%s854] sm:$0xf]
      %v1433 = vld [vmem:[%s854 + $0x4] sm:$0xf]
      %v1434 = vld [vmem:[%s854 + $0x8] sm:$0xf]
      %v1435 = vld [vmem:[%s854 + $0xc] sm:$0xf]
      %v1436 = vld [vmem:[%s854 + $0x10] sm:$0xf]
      %v1437 = vld [vmem:[%s854 + $0x14] sm:$0xf]
      %v1438 = vld [vmem:[%s854 + $0x18] sm:$0xf]
      %v1440 = vshrl.u32 %v1432, 16
      %v1442 = vrot.slane %v1440, 4
      %v1443 = vshll.u32 %v1432, 16
      %v1445 = vrot.slane %v1443, 5
      %v1446 = vor.u32 %v1442, %v1445
      %v1447 = vrot.slane %v1446, 4
      %v1449 = vshrl.u32 %v1433, 16
      %v1451 = vrot.slane %v1449, 4
      %v1452 = vshll.u32 %v1433, 16
      %v1454 = vrot.slane %v1452, 5
      %v1455 = vor.u32 %v1451, %v1454
      %v1456 = vrot.slane %v1455, 4
      %v1458 = vshrl.u32 %v1434, 16
      %v1460 = vrot.slane %v1458, 4
      %v1461 = vshll.u32 %v1434, 16
      %v1463 = vrot.slane %v1461, 5
      %v1464 = vor.u32 %v1460, %v1463
      %v1465 = vrot.slane %v1464, 4
      %v1467 = vshrl.u32 %v1435, 16
      %v1469 = vrot.slane %v1467, 4
      %v1470 = vshll.u32 %v1435, 16
      %v1472 = vrot.slane %v1470, 5
      %v1473 = vor.u32 %v1469, %v1472
      %v1474 = vrot.slane %v1473, 4
      %v1476 = vshrl.u32 %v1436, 16
      %v1478 = vrot.slane %v1476, 4
      %v1479 = vshll.u32 %v1436, 16
      %v1481 = vrot.slane %v1479, 5
      %v1482 = vor.u32 %v1478, %v1481
      %v1483 = vrot.slane %v1482, 4
      %v1485 = vshrl.u32 %v1437, 16
      %v1487 = vrot.slane %v1485, 4
      %v1488 = vshll.u32 %v1437, 16
      %v1490 = vrot.slane %v1488, 5
      %v1491 = vor.u32 %v1487, %v1490
      %v1492 = vrot.slane %v1491, 4
      %v1494 = vshrl.u32 %v1438, 16
      %v1496 = vrot.slane %v1494, 4
      %v1497 = vshll.u32 %v1438, 16
      %v1499 = vrot.slane %v1497, 5
      %v1500 = vor.u32 %v1496, %v1499
      %v1501 = vrot.slane %v1500, 4
      %v1509 = vld [vmem:[#allocation3] sm:$0xf]
      %v1510 = vsel %vm525, %v1447, %v1509
      %1511 = vst [vmem:[#allocation3] sm:$0xf] %v1510
      %v1512 = vld [vmem:[#allocation3 + $0x8] sm:$0xf]
      %v1513 = vsel %vm525, %v1456, %v1512
      %1514 = vst [vmem:[#allocation3 + $0x8] sm:$0xf] %v1513
      %v1515 = vld [vmem:[#allocation3 + $0x10] sm:$0xf]
      %v1516 = vsel %vm525, %v1465, %v1515
      %1517 = vst [vmem:[#allocation3 + $0x10] sm:$0xf] %v1516
      %v1518 = vld [vmem:[#allocation3 + $0x18] sm:$0xf]
      %v1519 = vsel %vm525, %v1474, %v1518
      %1520 = vst [vmem:[#allocation3 + $0x18] sm:$0xf] %v1519
      %v1521 = vld [vmem:[#allocation3 + $0x20] sm:$0xf]
      %v1522 = vsel %vm525, %v1483, %v1521
      %1523 = vst [vmem:[#allocation3 + $0x20] sm:$0xf] %v1522
      %v1524 = vld [vmem:[#allocation3 + $0x28] sm:$0xf]
      %v1525 = vsel %vm525, %v1492, %v1524
      %1526 = vst [vmem:[#allocation3 + $0x28] sm:$0xf] %v1525
      %v1527 = vld [vmem:[#allocation3 + $0x30] sm:$0xf]
      %v1528 = vsel %vm525, %v1501, %v1527
      %1529 = vst [vmem:[#allocation3 + $0x30] sm:$0xf] %v1528
      %v1530 = vld [vmem:[#allocation3] sm:$0xff]
      %v1531 = vld [vmem:[#allocation3 + $0x8] sm:$0xff]
      %v1532 = vld [vmem:[#allocation3 + $0x10] sm:$0xff]
      %v1533 = vld [vmem:[#allocation3 + $0x18] sm:$0xff]
      %v1534 = vld [vmem:[#allocation3 + $0x20] sm:$0xff]
      %v1535 = vld [vmem:[#allocation3 + $0x28] sm:$0xff]
      %v1536 = vld [vmem:[#allocation3 + $0x30] sm:$0xff]
      %v1537 = vld [vmem:[#allocation3 + $0x38] sm:$0xff]
      %s1538 = scalar_lea.vmem %s3, 256
      %v1539 = vld [vmem:[%s1538] sm:$0xf]
      %v1540 = vld [vmem:[%s1538 + $0x4] sm:$0xf]
      %v1541 = vld [vmem:[%s1538 + $0x8] sm:$0xf]
      %v1542 = vld [vmem:[%s1538 + $0xc] sm:$0xf]
      %v1543 = vld [vmem:[%s1538 + $0x10] sm:$0xf]
      %v1544 = vld [vmem:[%s1538 + $0x14] sm:$0xf]
      %v1545 = vld [vmem:[%s1538 + $0x18] sm:$0xf]
      %v1546 = vld [vmem:[%s1538 + $0x1c] sm:$0xf]
      %v1547 = vld [vmem:[%s1538 + $0x20] sm:$0xf]
      %v1548 = vld [vmem:[%s1538 + $0x24] sm:$0xf]
      %v1549 = vld [vmem:[%s1538 + $0x28] sm:$0xf]
      %v1550 = vld [vmem:[%s1538 + $0x2c] sm:$0xf]
      %v1551 = vld [vmem:[%s1538 + $0x30] sm:$0xf]
      %v1552 = vld [vmem:[%s1538 + $0x34] sm:$0xf]
      %v1553 = vld [vmem:[%s1538 + $0x38] sm:$0xf]
      %v1554 = vld [vmem:[%s1538 + $0x3c] sm:$0xf]
      %v1555 = vld [vmem:[%s1538 + $0x40] sm:$0xf]
      %v1556 = vld [vmem:[%s1538 + $0x44] sm:$0xf]
      %v1557 = vld [vmem:[%s1538 + $0x48] sm:$0xf]
      %v1558 = vld [vmem:[%s1538 + $0x4c] sm:$0xf]
      %v1559 = vld [vmem:[%s1538 + $0x50] sm:$0xf]
      %v1560 = vld [vmem:[%s1538 + $0x54] sm:$0xf]
      %v1561 = vld [vmem:[%s1538 + $0x58] sm:$0xf]
      %v1562 = vld [vmem:[%s1538 + $0x5c] sm:$0xf]
      %v1563 = vld [vmem:[%s1538 + $0x60] sm:$0xf]
      %v1564 = vld [vmem:[%s1538 + $0x64] sm:$0xf]
      %v1565 = vld [vmem:[%s1538 + $0x68] sm:$0xf]
      %v1566 = vld [vmem:[%s1538 + $0x6c] sm:$0xf]
      %v1567 = vld [vmem:[%s1538 + $0x70] sm:$0xf]
      %v1568 = vld [vmem:[%s1538 + $0x74] sm:$0xf]
      %v1569 = vld [vmem:[%s1538 + $0x78] sm:$0xf]
      %v1570 = vld [vmem:[%s1538 + $0x7c] sm:$0xf]
      %v1579 = vunpack.c.l.b16 %v1530
      %v1580 = vunpack.c.h.b16 %v1530
      %v1581 = vunpack.c.l.b16 %v1531
      %v1582 = vunpack.c.h.b16 %v1531
      %v1583 = vunpack.c.l.b16 %v1532
      %v1584 = vunpack.c.h.b16 %v1532
      %v1585 = vunpack.c.l.b16 %v1533
      %v1586 = vunpack.c.h.b16 %v1533
      %v1587 = vunpack.c.l.b16 %v1534
      %v1588 = vunpack.c.h.b16 %v1534
      %v1589 = vunpack.c.l.b16 %v1535
      %v1590 = vunpack.c.h.b16 %v1535
      %v1591 = vunpack.c.l.b16 %v1536
      %v1592 = vunpack.c.h.b16 %v1536
      %v1593 = vunpack.c.l.b16 %v1537
      %v1594 = vunpack.c.h.b16 %v1537
      %v1595 = vpack.c.b16 %v1581, %v1579
      %v1596 = vpack.c.b16 %v1582, %v1580
      %v1597 = vpack.c.b16 %v1585, %v1583
      %v1598 = vpack.c.b16 %v1586, %v1584
      %v1599 = vpack.c.b16 %v1589, %v1587
      %v1600 = vpack.c.b16 %v1590, %v1588
      %v1601 = vpack.c.b16 %v1593, %v1591
      %v1602 = vpack.c.b16 %v1594, %v1592
      %v1643 = vunpack.c.l.b16 %v1539
      %v1644 = vunpack.c.l.b16 %v1540
      %v1645 = vunpack.c.l.b16 %v1541
      %v1646 = vunpack.c.l.b16 %v1542
      %v1647 = vunpack.c.l.b16 %v1543
      %v1648 = vunpack.c.l.b16 %v1544
      %v1649 = vunpack.c.l.b16 %v1545
      %v1650 = vunpack.c.l.b16 %v1546
      %v1651 = vunpack.c.l.b16 %v1547
      %v1652 = vunpack.c.l.b16 %v1548
      %v1653 = vunpack.c.l.b16 %v1549
      %v1654 = vunpack.c.l.b16 %v1550
      %v1655 = vunpack.c.l.b16 %v1551
      %v1656 = vunpack.c.l.b16 %v1552
      %v1657 = vunpack.c.l.b16 %v1553
      %v1658 = vunpack.c.l.b16 %v1554
      %v1659 = vunpack.c.l.b16 %v1555
      %v1660 = vunpack.c.l.b16 %v1556
      %v1661 = vunpack.c.l.b16 %v1557
      %v1662 = vunpack.c.l.b16 %v1558
      %v1663 = vunpack.c.l.b16 %v1559
      %v1664 = vunpack.c.l.b16 %v1560
      %v1665 = vunpack.c.l.b16 %v1561
      %v1666 = vunpack.c.l.b16 %v1562
      %v1667 = vunpack.c.l.b16 %v1563
      %v1668 = vunpack.c.l.b16 %v1564
      %v1669 = vunpack.c.l.b16 %v1565
      %v1670 = vunpack.c.l.b16 %v1566
      %v1671 = vunpack.c.l.b16 %v1567
      %v1672 = vunpack.c.l.b16 %v1568
      %v1673 = vunpack.c.l.b16 %v1569
      %v1674 = vunpack.c.l.b16 %v1570
      %v1675 = vpack.c.b16 %v1644, %v1643
      %v1676 = vpack.c.b16 %v1646, %v1645
      %v1677 = vpack.c.b16 %v1648, %v1647
      %v1678 = vpack.c.b16 %v1650, %v1649
      %v1679 = vpack.c.b16 %v1652, %v1651
      %v1680 = vpack.c.b16 %v1654, %v1653
      %v1681 = vpack.c.b16 %v1656, %v1655
      %v1682 = vpack.c.b16 %v1658, %v1657
      %v1683 = vpack.c.b16 %v1660, %v1659
      %v1684 = vpack.c.b16 %v1662, %v1661
      %v1685 = vpack.c.b16 %v1664, %v1663
      %v1686 = vpack.c.b16 %v1666, %v1665
      %v1687 = vpack.c.b16 %v1668, %v1667
      %v1688 = vpack.c.b16 %v1670, %v1669
      %v1689 = vpack.c.b16 %v1672, %v1671
      %v1690 = vpack.c.b16 %v1674, %v1673
      %1707 = vmatprep.subr.bf16.mxu0 0
      %1708 = vmatpush1.bf16.msra.mxu0 %v1675
      %1709 = vmatprep.subr.bf16.mxu0 0
      %1710 = vmatpush1.bf16.msra.mxu0 %v1676
      %1711 = vmatprep.subr.bf16.mxu0 0
      %1712 = vmatpush1.bf16.msra.mxu0 %v1677
      %1713 = vmatprep.subr.bf16.mxu0 0
      %1714 = vmatpush1.bf16.msra.mxu0 %v1678
      %1715 = vmatprep.subr.bf16.mxu0 0
      %1716 = vmatpush1.bf16.msra.mxu0 %v1679
      %1717 = vmatprep.subr.bf16.mxu0 0
      %1718 = vmatpush1.bf16.msra.mxu0 %v1680
      %1719 = vmatprep.subr.bf16.mxu0 0
      %1720 = vmatpush1.bf16.msra.mxu0 %v1681
      %1721 = vmatprep.subr.bf16.mxu0 0
      %1722 = vmatpush1.bf16.msra.mxu0 %v1682
      %1723 = vmatprep.subr.bf16.mxu0 0
      %1724 = vmatpush1.bf16.msra.mxu0 %v1683
      %1725 = vmatprep.subr.bf16.mxu0 0
      %1726 = vmatpush1.bf16.msra.mxu0 %v1684
      %1727 = vmatprep.subr.bf16.mxu0 0
      %1728 = vmatpush1.bf16.msra.mxu0 %v1685
      %1729 = vmatprep.subr.bf16.mxu0 0
      %1730 = vmatpush1.bf16.msra.mxu0 %v1686
      %1731 = vmatprep.subr.bf16.mxu0 0
      %1732 = vmatpush1.bf16.msra.mxu0 %v1687
      %1733 = vmatprep.subr.bf16.mxu0 0
      %1734 = vmatpush1.bf16.msra.mxu0 %v1688
      %1735 = vmatprep.subr.bf16.mxu0 0
      %1736 = vmatpush1.bf16.msra.mxu0 %v1689
      %1737 = vmatprep.subr.bf16.mxu0 0
      %1738 = vmatpush1.bf16.msra.mxu0 %v1690
      %1739 = vmatprep.mubr.bf16.mxu0 %v1596
      %1740 = vmatmul.mubr.bf16.gmra.mrb[0].mxu0 %v1595
      %v1741 = vpop.f32.mrb[0].mxu0
      %v1742 = vadd.f32 0.0, %v1741
      %v1743 = vpop.f32.mrb[0].mxu0
      %v1744 = vpop.f32.mrb[0].mxu0
      %v1745 = vadd.f32 0.0, %v1744
      %v1746 = vpop.f32.mrb[0].mxu0
      %1747 = vmatprep.mubr.bf16.mxu0 %v1598
      %1748 = vmatmul.mubr.bf16.gmra.mrb[0].mxu0 %v1597
      %v1749 = vpop.f32.mrb[0].mxu0
      %v1750 = vadd.f32 0.0, %v1749
      %v1751 = vpop.f32.mrb[0].mxu0
      %v1752 = vpop.f32.mrb[0].mxu0
      %v1753 = vadd.f32 0.0, %v1752
      %v1754 = vpop.f32.mrb[0].mxu0
      %1755 = vmatprep.mubr.bf16.mxu0 %v1600
      %1756 = vmatmul.mubr.bf16.gmra.mrb[0].mxu0 %v1599
      %v1757 = vpop.f32.mrb[0].mxu0
      %v1758 = vadd.f32 0.0, %v1757
      %v1759 = vpop.f32.mrb[0].mxu0
      %v1760 = vpop.f32.mrb[0].mxu0
      %v1761 = vadd.f32 0.0, %v1760
      %v1762 = vpop.f32.mrb[0].mxu0
      %1763 = vmatprep.mubr.bf16.mxu0 %v1602
      %1764 = vmatmul.mubr.bf16.gmra.mrb[0].mxu0 %v1601
      %v1765 = vpop.f32.mrb[0].mxu0
      %v1766 = vadd.f32 0.0, %v1765
      %v1767 = vpop.f32.mrb[0].mxu0
      %v1768 = vpop.f32.mrb[0].mxu0
      %v1769 = vadd.f32 0.0, %v1768
      %v1770 = vpop.f32.mrb[0].mxu0
      %1771 = vdwg.mxu0
      %v1772 = vadd.f32 %v1394, %v1742
      %v1773 = vadd.f32 %v1397, %v1745
      %v1774 = vadd.f32 %v1402, %v1750
      %v1775 = vadd.f32 %v1405, %v1753
      %v1776 = vadd.f32 %v1410, %v1758
      %v1777 = vadd.f32 %v1413, %v1761
      %v1778 = vadd.f32 %v1418, %v1766
      %v1779 = vadd.f32 %v1421, %v1769
      %vm1780 = vcmask 523264
      %v1781 = vsel %vm1780, %v1772, 0.0
      %v1782 = vsel %vm1780, %v1773, 0.0
      %v1783 = vadd.f32 %v1781, %v1782
      %v1784 = vsel %vm1780, %v1774, 0.0
      %v1785 = vadd.f32 %v1783, %v1784
      %v1786 = vsel %vm1780, %v1775, 0.0
      %v1787 = vadd.f32 %v1785, %v1786
      %v1788 = vsel %vm1780, %v1776, 0.0
      %v1789 = vadd.f32 %v1787, %v1788
      %v1790 = vsel %vm1780, %v1777, 0.0
      %v1791 = vadd.f32 %v1789, %v1790
      %v1792 = vsel %vm1780, %v1778, 0.0
      %v1793 = vadd.f32 %v1791, %v1792
      %v1794 = vsel %vm1780, %v1779, 0.0
      %v1795 = vadd.f32 %v1793, %v1794
      %v1796 = vrot.slane %v1795, 4
      %v1797 = vadd.f32 %v1795, %v1796
      %v1798 = vrot.slane %v1797, 2
      %v1799 = vadd.f32 %v1797, %v1798
      %v1800 = vrot.slane %v1799, 1
      %v1801 = vadd.f32 %v1799, %v1800
      %vm1802 = vcmask 516096
      %1803 = vst.msk [vmem:[%s235] sm:$0x1] %vm1802, %v1801
      %v1804 = vmul.f32 %v1772, %v1772
      %v1805 = vmul.f32 %v1773, %v1773
      %v1806 = vmul.f32 %v1774, %v1774
      %v1807 = vmul.f32 %v1775, %v1775
      %v1808 = vmul.f32 %v1776, %v1776
      %v1809 = vmul.f32 %v1777, %v1777
      %v1810 = vmul.f32 %v1778, %v1778
      %v1811 = vmul.f32 %v1779, %v1779
      %v1812 = vsel %vm1780, %v1804, 0.0
      %v1813 = vsel %vm1780, %v1805, 0.0
      %v1814 = vadd.f32 %v1812, %v1813
      %v1815 = vsel %vm1780, %v1806, 0.0
      %v1816 = vadd.f32 %v1814, %v1815
      %v1817 = vsel %vm1780, %v1807, 0.0
      %v1818 = vadd.f32 %v1816, %v1817
      %v1819 = vsel %vm1780, %v1808, 0.0
      %v1820 = vadd.f32 %v1818, %v1819
      %v1821 = vsel %vm1780, %v1809, 0.0
      %v1822 = vadd.f32 %v1820, %v1821
      %v1823 = vsel %vm1780, %v1810, 0.0
      %v1824 = vadd.f32 %v1822, %v1823
      %v1825 = vsel %vm1780, %v1811, 0.0
      %v1826 = vadd.f32 %v1824, %v1825
      %v1827 = vrot.slane %v1826, 4
      %v1828 = vadd.f32 %v1826, %v1827
      %v1829 = vrot.slane %v1828, 2
      %v1830 = vadd.f32 %v1828, %v1829
      %v1831 = vrot.slane %v1830, 1
      %v1832 = vadd.f32 %v1830, %v1831
      %1833 = vst.msk [vmem:[%s235 + $0x1] sm:$0x1] %vm1802, %v1832
      %v1834 = vpack.c.bf16 %v1772, %v1772
      %v1835 = vpack.c.bf16 %v1773, %v1773
      %v1836 = vpack.c.bf16 %v1774, %v1774
      %v1837 = vpack.c.bf16 %v1775, %v1775
      %v1838 = vpack.c.bf16 %v1776, %v1776
      %v1839 = vpack.c.bf16 %v1777, %v1777
      %v1840 = vpack.c.bf16 %v1778, %v1778
      %v1841 = vpack.c.bf16 %v1779, %v1779
      %1842 = vst.msk [vmem:[%s231] sm:$0xf] %vm299, %v1834
      %1843 = vst.msk [vmem:[%s231 + $0x4] sm:$0xf] %vm299, %v1835
      %1844 = vst.msk [vmem:[%s231 + $0x8] sm:$0xf] %vm299, %v1836
      %1845 = vst.msk [vmem:[%s231 + $0xc] sm:$0xf] %vm299, %v1837
      %1846 = vst.msk [vmem:[%s231 + $0x10] sm:$0xf] %vm299, %v1838
      %1847 = vst.msk [vmem:[%s231 + $0x14] sm:$0xf] %vm299, %v1839
      %1848 = vst.msk [vmem:[%s231 + $0x18] sm:$0xf] %vm299, %v1840
      %1849 = vst.msk [vmem:[%s231 + $0x1c] sm:$0xf] %vm299, %v1841
      %p1850 = scmp.lt.s32.totalorder %s17, 1
      %s1851 = scalar_select %p1850, %s17, 1
      %s1852 = smul.addr %s1851, 8
      %s1853 = smul.addr %s1852, 4
      %s1854 = scalar_lea.vmem %s4, %s1853
      %p1855 = scmp.lt.s32.totalorder %s17, 1
      %s1856 = scalar_select %p1855, %s17, 1
      %s1857 = smul.addr %s1856, 2
      %s1858 = scalar_lea.vmem %s5, %s1857
      // Predicated region
      $region37: #{resnet_forward.21} parent=35 // pred_check
        %p1859 = pneg %p124
      $region38: #{resnet_forward.21} parent=35 // pred_check_branch
        %1861 = sbr.rel (%p1859) target = $region40
      $region39: #{resnet_forward.21} parent=35 // pred_region
        _
      $region40: #{resnet_forward.21} parent=35 // pred_fallthru
        _
      // Predicated region
      $region41: #{resnet_forward.21} parent=35 // pred_check
        %p1862 = pneg %p150
      $region42: #{resnet_forward.21} parent=35 // pred_check_branch
        %1864 = sbr.rel (%p1862) target = $region44
      $region43: #{resnet_forward.21} parent=35 // pred_region
        _
      $region44: #{resnet_forward.21} parent=35 // pred_fallthru
        _
    $region36: #{resnet_forward.21} parent=5 // pred_fallthru
      _
    %p1865 = scmp.le.s32.totalorder 2, %s12
    // Predicated region
    $region45: #{resnet_forward.21} parent=5 // pred_check
      %p1866 = pneg %p1865
    $region46: #{resnet_forward.21} parent=5 // pred_check_branch
      %1868 = sbr.rel (%p1866) target = $region48
    $region47: #{resnet_forward.21} parent=5 // pred_region
      %s1869 = ssub.s32 %s12, 2
      // Predicated region
      $region49: #{resnet_forward.21} parent=47 // pred_check
        %p1870 = pneg %p130
      $region50: #{resnet_forward.21} parent=47 // pred_check_branch
        %1872 = sbr.rel (%p1870) target = $region52
      $region51: #{resnet_forward.21} parent=47 // pred_region
        %p1873 = scmp.lt.s32.totalorder %s18, 1
        %s1874 = scalar_select %p1873, %s18, 1
        %s1875 = smul.addr %s1874, 8
        %s1876 = smul.addr %s1875, 4
        %s1877 = scalar_lea.vmem %s4, %s1876
      $region52: #{resnet_forward.21} parent=47 // pred_fallthru
        _
      // Predicated region
      $region53: #{resnet_forward.21} parent=47 // pred_check
        %p1878 = pneg %p156
      $region54: #{resnet_forward.21} parent=47 // pred_check_branch
        %1880 = sbr.rel (%p1878) target = $region56
      $region55: #{resnet_forward.21} parent=47 // pred_region
        %p1881 = scmp.lt.s32.totalorder %s18, 1
        %s1882 = scalar_select %p1881, %s18, 1
        %s1883 = smul.addr %s1882, 2
        %s1884 = scalar_lea.vmem %s5, %s1883
      $region56: #{resnet_forward.21} parent=47 // pred_fallthru
        _
    $region48: #{resnet_forward.21} parent=5 // pred_fallthru
      _
  $region6: #{resnet_forward.21} parent=0 // loop_footer
    %s16 = sadd.s32 1, %s12
  $region7: #{resnet_forward.21} parent=0 // loop_footer_branch
    %11 = sbr.rel target = $region3
  $region8: #{resnet_forward.21} parent=0 // loop_exit
    _

// kernel: resnet_forward.26
$region0: #{resnet_forward.26}
  #allocation0 [shape = 'u32[]', space=smem, size = 0x4, offset = 0x4, fixed_abs, tag = 'smem constant byte address 0x4 - core index']
  #allocation1 [shape = 'u32[144,128]{1,0:T(1,128)}', space=vmem, size = 0x12000, scoped, tag = 'internal scratch']
  %s0 = inlined_call_operand.vmem [shape: bf16[32,576], index: 0, kind: input, shape index: {}]
  %s1 = inlined_call_operand.vmem [shape: bf16[576,128], index: 1, kind: input, shape index: {}]
  %s2 = inlined_call_operand.vmem [shape: bf16[32,128], index: 2, kind: output, shape index: {0}]
  %s3 = inlined_call_operand.vmem [shape: f32[1,2,128], index: 3, kind: output, shape index: {1}]
  %4 = xla_tuple %s2, %s3
  %s5 = sld [smem:[#allocation0]]
  $region26: #{resnet_forward.26} parent=0
    _
  %s7 = ssub.s32 1, %s5
  %s8 = scalar_select 0, %s7, %s5
  // Predicated region
  $region2: #{resnet_forward.26} parent=0 // pred_check
    _
  $region3: #{resnet_forward.26} parent=0 // pred_check_branch
    %10 = sbr.rel (0) target = $region5
  $region4: #{resnet_forward.26} parent=0 // pred_region
    _
  $region5: #{resnet_forward.26} parent=0 // pred_fallthru
    _
  // Predicated region
  $region6: #{resnet_forward.26} parent=0 // pred_check
    _
  $region7: #{resnet_forward.26} parent=0 // pred_check_branch
    %12 = sbr.rel (0) target = $region9
  $region8: #{resnet_forward.26} parent=0 // pred_region
    _
  $region9: #{resnet_forward.26} parent=0 // pred_fallthru
    _
  %v14 = vld [vmem:[%s0] sm:$0xff]
  %v15 = vld [vmem:[%s0 + $0x8] sm:$0xff]
  %v16 = vld [vmem:[%s0 + $0x10] sm:$0xf]
  %v17 = vld [vmem:[%s0 + $0x14] sm:$0xff]
  %v18 = vld [vmem:[%s0 + $0x1c] sm:$0xff]
  %v19 = vld [vmem:[%s0 + $0x24] sm:$0xf]
  %v20 = vld [vmem:[%s0 + $0x28] sm:$0xff]
  %v21 = vld [vmem:[%s0 + $0x30] sm:$0xff]
  %v22 = vld [vmem:[%s0 + $0x38] sm:$0xf]
  %v23 = vld [vmem:[%s0 + $0x3c] sm:$0xff]
  %v24 = vld [vmem:[%s0 + $0x44] sm:$0xff]
  %v25 = vld [vmem:[%s0 + $0x4c] sm:$0xf]
  %v26 = vld [vmem:[%s1] sm:$0xf]
  %v27 = vld [vmem:[%s1 + $0x4] sm:$0xf]
  %v28 = vld [vmem:[%s1 + $0x8] sm:$0xf]
  %v29 = vld [vmem:[%s1 + $0xc] sm:$0xf]
  %v30 = vld [vmem:[%s1 + $0x10] sm:$0xf]
  %v31 = vld [vmem:[%s1 + $0x14] sm:$0xf]
  %v32 = vld [vmem:[%s1 + $0x18] sm:$0xf]
  %v33 = vld [vmem:[%s1 + $0x1c] sm:$0xf]
  %v34 = vld [vmem:[%s1 + $0x20] sm:$0xf]
  %v35 = vld [vmem:[%s1 + $0x24] sm:$0xf]
  %v36 = vld [vmem:[%s1 + $0x28] sm:$0xf]
  %v37 = vld [vmem:[%s1 + $0x2c] sm:$0xf]
  %v38 = vld [vmem:[%s1 + $0x30] sm:$0xf]
  %v39 = vld [vmem:[%s1 + $0x34] sm:$0xf]
  %v40 = vld [vmem:[%s1 + $0x38] sm:$0xf]
  %v41 = vld [vmem:[%s1 + $0x3c] sm:$0xf]
  %v42 = vld [vmem:[%s1 + $0x40] sm:$0xf]
  %v43 = vld [vmem:[%s1 + $0x44] sm:$0xf]
  %v44 = vld [vmem:[%s1 + $0x48] sm:$0xf]
  %v45 = vld [vmem:[%s1 + $0x4c] sm:$0xf]
  %v46 = vld [vmem:[%s1 + $0x50] sm:$0xf]
  %v47 = vld [vmem:[%s1 + $0x54] sm:$0xf]
  %v48 = vld [vmem:[%s1 + $0x58] sm:$0xf]
  %v49 = vld [vmem:[%s1 + $0x5c] sm:$0xf]
  %v50 = vld [vmem:[%s1 + $0x60] sm:$0xf]
  %v51 = vld [vmem:[%s1 + $0x64] sm:$0xf]
  %v52 = vld [vmem:[%s1 + $0x68] sm:$0xf]
  %v53 = vld [vmem:[%s1 + $0x6c] sm:$0xf]
  %v54 = vld [vmem:[%s1 + $0x70] sm:$0xf]
  %v55 = vld [vmem:[%s1 + $0x74] sm:$0xf]
  %v56 = vld [vmem:[%s1 + $0x78] sm:$0xf]
  %v57 = vld [vmem:[%s1 + $0x7c] sm:$0xf]
  %v58 = vld [vmem:[%s1 + $0x80] sm:$0xf]
  %v59 = vld [vmem:[%s1 + $0x84] sm:$0xf]
  %v60 = vld [vmem:[%s1 + $0x88] sm:$0xf]
  %v61 = vld [vmem:[%s1 + $0x8c] sm:$0xf]
  %v62 = vld [vmem:[%s1 + $0x90] sm:$0xf]
  %v63 = vld [vmem:[%s1 + $0x94] sm:$0xf]
  %v64 = vld [vmem:[%s1 + $0x98] sm:$0xf]
  %v65 = vld [vmem:[%s1 + $0x9c] sm:$0xf]
  %v66 = vld [vmem:[%s1 + $0xa0] sm:$0xf]
  %v67 = vld [vmem:[%s1 + $0xa4] sm:$0xf]
  %v68 = vld [vmem:[%s1 + $0xa8] sm:$0xf]
  %v69 = vld [vmem:[%s1 + $0xac] sm:$0xf]
  %v70 = vld [vmem:[%s1 + $0xb0] sm:$0xf]
  %v71 = vld [vmem:[%s1 + $0xb4] sm:$0xf]
  %v72 = vld [vmem:[%s1 + $0xb8] sm:$0xf]
  %v73 = vld [vmem:[%s1 + $0xbc] sm:$0xf]
  %v74 = vld [vmem:[%s1 + $0xc0] sm:$0xf]
  %v75 = vld [vmem:[%s1 + $0xc4] sm:$0xf]
  %v76 = vld [vmem:[%s1 + $0xc8] sm:$0xf]
  %v77 = vld [vmem:[%s1 + $0xcc] sm:$0xf]
  %v78 = vld [vmem:[%s1 + $0xd0] sm:$0xf]
  %v79 = vld [vmem:[%s1 + $0xd4] sm:$0xf]
  %v80 = vld [vmem:[%s1 + $0xd8] sm:$0xf]
  %v81 = vld [vmem:[%s1 + $0xdc] sm:$0xf]
  %v82 = vld [vmem:[%s1 + $0xe0] sm:$0xf]
  %v83 = vld [vmem:[%s1 + $0xe4] sm:$0xf]
  %v84 = vld [vmem:[%s1 + $0xe8] sm:$0xf]
  %v85 = vld [vmem:[%s1 + $0xec] sm:$0xf]
  %v86 = vld [vmem:[%s1 + $0xf0] sm:$0xf]
  %v87 = vld [vmem:[%s1 + $0xf4] sm:$0xf]
  %v88 = vld [vmem:[%s1 + $0xf8] sm:$0xf]
  %v89 = vld [vmem:[%s1 + $0xfc] sm:$0xf]
  %v90 = vld [vmem:[%s1 + $0x100] sm:$0xf]
  %v91 = vld [vmem:[%s1 + $0x104] sm:$0xf]
  %v92 = vld [vmem:[%s1 + $0x108] sm:$0xf]
  %v93 = vld [vmem:[%s1 + $0x10c] sm:$0xf]
  %v94 = vld [vmem:[%s1 + $0x110] sm:$0xf]
  %v95 = vld [vmem:[%s1 + $0x114] sm:$0xf]
  %v96 = vld [vmem:[%s1 + $0x118] sm:$0xf]
  %v97 = vld [vmem:[%s1 + $0x11c] sm:$0xf]
  %v110 = vunpack.c.l.b16 %v14
  %v111 = vunpack.c.h.b16 %v14
  %v112 = vunpack.c.l.b16 %v15
  %v113 = vunpack.c.h.b16 %v15
  %v114 = vunpack.c.l.b16 %v16
  %v115 = vunpack.c.l.b16 %v17
  %v116 = vunpack.c.h.b16 %v17
  %v117 = vunpack.c.l.b16 %v18
  %v118 = vunpack.c.h.b16 %v18
  %v119 = vunpack.c.l.b16 %v19
  %v120 = vunpack.c.l.b16 %v20
  %v121 = vunpack.c.h.b16 %v20
  %v122 = vunpack.c.l.b16 %v21
  %v123 = vunpack.c.h.b16 %v21
  %v124 = vunpack.c.l.b16 %v22
  %v125 = vunpack.c.l.b16 %v23
  %v126 = vunpack.c.h.b16 %v23
  %v127 = vunpack.c.l.b16 %v24
  %v128 = vunpack.c.h.b16 %v24
  %v129 = vunpack.c.l.b16 %v25
  %v130 = vpack.c.b16 %v115, %v110
  %v131 = vpack.c.b16 %v116, %v111
  %v132 = vpack.c.b16 %v117, %v112
  %v133 = vpack.c.b16 %v118, %v113
  %v134 = vpack.c.b16 %v119, %v114
  %v135 = vpack.c.b16 %v125, %v120
  %v136 = vpack.c.b16 %v126, %v121
  %v137 = vpack.c.b16 %v127, %v122
  %v138 = vpack.c.b16 %v128, %v123
  %v139 = vpack.c.b16 %v129, %v124
  %v220 = vunpack.c.l.b16 %v26
  %v221 = vunpack.c.l.b16 %v27
  %v222 = vunpack.c.l.b16 %v28
  %v223 = vunpack.c.l.b16 %v29
  %v224 = vunpack.c.l.b16 %v30
  %v225 = vunpack.c.l.b16 %v31
  %v226 = vunpack.c.l.b16 %v32
  %v227 = vunpack.c.l.b16 %v33
  %v228 = vunpack.c.l.b16 %v34
  %v229 = vunpack.c.l.b16 %v35
  %v230 = vunpack.c.l.b16 %v36
  %v231 = vunpack.c.l.b16 %v37
  %v232 = vunpack.c.l.b16 %v38
  %v233 = vunpack.c.l.b16 %v39
  %v234 = vunpack.c.l.b16 %v40
  %v235 = vunpack.c.l.b16 %v41
  %v236 = vunpack.c.l.b16 %v42
  %v237 = vunpack.c.l.b16 %v43
  %v238 = vunpack.c.l.b16 %v44
  %v239 = vunpack.c.l.b16 %v45
  %v240 = vunpack.c.l.b16 %v46
  %v241 = vunpack.c.l.b16 %v47
  %v242 = vunpack.c.l.b16 %v48
  %v243 = vunpack.c.l.b16 %v49
  %v244 = vunpack.c.l.b16 %v50
  %v245 = vunpack.c.l.b16 %v51
  %v246 = vunpack.c.l.b16 %v52
  %v247 = vunpack.c.l.b16 %v53
  %v248 = vunpack.c.l.b16 %v54
  %v249 = vunpack.c.l.b16 %v55
  %v250 = vunpack.c.l.b16 %v56
  %v251 = vunpack.c.l.b16 %v57
  %v252 = vunpack.c.l.b16 %v58
  %v253 = vunpack.c.l.b16 %v59
  %v254 = vunpack.c.l.b16 %v60
  %v255 = vunpack.c.l.b16 %v61
  %v256 = vunpack.c.l.b16 %v62
  %v257 = vunpack.c.l.b16 %v63
  %v258 = vunpack.c.l.b16 %v64
  %v259 = vunpack.c.l.b16 %v65
  %v260 = vunpack.c.l.b16 %v66
  %v261 = vunpack.c.l.b16 %v67
  %v262 = vunpack.c.l.b16 %v68
  %v263 = vunpack.c.l.b16 %v69
  %v264 = vunpack.c.l.b16 %v70
  %v265 = vunpack.c.l.b16 %v71
  %v266 = vunpack.c.l.b16 %v72
  %v267 = vunpack.c.l.b16 %v73
  %v268 = vunpack.c.l.b16 %v74
  %v269 = vunpack.c.l.b16 %v75
  %v270 = vunpack.c.l.b16 %v76
  %v271 = vunpack.c.l.b16 %v77
  %v272 = vunpack.c.l.b16 %v78
  %v273 = vunpack.c.l.b16 %v79
  %v274 = vunpack.c.l.b16 %v80
  %v275 = vunpack.c.l.b16 %v81
  %v276 = vunpack.c.l.b16 %v82
  %v277 = vunpack.c.l.b16 %v83
  %v278 = vunpack.c.l.b16 %v84
  %v279 = vunpack.c.l.b16 %v85
  %v280 = vunpack.c.l.b16 %v86
  %v281 = vunpack.c.l.b16 %v87
  %v282 = vunpack.c.l.b16 %v88
  %v283 = vunpack.c.l.b16 %v89
  %v284 = vunpack.c.l.b16 %v90
  %v285 = vunpack.c.l.b16 %v91
  %v286 = vunpack.c.l.b16 %v92
  %v287 = vunpack.c.l.b16 %v93
  %v288 = vunpack.c.l.b16 %v94
  %v289 = vunpack.c.l.b16 %v95
  %v290 = vunpack.c.l.b16 %v96
  %v291 = vunpack.c.l.b16 %v97
  %v292 = vpack.c.b16 %v221, %v220
  %v293 = vpack.c.b16 %v223, %v222
  %v294 = vpack.c.b16 %v225, %v224
  %v295 = vpack.c.b16 %v227, %v226
  %v296 = vpack.c.b16 %v229, %v228
  %v297 = vpack.c.b16 %v231, %v230
  %v298 = vpack.c.b16 %v233, %v232
  %v299 = vpack.c.b16 %v235, %v234
  %v300 = vpack.c.b16 %v237, %v236
  %v301 = vpack.c.b16 %v239, %v238
  %v302 = vpack.c.b16 %v241, %v240
  %v303 = vpack.c.b16 %v243, %v242
  %v304 = vpack.c.b16 %v245, %v244
  %v305 = vpack.c.b16 %v247, %v246
  %v306 = vpack.c.b16 %v249, %v248
  %v307 = vpack.c.b16 %v251, %v250
  %v308 = vpack.c.b16 %v253, %v252
  %v309 = vpack.c.b16 %v255, %v254
  %v310 = vpack.c.b16 %v257, %v256
  %v311 = vpack.c.b16 %v259, %v258
  %v312 = vpack.c.b16 %v261, %v260
  %v313 = vpack.c.b16 %v263, %v262
  %v314 = vpack.c.b16 %v265, %v264
  %v315 = vpack.c.b16 %v267, %v266
  %v316 = vpack.c.b16 %v269, %v268
  %v317 = vpack.c.b16 %v271, %v270
  %v318 = vpack.c.b16 %v273, %v272
  %v319 = vpack.c.b16 %v275, %v274
  %v320 = vpack.c.b16 %v277, %v276
  %v321 = vpack.c.b16 %v279, %v278
  %v322 = vpack.c.b16 %v281, %v280
  %v323 = vpack.c.b16 %v283, %v282
  %v324 = vpack.c.b16 %v285, %v284
  %v325 = vpack.c.b16 %v287, %v286
  %v326 = vpack.c.b16 %v289, %v288
  %v327 = vpack.c.b16 %v291, %v290
  %vm364 = vcmask 523264
  %v366 = vsel %vm364, %v134, 0
  %v369 = vsel %vm364, %v139, 0
  %371 = vmatprep.subr.bf16.mxu0 0
  %372 = vmatpush1.bf16.msra.mxu0 %v292
  %373 = vmatprep.subr.bf16.mxu0 0
  %374 = vmatpush1.bf16.msra.mxu0 %v293
  %375 = vmatprep.subr.bf16.mxu0 0
  %376 = vmatpush1.bf16.msra.mxu0 %v294
  %377 = vmatprep.subr.bf16.mxu0 0
  %378 = vmatpush1.bf16.msra.mxu0 %v295
  %379 = vmatprep.subr.bf16.mxu0 0
  %380 = vmatpush1.bf16.msra.mxu0 %v296
  %381 = vmatprep.subr.bf16.mxu0 0
  %382 = vmatpush1.bf16.msra.mxu0 %v297
  %383 = vmatprep.subr.bf16.mxu0 0
  %384 = vmatpush1.bf16.msra.mxu0 %v298
  %385 = vmatprep.subr.bf16.mxu0 0
  %386 = vmatpush1.bf16.msra.mxu0 %v299
  %387 = vmatprep.subr.bf16.mxu0 0
  %388 = vmatpush1.bf16.msra.mxu0 %v300
  %389 = vmatprep.subr.bf16.mxu0 0
  %390 = vmatpush1.bf16.msra.mxu0 %v301
  %391 = vmatprep.subr.bf16.mxu0 0
  %392 = vmatpush1.bf16.msra.mxu0 %v302
  %393 = vmatprep.subr.bf16.mxu0 0
  %394 = vmatpush1.bf16.msra.mxu0 %v303
  %395 = vmatprep.subr.bf16.mxu0 0
  %396 = vmatpush1.bf16.msra.mxu0 %v304
  %397 = vmatprep.subr.bf16.mxu0 0
  %398 = vmatpush1.bf16.msra.mxu0 %v305
  %399 = vmatprep.subr.bf16.mxu0 0
  %400 = vmatpush1.bf16.msra.mxu0 %v306
  %401 = vmatprep.subr.bf16.mxu0 0
  %402 = vmatpush1.bf16.msra.mxu0 %v307
  %403 = vmatprep.mubr.bf16.mxu0 %v131
  %404 = vmatmul.mubr.bf16.gmra.mrb[0].mxu0 %v130
  %v405 = vpop.f32.mrb[0].mxu0
  %v406 = vadd.f32 0.0, %v405
  %v407 = vpop.f32.mrb[0].mxu0
  %v408 = vpop.f32.mrb[0].mxu0
  %v409 = vadd.f32 0.0, %v408
  %v410 = vpop.f32.mrb[0].mxu0
  %411 = vmatprep.mubr.bf16.mxu0 %v136
  %412 = vmatmul.mubr.bf16.gmra.mrb[0].mxu0 %v135
  %v413 = vpop.f32.mrb[0].mxu0
  %v414 = vadd.f32 0.0, %v413
  %v415 = vpop.f32.mrb[0].mxu0
  %v416 = vpop.f32.mrb[0].mxu0
  %v417 = vadd.f32 0.0, %v416
  %v418 = vpop.f32.mrb[0].mxu0
  %419 = vdwg.mxu0
  %420 = vmatprep.subr.bf16.mxu0 0
  %421 = vmatpush1.bf16.msra.mxu0 %v308
  %422 = vmatprep.subr.bf16.mxu0 0
  %423 = vmatpush1.bf16.msra.mxu0 %v309
  %424 = vmatprep.subr.bf16.mxu0 0
  %425 = vmatpush1.bf16.msra.mxu0 %v310
  %426 = vmatprep.subr.bf16.mxu0 0
  %427 = vmatpush1.bf16.msra.mxu0 %v311
  %428 = vmatprep.subr.bf16.mxu0 0
  %429 = vmatpush1.bf16.msra.mxu0 %v312
  %430 = vmatprep.subr.bf16.mxu0 0
  %431 = vmatpush1.bf16.msra.mxu0 %v313
  %432 = vmatprep.subr.bf16.mxu0 0
  %433 = vmatpush1.bf16.msra.mxu0 %v314
  %434 = vmatprep.subr.bf16.mxu0 0
  %435 = vmatpush1.bf16.msra.mxu0 %v315
  %436 = vmatprep.subr.bf16.mxu0 0
  %437 = vmatpush1.bf16.msra.mxu0 %v316
  %438 = vmatprep.subr.bf16.mxu0 0
  %439 = vmatpush1.bf16.msra.mxu0 %v317
  %440 = vmatprep.subr.bf16.mxu0 0
  %441 = vmatpush1.bf16.msra.mxu0 %v318
  %442 = vmatprep.subr.bf16.mxu0 0
  %443 = vmatpush1.bf16.msra.mxu0 %v319
  %444 = vmatprep.subr.bf16.mxu0 0
  %445 = vmatpush1.bf16.msra.mxu0 %v320
  %446 = vmatprep.subr.bf16.mxu0 0
  %447 = vmatpush1.bf16.msra.mxu0 %v321
  %448 = vmatprep.subr.bf16.mxu0 0
  %449 = vmatpush1.bf16.msra.mxu0 %v322
  %450 = vmatprep.subr.bf16.mxu0 0
  %451 = vmatpush1.bf16.msra.mxu0 %v323
  %452 = vmatprep.mubr.bf16.mxu0 %v133
  %453 = vmatmul.mubr.bf16.gmra.mrb[0].mxu0 %v132
  %v454 = vpop.f32.mrb[0].mxu0
  %v455 = vadd.f32 %v406, %v454
  %v456 = vpop.f32.mrb[0].mxu0
  %v457 = vpop.f32.mrb[0].mxu0
  %v458 = vadd.f32 %v409, %v457
  %v459 = vpop.f32.mrb[0].mxu0
  %460 = vmatprep.mubr.bf16.mxu0 %v138
  %461 = vmatmul.mubr.bf16.gmra.mrb[0].mxu0 %v137
  %v462 = vpop.f32.mrb[0].mxu0
  %v463 = vadd.f32 %v414, %v462
  %v464 = vpop.f32.mrb[0].mxu0
  %v465 = vpop.f32.mrb[0].mxu0
  %v466 = vadd.f32 %v417, %v465
  %v467 = vpop.f32.mrb[0].mxu0
  %468 = vdwg.mxu0
  %469 = vmatprep.subr.bf16.mxu0 0
  %470 = vmatpush1.bf16.msra.mxu0 %v324
  %471 = vmatprep.subr.bf16.mxu0 0
  %472 = vmatpush1.bf16.msra.mxu0 %v325
  %473 = vmatprep.subr.bf16.mxu0 0
  %474 = vmatpush1.bf16.msra.mxu0 %v326
  %475 = vmatprep.subr.bf16.mxu0 0
  %476 = vmatpush1.bf16.msra.mxu0 %v327
  %477 = vmatprep.subr.bf16.mxu0 0
  %478 = vmatpush1.bf16.msra.mxu0 0
  %479 = vmatprep.subr.bf16.mxu0 0
  %480 = vmatpush1.bf16.msra.mxu0 0
  %481 = vmatprep.subr.bf16.mxu0 0
  %482 = vmatpush1.bf16.msra.mxu0 0
  %483 = vmatprep.subr.bf16.mxu0 0
  %484 = vmatpush1.bf16.msra.mxu0 0
  %485 = vmatprep.subr.bf16.mxu0 0
  %486 = vmatpush1.bf16.msra.mxu0 0
  %487 = vmatprep.subr.bf16.mxu0 0
  %488 = vmatpush1.bf16.msra.mxu0 0
  %489 = vmatprep.subr.bf16.mxu0 0
  %490 = vmatpush1.bf16.msra.mxu0 0
  %491 = vmatprep.subr.bf16.mxu0 0
  %492 = vmatpush1.bf16.msra.mxu0 0
  %493 = vmatprep.subr.bf16.mxu0 0
  %494 = vmatpush1.bf16.msra.mxu0 0
  %495 = vmatprep.subr.bf16.mxu0 0
  %496 = vmatpush1.bf16.msra.mxu0 0
  %497 = vmatprep.subr.bf16.mxu0 0
  %498 = vmatpush1.bf16.msra.mxu0 0
  %499 = vmatprep.subr.bf16.mxu0 0
  %500 = vmatpush1.bf16.msra.mxu0 0
  %501 = vmatprep.mubr.bf16.mxu0 0
  %502 = vmatmul.mubr.bf16.gmra.mrb[0].mxu0 %v366
  %v503 = vpop.f32.mrb[0].mxu0
  %v504 = vadd.f32 %v455, %v503
  %v505 = vpop.f32.mrb[0].mxu0
  %v506 = vpop.f32.mrb[0].mxu0
  %v507 = vadd.f32 %v458, %v506
  %v508 = vpop.f32.mrb[0].mxu0
  %509 = vmatprep.mubr.bf16.mxu0 0
  %510 = vmatmul.mubr.bf16.gmra.mrb[0].mxu0 %v369
  %v511 = vpop.f32.mrb[0].mxu0
  %v512 = vadd.f32 %v463, %v511
  %v513 = vpop.f32.mrb[0].mxu0
  %v514 = vpop.f32.mrb[0].mxu0
  %v515 = vadd.f32 %v466, %v514
  %v516 = vpop.f32.mrb[0].mxu0
  %517 = vdwg.mxu0
  %v518 = vadd.f32 %v504, %v507
  %v519 = vadd.f32 %v518, %v512
  %v520 = vadd.f32 %v519, %v515
  %v521 = vrot.slane %v520, 4
  %v522 = vadd.f32 %v520, %v521
  %v523 = vrot.slane %v522, 2
  %v524 = vadd.f32 %v522, %v523
  %v525 = vrot.slane %v524, 1
  %v526 = vadd.f32 %v524, %v525
  %527 = vst [vmem:[%s3] sm:$0x1] %v526
  %v528 = vmul.f32 %v504, %v504
  %v529 = vmul.f32 %v507, %v507
  %v530 = vmul.f32 %v512, %v512
  %v531 = vmul.f32 %v515, %v515
  %v532 = vadd.f32 %v528, %v529
  %v533 = vadd.f32 %v532, %v530
  %v534 = vadd.f32 %v533, %v531
  %v535 = vrot.slane %v534, 4
  %v536 = vadd.f32 %v534, %v535
  %v537 = vrot.slane %v536, 2
  %v538 = vadd.f32 %v536, %v537
  %v539 = vrot.slane %v538, 1
  %v540 = vadd.f32 %v538, %v539
  %541 = vst [vmem:[%s3 + $0x1] sm:$0x1] %v540
  %v542 = vpack.c.bf16 %v507, %v504
  %v543 = vpack.c.bf16 %v515, %v512
  %v546 = vunpack.c.l.b16 %v542
  %v547 = vunpack.c.h.b16 %v542
  %v548 = vunpack.c.l.b16 %v543
  %v549 = vunpack.c.h.b16 %v543
  %v550 = vpack.c.b16 %v546, %v546
  %v551 = vpack.c.b16 %v547, %v547
  %v552 = vpack.c.b16 %v548, %v548
  %v553 = vpack.c.b16 %v549, %v549
  %558 = vst [vmem:[%s2] sm:$0xf] %v550
  %559 = vst [vmem:[%s2 + $0x4] sm:$0xf] %v551
  %560 = vst [vmem:[%s2 + $0x8] sm:$0xf] %v552
  %561 = vst [vmem:[%s2 + $0xc] sm:$0xf] %v553
  // Predicated region
  $region10: #{resnet_forward.26} parent=0 // pred_check
    _
  $region11: #{resnet_forward.26} parent=0 // pred_check_branch
    %563 = sbr.rel (0) target = $region13
  $region12: #{resnet_forward.26} parent=0 // pred_region
    _
  $region13: #{resnet_forward.26} parent=0 // pred_fallthru
    _
  // Predicated region
  $region14: #{resnet_forward.26} parent=0 // pred_check
    _
  $region15: #{resnet_forward.26} parent=0 // pred_check_branch
    %565 = sbr.rel (0) target = $region17
  $region16: #{resnet_forward.26} parent=0 // pred_region
    _
  $region17: #{resnet_forward.26} parent=0 // pred_fallthru
    _
  // Predicated region
  $region18: #{resnet_forward.26} parent=0 // pred_check
    _
  $region19: #{resnet_forward.26} parent=0 // pred_check_branch
    %567 = sbr.rel (0) target = $region21
  $region20: #{resnet_forward.26} parent=0 // pred_region
    _
  $region21: #{resnet_forward.26} parent=0 // pred_fallthru
    _
  // Predicated region
  $region22: #{resnet_forward.26} parent=0 // pred_check
    _
  $region23: #{resnet_forward.26} parent=0 // pred_check_branch
    %569 = sbr.rel (0) target = $region25
  $region24: #{resnet_forward.26} parent=0 // pred_region
    _
  $region25: #{resnet_forward.26} parent=0 // pred_fallthru
    _

// kernel: resnet_forward.28
$region0: #{resnet_forward.28}
  #allocation0 [shape = 'u32[]', space=smem, size = 0x4, offset = 0x4, fixed_abs, tag = 'smem constant byte address 0x4 - core index']
  #allocation1 [shape = 'u32[144,128]{1,0:T(1,128)}', space=vmem, size = 0x12000, scoped, tag = 'internal scratch']
  %s0 = inlined_call_operand.vmem [shape: bf16[32,64], index: 0, kind: input, shape index: {}]
  %s1 = inlined_call_operand.vmem [shape: bf16[64,128], index: 1, kind: input, shape index: {}]
  %s2 = inlined_call_operand.vmem [shape: bf16[32,128], index: 2, kind: output, shape index: {0}]
  %s3 = inlined_call_operand.vmem [shape: f32[1,2,128], index: 3, kind: output, shape index: {1}]
  %4 = xla_tuple %s2, %s3
  %s5 = sld [smem:[#allocation0]]
  $region26: #{resnet_forward.28} parent=0
    _
  %s7 = ssub.s32 1, %s5
  %s8 = scalar_select 0, %s7, %s5
  // Predicated region
  $region2: #{resnet_forward.28} parent=0 // pred_check
    _
  $region3: #{resnet_forward.28} parent=0 // pred_check_branch
    %10 = sbr.rel (0) target = $region5
  $region4: #{resnet_forward.28} parent=0 // pred_region
    _
  $region5: #{resnet_forward.28} parent=0 // pred_fallthru
    _
  // Predicated region
  $region6: #{resnet_forward.28} parent=0 // pred_check
    _
  $region7: #{resnet_forward.28} parent=0 // pred_check_branch
    %12 = sbr.rel (0) target = $region9
  $region8: #{resnet_forward.28} parent=0 // pred_region
    _
  $region9: #{resnet_forward.28} parent=0 // pred_fallthru
    _
  %v14 = vld [vmem:[%s0] sm:$0xf]
  %v15 = vld [vmem:[%s0 + $0x4] sm:$0xf]
  %v16 = vld [vmem:[%s0 + $0x8] sm:$0xf]
  %v17 = vld [vmem:[%s0 + $0xc] sm:$0xf]
  %v18 = vld [vmem:[%s1] sm:$0xf]
  %v19 = vld [vmem:[%s1 + $0x4] sm:$0xf]
  %v20 = vld [vmem:[%s1 + $0x8] sm:$0xf]
  %v21 = vld [vmem:[%s1 + $0xc] sm:$0xf]
  %v22 = vld [vmem:[%s1 + $0x10] sm:$0xf]
  %v23 = vld [vmem:[%s1 + $0x14] sm:$0xf]
  %v24 = vld [vmem:[%s1 + $0x18] sm:$0xf]
  %v25 = vld [vmem:[%s1 + $0x1c] sm:$0xf]
  %v30 = vunpack.c.l.b16 %v14
  %v31 = vunpack.c.l.b16 %v15
  %v32 = vunpack.c.l.b16 %v16
  %v33 = vunpack.c.l.b16 %v17
  %v34 = vpack.c.b16 %v31, %v30
  %v35 = vpack.c.b16 %v33, %v32
  %v44 = vunpack.c.l.b16 %v18
  %v45 = vunpack.c.l.b16 %v19
  %v46 = vunpack.c.l.b16 %v20
  %v47 = vunpack.c.l.b16 %v21
  %v48 = vunpack.c.l.b16 %v22
  %v49 = vunpack.c.l.b16 %v23
  %v50 = vunpack.c.l.b16 %v24
  %v51 = vunpack.c.l.b16 %v25
  %v52 = vpack.c.b16 %v45, %v44
  %v53 = vpack.c.b16 %v47, %v46
  %v54 = vpack.c.b16 %v49, %v48
  %v55 = vpack.c.b16 %v51, %v50
  %vm60 = vcmask 523264
  %v62 = vsel %vm60, %v34, 0
  %v65 = vsel %vm60, %v35, 0
  %67 = vmatprep.subr.bf16.mxu0 0
  %68 = vmatpush1.bf16.msra.mxu0 %v52
  %69 = vmatprep.subr.bf16.mxu0 0
  %70 = vmatpush1.bf16.msra.mxu0 %v53
  %71 = vmatprep.subr.bf16.mxu0 0
  %72 = vmatpush1.bf16.msra.mxu0 %v54
  %73 = vmatprep.subr.bf16.mxu0 0
  %74 = vmatpush1.bf16.msra.mxu0 %v55
  %75 = vmatprep.subr.bf16.mxu0 0
  %76 = vmatpush1.bf16.msra.mxu0 0
  %77 = vmatprep.subr.bf16.mxu0 0
  %78 = vmatpush1.bf16.msra.mxu0 0
  %79 = vmatprep.subr.bf16.mxu0 0
  %80 = vmatpush1.bf16.msra.mxu0 0
  %81 = vmatprep.subr.bf16.mxu0 0
  %82 = vmatpush1.bf16.msra.mxu0 0
  %83 = vmatprep.subr.bf16.mxu0 0
  %84 = vmatpush1.bf16.msra.mxu0 0
  %85 = vmatprep.subr.bf16.mxu0 0
  %86 = vmatpush1.bf16.msra.mxu0 0
  %87 = vmatprep.subr.bf16.mxu0 0
  %88 = vmatpush1.bf16.msra.mxu0 0
  %89 = vmatprep.subr.bf16.mxu0 0
  %90 = vmatpush1.bf16.msra.mxu0 0
  %91 = vmatprep.subr.bf16.mxu0 0
  %92 = vmatpush1.bf16.msra.mxu0 0
  %93 = vmatprep.subr.bf16.mxu0 0
  %94 = vmatpush1.bf16.msra.mxu0 0
  %95 = vmatprep.subr.bf16.mxu0 0
  %96 = vmatpush1.bf16.msra.mxu0 0
  %97 = vmatprep.subr.bf16.mxu0 0
  %98 = vmatpush1.bf16.msra.mxu0 0
  %99 = vmatprep.mubr.bf16.mxu0 0
  %100 = vmatmul.mubr.bf16.gmra.mrb[0].mxu0 %v62
  %v101 = vpop.f32.mrb[0].mxu0
  %v102 = vadd.f32 0.0, %v101
  %v103 = vpop.f32.mrb[0].mxu0
  %v104 = vpop.f32.mrb[0].mxu0
  %v105 = vadd.f32 0.0, %v104
  %v106 = vpop.f32.mrb[0].mxu0
  %107 = vmatprep.mubr.bf16.mxu0 0
  %108 = vmatmul.mubr.bf16.gmra.mrb[0].mxu0 %v65
  %v109 = vpop.f32.mrb[0].mxu0
  %v110 = vadd.f32 0.0, %v109
  %v111 = vpop.f32.mrb[0].mxu0
  %v112 = vpop.f32.mrb[0].mxu0
  %v113 = vadd.f32 0.0, %v112
  %v114 = vpop.f32.mrb[0].mxu0
  %115 = vdwg.mxu0
  %v116 = vadd.f32 %v102, %v105
  %v117 = vadd.f32 %v116, %v110
  %v118 = vadd.f32 %v117, %v113
  %v119 = vrot.slane %v118, 4
  %v120 = vadd.f32 %v118, %v119
  %v121 = vrot.slane %v120, 2
  %v122 = vadd.f32 %v120, %v121
  %v123 = vrot.slane %v122, 1
  %v124 = vadd.f32 %v122, %v123
  %125 = vst [vmem:[%s3] sm:$0x1] %v124
  %v126 = vmul.f32 %v102, %v102
  %v127 = vmul.f32 %v105, %v105
  %v128 = vmul.f32 %v110, %v110
  %v129 = vmul.f32 %v113, %v113
  %v130 = vadd.f32 %v126, %v127
  %v131 = vadd.f32 %v130, %v128
  %v132 = vadd.f32 %v131, %v129
  %v133 = vrot.slane %v132, 4
  %v134 = vadd.f32 %v132, %v133
  %v135 = vrot.slane %v134, 2
  %v136 = vadd.f32 %v134, %v135
  %v137 = vrot.slane %v136, 1
  %v138 = vadd.f32 %v136, %v137
  %139 = vst [vmem:[%s3 + $0x1] sm:$0x1] %v138
  %v140 = vpack.c.bf16 %v105, %v102
  %v141 = vpack.c.bf16 %v113, %v110
  %v144 = vunpack.c.l.b16 %v140
  %v145 = vunpack.c.h.b16 %v140
  %v146 = vunpack.c.l.b16 %v141
  %v147 = vunpack.c.h.b16 %v141
  %v148 = vpack.c.b16 %v144, %v144
  %v149 = vpack.c.b16 %v145, %v145
  %v150 = vpack.c.b16 %v146, %v146
  %v151 = vpack.c.b16 %v147, %v147
  %156 = vst [vmem:[%s2] sm:$0xf] %v148
  %157 = vst [vmem:[%s2 + $0x4] sm:$0xf] %v149
  %158 = vst [vmem:[%s2 + $0x8] sm:$0xf] %v150
  %159 = vst [vmem:[%s2 + $0xc] sm:$0xf] %v151
  // Predicated region
  $region10: #{resnet_forward.28} parent=0 // pred_check
    _
  $region11: #{resnet_forward.28} parent=0 // pred_check_branch
    %161 = sbr.rel (0) target = $region13
  $region12: #{resnet_forward.28} parent=0 // pred_region
    _
  $region13: #{resnet_forward.28} parent=0 // pred_fallthru
    _
  // Predicated region
  $region14: #{resnet_forward.28} parent=0 // pred_check
    _
  $region15: #{resnet_forward.28} parent=0 // pred_check_branch
    %163 = sbr.rel (0) target = $region17
  $region16: #{resnet_forward.28} parent=0 // pred_region
    _
  $region17: #{resnet_forward.28} parent=0 // pred_fallthru
    _
  // Predicated region
  $region18: #{resnet_forward.28} parent=0 // pred_check
    _
  $region19: #{resnet_forward.28} parent=0 // pred_check_branch
    %165 = sbr.rel (0) target = $region21
  $region20: #{resnet_forward.28} parent=0 // pred_region
    _
  $region21: #{resnet_forward.28} parent=0 // pred_fallthru
    _
  // Predicated region
  $region22: #{resnet_forward.28} parent=0 // pred_check
    _
  $region23: #{resnet_forward.28} parent=0 // pred_check_branch
    %167 = sbr.rel (0) target = $region25
  $region24: #{resnet_forward.28} parent=0 // pred_region
    _
  $region25: #{resnet_forward.28} parent=0 // pred_fallthru
    _

// kernel: resnet_forward.29
$region0: #{resnet_forward.29}
  #allocation0 [shape = 'u32[]', space=smem, size = 0x4, offset = 0x4, fixed_abs, tag = 'smem constant byte address 0x4 - core index']
  #allocation1 [shape = 'u32[144,128]{1,0:T(1,128)}', space=vmem, size = 0x12000, scoped, tag = 'internal scratch']
  %s0 = inlined_call_operand.vmem [shape: bf16[32,128], index: 0, kind: input, shape index: {}]
  %s1 = inlined_call_operand.vmem [shape: f32[1,128], index: 1, kind: input, shape index: {}]
  %s2 = inlined_call_operand.vmem [shape: f32[1,128], index: 2, kind: input, shape index: {}]
  %s3 = inlined_call_operand.vmem [shape: bf16[32,128], index: 3, kind: input, shape index: {}]
  %s4 = inlined_call_operand.vmem [shape: f32[1,128], index: 4, kind: input, shape index: {}]
  %s5 = inlined_call_operand.vmem [shape: f32[1,128], index: 5, kind: input, shape index: {}]
  %s6 = inlined_call_operand.vmem [shape: bf16[32,128], index: 6, kind: output, shape index: {}]
  %s7 = sld [smem:[#allocation0]]
  $region34: #{resnet_forward.29} parent=0
    _
  %s9 = ssub.s32 1, %s7
  %s10 = scalar_select 0, %s9, %s7
  // Predicated region
  $region2: #{resnet_forward.29} parent=0 // pred_check
    _
  $region3: #{resnet_forward.29} parent=0 // pred_check_branch
    %12 = sbr.rel (0) target = $region5
  $region4: #{resnet_forward.29} parent=0 // pred_region
    _
  $region5: #{resnet_forward.29} parent=0 // pred_fallthru
    _
  // Predicated region
  $region6: #{resnet_forward.29} parent=0 // pred_check
    _
  $region7: #{resnet_forward.29} parent=0 // pred_check_branch
    %14 = sbr.rel (0) target = $region9
  $region8: #{resnet_forward.29} parent=0 // pred_region
    _
  $region9: #{resnet_forward.29} parent=0 // pred_fallthru
    _
  // Predicated region
  $region10: #{resnet_forward.29} parent=0 // pred_check
    _
  $region11: #{resnet_forward.29} parent=0 // pred_check_branch
    %16 = sbr.rel (0) target = $region13
  $region12: #{resnet_forward.29} parent=0 // pred_region
    _
  $region13: #{resnet_forward.29} parent=0 // pred_fallthru
    _
  // Predicated region
  $region14: #{resnet_forward.29} parent=0 // pred_check
    _
  $region15: #{resnet_forward.29} parent=0 // pred_check_branch
    %18 = sbr.rel (0) target = $region17
  $region16: #{resnet_forward.29} parent=0 // pred_region
    _
  $region17: #{resnet_forward.29} parent=0 // pred_fallthru
    _
  // Predicated region
  $region18: #{resnet_forward.29} parent=0 // pred_check
    _
  $region19: #{resnet_forward.29} parent=0 // pred_check_branch
    %20 = sbr.rel (0) target = $region21
  $region20: #{resnet_forward.29} parent=0 // pred_region
    _
  $region21: #{resnet_forward.29} parent=0 // pred_fallthru
    _
  // Predicated region
  $region22: #{resnet_forward.29} parent=0 // pred_check
    _
  $region23: #{resnet_forward.29} parent=0 // pred_check_branch
    %22 = sbr.rel (0) target = $region25
  $region24: #{resnet_forward.29} parent=0 // pred_region
    _
  $region25: #{resnet_forward.29} parent=0 // pred_fallthru
    _
  %v23 = vld [vmem:[%s0] sm:$0xf]
  %v24 = vld [vmem:[%s0 + $0x4] sm:$0xf]
  %v25 = vld [vmem:[%s0 + $0x8] sm:$0xf]
  %v26 = vld [vmem:[%s0 + $0xc] sm:$0xf]
  %v27 = vunpack.c.l.bf16 %v23
  %v28 = vunpack.c.l.bf16 %v24
  %v29 = vunpack.c.l.bf16 %v25
  %v30 = vunpack.c.l.bf16 %v26
  %v31 = vld [vmem:[%s1] sm:$0x1]
  %v33 = vlaneseq
  %v34 = vshrl.u32 %v33, 7
  %v35 = vsub.s32 0, %v34
  %v36 = vrot.slane %v31, %v35
  %v38 = vmul.f32 %v27, %v36
  %v39 = vmul.f32 %v28, %v36
  %v40 = vmul.f32 %v29, %v36
  %v41 = vmul.f32 %v30, %v36
  %v42 = vld [vmem:[%s2] sm:$0x1]
  %v44 = vlaneseq
  %v45 = vshrl.u32 %v44, 7
  %v46 = vsub.s32 0, %v45
  %v47 = vrot.slane %v42, %v46
  %v49 = vadd.f32 %v38, %v47
  %v50 = vadd.f32 %v39, %v47
  %v51 = vadd.f32 %v40, %v47
  %v52 = vadd.f32 %v41, %v47
  %v53 = vld [vmem:[%s3] sm:$0xf]
  %v54 = vld [vmem:[%s3 + $0x4] sm:$0xf]
  %v55 = vld [vmem:[%s3 + $0x8] sm:$0xf]
  %v56 = vld [vmem:[%s3 + $0xc] sm:$0xf]
  %v57 = vunpack.c.l.bf16 %v53
  %v58 = vunpack.c.l.bf16 %v54
  %v59 = vunpack.c.l.bf16 %v55
  %v60 = vunpack.c.l.bf16 %v56
  %v61 = vld [vmem:[%s4] sm:$0x1]
  %v63 = vlaneseq
  %v64 = vshrl.u32 %v63, 7
  %v65 = vsub.s32 0, %v64
  %v66 = vrot.slane %v61, %v65
  %v68 = vmul.f32 %v57, %v66
  %v69 = vmul.f32 %v58, %v66
  %v70 = vmul.f32 %v59, %v66
  %v71 = vmul.f32 %v60, %v66
  %v72 = vadd.f32 %v49, %v68
  %v73 = vadd.f32 %v50, %v69
  %v74 = vadd.f32 %v51, %v70
  %v75 = vadd.f32 %v52, %v71
  %v76 = vld [vmem:[%s5] sm:$0x1]
  %v78 = vlaneseq
  %v79 = vshrl.u32 %v78, 7
  %v80 = vsub.s32 0, %v79
  %v81 = vrot.slane %v76, %v80
  %v83 = vadd.f32 %v72, %v81
  %v84 = vadd.f32 %v73, %v81
  %v85 = vadd.f32 %v74, %v81
  %v86 = vadd.f32 %v75, %v81
  %v87 = vmax.f32 %v83, 0.0
  %v88 = vmax.f32 %v84, 0.0
  %v89 = vmax.f32 %v85, 0.0
  %v90 = vmax.f32 %v86, 0.0
  %v91 = vpack.c.bf16 %v88, %v87
  %v92 = vpack.c.bf16 %v90, %v89
  %v95 = vunpack.c.l.b16 %v91
  %v96 = vunpack.c.h.b16 %v91
  %v97 = vunpack.c.l.b16 %v92
  %v98 = vunpack.c.h.b16 %v92
  %v99 = vpack.c.b16 %v95, %v95
  %v100 = vpack.c.b16 %v96, %v96
  %v101 = vpack.c.b16 %v97, %v97
  %v102 = vpack.c.b16 %v98, %v98
  %107 = vst [vmem:[%s6] sm:$0xf] %v99
  %108 = vst [vmem:[%s6 + $0x4] sm:$0xf] %v100
  %109 = vst [vmem:[%s6 + $0x8] sm:$0xf] %v101
  %110 = vst [vmem:[%s6 + $0xc] sm:$0xf] %v102
  // Predicated region
  $region26: #{resnet_forward.29} parent=0 // pred_check
    _
  $region27: #{resnet_forward.29} parent=0 // pred_check_branch
    %112 = sbr.rel (0) target = $region29
  $region28: #{resnet_forward.29} parent=0 // pred_region
    _
  $region29: #{resnet_forward.29} parent=0 // pred_fallthru
    _
  // Predicated region
  $region30: #{resnet_forward.29} parent=0 // pred_check
    _
  $region31: #{resnet_forward.29} parent=0 // pred_check_branch
    %114 = sbr.rel (0) target = $region33
  $region32: #{resnet_forward.29} parent=0 // pred_region
    _
  $region33: #{resnet_forward.29} parent=0 // pred_fallthru
    _

// kernel: resnet_forward.33
$region0: #{resnet_forward.33}
  #allocation0 [shape = 'u32[]', space=smem, size = 0x4, offset = 0x4, fixed_abs, tag = 'smem constant byte address 0x4 - core index']
  #allocation1 [shape = 'u32[144,128]{1,0:T(1,128)}', space=vmem, size = 0x12000, scoped, tag = 'internal scratch']
  %s0 = inlined_call_operand.vmem [shape: bf16[2,16,128], index: 0, kind: input, shape index: {}]
  %s1 = inlined_call_operand.vmem [shape: bf16[128,128], index: 1, kind: input, shape index: {}]
  %s2 = inlined_call_operand.vmem [shape: f32[1,128], index: 2, kind: input, shape index: {}]
  %s3 = inlined_call_operand.hbm [shape: f32[2,128], index: 3, kind: output, shape index: {}]
  %s4 = sld [smem:[#allocation0]]
  $region22: #{resnet_forward.33} parent=0
    _
  %s6 = ssub.s32 1, %s4
  %s7 = scalar_select 0, %s6, %s4
  $region1: #{resnet_forward.33} parent=0
    #allocation2 [shape = 'u8[1024]{0}', space=vmem, size = 0x400, scoped, tag = 'output window, operand 0, single buffered']
    #allocation3 [shape = 's32[1]{0}', space=sflag, size = 0x4, scoped, tag = 'scoped memory for resnet_forward.33']
    %8 = vsyncpa [#allocation3], 0
    // Predicated region
    $region2: #{resnet_forward.33} parent=1 // pred_check
      _
    $region3: #{resnet_forward.33} parent=1 // pred_check_branch
      %10 = sbr.rel (0) target = $region5
    $region4: #{resnet_forward.33} parent=1 // pred_region
      _
    $region5: #{resnet_forward.33} parent=1 // pred_fallthru
      _
    // Predicated region
    $region6: #{resnet_forward.33} parent=1 // pred_check
      _
    $region7: #{resnet_forward.33} parent=1 // pred_check_branch
      %12 = sbr.rel (0) target = $region9
    $region8: #{resnet_forward.33} parent=1 // pred_region
      _
    $region9: #{resnet_forward.33} parent=1 // pred_fallthru
      _
    // Predicated region
    $region10: #{resnet_forward.33} parent=1 // pred_check
      _
    $region11: #{resnet_forward.33} parent=1 // pred_check_branch
      %14 = sbr.rel (0) target = $region13
    $region12: #{resnet_forward.33} parent=1 // pred_region
      _
    $region13: #{resnet_forward.33} parent=1 // pred_fallthru
      _
    %v16 = vld [vmem:[%s0] sm:$0xf]
    %v17 = vld [vmem:[%s0 + $0x4] sm:$0xf]
    %v18 = vld [vmem:[%s0 + $0x8] sm:$0xf]
    %v19 = vld [vmem:[%s0 + $0xc] sm:$0xf]
    %v20 = vunpack.c.l.bf16 %v16
    %v21 = vunpack.c.l.bf16 %v17
    %v22 = vunpack.c.l.bf16 %v18
    %v23 = vunpack.c.l.bf16 %v19
    %v24 = vadd.f32 %v20, %v21
    %v25 = vrot.slane %v24, 4
    %v26 = vadd.f32 %v24, %v25
    %v27 = vrot.slane %v26, 2
    %v28 = vadd.f32 %v26, %v27
    %v29 = vrot.slane %v28, 1
    %v30 = vadd.f32 %v28, %v29
    %v31 = vadd.f32 %v22, %v23
    %v32 = vrot.slane %v31, 4
    %v33 = vadd.f32 %v31, %v32
    %v34 = vrot.slane %v33, 2
    %v35 = vadd.f32 %v33, %v34
    %v36 = vrot.slane %v35, 1
    %v37 = vadd.f32 %v35, %v36
    %v38 = vrcp.pop 16.0
    %v39 = vmul.f32 %v30, %v38
    %v40 = vmul.f32 %v37, %v38
    %v41 = vpack.c.bf16 %v39, %v39
    %v42 = vpack.c.bf16 %v40, %v40
    %v43 = vld [vmem:[%s1] sm:$0xf]
    %v44 = vld [vmem:[%s1 + $0x4] sm:$0xf]
    %v45 = vld [vmem:[%s1 + $0x8] sm:$0xf]
    %v46 = vld [vmem:[%s1 + $0xc] sm:$0xf]
    %v47 = vld [vmem:[%s1 + $0x10] sm:$0xf]
    %v48 = vld [vmem:[%s1 + $0x14] sm:$0xf]
    %v49 = vld [vmem:[%s1 + $0x18] sm:$0xf]
    %v50 = vld [vmem:[%s1 + $0x1c] sm:$0xf]
    %v51 = vld [vmem:[%s1 + $0x20] sm:$0xf]
    %v52 = vld [vmem:[%s1 + $0x24] sm:$0xf]
    %v53 = vld [vmem:[%s1 + $0x28] sm:$0xf]
    %v54 = vld [vmem:[%s1 + $0x2c] sm:$0xf]
    %v55 = vld [vmem:[%s1 + $0x30] sm:$0xf]
    %v56 = vld [vmem:[%s1 + $0x34] sm:$0xf]
    %v57 = vld [vmem:[%s1 + $0x38] sm:$0xf]
    %v58 = vld [vmem:[%s1 + $0x3c] sm:$0xf]
    %v59 = vld [vmem:[%s2] sm:$0x1]
    %v61 = vlaneseq
    %v62 = vshrl.u32 %v61, 7
    %v63 = vsub.s32 0, %v62
    %v64 = vrot.slane %v59, %v63
    %v68 = vunpack.c.l.b16 %v41
    %v69 = vunpack.c.l.b16 %v42
    %vm70 = vcmask 1041409
    %v71 = vsel %vm70, %v69, %v68
    %v72 = vpack.c.b16 %v71, %v71
    %v90 = vunpack.c.l.b16 %v43
    %v91 = vunpack.c.l.b16 %v44
    %v92 = vunpack.c.l.b16 %v45
    %v93 = vunpack.c.l.b16 %v46
    %v94 = vunpack.c.l.b16 %v47
    %v95 = vunpack.c.l.b16 %v48
    %v96 = vunpack.c.l.b16 %v49
    %v97 = vunpack.c.l.b16 %v50
    %v98 = vunpack.c.l.b16 %v51
    %v99 = vunpack.c.l.b16 %v52
    %v100 = vunpack.c.l.b16 %v53
    %v101 = vunpack.c.l.b16 %v54
    %v102 = vunpack.c.l.b16 %v55
    %v103 = vunpack.c.l.b16 %v56
    %v104 = vunpack.c.l.b16 %v57
    %v105 = vunpack.c.l.b16 %v58
    %v106 = vpack.c.b16 %v91, %v90
    %v107 = vpack.c.b16 %v93, %v92
    %v108 = vpack.c.b16 %v95, %v94
    %v109 = vpack.c.b16 %v97, %v96
    %v110 = vpack.c.b16 %v99, %v98
    %v111 = vpack.c.b16 %v101, %v100
    %v112 = vpack.c.b16 %v103, %v102
    %v113 = vpack.c.b16 %v105, %v104
    %122 = vmatprep.subr.bf16.mxu0 0
    %123 = vmatpush1.bf16.msra.mxu0 %v106
    %124 = vmatprep.subr.bf16.mxu0 0
    %125 = vmatpush1.bf16.msra.mxu0 %v107
    %126 = vmatprep.subr.bf16.mxu0 0
    %127 = vmatpush1.bf16.msra.mxu0 %v108
    %128 = vmatprep.subr.bf16.mxu0 0
    %129 = vmatpush1.bf16.msra.mxu0 %v109
    %130 = vmatprep.subr.bf16.mxu0 0
    %131 = vmatpush1.bf16.msra.mxu0 %v110
    %132 = vmatprep.subr.bf16.mxu0 0
    %133 = vmatpush1.bf16.msra.mxu0 %v111
    %134 = vmatprep.subr.bf16.mxu0 0
    %135 = vmatpush1.bf16.msra.mxu0 %v112
    %136 = vmatprep.subr.bf16.mxu0 0
    %137 = vmatpush1.bf16.msra.mxu0 %v113
    %138 = vmatprep.subr.bf16.mxu0 0
    %139 = vmatpush1.bf16.msra.mxu0 0
    %140 = vmatprep.subr.bf16.mxu0 0
    %141 = vmatpush1.bf16.msra.mxu0 0
    %142 = vmatprep.subr.bf16.mxu0 0
    %143 = vmatpush1.bf16.msra.mxu0 0
    %144 = vmatprep.subr.bf16.mxu0 0
    %145 = vmatpush1.bf16.msra.mxu0 0
    %146 = vmatprep.subr.bf16.mxu0 0
    %147 = vmatpush1.bf16.msra.mxu0 0
    %148 = vmatprep.subr.bf16.mxu0 0
    %149 = vmatpush1.bf16.msra.mxu0 0
    %150 = vmatprep.subr.bf16.mxu0 0
    %151 = vmatpush1.bf16.msra.mxu0 0
    %152 = vmatprep.subr.bf16.mxu0 0
    %153 = vmatpush1.bf16.msra.mxu0 0
    %154 = vmatprep.mubr.bf16.mxu0 0
    %155 = vmatmul.mubr.bf16.gmra.mrb[0].mxu0 %v72
    %v156 = vpop.f32.mrb[0].mxu0
    %v157 = vadd.f32 %v64, %v156
    %v158 = vpop.f32.mrb[0].mxu0
    %v159 = vpop.f32.mrb[0].mxu0
    %v160 = vpop.f32.mrb[0].mxu0
    %161 = vdwg.mxu0
    %162 = vst [vmem:[#allocation2] sm:$0x3] %v157
    // Predicated region
    $region14: #{resnet_forward.33} parent=1 // pred_check
      _
    $region15: #{resnet_forward.33} parent=1 // pred_check_branch
      %164 = sbr.rel (0) target = $region17
    $region16: #{resnet_forward.33} parent=1 // pred_region
      %s166 = ssub.s32 32, 32
      %167 = vsyncadd [#allocation3], %s166
      %s169 = sshll.u32 [#allocation2], 4
      %s170 = int_to_ptr.vmem [resolvable:$true] %s169
      %172 = dma.vmem_to_hbm [thread:$0]  %s170, 32, %s3, [#allocation3]
    $region17: #{resnet_forward.33} parent=1 // pred_fallthru
      _
    // Predicated region
    $region18: #{resnet_forward.33} parent=1 // pred_check
      _
    $region19: #{resnet_forward.33} parent=1 // pred_check_branch
      %174 = sbr.rel (0) target = $region21
    $region20: #{resnet_forward.33} parent=1 // pred_region
      %175 = dma.done [#allocation3], 32
    $region21: #{resnet_forward.33} parent=1 // pred_fallthru
      _
    %176 = vsyncpa [#allocation3], 1

// kernel: resnet_forward.32
$region0: #{resnet_forward.32}
  #allocation0 [shape = 'u32[]', space=smem, size = 0x4, offset = 0x4, fixed_abs, tag = 'smem constant byte address 0x4 - core index']
  #allocation1 [shape = 'u32[144,128]{1,0:T(1,128)}', space=vmem, size = 0x12000, scoped, tag = 'internal scratch']
  %s0 = inlined_call_operand.vmem [shape: bf16[32,128], index: 0, kind: input, shape index: {}]
  %s1 = inlined_call_operand.vmem [shape: f32[1,128], index: 1, kind: input, shape index: {}]
  %s2 = inlined_call_operand.vmem [shape: f32[1,128], index: 2, kind: input, shape index: {}]
  %s3 = inlined_call_operand.vmem [shape: bf16[32,128], index: 3, kind: input, shape index: {}]
  %s4 = inlined_call_operand.vmem [shape: bf16[32,128], index: 4, kind: output, shape index: {}]
  %s5 = sld [smem:[#allocation0]]
  $region26: #{resnet_forward.32} parent=0
    _
  %s7 = ssub.s32 1, %s5
  %s8 = scalar_select 0, %s7, %s5
  // Predicated region
  $region2: #{resnet_forward.32} parent=0 // pred_check
    _
  $region3: #{resnet_forward.32} parent=0 // pred_check_branch
    %10 = sbr.rel (0) target = $region5
  $region4: #{resnet_forward.32} parent=0 // pred_region
    _
  $region5: #{resnet_forward.32} parent=0 // pred_fallthru
    _
  // Predicated region
  $region6: #{resnet_forward.32} parent=0 // pred_check
    _
  $region7: #{resnet_forward.32} parent=0 // pred_check_branch
    %12 = sbr.rel (0) target = $region9
  $region8: #{resnet_forward.32} parent=0 // pred_region
    _
  $region9: #{resnet_forward.32} parent=0 // pred_fallthru
    _
  // Predicated region
  $region10: #{resnet_forward.32} parent=0 // pred_check
    _
  $region11: #{resnet_forward.32} parent=0 // pred_check_branch
    %14 = sbr.rel (0) target = $region13
  $region12: #{resnet_forward.32} parent=0 // pred_region
    _
  $region13: #{resnet_forward.32} parent=0 // pred_fallthru
    _
  // Predicated region
  $region14: #{resnet_forward.32} parent=0 // pred_check
    _
  $region15: #{resnet_forward.32} parent=0 // pred_check_branch
    %16 = sbr.rel (0) target = $region17
  $region16: #{resnet_forward.32} parent=0 // pred_region
    _
  $region17: #{resnet_forward.32} parent=0 // pred_fallthru
    _
  %v17 = vld [vmem:[%s0] sm:$0xf]
  %v18 = vld [vmem:[%s0 + $0x4] sm:$0xf]
  %v19 = vld [vmem:[%s0 + $0x8] sm:$0xf]
  %v20 = vld [vmem:[%s0 + $0xc] sm:$0xf]
  %v21 = vunpack.c.l.bf16 %v17
  %v22 = vunpack.c.l.bf16 %v18
  %v23 = vunpack.c.l.bf16 %v19
  %v24 = vunpack.c.l.bf16 %v20
  %v25 = vld [vmem:[%s1] sm:$0x1]
  %v27 = vlaneseq
  %v28 = vshrl.u32 %v27, 7
  %v29 = vsub.s32 0, %v28
  %v30 = vrot.slane %v25, %v29
  %v32 = vmul.f32 %v21, %v30
  %v33 = vmul.f32 %v22, %v30
  %v34 = vmul.f32 %v23, %v30
  %v35 = vmul.f32 %v24, %v30
  %v36 = vld [vmem:[%s2] sm:$0x1]
  %v38 = vlaneseq
  %v39 = vshrl.u32 %v38, 7
  %v40 = vsub.s32 0, %v39
  %v41 = vrot.slane %v36, %v40
  %v43 = vadd.f32 %v32, %v41
  %v44 = vadd.f32 %v33, %v41
  %v45 = vadd.f32 %v34, %v41
  %v46 = vadd.f32 %v35, %v41
  %v47 = vld [vmem:[%s3] sm:$0xf]
  %v48 = vld [vmem:[%s3 + $0x4] sm:$0xf]
  %v49 = vld [vmem:[%s3 + $0x8] sm:$0xf]
  %v50 = vld [vmem:[%s3 + $0xc] sm:$0xf]
  %v51 = vunpack.c.l.bf16 %v47
  %v52 = vunpack.c.l.bf16 %v48
  %v53 = vunpack.c.l.bf16 %v49
  %v54 = vunpack.c.l.bf16 %v50
  %v55 = vadd.f32 %v43, %v51
  %v56 = vadd.f32 %v44, %v52
  %v57 = vadd.f32 %v45, %v53
  %v58 = vadd.f32 %v46, %v54
  %v59 = vmax.f32 %v55, 0.0
  %v60 = vmax.f32 %v56, 0.0
  %v61 = vmax.f32 %v57, 0.0
  %v62 = vmax.f32 %v58, 0.0
  %v63 = vpack.c.bf16 %v60, %v59
  %v64 = vpack.c.bf16 %v62, %v61
  %v67 = vunpack.c.l.b16 %v63
  %v68 = vunpack.c.h.b16 %v63
  %v69 = vunpack.c.l.b16 %v64
  %v70 = vunpack.c.h.b16 %v64
  %v71 = vpack.c.b16 %v67, %v67
  %v72 = vpack.c.b16 %v68, %v68
  %v73 = vpack.c.b16 %v69, %v69
  %v74 = vpack.c.b16 %v70, %v70
  %79 = vst [vmem:[%s4] sm:$0xf] %v71
  %80 = vst [vmem:[%s4 + $0x4] sm:$0xf] %v72
  %81 = vst [vmem:[%s4 + $0x8] sm:$0xf] %v73
  %82 = vst [vmem:[%s4 + $0xc] sm:$0xf] %v74
  // Predicated region
  $region18: #{resnet_forward.32} parent=0 // pred_check
    _
  $region19: #{resnet_forward.32} parent=0 // pred_check_branch
    %84 = sbr.rel (0) target = $region21
  $region20: #{resnet_forward.32} parent=0 // pred_region
    _
  $region21: #{resnet_forward.32} parent=0 // pred_fallthru
    _
  // Predicated region
  $region22: #{resnet_forward.32} parent=0 // pred_check
    _
  $region23: #{resnet_forward.32} parent=0 // pred_check_branch
    %86 = sbr.rel (0) target = $region25
  $region24: #{resnet_forward.32} parent=0 // pred_region
    _
  $region25: #{resnet_forward.32} parent=0 // pred_fallthru
    _

// kernel: resnet_forward.27
$region0: #{resnet_forward.27}
  #allocation0 [shape = 'u32[]', space=smem, size = 0x4, offset = 0x4, fixed_abs, tag = 'smem constant byte address 0x4 - core index']
  #allocation1 [shape = 'u32[144,128]{1,0:T(1,128)}', space=vmem, size = 0x12000, scoped, tag = 'internal scratch']
  #allocation2 [shape = 'bf16[4,4,128]{2,1,0:T(4,128)(2,1)}', space=vmem, size = 0x1000, scoped, tag = 'scratch operand']
  #allocation3 [shape = 'bf16[4,4,256]{2,1,0:T(4,128)(2,1)}', space=vmem, size = 0x2000, scoped, tag = 'scratch operand']
  %s0 = inlined_call_operand.vmem [shape: bf16[2,4,4,128], index: 0, kind: input, shape index: {}]
  %s1 = inlined_call_operand.vmem [shape: f32[1,128], index: 1, kind: input, shape index: {}]
  %s2 = inlined_call_operand.vmem [shape: f32[1,128], index: 2, kind: input, shape index: {}]
  %s3 = inlined_call_operand.vmem [shape: bf16[5,256,128], index: 3, kind: input, shape index: {}]
  %s4 = inlined_call_operand.vmem [shape: bf16[2,4,4,128], index: 4, kind: output, shape index: {0}]
  %s5 = inlined_call_operand.vmem [shape: f32[2,2,128], index: 5, kind: output, shape index: {1}]
  %6 = xla_tuple %s4, %s5
  %s7 = sld [smem:[#allocation0]]
  $region57: #{resnet_forward.27} parent=0
    _
  %s9 = ssub.s32 1, %s7
  %s10 = scalar_select 0, %s9, %s7
  loop: start=0, step=1, limit=4
  $region2: #{resnet_forward.27} parent=0 // loop_pre_header
    _
  $region3: #{resnet_forward.27} parent=0 // loop_header
    %s12 = sphi 0, %s16
    %p13 = scmp.ge.s32.totalorder %s12, 4
    %s22 = sphi 0, %s24
    %s25 = sphi 0, %s22
    %s26 = sphi 0, %s25
    %s42 = sphi 0, %s26
    %s46 = sphi 0, %s46
    %s48 = sphi 0, %s46
    %s49 = sphi 0, %s48
    %s63 = sphi 0, %s49
    %s67 = sphi 0, %s67
    %s69 = sphi 0, %s67
    %s70 = sphi 0, %s69
    %s84 = sphi 0, %s70
    %s88 = sphi 0, %s88
    %s90 = sphi 0, %s88
    %s91 = sphi 0, %s90
    %s105 = sphi 0, %s91
    %s111 = sphi 0, %s113
    %s114 = sphi 0, %s111
    %s115 = sphi 0, %s114
    %s131 = sphi 0, %s115
    %s137 = sphi 0, %s139
    %s140 = sphi 0, %s137
    %s141 = sphi 0, %s140
    %s157 = sphi 0, %s141
  $region4: #{resnet_forward.27} parent=0 // loop_header_branch
    %15 = sbr.rel (%p13) target = $region8
  $region5: #{resnet_forward.27} parent=0 // loop_body
    %s17 = ssub.s32 %s12, 1
    %s18 = ssub.s32 %s12, 2
    %s19 = sadd.s32 %s12, 1
    %s20 = ssub.s32 %s12, %s19
    %p21 = scmp.eq.s32.totalorder %s20, 0
    %s23 = sadd.s32 %s22, 1
    %s24 = scalar_select %p21, %s22, %s23
    %p27 = pneg %p21
    %p28 = scmp.eq.s32.totalorder %s12, 1
    %p29 = por %p27, %p28
    %p30 = scmp.ne.s32.totalorder %s22, %s25
    %p31 = scmp.eq.s32.totalorder %s12, 0
    %p32 = por %p30, %p31
    %p33 = scmp.ne.s32.totalorder %s22, %s25
    %p34 = scmp.eq.s32.totalorder %s17, 1
    %p35 = por %p33, %p34
    %p36 = scmp.ne.s32.totalorder %s25, %s26
    %p37 = scmp.eq.s32.totalorder %s17, 0
    %p38 = por %p36, %p37
    %p39 = scmp.ne.s32.totalorder %s25, %s26
    %p40 = scmp.eq.s32.totalorder %s18, 1
    %p41 = por %p39, %p40
    %p43 = scmp.ne.s32.totalorder %s26, %s42
    %p44 = scmp.eq.s32.totalorder %s18, 0
    %p45 = por %p43, %p44
    %s47 = sadd.s32 %s46, 1
    %p50 = scmp.eq.s32.totalorder %s12, 1
    %p51 = scmp.ne.s32.totalorder %s46, %s48
    %p52 = scmp.eq.s32.totalorder %s12, 0
    %p53 = por %p51, %p52
    %p54 = scmp.ne.s32.totalorder %s46, %s48
    %p55 = scmp.eq.s32.totalorder %s17, 1
    %p56 = por %p54, %p55
    %p57 = scmp.ne.s32.totalorder %s48, %s49
    %p58 = scmp.eq.s32.totalorder %s17, 0
    %p59 = por %p57, %p58
    %p60 = scmp.ne.s32.totalorder %s48, %s49
    %p61 = scmp.eq.s32.totalorder %s18, 1
    %p62 = por %p60, %p61
    %p64 = scmp.ne.s32.totalorder %s49, %s63
    %p65 = scmp.eq.s32.totalorder %s18, 0
    %p66 = por %p64, %p65
    %s68 = sadd.s32 %s67, 1
    %p71 = scmp.eq.s32.totalorder %s12, 1
    %p72 = scmp.ne.s32.totalorder %s67, %s69
    %p73 = scmp.eq.s32.totalorder %s12, 0
    %p74 = por %p72, %p73
    %p75 = scmp.ne.s32.totalorder %s67, %s69
    %p76 = scmp.eq.s32.totalorder %s17, 1
    %p77 = por %p75, %p76
    %p78 = scmp.ne.s32.totalorder %s69, %s70
    %p79 = scmp.eq.s32.totalorder %s17, 0
    %p80 = por %p78, %p79
    %p81 = scmp.ne.s32.totalorder %s69, %s70
    %p82 = scmp.eq.s32.totalorder %s18, 1
    %p83 = por %p81, %p82
    %p85 = scmp.ne.s32.totalorder %s70, %s84
    %p86 = scmp.eq.s32.totalorder %s18, 0
    %p87 = por %p85, %p86
    %s89 = sadd.s32 %s88, 1
    %p92 = scmp.eq.s32.totalorder %s12, 1
    %p93 = scmp.ne.s32.totalorder %s88, %s90
    %p94 = scmp.eq.s32.totalorder %s12, 0
    %p95 = por %p93, %p94
    %p96 = scmp.ne.s32.totalorder %s88, %s90
    %p97 = scmp.eq.s32.totalorder %s17, 1
    %p98 = por %p96, %p97
    %p99 = scmp.ne.s32.totalorder %s90, %s91
    %p100 = scmp.eq.s32.totalorder %s17, 0
    %p101 = por %p99, %p100
    %p102 = scmp.ne.s32.totalorder %s90, %s91
    %p103 = scmp.eq.s32.totalorder %s18, 1
    %p104 = por %p102, %p103
    %p106 = scmp.ne.s32.totalorder %s91, %s105
    %p107 = scmp.eq.s32.totalorder %s18, 0
    %p108 = por %p106, %p107
    %s109 = ssub.s32 %s12, %s19
    %p110 = scmp.eq.s32.totalorder %s109, 0
    %s112 = sadd.s32 %s111, 1
    %s113 = scalar_select %p110, %s111, %s112
    %p116 = pneg %p110
    %p117 = scmp.eq.s32.totalorder %s12, 1
    %p118 = por %p116, %p117
    %p119 = scmp.ne.s32.totalorder %s111, %s114
    %p120 = scmp.eq.s32.totalorder %s12, 0
    %p121 = por %p119, %p120
    %p122 = scmp.ne.s32.totalorder %s111, %s114
    %p123 = scmp.eq.s32.totalorder %s17, 1
    %p124 = por %p122, %p123
    %p125 = scmp.ne.s32.totalorder %s114, %s115
    %p126 = scmp.eq.s32.totalorder %s17, 0
    %p127 = por %p125, %p126
    %p128 = scmp.ne.s32.totalorder %s114, %s115
    %p129 = scmp.eq.s32.totalorder %s18, 1
    %p130 = por %p128, %p129
    %p132 = scmp.ne.s32.totalorder %s115, %s131
    %p133 = scmp.eq.s32.totalorder %s18, 0
    %p134 = por %p132, %p133
    %s135 = ssub.s32 %s12, %s19
    %p136 = scmp.eq.s32.totalorder %s135, 0
    %s138 = sadd.s32 %s137, 1
    %s139 = scalar_select %p136, %s137, %s138
    %p142 = pneg %p136
    %p143 = scmp.eq.s32.totalorder %s12, 1
    %p144 = por %p142, %p143
    %p145 = scmp.ne.s32.totalorder %s137, %s140
    %p146 = scmp.eq.s32.totalorder %s12, 0
    %p147 = por %p145, %p146
    %p148 = scmp.ne.s32.totalorder %s137, %s140
    %p149 = scmp.eq.s32.totalorder %s17, 1
    %p150 = por %p148, %p149
    %p151 = scmp.ne.s32.totalorder %s140, %s141
    %p152 = scmp.eq.s32.totalorder %s17, 0
    %p153 = por %p151, %p152
    %p154 = scmp.ne.s32.totalorder %s140, %s141
    %p155 = scmp.eq.s32.totalorder %s18, 1
    %p156 = por %p154, %p155
    %p158 = scmp.ne.s32.totalorder %s141, %s157
    %p159 = scmp.eq.s32.totalorder %s18, 0
    %p160 = por %p158, %p159
    %p161 = scmp.le.s32.totalorder 1, %s12
    %p162 = scmp.lt.s32.totalorder %s12, 3
    %p163 = pnand %p161, %p162
    %p164 = pneg %p163
    // Predicated region
    $region9: #{resnet_forward.27} parent=5 // pred_check
      _
    $region10: #{resnet_forward.27} parent=5 // pred_check_branch
      %166 = sbr.rel (%p163) target = $region12
    $region11: #{resnet_forward.27} parent=5 // pred_region
      %s167 = ssub.s32 %s12, 1
      // Predicated region
      $region13: #{resnet_forward.27} parent=11 // pred_check
        %p168 = pneg %p59
      $region14: #{resnet_forward.27} parent=11 // pred_check_branch
        %170 = sbr.rel (%p168) target = $region16
      $region15: #{resnet_forward.27} parent=11 // pred_region
        _
      $region16: #{resnet_forward.27} parent=11 // pred_fallthru
        _
      // Predicated region
      $region17: #{resnet_forward.27} parent=11 // pred_check
        %p171 = pneg %p80
      $region18: #{resnet_forward.27} parent=11 // pred_check_branch
        %173 = sbr.rel (%p171) target = $region20
      $region19: #{resnet_forward.27} parent=11 // pred_region
        _
      $region20: #{resnet_forward.27} parent=11 // pred_fallthru
        _
      // Predicated region
      $region21: #{resnet_forward.27} parent=11 // pred_check
        %p174 = pneg %p101
      $region22: #{resnet_forward.27} parent=11 // pred_check_branch
        %176 = sbr.rel (%p174) target = $region24
      $region23: #{resnet_forward.27} parent=11 // pred_region
        _
      $region24: #{resnet_forward.27} parent=11 // pred_fallthru
        _
    $region12: #{resnet_forward.27} parent=5 // pred_fallthru
      _
    %p177 = scmp.lt.s32.totalorder %s12, 2
    // Predicated region
    $region25: #{resnet_forward.27} parent=5 // pred_check
      %p178 = pneg %p177
    $region26: #{resnet_forward.27} parent=5 // pred_check_branch
      %180 = sbr.rel (%p178) target = $region28
    $region27: #{resnet_forward.27} parent=5 // pred_region
      // Predicated region
      $region29: #{resnet_forward.27} parent=27 // pred_check
        %p181 = pneg %p32
      $region30: #{resnet_forward.27} parent=27 // pred_check_branch
        %183 = sbr.rel (%p181) target = $region32
      $region31: #{resnet_forward.27} parent=27 // pred_region
        %p184 = scmp.lt.s32.totalorder %s12, 1
        %s185 = scalar_select %p184, %s12, 1
        %s186 = smul.addr %s185, 4
        %s187 = smul.addr %s186, 2
        %s188 = scalar_lea.vmem %s0, %s187
      $region32: #{resnet_forward.27} parent=27 // pred_fallthru
        _
    $region28: #{resnet_forward.27} parent=5 // pred_fallthru
      _
    %p189 = scmp.le.s32.totalorder 1, %s12
    %p190 = scmp.lt.s32.totalorder %s12, 3
    %p191 = pnand %p189, %p190
    %p192 = pneg %p191
    // Predicated region
    $region33: #{resnet_forward.27} parent=5 // pred_check
      _
    $region34: #{resnet_forward.27} parent=5 // pred_check_branch
      %194 = sbr.rel (%p191) target = $region36
    $region35: #{resnet_forward.27} parent=5 // pred_region
      %s195 = ssub.s32 %s12, 1
      %p196 = scmp.lt.s32.totalorder %s17, 1
      %s197 = scalar_select %p196, %s17, 1
      %s198 = smul.addr %s197, 4
      %s199 = smul.addr %s198, 2
      %s200 = scalar_lea.vmem %s0, %s199
      %p201 = pneg %p38
      %p202 = pneg %p35
      %p203 = pneg %p59
      %p204 = pneg %p56
      %p205 = pneg %p80
      %p206 = pneg %p77
      %p207 = pneg %p101
      %p208 = pneg %p98
      %p209 = pneg %p127
      %p210 = pneg %p124
      %p211 = scmp.lt.s32.totalorder %s17, 1
      %s212 = scalar_select %p211, %s17, 1
      %s213 = smul.addr %s212, 4
      %s214 = smul.addr %s213, 2
      %s215 = scalar_lea.vmem %s4, %s214
      %p216 = pneg %p153
      %p217 = pneg %p150
      %p218 = scmp.lt.s32.totalorder %s17, 1
      %s219 = scalar_select %p218, %s17, 1
      %s220 = smul.addr %s219, 2
      %s221 = scalar_lea.vmem %s5, %s220
      %p222 = scmp.lt.s32.totalorder %s17, 1
      %s223 = scalar_select %p222, %s17, 1
      %s224 = smul.addr %s223, 4
      %s225 = smul.addr %s224, 2
      %s226 = scalar_lea.vmem %s0, %s225
      %p227 = scmp.lt.s32.totalorder %s17, 1
      %s228 = scalar_select %p227, %s17, 1
      %s229 = smul.addr %s228, 4
      %s230 = smul.addr %s229, 2
      %s231 = scalar_lea.vmem %s4, %s230
      %p232 = scmp.lt.s32.totalorder %s17, 1
      %s233 = scalar_select %p232, %s17, 1
      %s234 = smul.addr %s233, 2
      %s235 = scalar_lea.vmem %s5, %s234
      %v237 = vld [vmem:[%s226] sm:$0x3]
      %v238 = vld [vmem:[%s226 + $0x2] sm:$0x3]
      %v239 = vld [vmem:[%s226 + $0x4] sm:$0x3]
      %v240 = vld [vmem:[%s226 + $0x6] sm:$0x3]
      %v241 = vunpack.c.l.bf16 %v237
      %v242 = vunpack.c.l.bf16 %v238
      %v243 = vunpack.c.l.bf16 %v239
      %v244 = vunpack.c.l.bf16 %v240
      %v245 = vld [vmem:[%s1] sm:$0x1]
      %v247 = vlaneseq
      %v248 = vshrl.u32 %v247, 7
      %v249 = vsub.s32 0, %v248
      %v250 = vrot.slane %v245, %v249
      %v252 = vmul.f32 %v241, %v250
      %v253 = vmul.f32 %v242, %v250
      %v254 = vmul.f32 %v243, %v250
      %v255 = vmul.f32 %v244, %v250
      %v256 = vld [vmem:[%s2] sm:$0x1]
      %v258 = vlaneseq
      %v259 = vshrl.u32 %v258, 7
      %v260 = vsub.s32 0, %v259
      %v261 = vrot.slane %v256, %v260
      %v263 = vadd.f32 %v252, %v261
      %v264 = vadd.f32 %v253, %v261
      %v265 = vadd.f32 %v254, %v261
      %v266 = vadd.f32 %v255, %v261
      %v267 = vmax.f32 %v263, 0.0
      %v268 = vmax.f32 %v264, 0.0
      %v269 = vmax.f32 %v265, 0.0
      %v270 = vmax.f32 %v266, 0.0
      %v271 = vpack.c.bf16 %v267, %v267
      %v272 = vpack.c.bf16 %v268, %v268
      %v273 = vpack.c.bf16 %v269, %v269
      %v274 = vpack.c.bf16 %v270, %v270
      %275 = vst [vmem:[#allocation2] sm:$0x3] %v271
      %276 = vst [vmem:[#allocation2 + $0x2] sm:$0x3] %v272
      %277 = vst [vmem:[#allocation2 + $0x4] sm:$0x3] %v273
      %278 = vst [vmem:[#allocation2 + $0x6] sm:$0x3] %v274
      %279 = vst [vmem:[#allocation3] sm:$0xf] 0
      %280 = vst [vmem:[#allocation3 + $0x4] sm:$0xf] 0
      %281 = vst [vmem:[#allocation3 + $0x8] sm:$0xf] 0
      %282 = vst [vmem:[#allocation3 + $0xc] sm:$0xf] 0
      %v283 = vld [vmem:[#allocation2] sm:$0x3]
      %v284 = vld [vmem:[#allocation2 + $0x2] sm:$0x3]
      %v285 = vld [vmem:[#allocation2 + $0x4] sm:$0x3]
      %v287 = vshrl.u32 %v283, 16
      %v289 = vrot.slane %v287, 7
      %v290 = vshll.u32 %v283, 16
      %v292 = vor.u32 %v289, %v290
      %v294 = vshrl.u32 %v284, 16
      %v296 = vrot.slane %v294, 7
      %v297 = vshll.u32 %v284, 16
      %v299 = vor.u32 %v296, %v297
      %v301 = vshrl.u32 %v285, 16
      %v303 = vrot.slane %v301, 7
      %v304 = vshll.u32 %v285, 16
      %v306 = vor.u32 %v303, %v304
      %s310 = scalar_lea.vmem [#allocation3], 4
      %vm311 = vcmask 1041408
      %vm312 = vsmask.f32 7938
      %vm313 = vmand %vm311, %vm312
      %v314 = vld [vmem:[%s310] sm:$0x3]
      %v315 = vsel %vm313, %v292, %v314
      %316 = vst [vmem:[%s310] sm:$0x3] %v315
      %v317 = vld [vmem:[%s310 + $0x4] sm:$0x3]
      %v318 = vsel %vm313, %v299, %v317
      %319 = vst [vmem:[%s310 + $0x4] sm:$0x3] %v318
      %v320 = vld [vmem:[%s310 + $0x8] sm:$0x3]
      %v321 = vsel %vm313, %v306, %v320
      %322 = vst [vmem:[%s310 + $0x8] sm:$0x3] %v321
      %v323 = vld [vmem:[#allocation2] sm:$0x3]
      %v324 = vld [vmem:[#allocation2 + $0x2] sm:$0x3]
      %v325 = vld [vmem:[#allocation2 + $0x4] sm:$0x3]
      %326 = vst [vmem:[%s310 + $0x2] sm:$0x3] %v323
      %327 = vst [vmem:[%s310 + $0x6] sm:$0x3] %v324
      %328 = vst [vmem:[%s310 + $0xa] sm:$0x3] %v325
      %v329 = vld [vmem:[#allocation3] sm:$0xf]
      %v330 = vld [vmem:[#allocation3 + $0x4] sm:$0xf]
      %v331 = vld [vmem:[#allocation3 + $0x8] sm:$0xf]
      %v332 = vld [vmem:[#allocation3 + $0xc] sm:$0xf]
      %v333 = vld [vmem:[%s3] sm:$0xf]
      %v334 = vld [vmem:[%s3 + $0x4] sm:$0xf]
      %v335 = vld [vmem:[%s3 + $0x8] sm:$0xf]
      %v336 = vld [vmem:[%s3 + $0xc] sm:$0xf]
      %v337 = vld [vmem:[%s3 + $0x10] sm:$0xf]
      %v338 = vld [vmem:[%s3 + $0x14] sm:$0xf]
      %v339 = vld [vmem:[%s3 + $0x18] sm:$0xf]
      %v340 = vld [vmem:[%s3 + $0x1c] sm:$0xf]
      %v341 = vld [vmem:[%s3 + $0x20] sm:$0xf]
      %v342 = vld [vmem:[%s3 + $0x24] sm:$0xf]
      %v343 = vld [vmem:[%s3 + $0x28] sm:$0xf]
      %v344 = vld [vmem:[%s3 + $0x2c] sm:$0xf]
      %v345 = vld [vmem:[%s3 + $0x30] sm:$0xf]
      %v346 = vld [vmem:[%s3 + $0x34] sm:$0xf]
      %v347 = vld [vmem:[%s3 + $0x38] sm:$0xf]
      %v348 = vld [vmem:[%s3 + $0x3c] sm:$0xf]
      %v349 = vld [vmem:[%s3 + $0x40] sm:$0xf]
      %v350 = vld [vmem:[%s3 + $0x44] sm:$0xf]
      %v351 = vld [vmem:[%s3 + $0x48] sm:$0xf]
      %v352 = vld [vmem:[%s3 + $0x4c] sm:$0xf]
      %v353 = vld [vmem:[%s3 + $0x50] sm:$0xf]
      %v354 = vld [vmem:[%s3 + $0x54] sm:$0xf]
      %v355 = vld [vmem:[%s3 + $0x58] sm:$0xf]
      %v356 = vld [vmem:[%s3 + $0x5c] sm:$0xf]
      %v357 = vld [vmem:[%s3 + $0x60] sm:$0xf]
      %v358 = vld [vmem:[%s3 + $0x64] sm:$0xf]
      %v359 = vld [vmem:[%s3 + $0x68] sm:$0xf]
      %v360 = vld [vmem:[%s3 + $0x6c] sm:$0xf]
      %v361 = vld [vmem:[%s3 + $0x70] sm:$0xf]
      %v362 = vld [vmem:[%s3 + $0x74] sm:$0xf]
      %v363 = vld [vmem:[%s3 + $0x78] sm:$0xf]
      %v364 = vld [vmem:[%s3 + $0x7c] sm:$0xf]
      %365 = vst [vmem:[#allocation3] sm:$0xf] 0
      %366 = vst [vmem:[#allocation3 + $0x4] sm:$0xf] 0
      %367 = vst [vmem:[#allocation3 + $0x8] sm:$0xf] 0
      %368 = vst [vmem:[#allocation3 + $0xc] sm:$0xf] 0
      %v369 = vld [vmem:[#allocation2] sm:$0x3]
      %v370 = vld [vmem:[#allocation2 + $0x2] sm:$0x3]
      %v371 = vld [vmem:[#allocation2 + $0x4] sm:$0x3]
      %v373 = vshrl.u32 %v369, 16
      %v375 = vrot.slane %v373, 6
      %v376 = vshll.u32 %v369, 16
      %v378 = vrot.slane %v376, 7
      %v379 = vor.u32 %v375, %v378
      %v380 = vrot.slane %v379, 2
      %v382 = vshrl.u32 %v370, 16
      %v384 = vrot.slane %v382, 6
      %v385 = vshll.u32 %v370, 16
      %v387 = vrot.slane %v385, 7
      %v388 = vor.u32 %v384, %v387
      %v389 = vrot.slane %v388, 2
      %v391 = vshrl.u32 %v371, 16
      %v393 = vrot.slane %v391, 6
      %v394 = vshll.u32 %v371, 16
      %v396 = vrot.slane %v394, 7
      %v397 = vor.u32 %v393, %v396
      %v398 = vrot.slane %v397, 2
      %vm402 = vsmask.f32 1280
      %vm403 = vmand %vm311, %vm402
      %v404 = vld [vmem:[%s310] sm:$0x3]
      %v405 = vsel %vm403, %v380, %v404
      %406 = vst [vmem:[%s310] sm:$0x3] %v405
      %v407 = vld [vmem:[%s310 + $0x4] sm:$0x3]
      %v408 = vsel %vm403, %v389, %v407
      %409 = vst [vmem:[%s310 + $0x4] sm:$0x3] %v408
      %v410 = vld [vmem:[%s310 + $0x8] sm:$0x3]
      %v411 = vsel %vm403, %v398, %v410
      %412 = vst [vmem:[%s310 + $0x8] sm:$0x3] %v411
      %v413 = vld [vmem:[#allocation2] sm:$0x3]
      %v414 = vld [vmem:[#allocation2 + $0x2] sm:$0x3]
      %v415 = vld [vmem:[#allocation2 + $0x4] sm:$0x3]
      %v416 = vld [vmem:[#allocation2 + $0x6] sm:$0x3]
      %v418 = vshrl.u32 %v413, 16
      %v420 = vrot.slane %v418, 7
      %v421 = vshll.u32 %v413, 16
      %v423 = vor.u32 %v420, %v421
      %v425 = vshrl.u32 %v414, 16
      %v427 = vrot.slane %v425, 7
      %v428 = vshll.u32 %v414, 16
      %v430 = vor.u32 %v427, %v428
      %v432 = vshrl.u32 %v415, 16
      %v434 = vrot.slane %v432, 7
      %v435 = vshll.u32 %v415, 16
      %v437 = vor.u32 %v434, %v435
      %v439 = vshrl.u32 %v416, 16
      %v441 = vrot.slane %v439, 7
      %v442 = vshll.u32 %v416, 16
      %v444 = vor.u32 %v441, %v442
      %v449 = vld [vmem:[#allocation3 + $0x2] sm:$0x3]
      %v450 = vsel %vm313, %v423, %v449
      %451 = vst [vmem:[#allocation3 + $0x2] sm:$0x3] %v450
      %v452 = vld [vmem:[#allocation3 + $0x6] sm:$0x3]
      %v453 = vsel %vm313, %v430, %v452
      %454 = vst [vmem:[#allocation3 + $0x6] sm:$0x3] %v453
      %v455 = vld [vmem:[#allocation3 + $0xa] sm:$0x3]
      %v456 = vsel %vm313, %v437, %v455
      %457 = vst [vmem:[#allocation3 + $0xa] sm:$0x3] %v456
      %v458 = vld [vmem:[#allocation3 + $0xe] sm:$0x3]
      %v459 = vsel %vm313, %v444, %v458
      %460 = vst [vmem:[#allocation3 + $0xe] sm:$0x3] %v459
      %v461 = vld [vmem:[#allocation3] sm:$0xf]
      %v462 = vld [vmem:[#allocation3 + $0x4] sm:$0xf]
      %v463 = vld [vmem:[#allocation3 + $0x8] sm:$0xf]
      %v464 = vld [vmem:[#allocation3 + $0xc] sm:$0xf]
      %s465 = scalar_lea.vmem %s3, 128
      %v466 = vld [vmem:[%s465] sm:$0xf]
      %v467 = vld [vmem:[%s465 + $0x4] sm:$0xf]
      %v468 = vld [vmem:[%s465 + $0x8] sm:$0xf]
      %v469 = vld [vmem:[%s465 + $0xc] sm:$0xf]
      %v470 = vld [vmem:[%s465 + $0x10] sm:$0xf]
      %v471 = vld [vmem:[%s465 + $0x14] sm:$0xf]
      %v472 = vld [vmem:[%s465 + $0x18] sm:$0xf]
      %v473 = vld [vmem:[%s465 + $0x1c] sm:$0xf]
      %v474 = vld [vmem:[%s465 + $0x20] sm:$0xf]
      %v475 = vld [vmem:[%s465 + $0x24] sm:$0xf]
      %v476 = vld [vmem:[%s465 + $0x28] sm:$0xf]
      %v477 = vld [vmem:[%s465 + $0x2c] sm:$0xf]
      %v478 = vld [vmem:[%s465 + $0x30] sm:$0xf]
      %v479 = vld [vmem:[%s465 + $0x34] sm:$0xf]
      %v480 = vld [vmem:[%s465 + $0x38] sm:$0xf]
      %v481 = vld [vmem:[%s465 + $0x3c] sm:$0xf]
      %v482 = vld [vmem:[%s465 + $0x40] sm:$0xf]
      %v483 = vld [vmem:[%s465 + $0x44] sm:$0xf]
      %v484 = vld [vmem:[%s465 + $0x48] sm:$0xf]
      %v485 = vld [vmem:[%s465 + $0x4c] sm:$0xf]
      %v486 = vld [vmem:[%s465 + $0x50] sm:$0xf]
      %v487 = vld [vmem:[%s465 + $0x54] sm:$0xf]
      %v488 = vld [vmem:[%s465 + $0x58] sm:$0xf]
      %v489 = vld [vmem:[%s465 + $0x5c] sm:$0xf]
      %v490 = vld [vmem:[%s465 + $0x60] sm:$0xf]
      %v491 = vld [vmem:[%s465 + $0x64] sm:$0xf]
      %v492 = vld [vmem:[%s465 + $0x68] sm:$0xf]
      %v493 = vld [vmem:[%s465 + $0x6c] sm:$0xf]
      %v494 = vld [vmem:[%s465 + $0x70] sm:$0xf]
      %v495 = vld [vmem:[%s465 + $0x74] sm:$0xf]
      %v496 = vld [vmem:[%s465 + $0x78] sm:$0xf]
      %v497 = vld [vmem:[%s465 + $0x7c] sm:$0xf]
      %v502 = vcombine.low %v461, %v462
      %v503 = vcombine.low %v463, %v464
      %v505 = vunpack.c.l.s4 1983009808
      %v506 = vunpack.c.0.s8 %v505
      %v507 = vlaneseq
      %v508 = vshrl.u32 %v507, 7
      %v509 = vsub.s32 %v506, %v508
      %v510 = vrot.slane %v502, %v509
      %v512 = vunpack.c.l.s4 1983009808
      %v513 = vunpack.c.0.s8 %v512
      %v514 = vlaneseq
      %v515 = vshrl.u32 %v514, 7
      %v516 = vsub.s32 %v513, %v515
      %v517 = vrot.slane %v503, %v516
      %v518 = vcombine.low %v510, %v517
      %v519 = vcombine.high %v510, %v517
      %v554 = vunpack.c.l.b16 %v466
      %v555 = vunpack.c.l.b16 %v467
      %v556 = vunpack.c.l.b16 %v468
      %v557 = vunpack.c.l.b16 %v469
      %v558 = vunpack.c.l.b16 %v470
      %v559 = vunpack.c.l.b16 %v471
      %v560 = vunpack.c.l.b16 %v472
      %v561 = vunpack.c.l.b16 %v473
      %v562 = vunpack.c.l.b16 %v474
      %v563 = vunpack.c.l.b16 %v475
      %v564 = vunpack.c.l.b16 %v476
      %v565 = vunpack.c.l.b16 %v477
      %v566 = vunpack.c.l.b16 %v478
      %v567 = vunpack.c.l.b16 %v479
      %v568 = vunpack.c.l.b16 %v480
      %v569 = vunpack.c.l.b16 %v481
      %v570 = vunpack.c.l.b16 %v482
      %v571 = vunpack.c.l.b16 %v483
      %v572 = vunpack.c.l.b16 %v484
      %v573 = vunpack.c.l.b16 %v485
      %v574 = vunpack.c.l.b16 %v486
      %v575 = vunpack.c.l.b16 %v487
      %v576 = vunpack.c.l.b16 %v488
      %v577 = vunpack.c.l.b16 %v489
      %v578 = vunpack.c.l.b16 %v490
      %v579 = vunpack.c.l.b16 %v491
      %v580 = vunpack.c.l.b16 %v492
      %v581 = vunpack.c.l.b16 %v493
      %v582 = vunpack.c.l.b16 %v494
      %v583 = vunpack.c.l.b16 %v495
      %v584 = vunpack.c.l.b16 %v496
      %v585 = vunpack.c.l.b16 %v497
      %v586 = vpack.c.b16 %v555, %v554
      %v587 = vpack.c.b16 %v557, %v556
      %v588 = vpack.c.b16 %v559, %v558
      %v589 = vpack.c.b16 %v561, %v560
      %v590 = vpack.c.b16 %v563, %v562
      %v591 = vpack.c.b16 %v565, %v564
      %v592 = vpack.c.b16 %v567, %v566
      %v593 = vpack.c.b16 %v569, %v568
      %v594 = vpack.c.b16 %v571, %v570
      %v595 = vpack.c.b16 %v573, %v572
      %v596 = vpack.c.b16 %v575, %v574
      %v597 = vpack.c.b16 %v577, %v576
      %v598 = vpack.c.b16 %v579, %v578
      %v599 = vpack.c.b16 %v581, %v580
      %v600 = vpack.c.b16 %v583, %v582
      %v601 = vpack.c.b16 %v585, %v584
      %618 = vmatprep.subr.bf16.mxu0 0
      %619 = vmatpush1.bf16.msra.mxu0 %v586
      %620 = vmatprep.subr.bf16.mxu0 0
      %621 = vmatpush1.bf16.msra.mxu0 %v587
      %622 = vmatprep.subr.bf16.mxu0 0
      %623 = vmatpush1.bf16.msra.mxu0 %v588
      %624 = vmatprep.subr.bf16.mxu0 0
      %625 = vmatpush1.bf16.msra.mxu0 %v589
      %626 = vmatprep.subr.bf16.mxu0 0
      %627 = vmatpush1.bf16.msra.mxu0 %v590
      %628 = vmatprep.subr.bf16.mxu0 0
      %629 = vmatpush1.bf16.msra.mxu0 %v591
      %630 = vmatprep.subr.bf16.mxu0 0
      %631 = vmatpush1.bf16.msra.mxu0 %v592
      %632 = vmatprep.subr.bf16.mxu0 0
      %633 = vmatpush1.bf16.msra.mxu0 %v593
      %634 = vmatprep.subr.bf16.mxu0 0
      %635 = vmatpush1.bf16.msra.mxu0 %v594
      %636 = vmatprep.subr.bf16.mxu0 0
      %637 = vmatpush1.bf16.msra.mxu0 %v595
      %638 = vmatprep.subr.bf16.mxu0 0
      %639 = vmatpush1.bf16.msra.mxu0 %v596
      %640 = vmatprep.subr.bf16.mxu0 0
      %641 = vmatpush1.bf16.msra.mxu0 %v597
      %642 = vmatprep.subr.bf16.mxu0 0
      %643 = vmatpush1.bf16.msra.mxu0 %v598
      %644 = vmatprep.subr.bf16.mxu0 0
      %645 = vmatpush1.bf16.msra.mxu0 %v599
      %646 = vmatprep.subr.bf16.mxu0 0
      %647 = vmatpush1.bf16.msra.mxu0 %v600
      %648 = vmatprep.subr.bf16.mxu0 0
      %649 = vmatpush1.bf16.msra.mxu0 %v601
      %650 = vmatprep.mubr.bf16.mxu0 %v519
      %651 = vmatmul.mubr.bf16.gmra.mrb[0].mxu0 %v518
      %v652 = vpop.f32.mrb[0].mxu0
      %v653 = vadd.f32 0.0, %v652
      %v654 = vpop.f32.mrb[0].mxu0
      %v655 = vpop.f32.mrb[0].mxu0
      %v656 = vadd.f32 0.0, %v655
      %v657 = vpop.f32.mrb[0].mxu0
      %658 = vdwg.mxu0
      %v663 = vcombine.low %v329, %v330
      %v664 = vcombine.low %v331, %v332
      %v666 = vunpack.c.l.s4 1983009808
      %v667 = vunpack.c.0.s8 %v666
      %v668 = vlaneseq
      %v669 = vshrl.u32 %v668, 7
      %v670 = vsub.s32 %v667, %v669
      %v671 = vrot.slane %v663, %v670
      %v673 = vunpack.c.l.s4 1983009808
      %v674 = vunpack.c.0.s8 %v673
      %v675 = vlaneseq
      %v676 = vshrl.u32 %v675, 7
      %v677 = vsub.s32 %v674, %v676
      %v678 = vrot.slane %v664, %v677
      %v679 = vcombine.low %v671, %v678
      %v680 = vcombine.high %v671, %v678
      %v715 = vunpack.c.l.b16 %v333
      %v716 = vunpack.c.l.b16 %v334
      %v717 = vunpack.c.l.b16 %v335
      %v718 = vunpack.c.l.b16 %v336
      %v719 = vunpack.c.l.b16 %v337
      %v720 = vunpack.c.l.b16 %v338
      %v721 = vunpack.c.l.b16 %v339
      %v722 = vunpack.c.l.b16 %v340
      %v723 = vunpack.c.l.b16 %v341
      %v724 = vunpack.c.l.b16 %v342
      %v725 = vunpack.c.l.b16 %v343
      %v726 = vunpack.c.l.b16 %v344
      %v727 = vunpack.c.l.b16 %v345
      %v728 = vunpack.c.l.b16 %v346
      %v729 = vunpack.c.l.b16 %v347
      %v730 = vunpack.c.l.b16 %v348
      %v731 = vunpack.c.l.b16 %v349
      %v732 = vunpack.c.l.b16 %v350
      %v733 = vunpack.c.l.b16 %v351
      %v734 = vunpack.c.l.b16 %v352
      %v735 = vunpack.c.l.b16 %v353
      %v736 = vunpack.c.l.b16 %v354
      %v737 = vunpack.c.l.b16 %v355
      %v738 = vunpack.c.l.b16 %v356
      %v739 = vunpack.c.l.b16 %v357
      %v740 = vunpack.c.l.b16 %v358
      %v741 = vunpack.c.l.b16 %v359
      %v742 = vunpack.c.l.b16 %v360
      %v743 = vunpack.c.l.b16 %v361
      %v744 = vunpack.c.l.b16 %v362
      %v745 = vunpack.c.l.b16 %v363
      %v746 = vunpack.c.l.b16 %v364
      %v747 = vpack.c.b16 %v716, %v715
      %v748 = vpack.c.b16 %v718, %v717
      %v749 = vpack.c.b16 %v720, %v719
      %v750 = vpack.c.b16 %v722, %v721
      %v751 = vpack.c.b16 %v724, %v723
      %v752 = vpack.c.b16 %v726, %v725
      %v753 = vpack.c.b16 %v728, %v727
      %v754 = vpack.c.b16 %v730, %v729
      %v755 = vpack.c.b16 %v732, %v731
      %v756 = vpack.c.b16 %v734, %v733
      %v757 = vpack.c.b16 %v736, %v735
      %v758 = vpack.c.b16 %v738, %v737
      %v759 = vpack.c.b16 %v740, %v739
      %v760 = vpack.c.b16 %v742, %v741
      %v761 = vpack.c.b16 %v744, %v743
      %v762 = vpack.c.b16 %v746, %v745
      %779 = vmatprep.subr.bf16.mxu0 0
      %780 = vmatpush1.bf16.msra.mxu0 %v747
      %781 = vmatprep.subr.bf16.mxu0 0
      %782 = vmatpush1.bf16.msra.mxu0 %v748
      %783 = vmatprep.subr.bf16.mxu0 0
      %784 = vmatpush1.bf16.msra.mxu0 %v749
      %785 = vmatprep.subr.bf16.mxu0 0
      %786 = vmatpush1.bf16.msra.mxu0 %v750
      %787 = vmatprep.subr.bf16.mxu0 0
      %788 = vmatpush1.bf16.msra.mxu0 %v751
      %789 = vmatprep.subr.bf16.mxu0 0
      %790 = vmatpush1.bf16.msra.mxu0 %v752
      %791 = vmatprep.subr.bf16.mxu0 0
      %792 = vmatpush1.bf16.msra.mxu0 %v753
      %793 = vmatprep.subr.bf16.mxu0 0
      %794 = vmatpush1.bf16.msra.mxu0 %v754
      %795 = vmatprep.subr.bf16.mxu0 0
      %796 = vmatpush1.bf16.msra.mxu0 %v755
      %797 = vmatprep.subr.bf16.mxu0 0
      %798 = vmatpush1.bf16.msra.mxu0 %v756
      %799 = vmatprep.subr.bf16.mxu0 0
      %800 = vmatpush1.bf16.msra.mxu0 %v757
      %801 = vmatprep.subr.bf16.mxu0 0
      %802 = vmatpush1.bf16.msra.mxu0 %v758
      %803 = vmatprep.subr.bf16.mxu0 0
      %804 = vmatpush1.bf16.msra.mxu0 %v759
      %805 = vmatprep.subr.bf16.mxu0 0
      %806 = vmatpush1.bf16.msra.mxu0 %v760
      %807 = vmatprep.subr.bf16.mxu0 0
      %808 = vmatpush1.bf16.msra.mxu0 %v761
      %809 = vmatprep.subr.bf16.mxu0 0
      %810 = vmatpush1.bf16.msra.mxu0 %v762
      %811 = vmatprep.mubr.bf16.mxu0 %v680
      %812 = vmatmul.mubr.bf16.gmra.mrb[0].mxu0 %v679
      %v813 = vpop.f32.mrb[0].mxu0
      %v814 = vadd.f32 %v653, %v813
      %v815 = vpop.f32.mrb[0].mxu0
      %v816 = vpop.f32.mrb[0].mxu0
      %v817 = vadd.f32 %v656, %v816
      %v818 = vpop.f32.mrb[0].mxu0
      %819 = vdwg.mxu0
      %820 = vst [vmem:[#allocation3] sm:$0xf] 0
      %821 = vst [vmem:[#allocation3 + $0x4] sm:$0xf] 0
      %822 = vst [vmem:[#allocation3 + $0x8] sm:$0xf] 0
      %823 = vst [vmem:[#allocation3 + $0xc] sm:$0xf] 0
      %v824 = vld [vmem:[#allocation2] sm:$0x3]
      %v825 = vld [vmem:[#allocation2 + $0x2] sm:$0x3]
      %v826 = vld [vmem:[#allocation2 + $0x4] sm:$0x3]
      %v827 = vld [vmem:[#allocation2 + $0x6] sm:$0x3]
      %828 = vst [vmem:[#allocation3] sm:$0x3] %v824
      %829 = vst [vmem:[#allocation3 + $0x4] sm:$0x3] %v825
      %830 = vst [vmem:[#allocation3 + $0x8] sm:$0x3] %v826
      %831 = vst [vmem:[#allocation3 + $0xc] sm:$0x3] %v827
      %v832 = vld [vmem:[#allocation2] sm:$0x3]
      %v833 = vld [vmem:[#allocation2 + $0x2] sm:$0x3]
      %v834 = vld [vmem:[#allocation2 + $0x4] sm:$0x3]
      %v835 = vld [vmem:[#allocation2 + $0x6] sm:$0x3]
      %v837 = vshrl.u32 %v832, 16
      %v839 = vrot.slane %v837, 6
      %v840 = vshll.u32 %v832, 16
      %v842 = vrot.slane %v840, 7
      %v843 = vor.u32 %v839, %v842
      %v844 = vrot.slane %v843, 2
      %v846 = vshrl.u32 %v833, 16
      %v848 = vrot.slane %v846, 6
      %v849 = vshll.u32 %v833, 16
      %v851 = vrot.slane %v849, 7
      %v852 = vor.u32 %v848, %v851
      %v853 = vrot.slane %v852, 2
      %v855 = vshrl.u32 %v834, 16
      %v857 = vrot.slane %v855, 6
      %v858 = vshll.u32 %v834, 16
      %v860 = vrot.slane %v858, 7
      %v861 = vor.u32 %v857, %v860
      %v862 = vrot.slane %v861, 2
      %v864 = vshrl.u32 %v835, 16
      %v866 = vrot.slane %v864, 6
      %v867 = vshll.u32 %v835, 16
      %v869 = vrot.slane %v867, 7
      %v870 = vor.u32 %v866, %v869
      %v871 = vrot.slane %v870, 2
      %v876 = vld [vmem:[#allocation3 + $0x2] sm:$0x3]
      %v877 = vsel %vm403, %v844, %v876
      %878 = vst [vmem:[#allocation3 + $0x2] sm:$0x3] %v877
      %v879 = vld [vmem:[#allocation3 + $0x6] sm:$0x3]
      %v880 = vsel %vm403, %v853, %v879
      %881 = vst [vmem:[#allocation3 + $0x6] sm:$0x3] %v880
      %v882 = vld [vmem:[#allocation3 + $0xa] sm:$0x3]
      %v883 = vsel %vm403, %v862, %v882
      %884 = vst [vmem:[#allocation3 + $0xa] sm:$0x3] %v883
      %v885 = vld [vmem:[#allocation3 + $0xe] sm:$0x3]
      %v886 = vsel %vm403, %v871, %v885
      %887 = vst [vmem:[#allocation3 + $0xe] sm:$0x3] %v886
      %v888 = vld [vmem:[#allocation3] sm:$0xf]
      %v889 = vld [vmem:[#allocation3 + $0x4] sm:$0xf]
      %v890 = vld [vmem:[#allocation3 + $0x8] sm:$0xf]
      %v891 = vld [vmem:[#allocation3 + $0xc] sm:$0xf]
      %s892 = scalar_lea.vmem %s3, 256
      %v893 = vld [vmem:[%s892] sm:$0xf]
      %v894 = vld [vmem:[%s892 + $0x4] sm:$0xf]
      %v895 = vld [vmem:[%s892 + $0x8] sm:$0xf]
      %v896 = vld [vmem:[%s892 + $0xc] sm:$0xf]
      %v897 = vld [vmem:[%s892 + $0x10] sm:$0xf]
      %v898 = vld [vmem:[%s892 + $0x14] sm:$0xf]
      %v899 = vld [vmem:[%s892 + $0x18] sm:$0xf]
      %v900 = vld [vmem:[%s892 + $0x1c] sm:$0xf]
      %v901 = vld [vmem:[%s892 + $0x20] sm:$0xf]
      %v902 = vld [vmem:[%s892 + $0x24] sm:$0xf]
      %v903 = vld [vmem:[%s892 + $0x28] sm:$0xf]
      %v904 = vld [vmem:[%s892 + $0x2c] sm:$0xf]
      %v905 = vld [vmem:[%s892 + $0x30] sm:$0xf]
      %v906 = vld [vmem:[%s892 + $0x34] sm:$0xf]
      %v907 = vld [vmem:[%s892 + $0x38] sm:$0xf]
      %v908 = vld [vmem:[%s892 + $0x3c] sm:$0xf]
      %v909 = vld [vmem:[%s892 + $0x40] sm:$0xf]
      %v910 = vld [vmem:[%s892 + $0x44] sm:$0xf]
      %v911 = vld [vmem:[%s892 + $0x48] sm:$0xf]
      %v912 = vld [vmem:[%s892 + $0x4c] sm:$0xf]
      %v913 = vld [vmem:[%s892 + $0x50] sm:$0xf]
      %v914 = vld [vmem:[%s892 + $0x54] sm:$0xf]
      %v915 = vld [vmem:[%s892 + $0x58] sm:$0xf]
      %v916 = vld [vmem:[%s892 + $0x5c] sm:$0xf]
      %v917 = vld [vmem:[%s892 + $0x60] sm:$0xf]
      %v918 = vld [vmem:[%s892 + $0x64] sm:$0xf]
      %v919 = vld [vmem:[%s892 + $0x68] sm:$0xf]
      %v920 = vld [vmem:[%s892 + $0x6c] sm:$0xf]
      %v921 = vld [vmem:[%s892 + $0x70] sm:$0xf]
      %v922 = vld [vmem:[%s892 + $0x74] sm:$0xf]
      %v923 = vld [vmem:[%s892 + $0x78] sm:$0xf]
      %v924 = vld [vmem:[%s892 + $0x7c] sm:$0xf]
      %v929 = vcombine.low %v888, %v889
      %v930 = vcombine.low %v890, %v891
      %v932 = vunpack.c.l.s4 1983009808
      %v933 = vunpack.c.0.s8 %v932
      %v934 = vlaneseq
      %v935 = vshrl.u32 %v934, 7
      %v936 = vsub.s32 %v933, %v935
      %v937 = vrot.slane %v929, %v936
      %v939 = vunpack.c.l.s4 1983009808
      %v940 = vunpack.c.0.s8 %v939
      %v941 = vlaneseq
      %v942 = vshrl.u32 %v941, 7
      %v943 = vsub.s32 %v940, %v942
      %v944 = vrot.slane %v930, %v943
      %v945 = vcombine.low %v937, %v944
      %v946 = vcombine.high %v937, %v944
      %v981 = vunpack.c.l.b16 %v893
      %v982 = vunpack.c.l.b16 %v894
      %v983 = vunpack.c.l.b16 %v895
      %v984 = vunpack.c.l.b16 %v896
      %v985 = vunpack.c.l.b16 %v897
      %v986 = vunpack.c.l.b16 %v898
      %v987 = vunpack.c.l.b16 %v899
      %v988 = vunpack.c.l.b16 %v900
      %v989 = vunpack.c.l.b16 %v901
      %v990 = vunpack.c.l.b16 %v902
      %v991 = vunpack.c.l.b16 %v903
      %v992 = vunpack.c.l.b16 %v904
      %v993 = vunpack.c.l.b16 %v905
      %v994 = vunpack.c.l.b16 %v906
      %v995 = vunpack.c.l.b16 %v907
      %v996 = vunpack.c.l.b16 %v908
      %v997 = vunpack.c.l.b16 %v909
      %v998 = vunpack.c.l.b16 %v910
      %v999 = vunpack.c.l.b16 %v911
      %v1000 = vunpack.c.l.b16 %v912
      %v1001 = vunpack.c.l.b16 %v913
      %v1002 = vunpack.c.l.b16 %v914
      %v1003 = vunpack.c.l.b16 %v915
      %v1004 = vunpack.c.l.b16 %v916
      %v1005 = vunpack.c.l.b16 %v917
      %v1006 = vunpack.c.l.b16 %v918
      %v1007 = vunpack.c.l.b16 %v919
      %v1008 = vunpack.c.l.b16 %v920
      %v1009 = vunpack.c.l.b16 %v921
      %v1010 = vunpack.c.l.b16 %v922
      %v1011 = vunpack.c.l.b16 %v923
      %v1012 = vunpack.c.l.b16 %v924
      %v1013 = vpack.c.b16 %v982, %v981
      %v1014 = vpack.c.b16 %v984, %v983
      %v1015 = vpack.c.b16 %v986, %v985
      %v1016 = vpack.c.b16 %v988, %v987
      %v1017 = vpack.c.b16 %v990, %v989
      %v1018 = vpack.c.b16 %v992, %v991
      %v1019 = vpack.c.b16 %v994, %v993
      %v1020 = vpack.c.b16 %v996, %v995
      %v1021 = vpack.c.b16 %v998, %v997
      %v1022 = vpack.c.b16 %v1000, %v999
      %v1023 = vpack.c.b16 %v1002, %v1001
      %v1024 = vpack.c.b16 %v1004, %v1003
      %v1025 = vpack.c.b16 %v1006, %v1005
      %v1026 = vpack.c.b16 %v1008, %v1007
      %v1027 = vpack.c.b16 %v1010, %v1009
      %v1028 = vpack.c.b16 %v1012, %v1011
      %1045 = vmatprep.subr.bf16.mxu0 0
      %1046 = vmatpush1.bf16.msra.mxu0 %v1013
      %1047 = vmatprep.subr.bf16.mxu0 0
      %1048 = vmatpush1.bf16.msra.mxu0 %v1014
      %1049 = vmatprep.subr.bf16.mxu0 0
      %1050 = vmatpush1.bf16.msra.mxu0 %v1015
      %1051 = vmatprep.subr.bf16.mxu0 0
      %1052 = vmatpush1.bf16.msra.mxu0 %v1016
      %1053 = vmatprep.subr.bf16.mxu0 0
      %1054 = vmatpush1.bf16.msra.mxu0 %v1017
      %1055 = vmatprep.subr.bf16.mxu0 0
      %1056 = vmatpush1.bf16.msra.mxu0 %v1018
      %1057 = vmatprep.subr.bf16.mxu0 0
      %1058 = vmatpush1.bf16.msra.mxu0 %v1019
      %1059 = vmatprep.subr.bf16.mxu0 0
      %1060 = vmatpush1.bf16.msra.mxu0 %v1020
      %1061 = vmatprep.subr.bf16.mxu0 0
      %1062 = vmatpush1.bf16.msra.mxu0 %v1021
      %1063 = vmatprep.subr.bf16.mxu0 0
      %1064 = vmatpush1.bf16.msra.mxu0 %v1022
      %1065 = vmatprep.subr.bf16.mxu0 0
      %1066 = vmatpush1.bf16.msra.mxu0 %v1023
      %1067 = vmatprep.subr.bf16.mxu0 0
      %1068 = vmatpush1.bf16.msra.mxu0 %v1024
      %1069 = vmatprep.subr.bf16.mxu0 0
      %1070 = vmatpush1.bf16.msra.mxu0 %v1025
      %1071 = vmatprep.subr.bf16.mxu0 0
      %1072 = vmatpush1.bf16.msra.mxu0 %v1026
      %1073 = vmatprep.subr.bf16.mxu0 0
      %1074 = vmatpush1.bf16.msra.mxu0 %v1027
      %1075 = vmatprep.subr.bf16.mxu0 0
      %1076 = vmatpush1.bf16.msra.mxu0 %v1028
      %1077 = vmatprep.mubr.bf16.mxu0 %v946
      %1078 = vmatmul.mubr.bf16.gmra.mrb[0].mxu0 %v945
      %v1079 = vpop.f32.mrb[0].mxu0
      %v1080 = vadd.f32 0.0, %v1079
      %v1081 = vpop.f32.mrb[0].mxu0
      %v1082 = vpop.f32.mrb[0].mxu0
      %v1083 = vadd.f32 0.0, %v1082
      %v1084 = vpop.f32.mrb[0].mxu0
      %1085 = vdwg.mxu0
      %v1086 = vadd.f32 %v814, %v1080
      %v1087 = vadd.f32 %v817, %v1083
      %1088 = vst [vmem:[#allocation3] sm:$0xf] 0
      %1089 = vst [vmem:[#allocation3 + $0x4] sm:$0xf] 0
      %1090 = vst [vmem:[#allocation3 + $0x8] sm:$0xf] 0
      %1091 = vst [vmem:[#allocation3 + $0xc] sm:$0xf] 0
      %s1092 = scalar_lea.vmem [#allocation2], 2
      %v1093 = vld [vmem:[%s1092] sm:$0x3]
      %v1094 = vld [vmem:[%s1092 + $0x2] sm:$0x3]
      %v1095 = vld [vmem:[%s1092 + $0x4] sm:$0x3]
      %v1097 = vshrl.u32 %v1093, 16
      %v1099 = vrot.slane %v1097, 7
      %v1100 = vshll.u32 %v1093, 16
      %v1102 = vor.u32 %v1099, %v1100
      %v1104 = vshrl.u32 %v1094, 16
      %v1106 = vrot.slane %v1104, 7
      %v1107 = vshll.u32 %v1094, 16
      %v1109 = vor.u32 %v1106, %v1107
      %v1111 = vshrl.u32 %v1095, 16
      %v1113 = vrot.slane %v1111, 7
      %v1114 = vshll.u32 %v1095, 16
      %v1116 = vor.u32 %v1113, %v1114
      %v1120 = vld [vmem:[#allocation3] sm:$0x3]
      %v1121 = vsel %vm313, %v1102, %v1120
      %1122 = vst [vmem:[#allocation3] sm:$0x3] %v1121
      %v1123 = vld [vmem:[#allocation3 + $0x4] sm:$0x3]
      %v1124 = vsel %vm313, %v1109, %v1123
      %1125 = vst [vmem:[#allocation3 + $0x4] sm:$0x3] %v1124
      %v1126 = vld [vmem:[#allocation3 + $0x8] sm:$0x3]
      %v1127 = vsel %vm313, %v1116, %v1126
      %1128 = vst [vmem:[#allocation3 + $0x8] sm:$0x3] %v1127
      %v1129 = vld [vmem:[%s1092] sm:$0x3]
      %v1130 = vld [vmem:[%s1092 + $0x2] sm:$0x3]
      %v1131 = vld [vmem:[%s1092 + $0x4] sm:$0x3]
      %1132 = vst [vmem:[#allocation3 + $0x2] sm:$0x3] %v1129
      %1133 = vst [vmem:[#allocation3 + $0x6] sm:$0x3] %v1130
      %1134 = vst [vmem:[#allocation3 + $0xa] sm:$0x3] %v1131
      %v1135 = vld [vmem:[#allocation3] sm:$0xf]
      %v1136 = vld [vmem:[#allocation3 + $0x4] sm:$0xf]
      %v1137 = vld [vmem:[#allocation3 + $0x8] sm:$0xf]
      %v1138 = vld [vmem:[#allocation3 + $0xc] sm:$0xf]
      %s1139 = scalar_lea.vmem %s3, 384
      %v1140 = vld [vmem:[%s1139] sm:$0xf]
      %v1141 = vld [vmem:[%s1139 + $0x4] sm:$0xf]
      %v1142 = vld [vmem:[%s1139 + $0x8] sm:$0xf]
      %v1143 = vld [vmem:[%s1139 + $0xc] sm:$0xf]
      %v1144 = vld [vmem:[%s1139 + $0x10] sm:$0xf]
      %v1145 = vld [vmem:[%s1139 + $0x14] sm:$0xf]
      %v1146 = vld [vmem:[%s1139 + $0x18] sm:$0xf]
      %v1147 = vld [vmem:[%s1139 + $0x1c] sm:$0xf]
      %v1148 = vld [vmem:[%s1139 + $0x20] sm:$0xf]
      %v1149 = vld [vmem:[%s1139 + $0x24] sm:$0xf]
      %v1150 = vld [vmem:[%s1139 + $0x28] sm:$0xf]
      %v1151 = vld [vmem:[%s1139 + $0x2c] sm:$0xf]
      %v1152 = vld [vmem:[%s1139 + $0x30] sm:$0xf]
      %v1153 = vld [vmem:[%s1139 + $0x34] sm:$0xf]
      %v1154 = vld [vmem:[%s1139 + $0x38] sm:$0xf]
      %v1155 = vld [vmem:[%s1139 + $0x3c] sm:$0xf]
      %v1156 = vld [vmem:[%s1139 + $0x40] sm:$0xf]
      %v1157 = vld [vmem:[%s1139 + $0x44] sm:$0xf]
      %v1158 = vld [vmem:[%s1139 + $0x48] sm:$0xf]
      %v1159 = vld [vmem:[%s1139 + $0x4c] sm:$0xf]
      %v1160 = vld [vmem:[%s1139 + $0x50] sm:$0xf]
      %v1161 = vld [vmem:[%s1139 + $0x54] sm:$0xf]
      %v1162 = vld [vmem:[%s1139 + $0x58] sm:$0xf]
      %v1163 = vld [vmem:[%s1139 + $0x5c] sm:$0xf]
      %v1164 = vld [vmem:[%s1139 + $0x60] sm:$0xf]
      %v1165 = vld [vmem:[%s1139 + $0x64] sm:$0xf]
      %v1166 = vld [vmem:[%s1139 + $0x68] sm:$0xf]
      %v1167 = vld [vmem:[%s1139 + $0x6c] sm:$0xf]
      %v1168 = vld [vmem:[%s1139 + $0x70] sm:$0xf]
      %v1169 = vld [vmem:[%s1139 + $0x74] sm:$0xf]
      %v1170 = vld [vmem:[%s1139 + $0x78] sm:$0xf]
      %v1171 = vld [vmem:[%s1139 + $0x7c] sm:$0xf]
      %v1176 = vcombine.low %v1135, %v1136
      %v1177 = vcombine.low %v1137, %v1138
      %v1179 = vunpack.c.l.s4 1983009808
      %v1180 = vunpack.c.0.s8 %v1179
      %v1181 = vlaneseq
      %v1182 = vshrl.u32 %v1181, 7
      %v1183 = vsub.s32 %v1180, %v1182
      %v1184 = vrot.slane %v1176, %v1183
      %v1186 = vunpack.c.l.s4 1983009808
      %v1187 = vunpack.c.0.s8 %v1186
      %v1188 = vlaneseq
      %v1189 = vshrl.u32 %v1188, 7
      %v1190 = vsub.s32 %v1187, %v1189
      %v1191 = vrot.slane %v1177, %v1190
      %v1192 = vcombine.low %v1184, %v1191
      %v1193 = vcombine.high %v1184, %v1191
      %v1228 = vunpack.c.l.b16 %v1140
      %v1229 = vunpack.c.l.b16 %v1141
      %v1230 = vunpack.c.l.b16 %v1142
      %v1231 = vunpack.c.l.b16 %v1143
      %v1232 = vunpack.c.l.b16 %v1144
      %v1233 = vunpack.c.l.b16 %v1145
      %v1234 = vunpack.c.l.b16 %v1146
      %v1235 = vunpack.c.l.b16 %v1147
      %v1236 = vunpack.c.l.b16 %v1148
      %v1237 = vunpack.c.l.b16 %v1149
      %v1238 = vunpack.c.l.b16 %v1150
      %v1239 = vunpack.c.l.b16 %v1151
      %v1240 = vunpack.c.l.b16 %v1152
      %v1241 = vunpack.c.l.b16 %v1153
      %v1242 = vunpack.c.l.b16 %v1154
      %v1243 = vunpack.c.l.b16 %v1155
      %v1244 = vunpack.c.l.b16 %v1156
      %v1245 = vunpack.c.l.b16 %v1157
      %v1246 = vunpack.c.l.b16 %v1158
      %v1247 = vunpack.c.l.b16 %v1159
      %v1248 = vunpack.c.l.b16 %v1160
      %v1249 = vunpack.c.l.b16 %v1161
      %v1250 = vunpack.c.l.b16 %v1162
      %v1251 = vunpack.c.l.b16 %v1163
      %v1252 = vunpack.c.l.b16 %v1164
      %v1253 = vunpack.c.l.b16 %v1165
      %v1254 = vunpack.c.l.b16 %v1166
      %v1255 = vunpack.c.l.b16 %v1167
      %v1256 = vunpack.c.l.b16 %v1168
      %v1257 = vunpack.c.l.b16 %v1169
      %v1258 = vunpack.c.l.b16 %v1170
      %v1259 = vunpack.c.l.b16 %v1171
      %v1260 = vpack.c.b16 %v1229, %v1228
      %v1261 = vpack.c.b16 %v1231, %v1230
      %v1262 = vpack.c.b16 %v1233, %v1232
      %v1263 = vpack.c.b16 %v1235, %v1234
      %v1264 = vpack.c.b16 %v1237, %v1236
      %v1265 = vpack.c.b16 %v1239, %v1238
      %v1266 = vpack.c.b16 %v1241, %v1240
      %v1267 = vpack.c.b16 %v1243, %v1242
      %v1268 = vpack.c.b16 %v1245, %v1244
      %v1269 = vpack.c.b16 %v1247, %v1246
      %v1270 = vpack.c.b16 %v1249, %v1248
      %v1271 = vpack.c.b16 %v1251, %v1250
      %v1272 = vpack.c.b16 %v1253, %v1252
      %v1273 = vpack.c.b16 %v1255, %v1254
      %v1274 = vpack.c.b16 %v1257, %v1256
      %v1275 = vpack.c.b16 %v1259, %v1258
      %1292 = vmatprep.subr.bf16.mxu0 0
      %1293 = vmatpush1.bf16.msra.mxu0 %v1260
      %1294 = vmatprep.subr.bf16.mxu0 0
      %1295 = vmatpush1.bf16.msra.mxu0 %v1261
      %1296 = vmatprep.subr.bf16.mxu0 0
      %1297 = vmatpush1.bf16.msra.mxu0 %v1262
      %1298 = vmatprep.subr.bf16.mxu0 0
      %1299 = vmatpush1.bf16.msra.mxu0 %v1263
      %1300 = vmatprep.subr.bf16.mxu0 0
      %1301 = vmatpush1.bf16.msra.mxu0 %v1264
      %1302 = vmatprep.subr.bf16.mxu0 0
      %1303 = vmatpush1.bf16.msra.mxu0 %v1265
      %1304 = vmatprep.subr.bf16.mxu0 0
      %1305 = vmatpush1.bf16.msra.mxu0 %v1266
      %1306 = vmatprep.subr.bf16.mxu0 0
      %1307 = vmatpush1.bf16.msra.mxu0 %v1267
      %1308 = vmatprep.subr.bf16.mxu0 0
      %1309 = vmatpush1.bf16.msra.mxu0 %v1268
      %1310 = vmatprep.subr.bf16.mxu0 0
      %1311 = vmatpush1.bf16.msra.mxu0 %v1269
      %1312 = vmatprep.subr.bf16.mxu0 0
      %1313 = vmatpush1.bf16.msra.mxu0 %v1270
      %1314 = vmatprep.subr.bf16.mxu0 0
      %1315 = vmatpush1.bf16.msra.mxu0 %v1271
      %1316 = vmatprep.subr.bf16.mxu0 0
      %1317 = vmatpush1.bf16.msra.mxu0 %v1272
      %1318 = vmatprep.subr.bf16.mxu0 0
      %1319 = vmatpush1.bf16.msra.mxu0 %v1273
      %1320 = vmatprep.subr.bf16.mxu0 0
      %1321 = vmatpush1.bf16.msra.mxu0 %v1274
      %1322 = vmatprep.subr.bf16.mxu0 0
      %1323 = vmatpush1.bf16.msra.mxu0 %v1275
      %1324 = vmatprep.mubr.bf16.mxu0 %v1193
      %1325 = vmatmul.mubr.bf16.gmra.mrb[0].mxu0 %v1192
      %v1326 = vpop.f32.mrb[0].mxu0
      %v1327 = vadd.f32 0.0, %v1326
      %v1328 = vpop.f32.mrb[0].mxu0
      %v1329 = vpop.f32.mrb[0].mxu0
      %v1330 = vadd.f32 0.0, %v1329
      %v1331 = vpop.f32.mrb[0].mxu0
      %1332 = vdwg.mxu0
      %v1333 = vadd.f32 %v1086, %v1327
      %v1334 = vadd.f32 %v1087, %v1330
      %1335 = vst [vmem:[#allocation3] sm:$0xf] 0
      %1336 = vst [vmem:[#allocation3 + $0x4] sm:$0xf] 0
      %1337 = vst [vmem:[#allocation3 + $0x8] sm:$0xf] 0
      %1338 = vst [vmem:[#allocation3 + $0xc] sm:$0xf] 0
      %v1339 = vld [vmem:[%s1092] sm:$0x3]
      %v1340 = vld [vmem:[%s1092 + $0x2] sm:$0x3]
      %v1341 = vld [vmem:[%s1092 + $0x4] sm:$0x3]
      %v1343 = vshrl.u32 %v1339, 16
      %v1345 = vrot.slane %v1343, 6
      %v1346 = vshll.u32 %v1339, 16
      %v1348 = vrot.slane %v1346, 7
      %v1349 = vor.u32 %v1345, %v1348
      %v1350 = vrot.slane %v1349, 2
      %v1352 = vshrl.u32 %v1340, 16
      %v1354 = vrot.slane %v1352, 6
      %v1355 = vshll.u32 %v1340, 16
      %v1357 = vrot.slane %v1355, 7
      %v1358 = vor.u32 %v1354, %v1357
      %v1359 = vrot.slane %v1358, 2
      %v1361 = vshrl.u32 %v1341, 16
      %v1363 = vrot.slane %v1361, 6
      %v1364 = vshll.u32 %v1341, 16
      %v1366 = vrot.slane %v1364, 7
      %v1367 = vor.u32 %v1363, %v1366
      %v1368 = vrot.slane %v1367, 2
      %v1372 = vld [vmem:[#allocation3] sm:$0x3]
      %v1373 = vsel %vm403, %v1350, %v1372
      %1374 = vst [vmem:[#allocation3] sm:$0x3] %v1373
      %v1375 = vld [vmem:[#allocation3 + $0x4] sm:$0x3]
      %v1376 = vsel %vm403, %v1359, %v1375
      %1377 = vst [vmem:[#allocation3 + $0x4] sm:$0x3] %v1376
      %v1378 = vld [vmem:[#allocation3 + $0x8] sm:$0x3]
      %v1379 = vsel %vm403, %v1368, %v1378
      %1380 = vst [vmem:[#allocation3 + $0x8] sm:$0x3] %v1379
      %v1381 = vld [vmem:[#allocation3] sm:$0xf]
      %v1382 = vld [vmem:[#allocation3 + $0x4] sm:$0xf]
      %v1383 = vld [vmem:[#allocation3 + $0x8] sm:$0xf]
      %v1384 = vld [vmem:[#allocation3 + $0xc] sm:$0xf]
      %s1385 = scalar_lea.vmem %s3, 512
      %v1386 = vld [vmem:[%s1385] sm:$0xf]
      %v1387 = vld [vmem:[%s1385 + $0x4] sm:$0xf]
      %v1388 = vld [vmem:[%s1385 + $0x8] sm:$0xf]
      %v1389 = vld [vmem:[%s1385 + $0xc] sm:$0xf]
      %v1390 = vld [vmem:[%s1385 + $0x10] sm:$0xf]
      %v1391 = vld [vmem:[%s1385 + $0x14] sm:$0xf]
      %v1392 = vld [vmem:[%s1385 + $0x18] sm:$0xf]
      %v1393 = vld [vmem:[%s1385 + $0x1c] sm:$0xf]
      %v1394 = vld [vmem:[%s1385 + $0x20] sm:$0xf]
      %v1395 = vld [vmem:[%s1385 + $0x24] sm:$0xf]
      %v1396 = vld [vmem:[%s1385 + $0x28] sm:$0xf]
      %v1397 = vld [vmem:[%s1385 + $0x2c] sm:$0xf]
      %v1398 = vld [vmem:[%s1385 + $0x30] sm:$0xf]
      %v1399 = vld [vmem:[%s1385 + $0x34] sm:$0xf]
      %v1400 = vld [vmem:[%s1385 + $0x38] sm:$0xf]
      %v1401 = vld [vmem:[%s1385 + $0x3c] sm:$0xf]
      %v1402 = vld [vmem:[%s1385 + $0x40] sm:$0xf]
      %v1403 = vld [vmem:[%s1385 + $0x44] sm:$0xf]
      %v1404 = vld [vmem:[%s1385 + $0x48] sm:$0xf]
      %v1405 = vld [vmem:[%s1385 + $0x4c] sm:$0xf]
      %v1406 = vld [vmem:[%s1385 + $0x50] sm:$0xf]
      %v1407 = vld [vmem:[%s1385 + $0x54] sm:$0xf]
      %v1408 = vld [vmem:[%s1385 + $0x58] sm:$0xf]
      %v1409 = vld [vmem:[%s1385 + $0x5c] sm:$0xf]
      %v1410 = vld [vmem:[%s1385 + $0x60] sm:$0xf]
      %v1411 = vld [vmem:[%s1385 + $0x64] sm:$0xf]
      %v1412 = vld [vmem:[%s1385 + $0x68] sm:$0xf]
      %v1413 = vld [vmem:[%s1385 + $0x6c] sm:$0xf]
      %v1414 = vld [vmem:[%s1385 + $0x70] sm:$0xf]
      %v1415 = vld [vmem:[%s1385 + $0x74] sm:$0xf]
      %v1416 = vld [vmem:[%s1385 + $0x78] sm:$0xf]
      %v1417 = vld [vmem:[%s1385 + $0x7c] sm:$0xf]
      %v1422 = vcombine.low %v1381, %v1382
      %v1423 = vcombine.low %v1383, %v1384
      %v1425 = vunpack.c.l.s4 1983009808
      %v1426 = vunpack.c.0.s8 %v1425
      %v1427 = vlaneseq
      %v1428 = vshrl.u32 %v1427, 7
      %v1429 = vsub.s32 %v1426, %v1428
      %v1430 = vrot.slane %v1422, %v1429
      %v1432 = vunpack.c.l.s4 1983009808
      %v1433 = vunpack.c.0.s8 %v1432
      %v1434 = vlaneseq
      %v1435 = vshrl.u32 %v1434, 7
      %v1436 = vsub.s32 %v1433, %v1435
      %v1437 = vrot.slane %v1423, %v1436
      %v1438 = vcombine.low %v1430, %v1437
      %v1439 = vcombine.high %v1430, %v1437
      %v1474 = vunpack.c.l.b16 %v1386
      %v1475 = vunpack.c.l.b16 %v1387
      %v1476 = vunpack.c.l.b16 %v1388
      %v1477 = vunpack.c.l.b16 %v1389
      %v1478 = vunpack.c.l.b16 %v1390
      %v1479 = vunpack.c.l.b16 %v1391
      %v1480 = vunpack.c.l.b16 %v1392
      %v1481 = vunpack.c.l.b16 %v1393
      %v1482 = vunpack.c.l.b16 %v1394
      %v1483 = vunpack.c.l.b16 %v1395
      %v1484 = vunpack.c.l.b16 %v1396
      %v1485 = vunpack.c.l.b16 %v1397
      %v1486 = vunpack.c.l.b16 %v1398
      %v1487 = vunpack.c.l.b16 %v1399
      %v1488 = vunpack.c.l.b16 %v1400
      %v1489 = vunpack.c.l.b16 %v1401
      %v1490 = vunpack.c.l.b16 %v1402
      %v1491 = vunpack.c.l.b16 %v1403
      %v1492 = vunpack.c.l.b16 %v1404
      %v1493 = vunpack.c.l.b16 %v1405
      %v1494 = vunpack.c.l.b16 %v1406
      %v1495 = vunpack.c.l.b16 %v1407
      %v1496 = vunpack.c.l.b16 %v1408
      %v1497 = vunpack.c.l.b16 %v1409
      %v1498 = vunpack.c.l.b16 %v1410
      %v1499 = vunpack.c.l.b16 %v1411
      %v1500 = vunpack.c.l.b16 %v1412
      %v1501 = vunpack.c.l.b16 %v1413
      %v1502 = vunpack.c.l.b16 %v1414
      %v1503 = vunpack.c.l.b16 %v1415
      %v1504 = vunpack.c.l.b16 %v1416
      %v1505 = vunpack.c.l.b16 %v1417
      %v1506 = vpack.c.b16 %v1475, %v1474
      %v1507 = vpack.c.b16 %v1477, %v1476
      %v1508 = vpack.c.b16 %v1479, %v1478
      %v1509 = vpack.c.b16 %v1481, %v1480
      %v1510 = vpack.c.b16 %v1483, %v1482
      %v1511 = vpack.c.b16 %v1485, %v1484
      %v1512 = vpack.c.b16 %v1487, %v1486
      %v1513 = vpack.c.b16 %v1489, %v1488
      %v1514 = vpack.c.b16 %v1491, %v1490
      %v1515 = vpack.c.b16 %v1493, %v1492
      %v1516 = vpack.c.b16 %v1495, %v1494
      %v1517 = vpack.c.b16 %v1497, %v1496
      %v1518 = vpack.c.b16 %v1499, %v1498
      %v1519 = vpack.c.b16 %v1501, %v1500
      %v1520 = vpack.c.b16 %v1503, %v1502
      %v1521 = vpack.c.b16 %v1505, %v1504
      %1538 = vmatprep.subr.bf16.mxu0 0
      %1539 = vmatpush1.bf16.msra.mxu0 %v1506
      %1540 = vmatprep.subr.bf16.mxu0 0
      %1541 = vmatpush1.bf16.msra.mxu0 %v1507
      %1542 = vmatprep.subr.bf16.mxu0 0
      %1543 = vmatpush1.bf16.msra.mxu0 %v1508
      %1544 = vmatprep.subr.bf16.mxu0 0
      %1545 = vmatpush1.bf16.msra.mxu0 %v1509
      %1546 = vmatprep.subr.bf16.mxu0 0
      %1547 = vmatpush1.bf16.msra.mxu0 %v1510
      %1548 = vmatprep.subr.bf16.mxu0 0
      %1549 = vmatpush1.bf16.msra.mxu0 %v1511
      %1550 = vmatprep.subr.bf16.mxu0 0
      %1551 = vmatpush1.bf16.msra.mxu0 %v1512
      %1552 = vmatprep.subr.bf16.mxu0 0
      %1553 = vmatpush1.bf16.msra.mxu0 %v1513
      %1554 = vmatprep.subr.bf16.mxu0 0
      %1555 = vmatpush1.bf16.msra.mxu0 %v1514
      %1556 = vmatprep.subr.bf16.mxu0 0
      %1557 = vmatpush1.bf16.msra.mxu0 %v1515
      %1558 = vmatprep.subr.bf16.mxu0 0
      %1559 = vmatpush1.bf16.msra.mxu0 %v1516
      %1560 = vmatprep.subr.bf16.mxu0 0
      %1561 = vmatpush1.bf16.msra.mxu0 %v1517
      %1562 = vmatprep.subr.bf16.mxu0 0
      %1563 = vmatpush1.bf16.msra.mxu0 %v1518
      %1564 = vmatprep.subr.bf16.mxu0 0
      %1565 = vmatpush1.bf16.msra.mxu0 %v1519
      %1566 = vmatprep.subr.bf16.mxu0 0
      %1567 = vmatpush1.bf16.msra.mxu0 %v1520
      %1568 = vmatprep.subr.bf16.mxu0 0
      %1569 = vmatpush1.bf16.msra.mxu0 %v1521
      %1570 = vmatprep.mubr.bf16.mxu0 %v1439
      %1571 = vmatmul.mubr.bf16.gmra.mrb[0].mxu0 %v1438
      %v1572 = vpop.f32.mrb[0].mxu0
      %v1573 = vadd.f32 0.0, %v1572
      %v1574 = vpop.f32.mrb[0].mxu0
      %v1575 = vpop.f32.mrb[0].mxu0
      %v1576 = vadd.f32 0.0, %v1575
      %v1577 = vpop.f32.mrb[0].mxu0
      %1578 = vdwg.mxu0
      %v1579 = vadd.f32 %v1333, %v1573
      %v1580 = vadd.f32 %v1334, %v1576
      %v1581 = vadd.f32 %v1579, %v1580
      %v1582 = vrot.slane %v1581, 4
      %v1583 = vadd.f32 %v1581, %v1582
      %v1584 = vrot.slane %v1583, 2
      %v1585 = vadd.f32 %v1583, %v1584
      %v1586 = vrot.slane %v1585, 1
      %v1587 = vadd.f32 %v1585, %v1586
      %1588 = vst [vmem:[%s235] sm:$0x1] %v1587
      %v1589 = vmul.f32 %v1579, %v1579
      %v1590 = vmul.f32 %v1580, %v1580
      %v1591 = vadd.f32 %v1589, %v1590
      %v1592 = vrot.slane %v1591, 4
      %v1593 = vadd.f32 %v1591, %v1592
      %v1594 = vrot.slane %v1593, 2
      %v1595 = vadd.f32 %v1593, %v1594
      %v1596 = vrot.slane %v1595, 1
      %v1597 = vadd.f32 %v1595, %v1596
      %1598 = vst [vmem:[%s235 + $0x1] sm:$0x1] %v1597
      %v1601 = vcombine.high %v1579, %v1579
      %v1602 = vcombine.high %v1580, %v1580
      %v1605 = vpack.c.bf16 %v1579, %v1579
      %v1606 = vpack.c.bf16 %v1601, %v1601
      %v1607 = vpack.c.bf16 %v1580, %v1580
      %v1608 = vpack.c.bf16 %v1602, %v1602
      %1609 = vst [vmem:[%s231] sm:$0x3] %v1605
      %1610 = vst [vmem:[%s231 + $0x2] sm:$0x3] %v1606
      %1611 = vst [vmem:[%s231 + $0x4] sm:$0x3] %v1607
      %1612 = vst [vmem:[%s231 + $0x6] sm:$0x3] %v1608
      %p1613 = scmp.lt.s32.totalorder %s17, 1
      %s1614 = scalar_select %p1613, %s17, 1
      %s1615 = smul.addr %s1614, 4
      %s1616 = smul.addr %s1615, 2
      %s1617 = scalar_lea.vmem %s4, %s1616
      %p1618 = scmp.lt.s32.totalorder %s17, 1
      %s1619 = scalar_select %p1618, %s17, 1
      %s1620 = smul.addr %s1619, 2
      %s1621 = scalar_lea.vmem %s5, %s1620
      // Predicated region
      $region37: #{resnet_forward.27} parent=35 // pred_check
        %p1622 = pneg %p124
      $region38: #{resnet_forward.27} parent=35 // pred_check_branch
        %1624 = sbr.rel (%p1622) target = $region40
      $region39: #{resnet_forward.27} parent=35 // pred_region
        _
      $region40: #{resnet_forward.27} parent=35 // pred_fallthru
        _
      // Predicated region
      $region41: #{resnet_forward.27} parent=35 // pred_check
        %p1625 = pneg %p150
      $region42: #{resnet_forward.27} parent=35 // pred_check_branch
        %1627 = sbr.rel (%p1625) target = $region44
      $region43: #{resnet_forward.27} parent=35 // pred_region
        _
      $region44: #{resnet_forward.27} parent=35 // pred_fallthru
        _
    $region36: #{resnet_forward.27} parent=5 // pred_fallthru
      _
    %p1628 = scmp.le.s32.totalorder 2, %s12
    // Predicated region
    $region45: #{resnet_forward.27} parent=5 // pred_check
      %p1629 = pneg %p1628
    $region46: #{resnet_forward.27} parent=5 // pred_check_branch
      %1631 = sbr.rel (%p1629) target = $region48
    $region47: #{resnet_forward.27} parent=5 // pred_region
      %s1632 = ssub.s32 %s12, 2
      // Predicated region
      $region49: #{resnet_forward.27} parent=47 // pred_check
        %p1633 = pneg %p130
      $region50: #{resnet_forward.27} parent=47 // pred_check_branch
        %1635 = sbr.rel (%p1633) target = $region52
      $region51: #{resnet_forward.27} parent=47 // pred_region
        %p1636 = scmp.lt.s32.totalorder %s18, 1
        %s1637 = scalar_select %p1636, %s18, 1
        %s1638 = smul.addr %s1637, 4
        %s1639 = smul.addr %s1638, 2
        %s1640 = scalar_lea.vmem %s4, %s1639
      $region52: #{resnet_forward.27} parent=47 // pred_fallthru
        _
      // Predicated region
      $region53: #{resnet_forward.27} parent=47 // pred_check
        %p1641 = pneg %p156
      $region54: #{resnet_forward.27} parent=47 // pred_check_branch
        %1643 = sbr.rel (%p1641) target = $region56
      $region55: #{resnet_forward.27} parent=47 // pred_region
        %p1644 = scmp.lt.s32.totalorder %s18, 1
        %s1645 = scalar_select %p1644, %s18, 1
        %s1646 = smul.addr %s1645, 2
        %s1647 = scalar_lea.vmem %s5, %s1646
      $region56: #{resnet_forward.27} parent=47 // pred_fallthru
        _
    $region48: #{resnet_forward.27} parent=5 // pred_fallthru
      _
  $region6: #{resnet_forward.27} parent=0 // loop_footer
    %s16 = sadd.s32 1, %s12
  $region7: #{resnet_forward.27} parent=0 // loop_footer_branch
    %11 = sbr.rel target = $region3
  $region8: #{resnet_forward.27} parent=0 // loop_exit
    _

// kernel: resnet_forward.30
$region0: #{resnet_forward.30}
  #allocation0 [shape = 'u32[]', space=smem, size = 0x4, offset = 0x4, fixed_abs, tag = 'smem constant byte address 0x4 - core index']
  #allocation1 [shape = 'u32[144,128]{1,0:T(1,128)}', space=vmem, size = 0x12000, scoped, tag = 'internal scratch']
  #allocation2 [shape = 'bf16[4,4,128]{2,1,0:T(4,128)(2,1)}', space=vmem, size = 0x1000, scoped, tag = 'scratch operand']
  #allocation3 [shape = 'bf16[4,4,256]{2,1,0:T(4,128)(2,1)}', space=vmem, size = 0x2000, scoped, tag = 'scratch operand']
  %s0 = inlined_call_operand.vmem [shape: bf16[2,4,4,128], index: 0, kind: input, shape index: {}]
  %s1 = inlined_call_operand.vmem [shape: f32[1,128], index: 1, kind: input, shape index: {}]
  %s2 = inlined_call_operand.vmem [shape: f32[1,128], index: 2, kind: input, shape index: {}]
  %s3 = inlined_call_operand.vmem [shape: bf16[5,256,128], index: 3, kind: input, shape index: {}]
  %s4 = inlined_call_operand.vmem [shape: bf16[2,4,4,128], index: 4, kind: output, shape index: {0}]
  %s5 = inlined_call_operand.vmem [shape: f32[2,2,128], index: 5, kind: output, shape index: {1}]
  %6 = xla_tuple %s4, %s5
  %s7 = sld [smem:[#allocation0]]
  $region57: #{resnet_forward.30} parent=0
    _
  %s9 = ssub.s32 1, %s7
  %s10 = scalar_select 0, %s9, %s7
  loop: start=0, step=1, limit=4
  $region2: #{resnet_forward.30} parent=0 // loop_pre_header
    _
  $region3: #{resnet_forward.30} parent=0 // loop_header
    %s12 = sphi 0, %s16
    %p13 = scmp.ge.s32.totalorder %s12, 4
    %s22 = sphi 0, %s24
    %s25 = sphi 0, %s22
    %s26 = sphi 0, %s25
    %s42 = sphi 0, %s26
    %s46 = sphi 0, %s46
    %s48 = sphi 0, %s46
    %s49 = sphi 0, %s48
    %s63 = sphi 0, %s49
    %s67 = sphi 0, %s67
    %s69 = sphi 0, %s67
    %s70 = sphi 0, %s69
    %s84 = sphi 0, %s70
    %s88 = sphi 0, %s88
    %s90 = sphi 0, %s88
    %s91 = sphi 0, %s90
    %s105 = sphi 0, %s91
    %s111 = sphi 0, %s113
    %s114 = sphi 0, %s111
    %s115 = sphi 0, %s114
    %s131 = sphi 0, %s115
    %s137 = sphi 0, %s139
    %s140 = sphi 0, %s137
    %s141 = sphi 0, %s140
    %s157 = sphi 0, %s141
  $region4: #{resnet_forward.30} parent=0 // loop_header_branch
    %15 = sbr.rel (%p13) target = $region8
  $region5: #{resnet_forward.30} parent=0 // loop_body
    %s17 = ssub.s32 %s12, 1
    %s18 = ssub.s32 %s12, 2
    %s19 = sadd.s32 %s12, 1
    %s20 = ssub.s32 %s12, %s19
    %p21 = scmp.eq.s32.totalorder %s20, 0
    %s23 = sadd.s32 %s22, 1
    %s24 = scalar_select %p21, %s22, %s23
    %p27 = pneg %p21
    %p28 = scmp.eq.s32.totalorder %s12, 1
    %p29 = por %p27, %p28
    %p30 = scmp.ne.s32.totalorder %s22, %s25
    %p31 = scmp.eq.s32.totalorder %s12, 0
    %p32 = por %p30, %p31
    %p33 = scmp.ne.s32.totalorder %s22, %s25
    %p34 = scmp.eq.s32.totalorder %s17, 1
    %p35 = por %p33, %p34
    %p36 = scmp.ne.s32.totalorder %s25, %s26
    %p37 = scmp.eq.s32.totalorder %s17, 0
    %p38 = por %p36, %p37
    %p39 = scmp.ne.s32.totalorder %s25, %s26
    %p40 = scmp.eq.s32.totalorder %s18, 1
    %p41 = por %p39, %p40
    %p43 = scmp.ne.s32.totalorder %s26, %s42
    %p44 = scmp.eq.s32.totalorder %s18, 0
    %p45 = por %p43, %p44
    %s47 = sadd.s32 %s46, 1
    %p50 = scmp.eq.s32.totalorder %s12, 1
    %p51 = scmp.ne.s32.totalorder %s46, %s48
    %p52 = scmp.eq.s32.totalorder %s12, 0
    %p53 = por %p51, %p52
    %p54 = scmp.ne.s32.totalorder %s46, %s48
    %p55 = scmp.eq.s32.totalorder %s17, 1
    %p56 = por %p54, %p55
    %p57 = scmp.ne.s32.totalorder %s48, %s49
    %p58 = scmp.eq.s32.totalorder %s17, 0
    %p59 = por %p57, %p58
    %p60 = scmp.ne.s32.totalorder %s48, %s49
    %p61 = scmp.eq.s32.totalorder %s18, 1
    %p62 = por %p60, %p61
    %p64 = scmp.ne.s32.totalorder %s49, %s63
    %p65 = scmp.eq.s32.totalorder %s18, 0
    %p66 = por %p64, %p65
    %s68 = sadd.s32 %s67, 1
    %p71 = scmp.eq.s32.totalorder %s12, 1
    %p72 = scmp.ne.s32.totalorder %s67, %s69
    %p73 = scmp.eq.s32.totalorder %s12, 0
    %p74 = por %p72, %p73
    %p75 = scmp.ne.s32.totalorder %s67, %s69
    %p76 = scmp.eq.s32.totalorder %s17, 1
    %p77 = por %p75, %p76
    %p78 = scmp.ne.s32.totalorder %s69, %s70
    %p79 = scmp.eq.s32.totalorder %s17, 0
    %p80 = por %p78, %p79
    %p81 = scmp.ne.s32.totalorder %s69, %s70
    %p82 = scmp.eq.s32.totalorder %s18, 1
    %p83 = por %p81, %p82
    %p85 = scmp.ne.s32.totalorder %s70, %s84
    %p86 = scmp.eq.s32.totalorder %s18, 0
    %p87 = por %p85, %p86
    %s89 = sadd.s32 %s88, 1
    %p92 = scmp.eq.s32.totalorder %s12, 1
    %p93 = scmp.ne.s32.totalorder %s88, %s90
    %p94 = scmp.eq.s32.totalorder %s12, 0
    %p95 = por %p93, %p94
    %p96 = scmp.ne.s32.totalorder %s88, %s90
    %p97 = scmp.eq.s32.totalorder %s17, 1
    %p98 = por %p96, %p97
    %p99 = scmp.ne.s32.totalorder %s90, %s91
    %p100 = scmp.eq.s32.totalorder %s17, 0
    %p101 = por %p99, %p100
    %p102 = scmp.ne.s32.totalorder %s90, %s91
    %p103 = scmp.eq.s32.totalorder %s18, 1
    %p104 = por %p102, %p103
    %p106 = scmp.ne.s32.totalorder %s91, %s105
    %p107 = scmp.eq.s32.totalorder %s18, 0
    %p108 = por %p106, %p107
    %s109 = ssub.s32 %s12, %s19
    %p110 = scmp.eq.s32.totalorder %s109, 0
    %s112 = sadd.s32 %s111, 1
    %s113 = scalar_select %p110, %s111, %s112
    %p116 = pneg %p110
    %p117 = scmp.eq.s32.totalorder %s12, 1
    %p118 = por %p116, %p117
    %p119 = scmp.ne.s32.totalorder %s111, %s114
    %p120 = scmp.eq.s32.totalorder %s12, 0
    %p121 = por %p119, %p120
    %p122 = scmp.ne.s32.totalorder %s111, %s114
    %p123 = scmp.eq.s32.totalorder %s17, 1
    %p124 = por %p122, %p123
    %p125 = scmp.ne.s32.totalorder %s114, %s115
    %p126 = scmp.eq.s32.totalorder %s17, 0
    %p127 = por %p125, %p126
    %p128 = scmp.ne.s32.totalorder %s114, %s115
    %p129 = scmp.eq.s32.totalorder %s18, 1
    %p130 = por %p128, %p129
    %p132 = scmp.ne.s32.totalorder %s115, %s131
    %p133 = scmp.eq.s32.totalorder %s18, 0
    %p134 = por %p132, %p133
    %s135 = ssub.s32 %s12, %s19
    %p136 = scmp.eq.s32.totalorder %s135, 0
    %s138 = sadd.s32 %s137, 1
    %s139 = scalar_select %p136, %s137, %s138
    %p142 = pneg %p136
    %p143 = scmp.eq.s32.totalorder %s12, 1
    %p144 = por %p142, %p143
    %p145 = scmp.ne.s32.totalorder %s137, %s140
    %p146 = scmp.eq.s32.totalorder %s12, 0
    %p147 = por %p145, %p146
    %p148 = scmp.ne.s32.totalorder %s137, %s140
    %p149 = scmp.eq.s32.totalorder %s17, 1
    %p150 = por %p148, %p149
    %p151 = scmp.ne.s32.totalorder %s140, %s141
    %p152 = scmp.eq.s32.totalorder %s17, 0
    %p153 = por %p151, %p152
    %p154 = scmp.ne.s32.totalorder %s140, %s141
    %p155 = scmp.eq.s32.totalorder %s18, 1
    %p156 = por %p154, %p155
    %p158 = scmp.ne.s32.totalorder %s141, %s157
    %p159 = scmp.eq.s32.totalorder %s18, 0
    %p160 = por %p158, %p159
    %p161 = scmp.le.s32.totalorder 1, %s12
    %p162 = scmp.lt.s32.totalorder %s12, 3
    %p163 = pnand %p161, %p162
    %p164 = pneg %p163
    // Predicated region
    $region9: #{resnet_forward.30} parent=5 // pred_check
      _
    $region10: #{resnet_forward.30} parent=5 // pred_check_branch
      %166 = sbr.rel (%p163) target = $region12
    $region11: #{resnet_forward.30} parent=5 // pred_region
      %s167 = ssub.s32 %s12, 1
      // Predicated region
      $region13: #{resnet_forward.30} parent=11 // pred_check
        %p168 = pneg %p59
      $region14: #{resnet_forward.30} parent=11 // pred_check_branch
        %170 = sbr.rel (%p168) target = $region16
      $region15: #{resnet_forward.30} parent=11 // pred_region
        _
      $region16: #{resnet_forward.30} parent=11 // pred_fallthru
        _
      // Predicated region
      $region17: #{resnet_forward.30} parent=11 // pred_check
        %p171 = pneg %p80
      $region18: #{resnet_forward.30} parent=11 // pred_check_branch
        %173 = sbr.rel (%p171) target = $region20
      $region19: #{resnet_forward.30} parent=11 // pred_region
        _
      $region20: #{resnet_forward.30} parent=11 // pred_fallthru
        _
      // Predicated region
      $region21: #{resnet_forward.30} parent=11 // pred_check
        %p174 = pneg %p101
      $region22: #{resnet_forward.30} parent=11 // pred_check_branch
        %176 = sbr.rel (%p174) target = $region24
      $region23: #{resnet_forward.30} parent=11 // pred_region
        _
      $region24: #{resnet_forward.30} parent=11 // pred_fallthru
        _
    $region12: #{resnet_forward.30} parent=5 // pred_fallthru
      _
    %p177 = scmp.lt.s32.totalorder %s12, 2
    // Predicated region
    $region25: #{resnet_forward.30} parent=5 // pred_check
      %p178 = pneg %p177
    $region26: #{resnet_forward.30} parent=5 // pred_check_branch
      %180 = sbr.rel (%p178) target = $region28
    $region27: #{resnet_forward.30} parent=5 // pred_region
      // Predicated region
      $region29: #{resnet_forward.30} parent=27 // pred_check
        %p181 = pneg %p32
      $region30: #{resnet_forward.30} parent=27 // pred_check_branch
        %183 = sbr.rel (%p181) target = $region32
      $region31: #{resnet_forward.30} parent=27 // pred_region
        %p184 = scmp.lt.s32.totalorder %s12, 1
        %s185 = scalar_select %p184, %s12, 1
        %s186 = smul.addr %s185, 4
        %s187 = smul.addr %s186, 2
        %s188 = scalar_lea.vmem %s0, %s187
      $region32: #{resnet_forward.30} parent=27 // pred_fallthru
        _
    $region28: #{resnet_forward.30} parent=5 // pred_fallthru
      _
    %p189 = scmp.le.s32.totalorder 1, %s12
    %p190 = scmp.lt.s32.totalorder %s12, 3
    %p191 = pnand %p189, %p190
    %p192 = pneg %p191
    // Predicated region
    $region33: #{resnet_forward.30} parent=5 // pred_check
      _
    $region34: #{resnet_forward.30} parent=5 // pred_check_branch
      %194 = sbr.rel (%p191) target = $region36
    $region35: #{resnet_forward.30} parent=5 // pred_region
      %s195 = ssub.s32 %s12, 1
      %p196 = scmp.lt.s32.totalorder %s17, 1
      %s197 = scalar_select %p196, %s17, 1
      %s198 = smul.addr %s197, 4
      %s199 = smul.addr %s198, 2
      %s200 = scalar_lea.vmem %s0, %s199
      %p201 = pneg %p38
      %p202 = pneg %p35
      %p203 = pneg %p59
      %p204 = pneg %p56
      %p205 = pneg %p80
      %p206 = pneg %p77
      %p207 = pneg %p101
      %p208 = pneg %p98
      %p209 = pneg %p127
      %p210 = pneg %p124
      %p211 = scmp.lt.s32.totalorder %s17, 1
      %s212 = scalar_select %p211, %s17, 1
      %s213 = smul.addr %s212, 4
      %s214 = smul.addr %s213, 2
      %s215 = scalar_lea.vmem %s4, %s214
      %p216 = pneg %p153
      %p217 = pneg %p150
      %p218 = scmp.lt.s32.totalorder %s17, 1
      %s219 = scalar_select %p218, %s17, 1
      %s220 = smul.addr %s219, 2
      %s221 = scalar_lea.vmem %s5, %s220
      %p222 = scmp.lt.s32.totalorder %s17, 1
      %s223 = scalar_select %p222, %s17, 1
      %s224 = smul.addr %s223, 4
      %s225 = smul.addr %s224, 2
      %s226 = scalar_lea.vmem %s0, %s225
      %p227 = scmp.lt.s32.totalorder %s17, 1
      %s228 = scalar_select %p227, %s17, 1
      %s229 = smul.addr %s228, 4
      %s230 = smul.addr %s229, 2
      %s231 = scalar_lea.vmem %s4, %s230
      %p232 = scmp.lt.s32.totalorder %s17, 1
      %s233 = scalar_select %p232, %s17, 1
      %s234 = smul.addr %s233, 2
      %s235 = scalar_lea.vmem %s5, %s234
      %v237 = vld [vmem:[%s226] sm:$0x3]
      %v238 = vld [vmem:[%s226 + $0x2] sm:$0x3]
      %v239 = vld [vmem:[%s226 + $0x4] sm:$0x3]
      %v240 = vld [vmem:[%s226 + $0x6] sm:$0x3]
      %241 = vst [vmem:[#allocation2] sm:$0x3] %v237
      %242 = vst [vmem:[#allocation2 + $0x2] sm:$0x3] %v238
      %243 = vst [vmem:[#allocation2 + $0x4] sm:$0x3] %v239
      %244 = vst [vmem:[#allocation2 + $0x6] sm:$0x3] %v240
      %245 = vst [vmem:[#allocation3] sm:$0xf] 0
      %246 = vst [vmem:[#allocation3 + $0x4] sm:$0xf] 0
      %247 = vst [vmem:[#allocation3 + $0x8] sm:$0xf] 0
      %248 = vst [vmem:[#allocation3 + $0xc] sm:$0xf] 0
      %v249 = vld [vmem:[#allocation2] sm:$0x3]
      %v250 = vld [vmem:[#allocation2 + $0x2] sm:$0x3]
      %v251 = vld [vmem:[#allocation2 + $0x4] sm:$0x3]
      %v253 = vshrl.u32 %v249, 16
      %v255 = vrot.slane %v253, 7
      %v256 = vshll.u32 %v249, 16
      %v258 = vor.u32 %v255, %v256
      %v260 = vshrl.u32 %v250, 16
      %v262 = vrot.slane %v260, 7
      %v263 = vshll.u32 %v250, 16
      %v265 = vor.u32 %v262, %v263
      %v267 = vshrl.u32 %v251, 16
      %v269 = vrot.slane %v267, 7
      %v270 = vshll.u32 %v251, 16
      %v272 = vor.u32 %v269, %v270
      %s276 = scalar_lea.vmem [#allocation3], 4
      %vm277 = vcmask 1041408
      %vm278 = vsmask.f32 7938
      %vm279 = vmand %vm277, %vm278
      %v280 = vld [vmem:[%s276] sm:$0x3]
      %v281 = vsel %vm279, %v258, %v280
      %282 = vst [vmem:[%s276] sm:$0x3] %v281
      %v283 = vld [vmem:[%s276 + $0x4] sm:$0x3]
      %v284 = vsel %vm279, %v265, %v283
      %285 = vst [vmem:[%s276 + $0x4] sm:$0x3] %v284
      %v286 = vld [vmem:[%s276 + $0x8] sm:$0x3]
      %v287 = vsel %vm279, %v272, %v286
      %288 = vst [vmem:[%s276 + $0x8] sm:$0x3] %v287
      %v289 = vld [vmem:[#allocation2] sm:$0x3]
      %v290 = vld [vmem:[#allocation2 + $0x2] sm:$0x3]
      %v291 = vld [vmem:[#allocation2 + $0x4] sm:$0x3]
      %292 = vst [vmem:[%s276 + $0x2] sm:$0x3] %v289
      %293 = vst [vmem:[%s276 + $0x6] sm:$0x3] %v290
      %294 = vst [vmem:[%s276 + $0xa] sm:$0x3] %v291
      %v295 = vld [vmem:[#allocation3] sm:$0xf]
      %v296 = vld [vmem:[#allocation3 + $0x4] sm:$0xf]
      %v297 = vld [vmem:[#allocation3 + $0x8] sm:$0xf]
      %v298 = vld [vmem:[#allocation3 + $0xc] sm:$0xf]
      %v299 = vld [vmem:[%s3] sm:$0xf]
      %v300 = vld [vmem:[%s3 + $0x4] sm:$0xf]
      %v301 = vld [vmem:[%s3 + $0x8] sm:$0xf]
      %v302 = vld [vmem:[%s3 + $0xc] sm:$0xf]
      %v303 = vld [vmem:[%s3 + $0x10] sm:$0xf]
      %v304 = vld [vmem:[%s3 + $0x14] sm:$0xf]
      %v305 = vld [vmem:[%s3 + $0x18] sm:$0xf]
      %v306 = vld [vmem:[%s3 + $0x1c] sm:$0xf]
      %v307 = vld [vmem:[%s3 + $0x20] sm:$0xf]
      %v308 = vld [vmem:[%s3 + $0x24] sm:$0xf]
      %v309 = vld [vmem:[%s3 + $0x28] sm:$0xf]
      %v310 = vld [vmem:[%s3 + $0x2c] sm:$0xf]
      %v311 = vld [vmem:[%s3 + $0x30] sm:$0xf]
      %v312 = vld [vmem:[%s3 + $0x34] sm:$0xf]
      %v313 = vld [vmem:[%s3 + $0x38] sm:$0xf]
      %v314 = vld [vmem:[%s3 + $0x3c] sm:$0xf]
      %v315 = vld [vmem:[%s3 + $0x40] sm:$0xf]
      %v316 = vld [vmem:[%s3 + $0x44] sm:$0xf]
      %v317 = vld [vmem:[%s3 + $0x48] sm:$0xf]
      %v318 = vld [vmem:[%s3 + $0x4c] sm:$0xf]
      %v319 = vld [vmem:[%s3 + $0x50] sm:$0xf]
      %v320 = vld [vmem:[%s3 + $0x54] sm:$0xf]
      %v321 = vld [vmem:[%s3 + $0x58] sm:$0xf]
      %v322 = vld [vmem:[%s3 + $0x5c] sm:$0xf]
      %v323 = vld [vmem:[%s3 + $0x60] sm:$0xf]
      %v324 = vld [vmem:[%s3 + $0x64] sm:$0xf]
      %v325 = vld [vmem:[%s3 + $0x68] sm:$0xf]
      %v326 = vld [vmem:[%s3 + $0x6c] sm:$0xf]
      %v327 = vld [vmem:[%s3 + $0x70] sm:$0xf]
      %v328 = vld [vmem:[%s3 + $0x74] sm:$0xf]
      %v329 = vld [vmem:[%s3 + $0x78] sm:$0xf]
      %v330 = vld [vmem:[%s3 + $0x7c] sm:$0xf]
      %331 = vst [vmem:[#allocation3] sm:$0xf] 0
      %332 = vst [vmem:[#allocation3 + $0x4] sm:$0xf] 0
      %333 = vst [vmem:[#allocation3 + $0x8] sm:$0xf] 0
      %334 = vst [vmem:[#allocation3 + $0xc] sm:$0xf] 0
      %v335 = vld [vmem:[#allocation2] sm:$0x3]
      %v336 = vld [vmem:[#allocation2 + $0x2] sm:$0x3]
      %v337 = vld [vmem:[#allocation2 + $0x4] sm:$0x3]
      %v339 = vshrl.u32 %v335, 16
      %v341 = vrot.slane %v339, 6
      %v342 = vshll.u32 %v335, 16
      %v344 = vrot.slane %v342, 7
      %v345 = vor.u32 %v341, %v344
      %v346 = vrot.slane %v345, 2
      %v348 = vshrl.u32 %v336, 16
      %v350 = vrot.slane %v348, 6
      %v351 = vshll.u32 %v336, 16
      %v353 = vrot.slane %v351, 7
      %v354 = vor.u32 %v350, %v353
      %v355 = vrot.slane %v354, 2
      %v357 = vshrl.u32 %v337, 16
      %v359 = vrot.slane %v357, 6
      %v360 = vshll.u32 %v337, 16
      %v362 = vrot.slane %v360, 7
      %v363 = vor.u32 %v359, %v362
      %v364 = vrot.slane %v363, 2
      %vm368 = vsmask.f32 1280
      %vm369 = vmand %vm277, %vm368
      %v370 = vld [vmem:[%s276] sm:$0x3]
      %v371 = vsel %vm369, %v346, %v370
      %372 = vst [vmem:[%s276] sm:$0x3] %v371
      %v373 = vld [vmem:[%s276 + $0x4] sm:$0x3]
      %v374 = vsel %vm369, %v355, %v373
      %375 = vst [vmem:[%s276 + $0x4] sm:$0x3] %v374
      %v376 = vld [vmem:[%s276 + $0x8] sm:$0x3]
      %v377 = vsel %vm369, %v364, %v376
      %378 = vst [vmem:[%s276 + $0x8] sm:$0x3] %v377
      %v379 = vld [vmem:[#allocation2] sm:$0x3]
      %v380 = vld [vmem:[#allocation2 + $0x2] sm:$0x3]
      %v381 = vld [vmem:[#allocation2 + $0x4] sm:$0x3]
      %v382 = vld [vmem:[#allocation2 + $0x6] sm:$0x3]
      %v384 = vshrl.u32 %v379, 16
      %v386 = vrot.slane %v384, 7
      %v387 = vshll.u32 %v379, 16
      %v389 = vor.u32 %v386, %v387
      %v391 = vshrl.u32 %v380, 16
      %v393 = vrot.slane %v391, 7
      %v394 = vshll.u32 %v380, 16
      %v396 = vor.u32 %v393, %v394
      %v398 = vshrl.u32 %v381, 16
      %v400 = vrot.slane %v398, 7
      %v401 = vshll.u32 %v381, 16
      %v403 = vor.u32 %v400, %v401
      %v405 = vshrl.u32 %v382, 16
      %v407 = vrot.slane %v405, 7
      %v408 = vshll.u32 %v382, 16
      %v410 = vor.u32 %v407, %v408
      %v415 = vld [vmem:[#allocation3 + $0x2] sm:$0x3]
      %v416 = vsel %vm279, %v389, %v415
      %417 = vst [vmem:[#allocation3 + $0x2] sm:$0x3] %v416
      %v418 = vld [vmem:[#allocation3 + $0x6] sm:$0x3]
      %v419 = vsel %vm279, %v396, %v418
      %420 = vst [vmem:[#allocation3 + $0x6] sm:$0x3] %v419
      %v421 = vld [vmem:[#allocation3 + $0xa] sm:$0x3]
      %v422 = vsel %vm279, %v403, %v421
      %423 = vst [vmem:[#allocation3 + $0xa] sm:$0x3] %v422
      %v424 = vld [vmem:[#allocation3 + $0xe] sm:$0x3]
      %v425 = vsel %vm279, %v410, %v424
      %426 = vst [vmem:[#allocation3 + $0xe] sm:$0x3] %v425
      %v427 = vld [vmem:[#allocation3] sm:$0xf]
      %v428 = vld [vmem:[#allocation3 + $0x4] sm:$0xf]
      %v429 = vld [vmem:[#allocation3 + $0x8] sm:$0xf]
      %v430 = vld [vmem:[#allocation3 + $0xc] sm:$0xf]
      %s431 = scalar_lea.vmem %s3, 128
      %v432 = vld [vmem:[%s431] sm:$0xf]
      %v433 = vld [vmem:[%s431 + $0x4] sm:$0xf]
      %v434 = vld [vmem:[%s431 + $0x8] sm:$0xf]
      %v435 = vld [vmem:[%s431 + $0xc] sm:$0xf]
      %v436 = vld [vmem:[%s431 + $0x10] sm:$0xf]
      %v437 = vld [vmem:[%s431 + $0x14] sm:$0xf]
      %v438 = vld [vmem:[%s431 + $0x18] sm:$0xf]
      %v439 = vld [vmem:[%s431 + $0x1c] sm:$0xf]
      %v440 = vld [vmem:[%s431 + $0x20] sm:$0xf]
      %v441 = vld [vmem:[%s431 + $0x24] sm:$0xf]
      %v442 = vld [vmem:[%s431 + $0x28] sm:$0xf]
      %v443 = vld [vmem:[%s431 + $0x2c] sm:$0xf]
      %v444 = vld [vmem:[%s431 + $0x30] sm:$0xf]
      %v445 = vld [vmem:[%s431 + $0x34] sm:$0xf]
      %v446 = vld [vmem:[%s431 + $0x38] sm:$0xf]
      %v447 = vld [vmem:[%s431 + $0x3c] sm:$0xf]
      %v448 = vld [vmem:[%s431 + $0x40] sm:$0xf]
      %v449 = vld [vmem:[%s431 + $0x44] sm:$0xf]
      %v450 = vld [vmem:[%s431 + $0x48] sm:$0xf]
      %v451 = vld [vmem:[%s431 + $0x4c] sm:$0xf]
      %v452 = vld [vmem:[%s431 + $0x50] sm:$0xf]
      %v453 = vld [vmem:[%s431 + $0x54] sm:$0xf]
      %v454 = vld [vmem:[%s431 + $0x58] sm:$0xf]
      %v455 = vld [vmem:[%s431 + $0x5c] sm:$0xf]
      %v456 = vld [vmem:[%s431 + $0x60] sm:$0xf]
      %v457 = vld [vmem:[%s431 + $0x64] sm:$0xf]
      %v458 = vld [vmem:[%s431 + $0x68] sm:$0xf]
      %v459 = vld [vmem:[%s431 + $0x6c] sm:$0xf]
      %v460 = vld [vmem:[%s431 + $0x70] sm:$0xf]
      %v461 = vld [vmem:[%s431 + $0x74] sm:$0xf]
      %v462 = vld [vmem:[%s431 + $0x78] sm:$0xf]
      %v463 = vld [vmem:[%s431 + $0x7c] sm:$0xf]
      %v468 = vcombine.low %v427, %v428
      %v469 = vcombine.low %v429, %v430
      %v471 = vunpack.c.l.s4 1983009808
      %v472 = vunpack.c.0.s8 %v471
      %v473 = vlaneseq
      %v474 = vshrl.u32 %v473, 7
      %v475 = vsub.s32 %v472, %v474
      %v476 = vrot.slane %v468, %v475
      %v478 = vunpack.c.l.s4 1983009808
      %v479 = vunpack.c.0.s8 %v478
      %v480 = vlaneseq
      %v481 = vshrl.u32 %v480, 7
      %v482 = vsub.s32 %v479, %v481
      %v483 = vrot.slane %v469, %v482
      %v484 = vcombine.low %v476, %v483
      %v485 = vcombine.high %v476, %v483
      %v520 = vunpack.c.l.b16 %v432
      %v521 = vunpack.c.l.b16 %v433
      %v522 = vunpack.c.l.b16 %v434
      %v523 = vunpack.c.l.b16 %v435
      %v524 = vunpack.c.l.b16 %v436
      %v525 = vunpack.c.l.b16 %v437
      %v526 = vunpack.c.l.b16 %v438
      %v527 = vunpack.c.l.b16 %v439
      %v528 = vunpack.c.l.b16 %v440
      %v529 = vunpack.c.l.b16 %v441
      %v530 = vunpack.c.l.b16 %v442
      %v531 = vunpack.c.l.b16 %v443
      %v532 = vunpack.c.l.b16 %v444
      %v533 = vunpack.c.l.b16 %v445
      %v534 = vunpack.c.l.b16 %v446
      %v535 = vunpack.c.l.b16 %v447
      %v536 = vunpack.c.l.b16 %v448
      %v537 = vunpack.c.l.b16 %v449
      %v538 = vunpack.c.l.b16 %v450
      %v539 = vunpack.c.l.b16 %v451
      %v540 = vunpack.c.l.b16 %v452
      %v541 = vunpack.c.l.b16 %v453
      %v542 = vunpack.c.l.b16 %v454
      %v543 = vunpack.c.l.b16 %v455
      %v544 = vunpack.c.l.b16 %v456
      %v545 = vunpack.c.l.b16 %v457
      %v546 = vunpack.c.l.b16 %v458
      %v547 = vunpack.c.l.b16 %v459
      %v548 = vunpack.c.l.b16 %v460
      %v549 = vunpack.c.l.b16 %v461
      %v550 = vunpack.c.l.b16 %v462
      %v551 = vunpack.c.l.b16 %v463
      %v552 = vpack.c.b16 %v521, %v520
      %v553 = vpack.c.b16 %v523, %v522
      %v554 = vpack.c.b16 %v525, %v524
      %v555 = vpack.c.b16 %v527, %v526
      %v556 = vpack.c.b16 %v529, %v528
      %v557 = vpack.c.b16 %v531, %v530
      %v558 = vpack.c.b16 %v533, %v532
      %v559 = vpack.c.b16 %v535, %v534
      %v560 = vpack.c.b16 %v537, %v536
      %v561 = vpack.c.b16 %v539, %v538
      %v562 = vpack.c.b16 %v541, %v540
      %v563 = vpack.c.b16 %v543, %v542
      %v564 = vpack.c.b16 %v545, %v544
      %v565 = vpack.c.b16 %v547, %v546
      %v566 = vpack.c.b16 %v549, %v548
      %v567 = vpack.c.b16 %v551, %v550
      %584 = vmatprep.subr.bf16.mxu0 0
      %585 = vmatpush1.bf16.msra.mxu0 %v552
      %586 = vmatprep.subr.bf16.mxu0 0
      %587 = vmatpush1.bf16.msra.mxu0 %v553
      %588 = vmatprep.subr.bf16.mxu0 0
      %589 = vmatpush1.bf16.msra.mxu0 %v554
      %590 = vmatprep.subr.bf16.mxu0 0
      %591 = vmatpush1.bf16.msra.mxu0 %v555
      %592 = vmatprep.subr.bf16.mxu0 0
      %593 = vmatpush1.bf16.msra.mxu0 %v556
      %594 = vmatprep.subr.bf16.mxu0 0
      %595 = vmatpush1.bf16.msra.mxu0 %v557
      %596 = vmatprep.subr.bf16.mxu0 0
      %597 = vmatpush1.bf16.msra.mxu0 %v558
      %598 = vmatprep.subr.bf16.mxu0 0
      %599 = vmatpush1.bf16.msra.mxu0 %v559
      %600 = vmatprep.subr.bf16.mxu0 0
      %601 = vmatpush1.bf16.msra.mxu0 %v560
      %602 = vmatprep.subr.bf16.mxu0 0
      %603 = vmatpush1.bf16.msra.mxu0 %v561
      %604 = vmatprep.subr.bf16.mxu0 0
      %605 = vmatpush1.bf16.msra.mxu0 %v562
      %606 = vmatprep.subr.bf16.mxu0 0
      %607 = vmatpush1.bf16.msra.mxu0 %v563
      %608 = vmatprep.subr.bf16.mxu0 0
      %609 = vmatpush1.bf16.msra.mxu0 %v564
      %610 = vmatprep.subr.bf16.mxu0 0
      %611 = vmatpush1.bf16.msra.mxu0 %v565
      %612 = vmatprep.subr.bf16.mxu0 0
      %613 = vmatpush1.bf16.msra.mxu0 %v566
      %614 = vmatprep.subr.bf16.mxu0 0
      %615 = vmatpush1.bf16.msra.mxu0 %v567
      %616 = vmatprep.mubr.bf16.mxu0 %v485
      %617 = vmatmul.mubr.bf16.gmra.mrb[0].mxu0 %v484
      %v618 = vpop.f32.mrb[0].mxu0
      %v619 = vadd.f32 0.0, %v618
      %v620 = vpop.f32.mrb[0].mxu0
      %v621 = vpop.f32.mrb[0].mxu0
      %v622 = vadd.f32 0.0, %v621
      %v623 = vpop.f32.mrb[0].mxu0
      %624 = vdwg.mxu0
      %v629 = vcombine.low %v295, %v296
      %v630 = vcombine.low %v297, %v298
      %v632 = vunpack.c.l.s4 1983009808
      %v633 = vunpack.c.0.s8 %v632
      %v634 = vlaneseq
      %v635 = vshrl.u32 %v634, 7
      %v636 = vsub.s32 %v633, %v635
      %v637 = vrot.slane %v629, %v636
      %v639 = vunpack.c.l.s4 1983009808
      %v640 = vunpack.c.0.s8 %v639
      %v641 = vlaneseq
      %v642 = vshrl.u32 %v641, 7
      %v643 = vsub.s32 %v640, %v642
      %v644 = vrot.slane %v630, %v643
      %v645 = vcombine.low %v637, %v644
      %v646 = vcombine.high %v637, %v644
      %v681 = vunpack.c.l.b16 %v299
      %v682 = vunpack.c.l.b16 %v300
      %v683 = vunpack.c.l.b16 %v301
      %v684 = vunpack.c.l.b16 %v302
      %v685 = vunpack.c.l.b16 %v303
      %v686 = vunpack.c.l.b16 %v304
      %v687 = vunpack.c.l.b16 %v305
      %v688 = vunpack.c.l.b16 %v306
      %v689 = vunpack.c.l.b16 %v307
      %v690 = vunpack.c.l.b16 %v308
      %v691 = vunpack.c.l.b16 %v309
      %v692 = vunpack.c.l.b16 %v310
      %v693 = vunpack.c.l.b16 %v311
      %v694 = vunpack.c.l.b16 %v312
      %v695 = vunpack.c.l.b16 %v313
      %v696 = vunpack.c.l.b16 %v314
      %v697 = vunpack.c.l.b16 %v315
      %v698 = vunpack.c.l.b16 %v316
      %v699 = vunpack.c.l.b16 %v317
      %v700 = vunpack.c.l.b16 %v318
      %v701 = vunpack.c.l.b16 %v319
      %v702 = vunpack.c.l.b16 %v320
      %v703 = vunpack.c.l.b16 %v321
      %v704 = vunpack.c.l.b16 %v322
      %v705 = vunpack.c.l.b16 %v323
      %v706 = vunpack.c.l.b16 %v324
      %v707 = vunpack.c.l.b16 %v325
      %v708 = vunpack.c.l.b16 %v326
      %v709 = vunpack.c.l.b16 %v327
      %v710 = vunpack.c.l.b16 %v328
      %v711 = vunpack.c.l.b16 %v329
      %v712 = vunpack.c.l.b16 %v330
      %v713 = vpack.c.b16 %v682, %v681
      %v714 = vpack.c.b16 %v684, %v683
      %v715 = vpack.c.b16 %v686, %v685
      %v716 = vpack.c.b16 %v688, %v687
      %v717 = vpack.c.b16 %v690, %v689
      %v718 = vpack.c.b16 %v692, %v691
      %v719 = vpack.c.b16 %v694, %v693
      %v720 = vpack.c.b16 %v696, %v695
      %v721 = vpack.c.b16 %v698, %v697
      %v722 = vpack.c.b16 %v700, %v699
      %v723 = vpack.c.b16 %v702, %v701
      %v724 = vpack.c.b16 %v704, %v703
      %v725 = vpack.c.b16 %v706, %v705
      %v726 = vpack.c.b16 %v708, %v707
      %v727 = vpack.c.b16 %v710, %v709
      %v728 = vpack.c.b16 %v712, %v711
      %745 = vmatprep.subr.bf16.mxu0 0
      %746 = vmatpush1.bf16.msra.mxu0 %v713
      %747 = vmatprep.subr.bf16.mxu0 0
      %748 = vmatpush1.bf16.msra.mxu0 %v714
      %749 = vmatprep.subr.bf16.mxu0 0
      %750 = vmatpush1.bf16.msra.mxu0 %v715
      %751 = vmatprep.subr.bf16.mxu0 0
      %752 = vmatpush1.bf16.msra.mxu0 %v716
      %753 = vmatprep.subr.bf16.mxu0 0
      %754 = vmatpush1.bf16.msra.mxu0 %v717
      %755 = vmatprep.subr.bf16.mxu0 0
      %756 = vmatpush1.bf16.msra.mxu0 %v718
      %757 = vmatprep.subr.bf16.mxu0 0
      %758 = vmatpush1.bf16.msra.mxu0 %v719
      %759 = vmatprep.subr.bf16.mxu0 0
      %760 = vmatpush1.bf16.msra.mxu0 %v720
      %761 = vmatprep.subr.bf16.mxu0 0
      %762 = vmatpush1.bf16.msra.mxu0 %v721
      %763 = vmatprep.subr.bf16.mxu0 0
      %764 = vmatpush1.bf16.msra.mxu0 %v722
      %765 = vmatprep.subr.bf16.mxu0 0
      %766 = vmatpush1.bf16.msra.mxu0 %v723
      %767 = vmatprep.subr.bf16.mxu0 0
      %768 = vmatpush1.bf16.msra.mxu0 %v724
      %769 = vmatprep.subr.bf16.mxu0 0
      %770 = vmatpush1.bf16.msra.mxu0 %v725
      %771 = vmatprep.subr.bf16.mxu0 0
      %772 = vmatpush1.bf16.msra.mxu0 %v726
      %773 = vmatprep.subr.bf16.mxu0 0
      %774 = vmatpush1.bf16.msra.mxu0 %v727
      %775 = vmatprep.subr.bf16.mxu0 0
      %776 = vmatpush1.bf16.msra.mxu0 %v728
      %777 = vmatprep.mubr.bf16.mxu0 %v646
      %778 = vmatmul.mubr.bf16.gmra.mrb[0].mxu0 %v645
      %v779 = vpop.f32.mrb[0].mxu0
      %v780 = vadd.f32 %v619, %v779
      %v781 = vpop.f32.mrb[0].mxu0
      %v782 = vpop.f32.mrb[0].mxu0
      %v783 = vadd.f32 %v622, %v782
      %v784 = vpop.f32.mrb[0].mxu0
      %785 = vdwg.mxu0
      %786 = vst [vmem:[#allocation3] sm:$0xf] 0
      %787 = vst [vmem:[#allocation3 + $0x4] sm:$0xf] 0
      %788 = vst [vmem:[#allocation3 + $0x8] sm:$0xf] 0
      %789 = vst [vmem:[#allocation3 + $0xc] sm:$0xf] 0
      %v790 = vld [vmem:[#allocation2] sm:$0x3]
      %v791 = vld [vmem:[#allocation2 + $0x2] sm:$0x3]
      %v792 = vld [vmem:[#allocation2 + $0x4] sm:$0x3]
      %v793 = vld [vmem:[#allocation2 + $0x6] sm:$0x3]
      %794 = vst [vmem:[#allocation3] sm:$0x3] %v790
      %795 = vst [vmem:[#allocation3 + $0x4] sm:$0x3] %v791
      %796 = vst [vmem:[#allocation3 + $0x8] sm:$0x3] %v792
      %797 = vst [vmem:[#allocation3 + $0xc] sm:$0x3] %v793
      %v798 = vld [vmem:[#allocation2] sm:$0x3]
      %v799 = vld [vmem:[#allocation2 + $0x2] sm:$0x3]
      %v800 = vld [vmem:[#allocation2 + $0x4] sm:$0x3]
      %v801 = vld [vmem:[#allocation2 + $0x6] sm:$0x3]
      %v803 = vshrl.u32 %v798, 16
      %v805 = vrot.slane %v803, 6
      %v806 = vshll.u32 %v798, 16
      %v808 = vrot.slane %v806, 7
      %v809 = vor.u32 %v805, %v808
      %v810 = vrot.slane %v809, 2
      %v812 = vshrl.u32 %v799, 16
      %v814 = vrot.slane %v812, 6
      %v815 = vshll.u32 %v799, 16
      %v817 = vrot.slane %v815, 7
      %v818 = vor.u32 %v814, %v817
      %v819 = vrot.slane %v818, 2
      %v821 = vshrl.u32 %v800, 16
      %v823 = vrot.slane %v821, 6
      %v824 = vshll.u32 %v800, 16
      %v826 = vrot.slane %v824, 7
      %v827 = vor.u32 %v823, %v826
      %v828 = vrot.slane %v827, 2
      %v830 = vshrl.u32 %v801, 16
      %v832 = vrot.slane %v830, 6
      %v833 = vshll.u32 %v801, 16
      %v835 = vrot.slane %v833, 7
      %v836 = vor.u32 %v832, %v835
      %v837 = vrot.slane %v836, 2
      %v842 = vld [vmem:[#allocation3 + $0x2] sm:$0x3]
      %v843 = vsel %vm369, %v810, %v842
      %844 = vst [vmem:[#allocation3 + $0x2] sm:$0x3] %v843
      %v845 = vld [vmem:[#allocation3 + $0x6] sm:$0x3]
      %v846 = vsel %vm369, %v819, %v845
      %847 = vst [vmem:[#allocation3 + $0x6] sm:$0x3] %v846
      %v848 = vld [vmem:[#allocation3 + $0xa] sm:$0x3]
      %v849 = vsel %vm369, %v828, %v848
      %850 = vst [vmem:[#allocation3 + $0xa] sm:$0x3] %v849
      %v851 = vld [vmem:[#allocation3 + $0xe] sm:$0x3]
      %v852 = vsel %vm369, %v837, %v851
      %853 = vst [vmem:[#allocation3 + $0xe] sm:$0x3] %v852
      %v854 = vld [vmem:[#allocation3] sm:$0xf]
      %v855 = vld [vmem:[#allocation3 + $0x4] sm:$0xf]
      %v856 = vld [vmem:[#allocation3 + $0x8] sm:$0xf]
      %v857 = vld [vmem:[#allocation3 + $0xc] sm:$0xf]
      %s858 = scalar_lea.vmem %s3, 256
      %v859 = vld [vmem:[%s858] sm:$0xf]
      %v860 = vld [vmem:[%s858 + $0x4] sm:$0xf]
      %v861 = vld [vmem:[%s858 + $0x8] sm:$0xf]
      %v862 = vld [vmem:[%s858 + $0xc] sm:$0xf]
      %v863 = vld [vmem:[%s858 + $0x10] sm:$0xf]
      %v864 = vld [vmem:[%s858 + $0x14] sm:$0xf]
      %v865 = vld [vmem:[%s858 + $0x18] sm:$0xf]
      %v866 = vld [vmem:[%s858 + $0x1c] sm:$0xf]
      %v867 = vld [vmem:[%s858 + $0x20] sm:$0xf]
      %v868 = vld [vmem:[%s858 + $0x24] sm:$0xf]
      %v869 = vld [vmem:[%s858 + $0x28] sm:$0xf]
      %v870 = vld [vmem:[%s858 + $0x2c] sm:$0xf]
      %v871 = vld [vmem:[%s858 + $0x30] sm:$0xf]
      %v872 = vld [vmem:[%s858 + $0x34] sm:$0xf]
      %v873 = vld [vmem:[%s858 + $0x38] sm:$0xf]
      %v874 = vld [vmem:[%s858 + $0x3c] sm:$0xf]
      %v875 = vld [vmem:[%s858 + $0x40] sm:$0xf]
      %v876 = vld [vmem:[%s858 + $0x44] sm:$0xf]
      %v877 = vld [vmem:[%s858 + $0x48] sm:$0xf]
      %v878 = vld [vmem:[%s858 + $0x4c] sm:$0xf]
      %v879 = vld [vmem:[%s858 + $0x50] sm:$0xf]
      %v880 = vld [vmem:[%s858 + $0x54] sm:$0xf]
      %v881 = vld [vmem:[%s858 + $0x58] sm:$0xf]
      %v882 = vld [vmem:[%s858 + $0x5c] sm:$0xf]
      %v883 = vld [vmem:[%s858 + $0x60] sm:$0xf]
      %v884 = vld [vmem:[%s858 + $0x64] sm:$0xf]
      %v885 = vld [vmem:[%s858 + $0x68] sm:$0xf]
      %v886 = vld [vmem:[%s858 + $0x6c] sm:$0xf]
      %v887 = vld [vmem:[%s858 + $0x70] sm:$0xf]
      %v888 = vld [vmem:[%s858 + $0x74] sm:$0xf]
      %v889 = vld [vmem:[%s858 + $0x78] sm:$0xf]
      %v890 = vld [vmem:[%s858 + $0x7c] sm:$0xf]
      %v895 = vcombine.low %v854, %v855
      %v896 = vcombine.low %v856, %v857
      %v898 = vunpack.c.l.s4 1983009808
      %v899 = vunpack.c.0.s8 %v898
      %v900 = vlaneseq
      %v901 = vshrl.u32 %v900, 7
      %v902 = vsub.s32 %v899, %v901
      %v903 = vrot.slane %v895, %v902
      %v905 = vunpack.c.l.s4 1983009808
      %v906 = vunpack.c.0.s8 %v905
      %v907 = vlaneseq
      %v908 = vshrl.u32 %v907, 7
      %v909 = vsub.s32 %v906, %v908
      %v910 = vrot.slane %v896, %v909
      %v911 = vcombine.low %v903, %v910
      %v912 = vcombine.high %v903, %v910
      %v947 = vunpack.c.l.b16 %v859
      %v948 = vunpack.c.l.b16 %v860
      %v949 = vunpack.c.l.b16 %v861
      %v950 = vunpack.c.l.b16 %v862
      %v951 = vunpack.c.l.b16 %v863
      %v952 = vunpack.c.l.b16 %v864
      %v953 = vunpack.c.l.b16 %v865
      %v954 = vunpack.c.l.b16 %v866
      %v955 = vunpack.c.l.b16 %v867
      %v956 = vunpack.c.l.b16 %v868
      %v957 = vunpack.c.l.b16 %v869
      %v958 = vunpack.c.l.b16 %v870
      %v959 = vunpack.c.l.b16 %v871
      %v960 = vunpack.c.l.b16 %v872
      %v961 = vunpack.c.l.b16 %v873
      %v962 = vunpack.c.l.b16 %v874
      %v963 = vunpack.c.l.b16 %v875
      %v964 = vunpack.c.l.b16 %v876
      %v965 = vunpack.c.l.b16 %v877
      %v966 = vunpack.c.l.b16 %v878
      %v967 = vunpack.c.l.b16 %v879
      %v968 = vunpack.c.l.b16 %v880
      %v969 = vunpack.c.l.b16 %v881
      %v970 = vunpack.c.l.b16 %v882
      %v971 = vunpack.c.l.b16 %v883
      %v972 = vunpack.c.l.b16 %v884
      %v973 = vunpack.c.l.b16 %v885
      %v974 = vunpack.c.l.b16 %v886
      %v975 = vunpack.c.l.b16 %v887
      %v976 = vunpack.c.l.b16 %v888
      %v977 = vunpack.c.l.b16 %v889
      %v978 = vunpack.c.l.b16 %v890
      %v979 = vpack.c.b16 %v948, %v947
      %v980 = vpack.c.b16 %v950, %v949
      %v981 = vpack.c.b16 %v952, %v951
      %v982 = vpack.c.b16 %v954, %v953
      %v983 = vpack.c.b16 %v956, %v955
      %v984 = vpack.c.b16 %v958, %v957
      %v985 = vpack.c.b16 %v960, %v959
      %v986 = vpack.c.b16 %v962, %v961
      %v987 = vpack.c.b16 %v964, %v963
      %v988 = vpack.c.b16 %v966, %v965
      %v989 = vpack.c.b16 %v968, %v967
      %v990 = vpack.c.b16 %v970, %v969
      %v991 = vpack.c.b16 %v972, %v971
      %v992 = vpack.c.b16 %v974, %v973
      %v993 = vpack.c.b16 %v976, %v975
      %v994 = vpack.c.b16 %v978, %v977
      %1011 = vmatprep.subr.bf16.mxu0 0
      %1012 = vmatpush1.bf16.msra.mxu0 %v979
      %1013 = vmatprep.subr.bf16.mxu0 0
      %1014 = vmatpush1.bf16.msra.mxu0 %v980
      %1015 = vmatprep.subr.bf16.mxu0 0
      %1016 = vmatpush1.bf16.msra.mxu0 %v981
      %1017 = vmatprep.subr.bf16.mxu0 0
      %1018 = vmatpush1.bf16.msra.mxu0 %v982
      %1019 = vmatprep.subr.bf16.mxu0 0
      %1020 = vmatpush1.bf16.msra.mxu0 %v983
      %1021 = vmatprep.subr.bf16.mxu0 0
      %1022 = vmatpush1.bf16.msra.mxu0 %v984
      %1023 = vmatprep.subr.bf16.mxu0 0
      %1024 = vmatpush1.bf16.msra.mxu0 %v985
      %1025 = vmatprep.subr.bf16.mxu0 0
      %1026 = vmatpush1.bf16.msra.mxu0 %v986
      %1027 = vmatprep.subr.bf16.mxu0 0
      %1028 = vmatpush1.bf16.msra.mxu0 %v987
      %1029 = vmatprep.subr.bf16.mxu0 0
      %1030 = vmatpush1.bf16.msra.mxu0 %v988
      %1031 = vmatprep.subr.bf16.mxu0 0
      %1032 = vmatpush1.bf16.msra.mxu0 %v989
      %1033 = vmatprep.subr.bf16.mxu0 0
      %1034 = vmatpush1.bf16.msra.mxu0 %v990
      %1035 = vmatprep.subr.bf16.mxu0 0
      %1036 = vmatpush1.bf16.msra.mxu0 %v991
      %1037 = vmatprep.subr.bf16.mxu0 0
      %1038 = vmatpush1.bf16.msra.mxu0 %v992
      %1039 = vmatprep.subr.bf16.mxu0 0
      %1040 = vmatpush1.bf16.msra.mxu0 %v993
      %1041 = vmatprep.subr.bf16.mxu0 0
      %1042 = vmatpush1.bf16.msra.mxu0 %v994
      %1043 = vmatprep.mubr.bf16.mxu0 %v912
      %1044 = vmatmul.mubr.bf16.gmra.mrb[0].mxu0 %v911
      %v1045 = vpop.f32.mrb[0].mxu0
      %v1046 = vadd.f32 0.0, %v1045
      %v1047 = vpop.f32.mrb[0].mxu0
      %v1048 = vpop.f32.mrb[0].mxu0
      %v1049 = vadd.f32 0.0, %v1048
      %v1050 = vpop.f32.mrb[0].mxu0
      %1051 = vdwg.mxu0
      %v1052 = vadd.f32 %v780, %v1046
      %v1053 = vadd.f32 %v783, %v1049
      %1054 = vst [vmem:[#allocation3] sm:$0xf] 0
      %1055 = vst [vmem:[#allocation3 + $0x4] sm:$0xf] 0
      %1056 = vst [vmem:[#allocation3 + $0x8] sm:$0xf] 0
      %1057 = vst [vmem:[#allocation3 + $0xc] sm:$0xf] 0
      %s1058 = scalar_lea.vmem [#allocation2], 2
      %v1059 = vld [vmem:[%s1058] sm:$0x3]
      %v1060 = vld [vmem:[%s1058 + $0x2] sm:$0x3]
      %v1061 = vld [vmem:[%s1058 + $0x4] sm:$0x3]
      %v1063 = vshrl.u32 %v1059, 16
      %v1065 = vrot.slane %v1063, 7
      %v1066 = vshll.u32 %v1059, 16
      %v1068 = vor.u32 %v1065, %v1066
      %v1070 = vshrl.u32 %v1060, 16
      %v1072 = vrot.slane %v1070, 7
      %v1073 = vshll.u32 %v1060, 16
      %v1075 = vor.u32 %v1072, %v1073
      %v1077 = vshrl.u32 %v1061, 16
      %v1079 = vrot.slane %v1077, 7
      %v1080 = vshll.u32 %v1061, 16
      %v1082 = vor.u32 %v1079, %v1080
      %v1086 = vld [vmem:[#allocation3] sm:$0x3]
      %v1087 = vsel %vm279, %v1068, %v1086
      %1088 = vst [vmem:[#allocation3] sm:$0x3] %v1087
      %v1089 = vld [vmem:[#allocation3 + $0x4] sm:$0x3]
      %v1090 = vsel %vm279, %v1075, %v1089
      %1091 = vst [vmem:[#allocation3 + $0x4] sm:$0x3] %v1090
      %v1092 = vld [vmem:[#allocation3 + $0x8] sm:$0x3]
      %v1093 = vsel %vm279, %v1082, %v1092
      %1094 = vst [vmem:[#allocation3 + $0x8] sm:$0x3] %v1093
      %v1095 = vld [vmem:[%s1058] sm:$0x3]
      %v1096 = vld [vmem:[%s1058 + $0x2] sm:$0x3]
      %v1097 = vld [vmem:[%s1058 + $0x4] sm:$0x3]
      %1098 = vst [vmem:[#allocation3 + $0x2] sm:$0x3] %v1095
      %1099 = vst [vmem:[#allocation3 + $0x6] sm:$0x3] %v1096
      %1100 = vst [vmem:[#allocation3 + $0xa] sm:$0x3] %v1097
      %v1101 = vld [vmem:[#allocation3] sm:$0xf]
      %v1102 = vld [vmem:[#allocation3 + $0x4] sm:$0xf]
      %v1103 = vld [vmem:[#allocation3 + $0x8] sm:$0xf]
      %v1104 = vld [vmem:[#allocation3 + $0xc] sm:$0xf]
      %s1105 = scalar_lea.vmem %s3, 384
      %v1106 = vld [vmem:[%s1105] sm:$0xf]
      %v1107 = vld [vmem:[%s1105 + $0x4] sm:$0xf]
      %v1108 = vld [vmem:[%s1105 + $0x8] sm:$0xf]
      %v1109 = vld [vmem:[%s1105 + $0xc] sm:$0xf]
      %v1110 = vld [vmem:[%s1105 + $0x10] sm:$0xf]
      %v1111 = vld [vmem:[%s1105 + $0x14] sm:$0xf]
      %v1112 = vld [vmem:[%s1105 + $0x18] sm:$0xf]
      %v1113 = vld [vmem:[%s1105 + $0x1c] sm:$0xf]
      %v1114 = vld [vmem:[%s1105 + $0x20] sm:$0xf]
      %v1115 = vld [vmem:[%s1105 + $0x24] sm:$0xf]
      %v1116 = vld [vmem:[%s1105 + $0x28] sm:$0xf]
      %v1117 = vld [vmem:[%s1105 + $0x2c] sm:$0xf]
      %v1118 = vld [vmem:[%s1105 + $0x30] sm:$0xf]
      %v1119 = vld [vmem:[%s1105 + $0x34] sm:$0xf]
      %v1120 = vld [vmem:[%s1105 + $0x38] sm:$0xf]
      %v1121 = vld [vmem:[%s1105 + $0x3c] sm:$0xf]
      %v1122 = vld [vmem:[%s1105 + $0x40] sm:$0xf]
      %v1123 = vld [vmem:[%s1105 + $0x44] sm:$0xf]
      %v1124 = vld [vmem:[%s1105 + $0x48] sm:$0xf]
      %v1125 = vld [vmem:[%s1105 + $0x4c] sm:$0xf]
      %v1126 = vld [vmem:[%s1105 + $0x50] sm:$0xf]
      %v1127 = vld [vmem:[%s1105 + $0x54] sm:$0xf]
      %v1128 = vld [vmem:[%s1105 + $0x58] sm:$0xf]
      %v1129 = vld [vmem:[%s1105 + $0x5c] sm:$0xf]
      %v1130 = vld [vmem:[%s1105 + $0x60] sm:$0xf]
      %v1131 = vld [vmem:[%s1105 + $0x64] sm:$0xf]
      %v1132 = vld [vmem:[%s1105 + $0x68] sm:$0xf]
      %v1133 = vld [vmem:[%s1105 + $0x6c] sm:$0xf]
      %v1134 = vld [vmem:[%s1105 + $0x70] sm:$0xf]
      %v1135 = vld [vmem:[%s1105 + $0x74] sm:$0xf]
      %v1136 = vld [vmem:[%s1105 + $0x78] sm:$0xf]
      %v1137 = vld [vmem:[%s1105 + $0x7c] sm:$0xf]
      %v1142 = vcombine.low %v1101, %v1102
      %v1143 = vcombine.low %v1103, %v1104
      %v1145 = vunpack.c.l.s4 1983009808
      %v1146 = vunpack.c.0.s8 %v1145
      %v1147 = vlaneseq
      %v1148 = vshrl.u32 %v1147, 7
      %v1149 = vsub.s32 %v1146, %v1148
      %v1150 = vrot.slane %v1142, %v1149
      %v1152 = vunpack.c.l.s4 1983009808
      %v1153 = vunpack.c.0.s8 %v1152
      %v1154 = vlaneseq
      %v1155 = vshrl.u32 %v1154, 7
      %v1156 = vsub.s32 %v1153, %v1155
      %v1157 = vrot.slane %v1143, %v1156
      %v1158 = vcombine.low %v1150, %v1157
      %v1159 = vcombine.high %v1150, %v1157
      %v1194 = vunpack.c.l.b16 %v1106
      %v1195 = vunpack.c.l.b16 %v1107
      %v1196 = vunpack.c.l.b16 %v1108
      %v1197 = vunpack.c.l.b16 %v1109
      %v1198 = vunpack.c.l.b16 %v1110
      %v1199 = vunpack.c.l.b16 %v1111
      %v1200 = vunpack.c.l.b16 %v1112
      %v1201 = vunpack.c.l.b16 %v1113
      %v1202 = vunpack.c.l.b16 %v1114
      %v1203 = vunpack.c.l.b16 %v1115
      %v1204 = vunpack.c.l.b16 %v1116
      %v1205 = vunpack.c.l.b16 %v1117
      %v1206 = vunpack.c.l.b16 %v1118
      %v1207 = vunpack.c.l.b16 %v1119
      %v1208 = vunpack.c.l.b16 %v1120
      %v1209 = vunpack.c.l.b16 %v1121
      %v1210 = vunpack.c.l.b16 %v1122
      %v1211 = vunpack.c.l.b16 %v1123
      %v1212 = vunpack.c.l.b16 %v1124
      %v1213 = vunpack.c.l.b16 %v1125
      %v1214 = vunpack.c.l.b16 %v1126
      %v1215 = vunpack.c.l.b16 %v1127
      %v1216 = vunpack.c.l.b16 %v1128
      %v1217 = vunpack.c.l.b16 %v1129
      %v1218 = vunpack.c.l.b16 %v1130
      %v1219 = vunpack.c.l.b16 %v1131
      %v1220 = vunpack.c.l.b16 %v1132
      %v1221 = vunpack.c.l.b16 %v1133
      %v1222 = vunpack.c.l.b16 %v1134
      %v1223 = vunpack.c.l.b16 %v1135
      %v1224 = vunpack.c.l.b16 %v1136
      %v1225 = vunpack.c.l.b16 %v1137
      %v1226 = vpack.c.b16 %v1195, %v1194
      %v1227 = vpack.c.b16 %v1197, %v1196
      %v1228 = vpack.c.b16 %v1199, %v1198
      %v1229 = vpack.c.b16 %v1201, %v1200
      %v1230 = vpack.c.b16 %v1203, %v1202
      %v1231 = vpack.c.b16 %v1205, %v1204
      %v1232 = vpack.c.b16 %v1207, %v1206
      %v1233 = vpack.c.b16 %v1209, %v1208
      %v1234 = vpack.c.b16 %v1211, %v1210
      %v1235 = vpack.c.b16 %v1213, %v1212
      %v1236 = vpack.c.b16 %v1215, %v1214
      %v1237 = vpack.c.b16 %v1217, %v1216
      %v1238 = vpack.c.b16 %v1219, %v1218
      %v1239 = vpack.c.b16 %v1221, %v1220
      %v1240 = vpack.c.b16 %v1223, %v1222
      %v1241 = vpack.c.b16 %v1225, %v1224
      %1258 = vmatprep.subr.bf16.mxu0 0
      %1259 = vmatpush1.bf16.msra.mxu0 %v1226
      %1260 = vmatprep.subr.bf16.mxu0 0
      %1261 = vmatpush1.bf16.msra.mxu0 %v1227
      %1262 = vmatprep.subr.bf16.mxu0 0
      %1263 = vmatpush1.bf16.msra.mxu0 %v1228
      %1264 = vmatprep.subr.bf16.mxu0 0
      %1265 = vmatpush1.bf16.msra.mxu0 %v1229
      %1266 = vmatprep.subr.bf16.mxu0 0
      %1267 = vmatpush1.bf16.msra.mxu0 %v1230
      %1268 = vmatprep.subr.bf16.mxu0 0
      %1269 = vmatpush1.bf16.msra.mxu0 %v1231
      %1270 = vmatprep.subr.bf16.mxu0 0
      %1271 = vmatpush1.bf16.msra.mxu0 %v1232
      %1272 = vmatprep.subr.bf16.mxu0 0
      %1273 = vmatpush1.bf16.msra.mxu0 %v1233
      %1274 = vmatprep.subr.bf16.mxu0 0
      %1275 = vmatpush1.bf16.msra.mxu0 %v1234
      %1276 = vmatprep.subr.bf16.mxu0 0
      %1277 = vmatpush1.bf16.msra.mxu0 %v1235
      %1278 = vmatprep.subr.bf16.mxu0 0
      %1279 = vmatpush1.bf16.msra.mxu0 %v1236
      %1280 = vmatprep.subr.bf16.mxu0 0
      %1281 = vmatpush1.bf16.msra.mxu0 %v1237
      %1282 = vmatprep.subr.bf16.mxu0 0
      %1283 = vmatpush1.bf16.msra.mxu0 %v1238
      %1284 = vmatprep.subr.bf16.mxu0 0
      %1285 = vmatpush1.bf16.msra.mxu0 %v1239
      %1286 = vmatprep.subr.bf16.mxu0 0
      %1287 = vmatpush1.bf16.msra.mxu0 %v1240
      %1288 = vmatprep.subr.bf16.mxu0 0
      %1289 = vmatpush1.bf16.msra.mxu0 %v1241
      %1290 = vmatprep.mubr.bf16.mxu0 %v1159
      %1291 = vmatmul.mubr.bf16.gmra.mrb[0].mxu0 %v1158
      %v1292 = vpop.f32.mrb[0].mxu0
      %v1293 = vadd.f32 0.0, %v1292
      %v1294 = vpop.f32.mrb[0].mxu0
      %v1295 = vpop.f32.mrb[0].mxu0
      %v1296 = vadd.f32 0.0, %v1295
      %v1297 = vpop.f32.mrb[0].mxu0
      %1298 = vdwg.mxu0
      %v1299 = vadd.f32 %v1052, %v1293
      %v1300 = vadd.f32 %v1053, %v1296
      %1301 = vst [vmem:[#allocation3] sm:$0xf] 0
      %1302 = vst [vmem:[#allocation3 + $0x4] sm:$0xf] 0
      %1303 = vst [vmem:[#allocation3 + $0x8] sm:$0xf] 0
      %1304 = vst [vmem:[#allocation3 + $0xc] sm:$0xf] 0
      %v1305 = vld [vmem:[%s1058] sm:$0x3]
      %v1306 = vld [vmem:[%s1058 + $0x2] sm:$0x3]
      %v1307 = vld [vmem:[%s1058 + $0x4] sm:$0x3]
      %v1309 = vshrl.u32 %v1305, 16
      %v1311 = vrot.slane %v1309, 6
      %v1312 = vshll.u32 %v1305, 16
      %v1314 = vrot.slane %v1312, 7
      %v1315 = vor.u32 %v1311, %v1314
      %v1316 = vrot.slane %v1315, 2
      %v1318 = vshrl.u32 %v1306, 16
      %v1320 = vrot.slane %v1318, 6
      %v1321 = vshll.u32 %v1306, 16
      %v1323 = vrot.slane %v1321, 7
      %v1324 = vor.u32 %v1320, %v1323
      %v1325 = vrot.slane %v1324, 2
      %v1327 = vshrl.u32 %v1307, 16
      %v1329 = vrot.slane %v1327, 6
      %v1330 = vshll.u32 %v1307, 16
      %v1332 = vrot.slane %v1330, 7
      %v1333 = vor.u32 %v1329, %v1332
      %v1334 = vrot.slane %v1333, 2
      %v1338 = vld [vmem:[#allocation3] sm:$0x3]
      %v1339 = vsel %vm369, %v1316, %v1338
      %1340 = vst [vmem:[#allocation3] sm:$0x3] %v1339
      %v1341 = vld [vmem:[#allocation3 + $0x4] sm:$0x3]
      %v1342 = vsel %vm369, %v1325, %v1341
      %1343 = vst [vmem:[#allocation3 + $0x4] sm:$0x3] %v1342
      %v1344 = vld [vmem:[#allocation3 + $0x8] sm:$0x3]
      %v1345 = vsel %vm369, %v1334, %v1344
      %1346 = vst [vmem:[#allocation3 + $0x8] sm:$0x3] %v1345
      %v1347 = vld [vmem:[#allocation3] sm:$0xf]
      %v1348 = vld [vmem:[#allocation3 + $0x4] sm:$0xf]
      %v1349 = vld [vmem:[#allocation3 + $0x8] sm:$0xf]
      %v1350 = vld [vmem:[#allocation3 + $0xc] sm:$0xf]
      %s1351 = scalar_lea.vmem %s3, 512
      %v1352 = vld [vmem:[%s1351] sm:$0xf]
      %v1353 = vld [vmem:[%s1351 + $0x4] sm:$0xf]
      %v1354 = vld [vmem:[%s1351 + $0x8] sm:$0xf]
      %v1355 = vld [vmem:[%s1351 + $0xc] sm:$0xf]
      %v1356 = vld [vmem:[%s1351 + $0x10] sm:$0xf]
      %v1357 = vld [vmem:[%s1351 + $0x14] sm:$0xf]
      %v1358 = vld [vmem:[%s1351 + $0x18] sm:$0xf]
      %v1359 = vld [vmem:[%s1351 + $0x1c] sm:$0xf]
      %v1360 = vld [vmem:[%s1351 + $0x20] sm:$0xf]
      %v1361 = vld [vmem:[%s1351 + $0x24] sm:$0xf]
      %v1362 = vld [vmem:[%s1351 + $0x28] sm:$0xf]
      %v1363 = vld [vmem:[%s1351 + $0x2c] sm:$0xf]
      %v1364 = vld [vmem:[%s1351 + $0x30] sm:$0xf]
      %v1365 = vld [vmem:[%s1351 + $0x34] sm:$0xf]
      %v1366 = vld [vmem:[%s1351 + $0x38] sm:$0xf]
      %v1367 = vld [vmem:[%s1351 + $0x3c] sm:$0xf]
      %v1368 = vld [vmem:[%s1351 + $0x40] sm:$0xf]
      %v1369 = vld [vmem:[%s1351 + $0x44] sm:$0xf]
      %v1370 = vld [vmem:[%s1351 + $0x48] sm:$0xf]
      %v1371 = vld [vmem:[%s1351 + $0x4c] sm:$0xf]
      %v1372 = vld [vmem:[%s1351 + $0x50] sm:$0xf]
      %v1373 = vld [vmem:[%s1351 + $0x54] sm:$0xf]
      %v1374 = vld [vmem:[%s1351 + $0x58] sm:$0xf]
      %v1375 = vld [vmem:[%s1351 + $0x5c] sm:$0xf]
      %v1376 = vld [vmem:[%s1351 + $0x60] sm:$0xf]
      %v1377 = vld [vmem:[%s1351 + $0x64] sm:$0xf]
      %v1378 = vld [vmem:[%s1351 + $0x68] sm:$0xf]
      %v1379 = vld [vmem:[%s1351 + $0x6c] sm:$0xf]
      %v1380 = vld [vmem:[%s1351 + $0x70] sm:$0xf]
      %v1381 = vld [vmem:[%s1351 + $0x74] sm:$0xf]
      %v1382 = vld [vmem:[%s1351 + $0x78] sm:$0xf]
      %v1383 = vld [vmem:[%s1351 + $0x7c] sm:$0xf]
      %v1388 = vcombine.low %v1347, %v1348
      %v1389 = vcombine.low %v1349, %v1350
      %v1391 = vunpack.c.l.s4 1983009808
      %v1392 = vunpack.c.0.s8 %v1391
      %v1393 = vlaneseq
      %v1394 = vshrl.u32 %v1393, 7
      %v1395 = vsub.s32 %v1392, %v1394
      %v1396 = vrot.slane %v1388, %v1395
      %v1398 = vunpack.c.l.s4 1983009808
      %v1399 = vunpack.c.0.s8 %v1398
      %v1400 = vlaneseq
      %v1401 = vshrl.u32 %v1400, 7
      %v1402 = vsub.s32 %v1399, %v1401
      %v1403 = vrot.slane %v1389, %v1402
      %v1404 = vcombine.low %v1396, %v1403
      %v1405 = vcombine.high %v1396, %v1403
      %v1440 = vunpack.c.l.b16 %v1352
      %v1441 = vunpack.c.l.b16 %v1353
      %v1442 = vunpack.c.l.b16 %v1354
      %v1443 = vunpack.c.l.b16 %v1355
      %v1444 = vunpack.c.l.b16 %v1356
      %v1445 = vunpack.c.l.b16 %v1357
      %v1446 = vunpack.c.l.b16 %v1358
      %v1447 = vunpack.c.l.b16 %v1359
      %v1448 = vunpack.c.l.b16 %v1360
      %v1449 = vunpack.c.l.b16 %v1361
      %v1450 = vunpack.c.l.b16 %v1362
      %v1451 = vunpack.c.l.b16 %v1363
      %v1452 = vunpack.c.l.b16 %v1364
      %v1453 = vunpack.c.l.b16 %v1365
      %v1454 = vunpack.c.l.b16 %v1366
      %v1455 = vunpack.c.l.b16 %v1367
      %v1456 = vunpack.c.l.b16 %v1368
      %v1457 = vunpack.c.l.b16 %v1369
      %v1458 = vunpack.c.l.b16 %v1370
      %v1459 = vunpack.c.l.b16 %v1371
      %v1460 = vunpack.c.l.b16 %v1372
      %v1461 = vunpack.c.l.b16 %v1373
      %v1462 = vunpack.c.l.b16 %v1374
      %v1463 = vunpack.c.l.b16 %v1375
      %v1464 = vunpack.c.l.b16 %v1376
      %v1465 = vunpack.c.l.b16 %v1377
      %v1466 = vunpack.c.l.b16 %v1378
      %v1467 = vunpack.c.l.b16 %v1379
      %v1468 = vunpack.c.l.b16 %v1380
      %v1469 = vunpack.c.l.b16 %v1381
      %v1470 = vunpack.c.l.b16 %v1382
      %v1471 = vunpack.c.l.b16 %v1383
      %v1472 = vpack.c.b16 %v1441, %v1440
      %v1473 = vpack.c.b16 %v1443, %v1442
      %v1474 = vpack.c.b16 %v1445, %v1444
      %v1475 = vpack.c.b16 %v1447, %v1446
      %v1476 = vpack.c.b16 %v1449, %v1448
      %v1477 = vpack.c.b16 %v1451, %v1450
      %v1478 = vpack.c.b16 %v1453, %v1452
      %v1479 = vpack.c.b16 %v1455, %v1454
      %v1480 = vpack.c.b16 %v1457, %v1456
      %v1481 = vpack.c.b16 %v1459, %v1458
      %v1482 = vpack.c.b16 %v1461, %v1460
      %v1483 = vpack.c.b16 %v1463, %v1462
      %v1484 = vpack.c.b16 %v1465, %v1464
      %v1485 = vpack.c.b16 %v1467, %v1466
      %v1486 = vpack.c.b16 %v1469, %v1468
      %v1487 = vpack.c.b16 %v1471, %v1470
      %1504 = vmatprep.subr.bf16.mxu0 0
      %1505 = vmatpush1.bf16.msra.mxu0 %v1472
      %1506 = vmatprep.subr.bf16.mxu0 0
      %1507 = vmatpush1.bf16.msra.mxu0 %v1473
      %1508 = vmatprep.subr.bf16.mxu0 0
      %1509 = vmatpush1.bf16.msra.mxu0 %v1474
      %1510 = vmatprep.subr.bf16.mxu0 0
      %1511 = vmatpush1.bf16.msra.mxu0 %v1475
      %1512 = vmatprep.subr.bf16.mxu0 0
      %1513 = vmatpush1.bf16.msra.mxu0 %v1476
      %1514 = vmatprep.subr.bf16.mxu0 0
      %1515 = vmatpush1.bf16.msra.mxu0 %v1477
      %1516 = vmatprep.subr.bf16.mxu0 0
      %1517 = vmatpush1.bf16.msra.mxu0 %v1478
      %1518 = vmatprep.subr.bf16.mxu0 0
      %1519 = vmatpush1.bf16.msra.mxu0 %v1479
      %1520 = vmatprep.subr.bf16.mxu0 0
      %1521 = vmatpush1.bf16.msra.mxu0 %v1480
      %1522 = vmatprep.subr.bf16.mxu0 0
      %1523 = vmatpush1.bf16.msra.mxu0 %v1481
      %1524 = vmatprep.subr.bf16.mxu0 0
      %1525 = vmatpush1.bf16.msra.mxu0 %v1482
      %1526 = vmatprep.subr.bf16.mxu0 0
      %1527 = vmatpush1.bf16.msra.mxu0 %v1483
      %1528 = vmatprep.subr.bf16.mxu0 0
      %1529 = vmatpush1.bf16.msra.mxu0 %v1484
      %1530 = vmatprep.subr.bf16.mxu0 0
      %1531 = vmatpush1.bf16.msra.mxu0 %v1485
      %1532 = vmatprep.subr.bf16.mxu0 0
      %1533 = vmatpush1.bf16.msra.mxu0 %v1486
      %1534 = vmatprep.subr.bf16.mxu0 0
      %1535 = vmatpush1.bf16.msra.mxu0 %v1487
      %1536 = vmatprep.mubr.bf16.mxu0 %v1405
      %1537 = vmatmul.mubr.bf16.gmra.mrb[0].mxu0 %v1404
      %v1538 = vpop.f32.mrb[0].mxu0
      %v1539 = vadd.f32 0.0, %v1538
      %v1540 = vpop.f32.mrb[0].mxu0
      %v1541 = vpop.f32.mrb[0].mxu0
      %v1542 = vadd.f32 0.0, %v1541
      %v1543 = vpop.f32.mrb[0].mxu0
      %1544 = vdwg.mxu0
      %v1545 = vadd.f32 %v1299, %v1539
      %v1546 = vadd.f32 %v1300, %v1542
      %v1547 = vadd.f32 %v1545, %v1546
      %v1548 = vrot.slane %v1547, 4
      %v1549 = vadd.f32 %v1547, %v1548
      %v1550 = vrot.slane %v1549, 2
      %v1551 = vadd.f32 %v1549, %v1550
      %v1552 = vrot.slane %v1551, 1
      %v1553 = vadd.f32 %v1551, %v1552
      %1554 = vst [vmem:[%s235] sm:$0x1] %v1553
      %v1555 = vmul.f32 %v1545, %v1545
      %v1556 = vmul.f32 %v1546, %v1546
      %v1557 = vadd.f32 %v1555, %v1556
      %v1558 = vrot.slane %v1557, 4
      %v1559 = vadd.f32 %v1557, %v1558
      %v1560 = vrot.slane %v1559, 2
      %v1561 = vadd.f32 %v1559, %v1560
      %v1562 = vrot.slane %v1561, 1
      %v1563 = vadd.f32 %v1561, %v1562
      %1564 = vst [vmem:[%s235 + $0x1] sm:$0x1] %v1563
      %v1567 = vcombine.high %v1545, %v1545
      %v1568 = vcombine.high %v1546, %v1546
      %v1571 = vpack.c.bf16 %v1545, %v1545
      %v1572 = vpack.c.bf16 %v1567, %v1567
      %v1573 = vpack.c.bf16 %v1546, %v1546
      %v1574 = vpack.c.bf16 %v1568, %v1568
      %1575 = vst [vmem:[%s231] sm:$0x3] %v1571
      %1576 = vst [vmem:[%s231 + $0x2] sm:$0x3] %v1572
      %1577 = vst [vmem:[%s231 + $0x4] sm:$0x3] %v1573
      %1578 = vst [vmem:[%s231 + $0x6] sm:$0x3] %v1574
      %p1579 = scmp.lt.s32.totalorder %s17, 1
      %s1580 = scalar_select %p1579, %s17, 1
      %s1581 = smul.addr %s1580, 4
      %s1582 = smul.addr %s1581, 2
      %s1583 = scalar_lea.vmem %s4, %s1582
      %p1584 = scmp.lt.s32.totalorder %s17, 1
      %s1585 = scalar_select %p1584, %s17, 1
      %s1586 = smul.addr %s1585, 2
      %s1587 = scalar_lea.vmem %s5, %s1586
      // Predicated region
      $region37: #{resnet_forward.30} parent=35 // pred_check
        %p1588 = pneg %p124
      $region38: #{resnet_forward.30} parent=35 // pred_check_branch
        %1590 = sbr.rel (%p1588) target = $region40
      $region39: #{resnet_forward.30} parent=35 // pred_region
        _
      $region40: #{resnet_forward.30} parent=35 // pred_fallthru
        _
      // Predicated region
      $region41: #{resnet_forward.30} parent=35 // pred_check
        %p1591 = pneg %p150
      $region42: #{resnet_forward.30} parent=35 // pred_check_branch
        %1593 = sbr.rel (%p1591) target = $region44
      $region43: #{resnet_forward.30} parent=35 // pred_region
        _
      $region44: #{resnet_forward.30} parent=35 // pred_fallthru
        _
    $region36: #{resnet_forward.30} parent=5 // pred_fallthru
      _
    %p1594 = scmp.le.s32.totalorder 2, %s12
    // Predicated region
    $region45: #{resnet_forward.30} parent=5 // pred_check
      %p1595 = pneg %p1594
    $region46: #{resnet_forward.30} parent=5 // pred_check_branch
      %1597 = sbr.rel (%p1595) target = $region48
    $region47: #{resnet_forward.30} parent=5 // pred_region
      %s1598 = ssub.s32 %s12, 2
      // Predicated region
      $region49: #{resnet_forward.30} parent=47 // pred_check
        %p1599 = pneg %p130
      $region50: #{resnet_forward.30} parent=47 // pred_check_branch
        %1601 = sbr.rel (%p1599) target = $region52
      $region51: #{resnet_forward.30} parent=47 // pred_region
        %p1602 = scmp.lt.s32.totalorder %s18, 1
        %s1603 = scalar_select %p1602, %s18, 1
        %s1604 = smul.addr %s1603, 4
        %s1605 = smul.addr %s1604, 2
        %s1606 = scalar_lea.vmem %s4, %s1605
      $region52: #{resnet_forward.30} parent=47 // pred_fallthru
        _
      // Predicated region
      $region53: #{resnet_forward.30} parent=47 // pred_check
        %p1607 = pneg %p156
      $region54: #{resnet_forward.30} parent=47 // pred_check_branch
        %1609 = sbr.rel (%p1607) target = $region56
      $region55: #{resnet_forward.30} parent=47 // pred_region
        %p1610 = scmp.lt.s32.totalorder %s18, 1
        %s1611 = scalar_select %p1610, %s18, 1
        %s1612 = smul.addr %s1611, 2
        %s1613 = scalar_lea.vmem %s5, %s1612
      $region56: #{resnet_forward.30} parent=47 // pred_fallthru
        _
    $region48: #{resnet_forward.30} parent=5 // pred_fallthru
      _
  $region6: #{resnet_forward.30} parent=0 // loop_footer
    %s16 = sadd.s32 1, %s12
  $region7: #{resnet_forward.30} parent=0 // loop_footer_branch
    %11 = sbr.rel target = $region3
  $region8: #{resnet_forward.30} parent=0 // loop_exit
    _

</llo_original>
